<compile_context>
chip_gen: v7x
topology: tpu7x:2x2x1
jax: 0.10.0
libtpu: 0.0.40
codegen_flags: <defaults>
</compile_context>

<pallas_src>
import functools

import jax
import jax.numpy as jnp
from jax.experimental import pallas as pl
from jax.experimental.pallas import tpu as pltpu


def _round_up(x, m):
    return ((x + m - 1) // m) * m


def _tpu_generation():
    """Best-effort TPU generation (5/6/7...); 0 if unknown."""
    try:
        kind = jax.devices()[0].device_kind.lower()
    except Exception:
        return 0
    for g in (7, 6, 5, 4, 3, 2):
        if f"v{g}" in kind:
            return g
    return 0


def lstm_classifier_kernel(gx0_ref, w_ih_ref, w_hh_ref, b_ref, fc_w_ref, fc_b_ref,
                           out_ref, seq_ref, gx_ref, *,
                           num_layers, seq_len, hidden, batch_tile,
                           matmul_dtype=jnp.float32):
    """Multi-layer LSTM recurrence + final Linear for one batch tile.

    The hidden dim is padded to Hp (= `hidden`), a multiple of 128, so every gate
    slice / seq store is lane-aligned.  Gate math stays f32; matmul operands are
    optionally bf16 with f32 accumulation.

    gx0_ref : (T, Bt, 4Hp)       layer-0 gates precomputed in the wrapper (time-major)
    w_ih_ref: (max(L-1,1), Hp, 4Hp) input->gates weights for layers 1..L-1
    w_hh_ref: (L, Hp, 4Hp)       hidden->gates weights for all layers
    b_ref   : (max(L-1,1), 1, 4Hp)  combined biases (b_ih + b_hh) for layers 1..L-1
    fc_w_ref: (1, Hp)            final linear weight (zero padded beyond H)
    fc_b_ref: (1, 1)             final linear bias
    out_ref : (Bt, 1)
    seq_ref : (T*Bt, Hp)   scratch: previous layer's hidden sequence (row = t*Bt + b)
    gx_ref  : (T*Bt, 4Hp)  scratch: current layer's hoisted input-projection gates
    """
    H = hidden
    T = seq_len
    Bt = batch_tile

    h = jnp.zeros((Bt, H), jnp.float32)

    for layer in range(num_layers):
        is_first = layer == 0
        is_last = layer == num_layers - 1
        w_hh = w_hh_ref[layer].astype(matmul_dtype)            # (Hp, 4Hp)

        if not is_first:
            # Hoisted input projection for every timestep of this layer: one big
            # (T*Bt, Hp) @ (Hp, 4Hp) MXU matmul outside the serial recurrence.
            w_ih = w_ih_ref[layer - 1].astype(matmul_dtype)
            gx_ref[...] = (
                jnp.dot(seq_ref[...].astype(matmul_dtype), w_ih,
                        preferred_element_type=jnp.float32)
                + b_ref[layer - 1])                            # (1, 4Hp) broadcast

        # ---- t = 0 peeled: h = c = 0 -> no h @ W_hh matmul and no f*c term. ----
        g0 = gx0_ref[0] if is_first else gx_ref[pl.ds(0, Bt), :]
        c = jax.nn.sigmoid(g0[:, :H]) * jnp.tanh(g0[:, 2 * H:3 * H])
        h = jax.nn.sigmoid(g0[:, 3 * H:]) * jnp.tanh(c)
        if not is_last:
            seq_ref[pl.ds(0, Bt), :] = h

        # ---- t = 1 .. T-1 ----
        def step(t, carry, *, _is_first=is_first, _is_last=is_last, _w_hh=w_hh):
            h, c = carry
            row = pl.multiple_of(t * Bt, Bt)                   # tile-aligned row offset
            gx_t = gx0_ref[t] if _is_first else gx_ref[pl.ds(row, Bt), :]
            gates = gx_t + jnp.dot(h.astype(matmul_dtype), _w_hh,
                                   preferred_element_type=jnp.float32)
            # PyTorch gate order: i, f, g, o.  i/f share one sigmoid over 2Hp lanes;
            # all slice offsets are multiples of 128 (Hp padded) -> no lane rotates.
            if_g = jax.nn.sigmoid(gates[:, :2 * H])
            g_g = jnp.tanh(gates[:, 2 * H:3 * H])
            o_g = jax.nn.sigmoid(gates[:, 3 * H:])
            c = if_g[:, H:] * c + if_g[:, :H] * g_g
            h = o_g * jnp.tanh(c)
            if not _is_last:
                seq_ref[pl.ds(row, Bt), :] = h                 # next layer's input
            return h, c

        steps = T - 1
        unroll = steps if steps <= 16 else 8                   # partial unroll for long T
        h, c = jax.lax.fori_loop(1, T, step, (h, c), unroll=max(unroll, 1))

    # fc(last_hidden): (Bt, Hp) @ (Hp, 1) as VPU multiply + lane reduce (skip MXU, N=1).
    out_ref[...] = (jnp.sum(h * fc_w_ref[...], axis=-1, keepdims=True) + fc_b_ref[...])


def _pad_gate_cols(w, H, Hp):
    """(..., 4H) -> (..., 4Hp): zero-pad each of the i/f/g/o column blocks to Hp lanes."""
    if Hp == H:
        return w
    lead = w.shape[:-1]
    w4 = w.reshape(lead + (4, H))
    w4 = jnp.pad(w4, [(0, 0)] * len(lead) + [(0, 0), (0, Hp - H)])
    return w4.reshape(lead + (4 * Hp,))


def _pad_axis(w, H, Hp, axis):
    if Hp == H:
        return w
    pad = [(0, 0)] * w.ndim
    pad[axis] = (0, Hp - H)
    return jnp.pad(w, pad)


def init_params(key, input_size, hidden, num_layers):
    """Xavier-uniform weights / zero biases, same shapes/init policy as the PyTorch module."""
    H = hidden
    key, k0 = jax.random.split(key)
    bound0 = (6.0 / (input_size + 4 * H)) ** 0.5
    w_ih0 = jax.random.uniform(k0, (input_size, 4 * H), jnp.float32, -bound0, bound0)

    bound_h = (6.0 / (H + 4 * H)) ** 0.5
    w_hh_list, w_ih_rest, b_rest = [], [], []
    for layer in range(num_layers):
        key, k_hh = jax.random.split(key)
        w_hh_list.append(jax.random.uniform(k_hh, (H, 4 * H), jnp.float32, -bound_h, bound_h))
        if layer > 0:
            key, k_ih = jax.random.split(key)
            w_ih_rest.append(jax.random.uniform(k_ih, (H, 4 * H), jnp.float32,
                                                -bound_h, bound_h))
            b_rest.append(jnp.zeros((1, 4 * H), jnp.float32))   # b_ih + b_hh, init 0
    if not w_ih_rest:   # num_layers == 1: dummies so the kernel signature is uniform
        w_ih_rest = [jnp.zeros((H, 4 * H), jnp.float32)]
        b_rest = [jnp.zeros((1, 4 * H), jnp.float32)]

    key, k_fc = jax.random.split(key)
    bound_fc = (6.0 / (H + 1)) ** 0.5
    fc_w = jax.random.uniform(k_fc, (1, H), jnp.float32, -bound_fc, bound_fc)
    fc_b = jnp.zeros((1, 1), jnp.float32)
    return dict(w_ih0=w_ih0,                              # (input_size, 4H)
                b0=jnp.zeros((1, 4 * H), jnp.float32),    # layer-0 bias
                w_ih_rest=jnp.stack(w_ih_rest),           # (max(L-1,1), H, 4H)
                b_rest=jnp.stack(b_rest),                 # (max(L-1,1), 1, 4H)
                w_hh=jnp.stack(w_hh_list),                # (L, H, 4H)
                fc_w=fc_w, fc_b=fc_b)


def lstm_classifier_forward(x, params, *, hidden, num_layers, matmul_dtype=None):
    """x: (B, T, input_size) float32 -> (B,) float32 (matches out.squeeze())."""
    B, T, _ = x.shape
    H = hidden
    x = x.astype(jnp.float32)

    gen = _tpu_generation()
    if matmul_dtype is None:
        # v6e/v7x MXUs are bf16-native; f32 operands cost extra MXU passes.  Gate math
        # and accumulation stay f32; only the dot operands are cast.
        matmul_dtype = jnp.bfloat16 if gen >= 6 else jnp.float32

    # Pad the hidden dim (per gate block) to a multiple of 128 lanes.  Padding rows /
    # columns are zero, so padded lanes of h and c remain exactly zero through the
    # recurrence -> numerics unchanged, but all gate slices and stores are lane-aligned.
    Hp = _round_up(H, 128)
    w_ih0 = _pad_gate_cols(params["w_ih0"], H, Hp)                      # (in, 4Hp)
    b0 = _pad_gate_cols(params["b0"], H, Hp)                            # (1, 4Hp)
    w_ih_rest = _pad_gate_cols(_pad_axis(params["w_ih_rest"], H, Hp, 1), H, Hp)
    w_hh = _pad_gate_cols(_pad_axis(params["w_hh"], H, Hp, 1), H, Hp)   # (L, Hp, 4Hp)
    b_rest = _pad_gate_cols(params["b_rest"], H, Hp)                    # (.., 1, 4Hp)
    fc_w = _pad_axis(params["fc_w"], H, Hp, 1)                          # (1, Hp)
    fc_b = params["fc_b"]

    # Layer-0 input projection hoisted out of the kernel, produced time-major directly
    # (no separate (T,B,4H) HBM transpose pass).
    gx0 = jnp.einsum("bti,ig->tbg", x, w_ih0) + b0                      # (T, B, 4Hp)

    # ---- grid / tile selection (per TPU generation) ----
    vmem_cap = (64 << 20) if gen >= 7 else (128 << 20)                  # physical VMEM / TC
    budget = int(vmem_cap * 0.6)
    per_row = 13 * T * Hp * 4        # 2x gx0 block (dbl-buf) + gx scratch + seq scratch
    weight_bytes = 4 * Hp * 4 * Hp * (num_layers + max(num_layers - 1, 1))
    max_tile = max(8, ((budget - 2 * weight_bytes) // max(per_row, 1)) // 8 * 8)

    b_pad8 = _round_up(max(B, 1), 8)
    # v7x has 2 TensorCores: target exactly 2 grid tiles (sharded by the "parallel"
    # axis) when the batch is big enough.  v5e/v6e have 1 TC: one fat tile, splitting
    # further only if VMEM forces it (every extra tile replays the serial recurrence).
    target_tiles = 2 if (gen >= 7 and b_pad8 >= 16) else 1
    n_tiles = max(target_tiles, -(-b_pad8 // max_tile))
    tile = _round_up(-(-b_pad8 // n_tiles), 8)
    b_pad = n_tiles * tile

    if b_pad != B:
        gx0 = jnp.pad(gx0, ((0, 0), (0, b_pad - B), (0, 0)))

    # Explicit scoped-VMEM limit: the 16/32 MiB defaults would cap the tile size long
    # before physical VMEM, defeating the "one fat tile" strategy.
    gate_slab = T * tile * 4 * Hp * 4
    need = 3 * gate_slab + T * tile * Hp * 4 + 2 * weight_bytes + (2 << 20)
    vmem_limit = int(min(vmem_cap * 0.9, max(need, 32 << 20)))

    kernel = functools.partial(
        lstm_classifier_kernel,
        num_layers=num_layers, seq_len=T, hidden=Hp, batch_tile=tile,
        matmul_dtype=matmul_dtype)

    def weight_spec(shape, single_buffer):
        # Grid-invariant operands: single-buffer so large weights are not held twice
        # in VMEM by default double-buffering.
        zeros = (0,) * len(shape)
        idx = lambda b, _z=zeros: _z
        if single_buffer:
            return pl.BlockSpec(shape, idx, pipeline_mode=pl.Buffered(1))
        return pl.BlockSpec(shape, idx)

    def run(single_buffer_weights):
        # TODO(synk): for very long T, stream gx0 / the inter-layer sequence over a
        # trailing T-chunk grid axis (VMEM O(T_chunk*Bt*Hp)) instead of holding the
        # full (T, tile, 4Hp) slab resident; unnecessary at these shapes.
        return pl.pallas_call(
            kernel,
            out_shape=jax.ShapeDtypeStruct((b_pad, 1), jnp.float32),
            grid=(n_tiles,),
            in_specs=[
                pl.BlockSpec((T, tile, 4 * Hp), lambda b: (0, b, 0)),       # gx0
                weight_spec(w_ih_rest.shape, single_buffer_weights),        # W_ih 1..L-1
                weight_spec(w_hh.shape, single_buffer_weights),             # W_hh all layers
                weight_spec(b_rest.shape, single_buffer_weights),           # biases 1..L-1
                weight_spec(fc_w.shape, single_buffer_weights),             # fc_w
                weight_spec(fc_b.shape, single_buffer_weights),             # fc_b
            ],
            out_specs=pl.BlockSpec((tile, 1), lambda b: (b, 0)),
            scratch_shapes=[
                pltpu.VMEM((T * tile, Hp), jnp.float32),      # prev layer's output seq
                pltpu.VMEM((T * tile, 4 * Hp), jnp.float32),  # current layer's gates
            ],
            compiler_params=pltpu.CompilerParams(
                dimension_semantics=("parallel",),
                vmem_limit_bytes=vmem_limit),
        )(gx0, w_ih_rest, w_hh, b_rest, fc_w, fc_b)

    try:
        out = run(single_buffer_weights=True)
    except Exception:
        # pl.Buffered(1) rejected by this jax/Mosaic build -> default double-buffering.
        out = run(single_buffer_weights=False)

    return jnp.squeeze(out[:B, :])   # (B, 1) -> (B,)  (scalar if B == 1, like torch)


def reference_forward(x, params, *, hidden, num_layers):
    """Pure-JAX reference with identical semantics (for verification)."""
    B, T, _ = x.shape
    H = hidden
    seq = x.astype(jnp.float32)      # (B, T, in)
    h = jnp.zeros((B, H), jnp.float32)
    for layer in range(num_layers):
        if layer == 0:
            w_ih, bias = params["w_ih0"], params["b0"]
        else:
            w_ih, bias = params["w_ih_rest"][layer - 1], params["b_rest"][layer - 1]
        w_hh = params["w_hh"][layer]
        h = jnp.zeros((B, H), jnp.float32)
        c = jnp.zeros((B, H), jnp.float32)
        outs = []
        for t in range(T):
            gates = seq[:, t, :] @ w_ih + h @ w_hh + bias
            i_g = jax.nn.sigmoid(gates[:, :H])
            f_g = jax.nn.sigmoid(gates[:, H:2 * H])
            g_g = jnp.tanh(gates[:, 2 * H:3 * H])
            o_g = jax.nn.sigmoid(gates[:, 3 * H:])
            c = f_g * c + i_g * g_g
            h = o_g * jnp.tanh(c)
            outs.append(h)
        seq = jnp.stack(outs, axis=1)
    return jnp.squeeze(h @ params["fc_w"].T + params["fc_b"])


if __name__ == "__main__":
    INPUT_SIZE = 1      # module-level `input_size = 1` in the reference file
    HIDDEN = 32
    NUM_LAYERS = 2
    BATCH = 4
    SEQ_LEN = 8

    key = jax.random.PRNGKey(0)
    key, k_x, k_p = jax.random.split(key, 3)
    x = jax.random.normal(k_x, (BATCH, SEQ_LEN, INPUT_SIZE), jnp.float32)
    params = init_params(k_p, INPUT_SIZE, HIDDEN, NUM_LAYERS)

    ref = reference_forward(x, params, hidden=HIDDEN, num_layers=NUM_LAYERS)

    # Strict correctness check with f32 MXU operands.
    out = lstm_classifier_forward(x, params, hidden=HIDDEN, num_layers=NUM_LAYERS,
                                  matmul_dtype=jnp.float32)
    out = jax.block_until_ready(out)
    assert out.shape == (BATCH,), out.shape
    assert jnp.allclose(out, ref, atol=1e-5, rtol=1e-5), (out, ref)

    # Auto dtype path (bf16 MXU operands on v6e/v7x, f32 elsewhere) — looser tolerance.
    out_auto = jax.block_until_ready(
        lstm_classifier_forward(x, params, hidden=HIDDEN, num_layers=NUM_LAYERS))
    assert jnp.allclose(out_auto, ref, atol=5e-2, rtol=5e-2), (out_auto, ref)

    print("KERNEL_OK")
</pallas_src>

<mosaic_0001>
module attributes {stable_mosaic.version = 11 : i64} {
  func.func @lstm_classifier_kernel(%arg0: i32, %arg1: memref<8x8x512xf32, #tpu.memory_space<vmem>>, %arg2: memref<1x128x512xf32, #tpu.memory_space<vmem>>, %arg3: memref<2x128x512xf32, #tpu.memory_space<vmem>>, %arg4: memref<1x1x512xf32, #tpu.memory_space<vmem>>, %arg5: memref<1x128xf32, #tpu.memory_space<vmem>>, %arg6: memref<1x1xf32, #tpu.memory_space<vmem>>, %arg7: memref<8x1xf32, #tpu.memory_space<vmem>>, %arg8: memref<64x128xf32, #tpu.memory_space<vmem>>, %arg9: memref<64x512xf32, #tpu.memory_space<vmem>>) attributes {dimension_semantics = [#tpu.dimension_semantics<parallel>], iteration_bounds = array<i64: 1>, scalar_prefetch = 0 : i64, scratch_operands = 2 : i64, tpu.core_type = #tpu.core_type<tc>, window_params = [{transform_indices = @transform_0, window_bounds = array<i64: 8, 8, 512>}, {pipeline_mode = #tpu.pipeline_mode<synchronous>, transform_indices = @transform_1, window_bounds = array<i64: 1, 128, 512>}, {pipeline_mode = #tpu.pipeline_mode<synchronous>, transform_indices = @transform_2, window_bounds = array<i64: 2, 128, 512>}, {pipeline_mode = #tpu.pipeline_mode<synchronous>, transform_indices = @transform_3, window_bounds = array<i64: 1, 1, 512>}, {pipeline_mode = #tpu.pipeline_mode<synchronous>, transform_indices = @transform_4, window_bounds = array<i64: 1, 128>}, {pipeline_mode = #tpu.pipeline_mode<synchronous>, transform_indices = @transform_5, window_bounds = array<i64: 1, 1>}, {transform_indices = @transform_6, window_bounds = array<i64: 8, 1>}]} {
    %c0 = arith.constant 0 : index
    %c0_0 = arith.constant 0 : index
    %c0_1 = arith.constant 0 : index
    %0 = vector.load %arg3[%c0, %c0_0, %c0_1] : memref<2x128x512xf32, #tpu.memory_space<vmem>>, vector<1x128x512xf32>
    %1 = vector.shape_cast %0 : vector<1x128x512xf32> to vector<128x512xf32>
    %c0_2 = arith.constant 0 : index
    %c0_3 = arith.constant 0 : index
    %c0_4 = arith.constant 0 : index
    %2 = vector.load %arg1[%c0_2, %c0_3, %c0_4] : memref<8x8x512xf32, #tpu.memory_space<vmem>>, vector<1x8x512xf32>
    %3 = vector.shape_cast %2 : vector<1x8x512xf32> to vector<8x512xf32>
    %4 = vector.extract_strided_slice %3 {offsets = [0, 0], sizes = [8, 128], strides = [1, 1]} : vector<8x512xf32> to vector<8x128xf32>
    %5 = arith.negf %4 : vector<8x128xf32>
    %6 = math.exp %5 : vector<8x128xf32>
    %cst = arith.constant 1.000000e+00 : f32
    %7 = vector.broadcast %cst : f32 to vector<8x128xf32>
    %8 = arith.addf %7, %6 : vector<8x128xf32>
    %9 = arith.divf %7, %8 : vector<8x128xf32>
    %10 = vector.extract_strided_slice %3 {offsets = [0, 256], sizes = [8, 128], strides = [1, 1]} : vector<8x512xf32> to vector<8x128xf32>
    %11 = math.tanh %10 : vector<8x128xf32>
    %12 = arith.mulf %9, %11 : vector<8x128xf32>
    %13 = vector.extract_strided_slice %3 {offsets = [0, 384], sizes = [8, 128], strides = [1, 1]} : vector<8x512xf32> to vector<8x128xf32>
    %14 = arith.negf %13 : vector<8x128xf32>
    %15 = math.exp %14 : vector<8x128xf32>
    %cst_5 = arith.constant 1.000000e+00 : f32
    %16 = vector.broadcast %cst_5 : f32 to vector<8x128xf32>
    %17 = arith.addf %16, %15 : vector<8x128xf32>
    %18 = arith.divf %16, %17 : vector<8x128xf32>
    %19 = math.tanh %12 : vector<8x128xf32>
    %20 = arith.mulf %18, %19 : vector<8x128xf32>
    %c0_6 = arith.constant 0 : index
    %c0_7 = arith.constant 0 : index
    %21 = vector.load %arg8[%c0_6, %c0_7] : memref<64x128xf32, #tpu.memory_space<vmem>>, vector<8x128xf32>
    tpu.vector_store %arg8[%c0_6, %c0_7], %20 {strides = array<i32>} : memref<64x128xf32, #tpu.memory_space<vmem>>, vector<8x128xf32>,
    %c1_i32 = arith.constant 1 : i32
    %c8_i32 = arith.constant 8 : i32
    %22 = arith.muli %c1_i32, %c8_i32 : i32
    %23 = tpu.assume_multiple %22, 8 : i32
    %24 = arith.index_cast %c1_i32 : i32 to index
    %c0_8 = arith.constant 0 : index
    %c0_9 = arith.constant 0 : index
    %25 = vector.load %arg1[%24, %c0_8, %c0_9] : memref<8x8x512xf32, #tpu.memory_space<vmem>>, vector<1x8x512xf32>
    %26 = vector.shape_cast %25 : vector<1x8x512xf32> to vector<8x512xf32>
    %cst_10 = arith.constant dense<0.000000e+00> : vector<8x512xf32>
    %27 = tpu.matmul %20, %1, %cst_10 {dimension_numbers = #tpu.dot_dimension_numbers<[1], [0], [0], [1], [0, 0, 1, 1], [], []>} : vector<8x128xf32>, vector<128x512xf32>, vector<8x512xf32> -> vector<8x512xf32>
    %28 = arith.addf %26, %27 : vector<8x512xf32>
    %29 = vector.extract_strided_slice %28 {offsets = [0, 0], sizes = [8, 256], strides = [1, 1]} : vector<8x512xf32> to vector<8x256xf32>
    %30 = arith.negf %29 : vector<8x256xf32>
    %31 = math.exp %30 : vector<8x256xf32>
    %cst_11 = arith.constant 1.000000e+00 : f32
    %32 = vector.broadcast %cst_11 : f32 to vector<8x256xf32>
    %33 = arith.addf %32, %31 : vector<8x256xf32>
    %34 = arith.divf %32, %33 : vector<8x256xf32>
    %35 = vector.extract_strided_slice %28 {offsets = [0, 256], sizes = [8, 128], strides = [1, 1]} : vector<8x512xf32> to vector<8x128xf32>
    %36 = math.tanh %35 : vector<8x128xf32>
    %37 = vector.extract_strided_slice %28 {offsets = [0, 384], sizes = [8, 128], strides = [1, 1]} : vector<8x512xf32> to vector<8x128xf32>
    %38 = arith.negf %37 : vector<8x128xf32>
    %39 = math.exp %38 : vector<8x128xf32>
    %cst_12 = arith.constant 1.000000e+00 : f32
    %40 = vector.broadcast %cst_12 : f32 to vector<8x128xf32>
    %41 = arith.addf %40, %39 : vector<8x128xf32>
    %42 = arith.divf %40, %41 : vector<8x128xf32>
    %43 = vector.extract_strided_slice %34 {offsets = [0, 128], sizes = [8, 128], strides = [1, 1]} : vector<8x256xf32> to vector<8x128xf32>
    %44 = arith.mulf %43, %12 : vector<8x128xf32>
    %45 = vector.extract_strided_slice %34 {offsets = [0, 0], sizes = [8, 128], strides = [1, 1]} : vector<8x256xf32> to vector<8x128xf32>
    %46 = arith.mulf %45, %36 : vector<8x128xf32>
    %47 = arith.addf %44, %46 : vector<8x128xf32>
    %48 = math.tanh %47 : vector<8x128xf32>
    %49 = arith.mulf %42, %48 : vector<8x128xf32>
    %50 = arith.index_cast %23 : i32 to index
    %c0_13 = arith.constant 0 : index
    %51 = vector.load %arg8[%50, %c0_13] : memref<64x128xf32, #tpu.memory_space<vmem>>, vector<8x128xf32>
    tpu.vector_store %arg8[%50, %c0_13], %49 {strides = array<i32>} : memref<64x128xf32, #tpu.memory_space<vmem>>, vector<8x128xf32>,
    %c2_i32 = arith.constant 2 : i32
    %c8_i32_14 = arith.constant 8 : i32
    %52 = arith.muli %c2_i32, %c8_i32_14 : i32
    %53 = tpu.assume_multiple %52, 8 : i32
    %54 = arith.index_cast %c2_i32 : i32 to index
    %c0_15 = arith.constant 0 : index
    %c0_16 = arith.constant 0 : index
    %55 = vector.load %arg1[%54, %c0_15, %c0_16] : memref<8x8x512xf32, #tpu.memory_space<vmem>>, vector<1x8x512xf32>
    %56 = vector.shape_cast %55 : vector<1x8x512xf32> to vector<8x512xf32>
    %cst_17 = arith.constant dense<0.000000e+00> : vector<8x512xf32>
    %57 = tpu.matmul %49, %1, %cst_17 {dimension_numbers = #tpu.dot_dimension_numbers<[1], [0], [0], [1], [0, 0, 1, 1], [], []>} : vector<8x128xf32>, vector<128x512xf32>, vector<8x512xf32> -> vector<8x512xf32>
    %58 = arith.addf %56, %57 : vector<8x512xf32>
    %59 = vector.extract_strided_slice %58 {offsets = [0, 0], sizes = [8, 256], strides = [1, 1]} : vector<8x512xf32> to vector<8x256xf32>
    %60 = arith.negf %59 : vector<8x256xf32>
    %61 = math.exp %60 : vector<8x256xf32>
    %cst_18 = arith.constant 1.000000e+00 : f32
    %62 = vector.broadcast %cst_18 : f32 to vector<8x256xf32>
    %63 = arith.addf %62, %61 : vector<8x256xf32>
    %64 = arith.divf %62, %63 : vector<8x256xf32>
    %65 = vector.extract_strided_slice %58 {offsets = [0, 256], sizes = [8, 128], strides = [1, 1]} : vector<8x512xf32> to vector<8x128xf32>
    %66 = math.tanh %65 : vector<8x128xf32>
    %67 = vector.extract_strided_slice %58 {offsets = [0, 384], sizes = [8, 128], strides = [1, 1]} : vector<8x512xf32> to vector<8x128xf32>
    %68 = arith.negf %67 : vector<8x128xf32>
    %69 = math.exp %68 : vector<8x128xf32>
    %cst_19 = arith.constant 1.000000e+00 : f32
    %70 = vector.broadcast %cst_19 : f32 to vector<8x128xf32>
    %71 = arith.addf %70, %69 : vector<8x128xf32>
    %72 = arith.divf %70, %71 : vector<8x128xf32>
    %73 = vector.extract_strided_slice %64 {offsets = [0, 128], sizes = [8, 128], strides = [1, 1]} : vector<8x256xf32> to vector<8x128xf32>
    %74 = arith.mulf %73, %47 : vector<8x128xf32>
    %75 = vector.extract_strided_slice %64 {offsets = [0, 0], sizes = [8, 128], strides = [1, 1]} : vector<8x256xf32> to vector<8x128xf32>
    %76 = arith.mulf %75, %66 : vector<8x128xf32>
    %77 = arith.addf %74, %76 : vector<8x128xf32>
    %78 = math.tanh %77 : vector<8x128xf32>
    %79 = arith.mulf %72, %78 : vector<8x128xf32>
    %80 = arith.index_cast %53 : i32 to index
    %c0_20 = arith.constant 0 : index
    %81 = vector.load %arg8[%80, %c0_20] : memref<64x128xf32, #tpu.memory_space<vmem>>, vector<8x128xf32>
    tpu.vector_store %arg8[%80, %c0_20], %79 {strides = array<i32>} : memref<64x128xf32, #tpu.memory_space<vmem>>, vector<8x128xf32>,
    %c3_i32 = arith.constant 3 : i32
    %c8_i32_21 = arith.constant 8 : i32
    %82 = arith.muli %c3_i32, %c8_i32_21 : i32
    %83 = tpu.assume_multiple %82, 8 : i32
    %84 = arith.index_cast %c3_i32 : i32 to index
    %c0_22 = arith.constant 0 : index
    %c0_23 = arith.constant 0 : index
    %85 = vector.load %arg1[%84, %c0_22, %c0_23] : memref<8x8x512xf32, #tpu.memory_space<vmem>>, vector<1x8x512xf32>
    %86 = vector.shape_cast %85 : vector<1x8x512xf32> to vector<8x512xf32>
    %cst_24 = arith.constant dense<0.000000e+00> : vector<8x512xf32>
    %87 = tpu.matmul %79, %1, %cst_24 {dimension_numbers = #tpu.dot_dimension_numbers<[1], [0], [0], [1], [0, 0, 1, 1], [], []>} : vector<8x128xf32>, vector<128x512xf32>, vector<8x512xf32> -> vector<8x512xf32>
    %88 = arith.addf %86, %87 : vector<8x512xf32>
    %89 = vector.extract_strided_slice %88 {offsets = [0, 0], sizes = [8, 256], strides = [1, 1]} : vector<8x512xf32> to vector<8x256xf32>
    %90 = arith.negf %89 : vector<8x256xf32>
    %91 = math.exp %90 : vector<8x256xf32>
    %cst_25 = arith.constant 1.000000e+00 : f32
    %92 = vector.broadcast %cst_25 : f32 to vector<8x256xf32>
    %93 = arith.addf %92, %91 : vector<8x256xf32>
    %94 = arith.divf %92, %93 : vector<8x256xf32>
    %95 = vector.extract_strided_slice %88 {offsets = [0, 256], sizes = [8, 128], strides = [1, 1]} : vector<8x512xf32> to vector<8x128xf32>
    %96 = math.tanh %95 : vector<8x128xf32>
    %97 = vector.extract_strided_slice %88 {offsets = [0, 384], sizes = [8, 128], strides = [1, 1]} : vector<8x512xf32> to vector<8x128xf32>
    %98 = arith.negf %97 : vector<8x128xf32>
    %99 = math.exp %98 : vector<8x128xf32>
    %cst_26 = arith.constant 1.000000e+00 : f32
    %100 = vector.broadcast %cst_26 : f32 to vector<8x128xf32>
    %101 = arith.addf %100, %99 : vector<8x128xf32>
    %102 = arith.divf %100, %101 : vector<8x128xf32>
    %103 = vector.extract_strided_slice %94 {offsets = [0, 128], sizes = [8, 128], strides = [1, 1]} : vector<8x256xf32> to vector<8x128xf32>
    %104 = arith.mulf %103, %77 : vector<8x128xf32>
    %105 = vector.extract_strided_slice %94 {offsets = [0, 0], sizes = [8, 128], strides = [1, 1]} : vector<8x256xf32> to vector<8x128xf32>
    %106 = arith.mulf %105, %96 : vector<8x128xf32>
    %107 = arith.addf %104, %106 : vector<8x128xf32>
    %108 = math.tanh %107 : vector<8x128xf32>
    %109 = arith.mulf %102, %108 : vector<8x128xf32>
    %110 = arith.index_cast %83 : i32 to index
    %c0_27 = arith.constant 0 : index
    %111 = vector.load %arg8[%110, %c0_27] : memref<64x128xf32, #tpu.memory_space<vmem>>, vector<8x128xf32>
    tpu.vector_store %arg8[%110, %c0_27], %109 {strides = array<i32>} : memref<64x128xf32, #tpu.memory_space<vmem>>, vector<8x128xf32>,
    %c4_i32 = arith.constant 4 : i32
    %c8_i32_28 = arith.constant 8 : i32
    %112 = arith.muli %c4_i32, %c8_i32_28 : i32
    %113 = tpu.assume_multiple %112, 8 : i32
    %114 = arith.index_cast %c4_i32 : i32 to index
    %c0_29 = arith.constant 0 : index
    %c0_30 = arith.constant 0 : index
    %115 = vector.load %arg1[%114, %c0_29, %c0_30] : memref<8x8x512xf32, #tpu.memory_space<vmem>>, vector<1x8x512xf32>
    %116 = vector.shape_cast %115 : vector<1x8x512xf32> to vector<8x512xf32>
    %cst_31 = arith.constant dense<0.000000e+00> : vector<8x512xf32>
    %117 = tpu.matmul %109, %1, %cst_31 {dimension_numbers = #tpu.dot_dimension_numbers<[1], [0], [0], [1], [0, 0, 1, 1], [], []>} : vector<8x128xf32>, vector<128x512xf32>, vector<8x512xf32> -> vector<8x512xf32>
    %118 = arith.addf %116, %117 : vector<8x512xf32>
    %119 = vector.extract_strided_slice %118 {offsets = [0, 0], sizes = [8, 256], strides = [1, 1]} : vector<8x512xf32> to vector<8x256xf32>
    %120 = arith.negf %119 : vector<8x256xf32>
    %121 = math.exp %120 : vector<8x256xf32>
    %cst_32 = arith.constant 1.000000e+00 : f32
    %122 = vector.broadcast %cst_32 : f32 to vector<8x256xf32>
    %123 = arith.addf %122, %121 : vector<8x256xf32>
    %124 = arith.divf %122, %123 : vector<8x256xf32>
    %125 = vector.extract_strided_slice %118 {offsets = [0, 256], sizes = [8, 128], strides = [1, 1]} : vector<8x512xf32> to vector<8x128xf32>
    %126 = math.tanh %125 : vector<8x128xf32>
    %127 = vector.extract_strided_slice %118 {offsets = [0, 384], sizes = [8, 128], strides = [1, 1]} : vector<8x512xf32> to vector<8x128xf32>
    %128 = arith.negf %127 : vector<8x128xf32>
    %129 = math.exp %128 : vector<8x128xf32>
    %cst_33 = arith.constant 1.000000e+00 : f32
    %130 = vector.broadcast %cst_33 : f32 to vector<8x128xf32>
    %131 = arith.addf %130, %129 : vector<8x128xf32>
    %132 = arith.divf %130, %131 : vector<8x128xf32>
    %133 = vector.extract_strided_slice %124 {offsets = [0, 128], sizes = [8, 128], strides = [1, 1]} : vector<8x256xf32> to vector<8x128xf32>
    %134 = arith.mulf %133, %107 : vector<8x128xf32>
    %135 = vector.extract_strided_slice %124 {offsets = [0, 0], sizes = [8, 128], strides = [1, 1]} : vector<8x256xf32> to vector<8x128xf32>
    %136 = arith.mulf %135, %126 : vector<8x128xf32>
    %137 = arith.addf %134, %136 : vector<8x128xf32>
    %138 = math.tanh %137 : vector<8x128xf32>
    %139 = arith.mulf %132, %138 : vector<8x128xf32>
    %140 = arith.index_cast %113 : i32 to index
    %c0_34 = arith.constant 0 : index
    %141 = vector.load %arg8[%140, %c0_34] : memref<64x128xf32, #tpu.memory_space<vmem>>, vector<8x128xf32>
    tpu.vector_store %arg8[%140, %c0_34], %139 {strides = array<i32>} : memref<64x128xf32, #tpu.memory_space<vmem>>, vector<8x128xf32>,
    %c5_i32 = arith.constant 5 : i32
    %c8_i32_35 = arith.constant 8 : i32
    %142 = arith.muli %c5_i32, %c8_i32_35 : i32
    %143 = tpu.assume_multiple %142, 8 : i32
    %144 = arith.index_cast %c5_i32 : i32 to index
    %c0_36 = arith.constant 0 : index
    %c0_37 = arith.constant 0 : index
    %145 = vector.load %arg1[%144, %c0_36, %c0_37] : memref<8x8x512xf32, #tpu.memory_space<vmem>>, vector<1x8x512xf32>
    %146 = vector.shape_cast %145 : vector<1x8x512xf32> to vector<8x512xf32>
    %cst_38 = arith.constant dense<0.000000e+00> : vector<8x512xf32>
    %147 = tpu.matmul %139, %1, %cst_38 {dimension_numbers = #tpu.dot_dimension_numbers<[1], [0], [0], [1], [0, 0, 1, 1], [], []>} : vector<8x128xf32>, vector<128x512xf32>, vector<8x512xf32> -> vector<8x512xf32>
    %148 = arith.addf %146, %147 : vector<8x512xf32>
    %149 = vector.extract_strided_slice %148 {offsets = [0, 0], sizes = [8, 256], strides = [1, 1]} : vector<8x512xf32> to vector<8x256xf32>
    %150 = arith.negf %149 : vector<8x256xf32>
    %151 = math.exp %150 : vector<8x256xf32>
    %cst_39 = arith.constant 1.000000e+00 : f32
    %152 = vector.broadcast %cst_39 : f32 to vector<8x256xf32>
    %153 = arith.addf %152, %151 : vector<8x256xf32>
    %154 = arith.divf %152, %153 : vector<8x256xf32>
    %155 = vector.extract_strided_slice %148 {offsets = [0, 256], sizes = [8, 128], strides = [1, 1]} : vector<8x512xf32> to vector<8x128xf32>
    %156 = math.tanh %155 : vector<8x128xf32>
    %157 = vector.extract_strided_slice %148 {offsets = [0, 384], sizes = [8, 128], strides = [1, 1]} : vector<8x512xf32> to vector<8x128xf32>
    %158 = arith.negf %157 : vector<8x128xf32>
    %159 = math.exp %158 : vector<8x128xf32>
    %cst_40 = arith.constant 1.000000e+00 : f32
    %160 = vector.broadcast %cst_40 : f32 to vector<8x128xf32>
    %161 = arith.addf %160, %159 : vector<8x128xf32>
    %162 = arith.divf %160, %161 : vector<8x128xf32>
    %163 = vector.extract_strided_slice %154 {offsets = [0, 128], sizes = [8, 128], strides = [1, 1]} : vector<8x256xf32> to vector<8x128xf32>
    %164 = arith.mulf %163, %137 : vector<8x128xf32>
    %165 = vector.extract_strided_slice %154 {offsets = [0, 0], sizes = [8, 128], strides = [1, 1]} : vector<8x256xf32> to vector<8x128xf32>
    %166 = arith.mulf %165, %156 : vector<8x128xf32>
    %167 = arith.addf %164, %166 : vector<8x128xf32>
    %168 = math.tanh %167 : vector<8x128xf32>
    %169 = arith.mulf %162, %168 : vector<8x128xf32>
    %170 = arith.index_cast %143 : i32 to index
    %c0_41 = arith.constant 0 : index
    %171 = vector.load %arg8[%170, %c0_41] : memref<64x128xf32, #tpu.memory_space<vmem>>, vector<8x128xf32>
    tpu.vector_store %arg8[%170, %c0_41], %169 {strides = array<i32>} : memref<64x128xf32, #tpu.memory_space<vmem>>, vector<8x128xf32>,
    %c6_i32 = arith.constant 6 : i32
    %c8_i32_42 = arith.constant 8 : i32
    %172 = arith.muli %c6_i32, %c8_i32_42 : i32
    %173 = tpu.assume_multiple %172, 8 : i32
    %174 = arith.index_cast %c6_i32 : i32 to index
    %c0_43 = arith.constant 0 : index
    %c0_44 = arith.constant 0 : index
    %175 = vector.load %arg1[%174, %c0_43, %c0_44] : memref<8x8x512xf32, #tpu.memory_space<vmem>>, vector<1x8x512xf32>
    %176 = vector.shape_cast %175 : vector<1x8x512xf32> to vector<8x512xf32>
    %cst_45 = arith.constant dense<0.000000e+00> : vector<8x512xf32>
    %177 = tpu.matmul %169, %1, %cst_45 {dimension_numbers = #tpu.dot_dimension_numbers<[1], [0], [0], [1], [0, 0, 1, 1], [], []>} : vector<8x128xf32>, vector<128x512xf32>, vector<8x512xf32> -> vector<8x512xf32>
    %178 = arith.addf %176, %177 : vector<8x512xf32>
    %179 = vector.extract_strided_slice %178 {offsets = [0, 0], sizes = [8, 256], strides = [1, 1]} : vector<8x512xf32> to vector<8x256xf32>
    %180 = arith.negf %179 : vector<8x256xf32>
    %181 = math.exp %180 : vector<8x256xf32>
    %cst_46 = arith.constant 1.000000e+00 : f32
    %182 = vector.broadcast %cst_46 : f32 to vector<8x256xf32>
    %183 = arith.addf %182, %181 : vector<8x256xf32>
    %184 = arith.divf %182, %183 : vector<8x256xf32>
    %185 = vector.extract_strided_slice %178 {offsets = [0, 256], sizes = [8, 128], strides = [1, 1]} : vector<8x512xf32> to vector<8x128xf32>
    %186 = math.tanh %185 : vector<8x128xf32>
    %187 = vector.extract_strided_slice %178 {offsets = [0, 384], sizes = [8, 128], strides = [1, 1]} : vector<8x512xf32> to vector<8x128xf32>
    %188 = arith.negf %187 : vector<8x128xf32>
    %189 = math.exp %188 : vector<8x128xf32>
    %cst_47 = arith.constant 1.000000e+00 : f32
    %190 = vector.broadcast %cst_47 : f32 to vector<8x128xf32>
    %191 = arith.addf %190, %189 : vector<8x128xf32>
    %192 = arith.divf %190, %191 : vector<8x128xf32>
    %193 = vector.extract_strided_slice %184 {offsets = [0, 128], sizes = [8, 128], strides = [1, 1]} : vector<8x256xf32> to vector<8x128xf32>
    %194 = arith.mulf %193, %167 : vector<8x128xf32>
    %195 = vector.extract_strided_slice %184 {offsets = [0, 0], sizes = [8, 128], strides = [1, 1]} : vector<8x256xf32> to vector<8x128xf32>
    %196 = arith.mulf %195, %186 : vector<8x128xf32>
    %197 = arith.addf %194, %196 : vector<8x128xf32>
    %198 = math.tanh %197 : vector<8x128xf32>
    %199 = arith.mulf %192, %198 : vector<8x128xf32>
    %200 = arith.index_cast %173 : i32 to index
    %c0_48 = arith.constant 0 : index
    %201 = vector.load %arg8[%200, %c0_48] : memref<64x128xf32, #tpu.memory_space<vmem>>, vector<8x128xf32>
    tpu.vector_store %arg8[%200, %c0_48], %199 {strides = array<i32>} : memref<64x128xf32, #tpu.memory_space<vmem>>, vector<8x128xf32>,
    %c7_i32 = arith.constant 7 : i32
    %c8_i32_49 = arith.constant 8 : i32
    %202 = arith.muli %c7_i32, %c8_i32_49 : i32
    %203 = tpu.assume_multiple %202, 8 : i32
    %204 = arith.index_cast %c7_i32 : i32 to index
    %c0_50 = arith.constant 0 : index
    %c0_51 = arith.constant 0 : index
    %205 = vector.load %arg1[%204, %c0_50, %c0_51] : memref<8x8x512xf32, #tpu.memory_space<vmem>>, vector<1x8x512xf32>
    %206 = vector.shape_cast %205 : vector<1x8x512xf32> to vector<8x512xf32>
    %cst_52 = arith.constant dense<0.000000e+00> : vector<8x512xf32>
    %207 = tpu.matmul %199, %1, %cst_52 {dimension_numbers = #tpu.dot_dimension_numbers<[1], [0], [0], [1], [0, 0, 1, 1], [], []>} : vector<8x128xf32>, vector<128x512xf32>, vector<8x512xf32> -> vector<8x512xf32>
    %208 = arith.addf %206, %207 : vector<8x512xf32>
    %209 = vector.extract_strided_slice %208 {offsets = [0, 0], sizes = [8, 256], strides = [1, 1]} : vector<8x512xf32> to vector<8x256xf32>
    %210 = arith.negf %209 : vector<8x256xf32>
    %211 = math.exp %210 : vector<8x256xf32>
    %cst_53 = arith.constant 1.000000e+00 : f32
    %212 = vector.broadcast %cst_53 : f32 to vector<8x256xf32>
    %213 = arith.addf %212, %211 : vector<8x256xf32>
    %214 = arith.divf %212, %213 : vector<8x256xf32>
    %215 = vector.extract_strided_slice %208 {offsets = [0, 256], sizes = [8, 128], strides = [1, 1]} : vector<8x512xf32> to vector<8x128xf32>
    %216 = math.tanh %215 : vector<8x128xf32>
    %217 = vector.extract_strided_slice %208 {offsets = [0, 384], sizes = [8, 128], strides = [1, 1]} : vector<8x512xf32> to vector<8x128xf32>
    %218 = arith.negf %217 : vector<8x128xf32>
    %219 = math.exp %218 : vector<8x128xf32>
    %cst_54 = arith.constant 1.000000e+00 : f32
    %220 = vector.broadcast %cst_54 : f32 to vector<8x128xf32>
    %221 = arith.addf %220, %219 : vector<8x128xf32>
    %222 = arith.divf %220, %221 : vector<8x128xf32>
    %223 = vector.extract_strided_slice %214 {offsets = [0, 128], sizes = [8, 128], strides = [1, 1]} : vector<8x256xf32> to vector<8x128xf32>
    %224 = arith.mulf %223, %197 : vector<8x128xf32>
    %225 = vector.extract_strided_slice %214 {offsets = [0, 0], sizes = [8, 128], strides = [1, 1]} : vector<8x256xf32> to vector<8x128xf32>
    %226 = arith.mulf %225, %216 : vector<8x128xf32>
    %227 = arith.addf %224, %226 : vector<8x128xf32>
    %228 = math.tanh %227 : vector<8x128xf32>
    %229 = arith.mulf %222, %228 : vector<8x128xf32>
    %230 = arith.index_cast %203 : i32 to index
    %c0_55 = arith.constant 0 : index
    %231 = vector.load %arg8[%230, %c0_55] : memref<64x128xf32, #tpu.memory_space<vmem>>, vector<8x128xf32>
    tpu.vector_store %arg8[%230, %c0_55], %229 {strides = array<i32>} : memref<64x128xf32, #tpu.memory_space<vmem>>, vector<8x128xf32>,
    %c7_i32_56 = arith.constant 7 : i32
    %c1 = arith.constant 1 : index
    %c0_57 = arith.constant 0 : index
    %c0_58 = arith.constant 0 : index
    %232 = vector.load %arg3[%c1, %c0_57, %c0_58] : memref<2x128x512xf32, #tpu.memory_space<vmem>>, vector<1x128x512xf32>
    %233 = vector.shape_cast %232 : vector<1x128x512xf32> to vector<128x512xf32>
    %c0_59 = arith.constant 0 : index
    %c0_60 = arith.constant 0 : index
    %c0_61 = arith.constant 0 : index
    %234 = vector.load %arg2[%c0_59, %c0_60, %c0_61] : memref<1x128x512xf32, #tpu.memory_space<vmem>>, vector<1x128x512xf32>
    %235 = vector.shape_cast %234 : vector<1x128x512xf32> to vector<128x512xf32>
    %c0_62 = arith.constant 0 : index
    %c0_63 = arith.constant 0 : index
    %236 = vector.load %arg8[%c0_62, %c0_63] : memref<64x128xf32, #tpu.memory_space<vmem>>, vector<64x128xf32>
    %cst_64 = arith.constant dense<0.000000e+00> : vector<64x512xf32>
    %237 = tpu.matmul %236, %235, %cst_64 {dimension_numbers = #tpu.dot_dimension_numbers<[1], [0], [0], [1], [0, 0, 1, 1], [], []>} : vector<64x128xf32>, vector<128x512xf32>, vector<64x512xf32> -> vector<64x512xf32>
    %c0_65 = arith.constant 0 : index
    %c0_66 = arith.constant 0 : index
    %c0_67 = arith.constant 0 : index
    %238 = vector.load %arg4[%c0_65, %c0_66, %c0_67] : memref<1x1x512xf32, #tpu.memory_space<vmem>>, vector<1x1x512xf32>
    %239 = vector.shape_cast %238 : vector<1x1x512xf32> to vector<1x512xf32>
    %240 = vector.broadcast %239 : vector<1x512xf32> to vector<64x512xf32>
    %241 = arith.addf %237, %240 : vector<64x512xf32>
    %c0_68 = arith.constant 0 : index
    %c0_69 = arith.constant 0 : index
    %242 = vector.load %arg9[%c0_68, %c0_69] : memref<64x512xf32, #tpu.memory_space<vmem>>, vector<64x512xf32>
    tpu.vector_store %arg9[%c0_68, %c0_69], %241 {strides = array<i32>} : memref<64x512xf32, #tpu.memory_space<vmem>>, vector<64x512xf32>,
    %c0_70 = arith.constant 0 : index
    %c0_71 = arith.constant 0 : index
    %243 = vector.load %arg9[%c0_70, %c0_71] : memref<64x512xf32, #tpu.memory_space<vmem>>, vector<8x512xf32>
    %244 = vector.extract_strided_slice %243 {offsets = [0, 0], sizes = [8, 128], strides = [1, 1]} : vector<8x512xf32> to vector<8x128xf32>
    %245 = arith.negf %244 : vector<8x128xf32>
    %246 = math.exp %245 : vector<8x128xf32>
    %cst_72 = arith.constant 1.000000e+00 : f32
    %247 = vector.broadcast %cst_72 : f32 to vector<8x128xf32>
    %248 = arith.addf %247, %246 : vector<8x128xf32>
    %249 = arith.divf %247, %248 : vector<8x128xf32>
    %250 = vector.extract_strided_slice %243 {offsets = [0, 256], sizes = [8, 128], strides = [1, 1]} : vector<8x512xf32> to vector<8x128xf32>
    %251 = math.tanh %250 : vector<8x128xf32>
    %252 = arith.mulf %249, %251 : vector<8x128xf32>
    %253 = vector.extract_strided_slice %243 {offsets = [0, 384], sizes = [8, 128], strides = [1, 1]} : vector<8x512xf32> to vector<8x128xf32>
    %254 = arith.negf %253 : vector<8x128xf32>
    %255 = math.exp %254 : vector<8x128xf32>
    %cst_73 = arith.constant 1.000000e+00 : f32
    %256 = vector.broadcast %cst_73 : f32 to vector<8x128xf32>
    %257 = arith.addf %256, %255 : vector<8x128xf32>
    %258 = arith.divf %256, %257 : vector<8x128xf32>
    %259 = math.tanh %252 : vector<8x128xf32>
    %260 = arith.mulf %258, %259 : vector<8x128xf32>
    %c1_i32_74 = arith.constant 1 : i32
    %c8_i32_75 = arith.constant 8 : i32
    %261 = arith.muli %c1_i32_74, %c8_i32_75 : i32
    %262 = tpu.assume_multiple %261, 8 : i32
    %263 = arith.index_cast %262 : i32 to index
    %c0_76 = arith.constant 0 : index
    %264 = vector.load %arg9[%263, %c0_76] : memref<64x512xf32, #tpu.memory_space<vmem>>, vector<8x512xf32>
    %cst_77 = arith.constant dense<0.000000e+00> : vector<8x512xf32>
    %265 = tpu.matmul %260, %233, %cst_77 {dimension_numbers = #tpu.dot_dimension_numbers<[1], [0], [0], [1], [0, 0, 1, 1], [], []>} : vector<8x128xf32>, vector<128x512xf32>, vector<8x512xf32> -> vector<8x512xf32>
    %266 = arith.addf %264, %265 : vector<8x512xf32>
    %267 = vector.extract_strided_slice %266 {offsets = [0, 0], sizes = [8, 256], strides = [1, 1]} : vector<8x512xf32> to vector<8x256xf32>
    %268 = arith.negf %267 : vector<8x256xf32>
    %269 = math.exp %268 : vector<8x256xf32>
    %cst_78 = arith.constant 1.000000e+00 : f32
    %270 = vector.broadcast %cst_78 : f32 to vector<8x256xf32>
    %271 = arith.addf %270, %269 : vector<8x256xf32>
    %272 = arith.divf %270, %271 : vector<8x256xf32>
    %273 = vector.extract_strided_slice %266 {offsets = [0, 256], sizes = [8, 128], strides = [1, 1]} : vector<8x512xf32> to vector<8x128xf32>
    %274 = math.tanh %273 : vector<8x128xf32>
    %275 = vector.extract_strided_slice %266 {offsets = [0, 384], sizes = [8, 128], strides = [1, 1]} : vector<8x512xf32> to vector<8x128xf32>
    %276 = arith.negf %275 : vector<8x128xf32>
    %277 = math.exp %276 : vector<8x128xf32>
    %cst_79 = arith.constant 1.000000e+00 : f32
    %278 = vector.broadcast %cst_79 : f32 to vector<8x128xf32>
    %279 = arith.addf %278, %277 : vector<8x128xf32>
    %280 = arith.divf %278, %279 : vector<8x128xf32>
    %281 = vector.extract_strided_slice %272 {offsets = [0, 128], sizes = [8, 128], strides = [1, 1]} : vector<8x256xf32> to vector<8x128xf32>
    %282 = arith.mulf %281, %252 : vector<8x128xf32>
    %283 = vector.extract_strided_slice %272 {offsets = [0, 0], sizes = [8, 128], strides = [1, 1]} : vector<8x256xf32> to vector<8x128xf32>
    %284 = arith.mulf %283, %274 : vector<8x128xf32>
    %285 = arith.addf %282, %284 : vector<8x128xf32>
    %286 = math.tanh %285 : vector<8x128xf32>
    %287 = arith.mulf %280, %286 : vector<8x128xf32>
    %c2_i32_80 = arith.constant 2 : i32
    %c8_i32_81 = arith.constant 8 : i32
    %288 = arith.muli %c2_i32_80, %c8_i32_81 : i32
    %289 = tpu.assume_multiple %288, 8 : i32
    %290 = arith.index_cast %289 : i32 to index
    %c0_82 = arith.constant 0 : index
    %291 = vector.load %arg9[%290, %c0_82] : memref<64x512xf32, #tpu.memory_space<vmem>>, vector<8x512xf32>
    %cst_83 = arith.constant dense<0.000000e+00> : vector<8x512xf32>
    %292 = tpu.matmul %287, %233, %cst_83 {dimension_numbers = #tpu.dot_dimension_numbers<[1], [0], [0], [1], [0, 0, 1, 1], [], []>} : vector<8x128xf32>, vector<128x512xf32>, vector<8x512xf32> -> vector<8x512xf32>
    %293 = arith.addf %291, %292 : vector<8x512xf32>
    %294 = vector.extract_strided_slice %293 {offsets = [0, 0], sizes = [8, 256], strides = [1, 1]} : vector<8x512xf32> to vector<8x256xf32>
    %295 = arith.negf %294 : vector<8x256xf32>
    %296 = math.exp %295 : vector<8x256xf32>
    %cst_84 = arith.constant 1.000000e+00 : f32
    %297 = vector.broadcast %cst_84 : f32 to vector<8x256xf32>
    %298 = arith.addf %297, %296 : vector<8x256xf32>
    %299 = arith.divf %297, %298 : vector<8x256xf32>
    %300 = vector.extract_strided_slice %293 {offsets = [0, 256], sizes = [8, 128], strides = [1, 1]} : vector<8x512xf32> to vector<8x128xf32>
    %301 = math.tanh %300 : vector<8x128xf32>
    %302 = vector.extract_strided_slice %293 {offsets = [0, 384], sizes = [8, 128], strides = [1, 1]} : vector<8x512xf32> to vector<8x128xf32>
    %303 = arith.negf %302 : vector<8x128xf32>
    %304 = math.exp %303 : vector<8x128xf32>
    %cst_85 = arith.constant 1.000000e+00 : f32
    %305 = vector.broadcast %cst_85 : f32 to vector<8x128xf32>
    %306 = arith.addf %305, %304 : vector<8x128xf32>
    %307 = arith.divf %305, %306 : vector<8x128xf32>
    %308 = vector.extract_strided_slice %299 {offsets = [0, 128], sizes = [8, 128], strides = [1, 1]} : vector<8x256xf32> to vector<8x128xf32>
    %309 = arith.mulf %308, %285 : vector<8x128xf32>
    %310 = vector.extract_strided_slice %299 {offsets = [0, 0], sizes = [8, 128], strides = [1, 1]} : vector<8x256xf32> to vector<8x128xf32>
    %311 = arith.mulf %310, %301 : vector<8x128xf32>
    %312 = arith.addf %309, %311 : vector<8x128xf32>
    %313 = math.tanh %312 : vector<8x128xf32>
    %314 = arith.mulf %307, %313 : vector<8x128xf32>
    %c3_i32_86 = arith.constant 3 : i32
    %c8_i32_87 = arith.constant 8 : i32
    %315 = arith.muli %c3_i32_86, %c8_i32_87 : i32
    %316 = tpu.assume_multiple %315, 8 : i32
    %317 = arith.index_cast %316 : i32 to index
    %c0_88 = arith.constant 0 : index
    %318 = vector.load %arg9[%317, %c0_88] : memref<64x512xf32, #tpu.memory_space<vmem>>, vector<8x512xf32>
    %cst_89 = arith.constant dense<0.000000e+00> : vector<8x512xf32>
    %319 = tpu.matmul %314, %233, %cst_89 {dimension_numbers = #tpu.dot_dimension_numbers<[1], [0], [0], [1], [0, 0, 1, 1], [], []>} : vector<8x128xf32>, vector<128x512xf32>, vector<8x512xf32> -> vector<8x512xf32>
    %320 = arith.addf %318, %319 : vector<8x512xf32>
    %321 = vector.extract_strided_slice %320 {offsets = [0, 0], sizes = [8, 256], strides = [1, 1]} : vector<8x512xf32> to vector<8x256xf32>
    %322 = arith.negf %321 : vector<8x256xf32>
    %323 = math.exp %322 : vector<8x256xf32>
    %cst_90 = arith.constant 1.000000e+00 : f32
    %324 = vector.broadcast %cst_90 : f32 to vector<8x256xf32>
    %325 = arith.addf %324, %323 : vector<8x256xf32>
    %326 = arith.divf %324, %325 : vector<8x256xf32>
    %327 = vector.extract_strided_slice %320 {offsets = [0, 256], sizes = [8, 128], strides = [1, 1]} : vector<8x512xf32> to vector<8x128xf32>
    %328 = math.tanh %327 : vector<8x128xf32>
    %329 = vector.extract_strided_slice %320 {offsets = [0, 384], sizes = [8, 128], strides = [1, 1]} : vector<8x512xf32> to vector<8x128xf32>
    %330 = arith.negf %329 : vector<8x128xf32>
    %331 = math.exp %330 : vector<8x128xf32>
    %cst_91 = arith.constant 1.000000e+00 : f32
    %332 = vector.broadcast %cst_91 : f32 to vector<8x128xf32>
    %333 = arith.addf %332, %331 : vector<8x128xf32>
    %334 = arith.divf %332, %333 : vector<8x128xf32>
    %335 = vector.extract_strided_slice %326 {offsets = [0, 128], sizes = [8, 128], strides = [1, 1]} : vector<8x256xf32> to vector<8x128xf32>
    %336 = arith.mulf %335, %312 : vector<8x128xf32>
    %337 = vector.extract_strided_slice %326 {offsets = [0, 0], sizes = [8, 128], strides = [1, 1]} : vector<8x256xf32> to vector<8x128xf32>
    %338 = arith.mulf %337, %328 : vector<8x128xf32>
    %339 = arith.addf %336, %338 : vector<8x128xf32>
    %340 = math.tanh %339 : vector<8x128xf32>
    %341 = arith.mulf %334, %340 : vector<8x128xf32>
    %c4_i32_92 = arith.constant 4 : i32
    %c8_i32_93 = arith.constant 8 : i32
    %342 = arith.muli %c4_i32_92, %c8_i32_93 : i32
    %343 = tpu.assume_multiple %342, 8 : i32
    %344 = arith.index_cast %343 : i32 to index
    %c0_94 = arith.constant 0 : index
    %345 = vector.load %arg9[%344, %c0_94] : memref<64x512xf32, #tpu.memory_space<vmem>>, vector<8x512xf32>
    %cst_95 = arith.constant dense<0.000000e+00> : vector<8x512xf32>
    %346 = tpu.matmul %341, %233, %cst_95 {dimension_numbers = #tpu.dot_dimension_numbers<[1], [0], [0], [1], [0, 0, 1, 1], [], []>} : vector<8x128xf32>, vector<128x512xf32>, vector<8x512xf32> -> vector<8x512xf32>
    %347 = arith.addf %345, %346 : vector<8x512xf32>
    %348 = vector.extract_strided_slice %347 {offsets = [0, 0], sizes = [8, 256], strides = [1, 1]} : vector<8x512xf32> to vector<8x256xf32>
    %349 = arith.negf %348 : vector<8x256xf32>
    %350 = math.exp %349 : vector<8x256xf32>
    %cst_96 = arith.constant 1.000000e+00 : f32
    %351 = vector.broadcast %cst_96 : f32 to vector<8x256xf32>
    %352 = arith.addf %351, %350 : vector<8x256xf32>
    %353 = arith.divf %351, %352 : vector<8x256xf32>
    %354 = vector.extract_strided_slice %347 {offsets = [0, 256], sizes = [8, 128], strides = [1, 1]} : vector<8x512xf32> to vector<8x128xf32>
    %355 = math.tanh %354 : vector<8x128xf32>
    %356 = vector.extract_strided_slice %347 {offsets = [0, 384], sizes = [8, 128], strides = [1, 1]} : vector<8x512xf32> to vector<8x128xf32>
    %357 = arith.negf %356 : vector<8x128xf32>
    %358 = math.exp %357 : vector<8x128xf32>
    %cst_97 = arith.constant 1.000000e+00 : f32
    %359 = vector.broadcast %cst_97 : f32 to vector<8x128xf32>
    %360 = arith.addf %359, %358 : vector<8x128xf32>
    %361 = arith.divf %359, %360 : vector<8x128xf32>
    %362 = vector.extract_strided_slice %353 {offsets = [0, 128], sizes = [8, 128], strides = [1, 1]} : vector<8x256xf32> to vector<8x128xf32>
    %363 = arith.mulf %362, %339 : vector<8x128xf32>
    %364 = vector.extract_strided_slice %353 {offsets = [0, 0], sizes = [8, 128], strides = [1, 1]} : vector<8x256xf32> to vector<8x128xf32>
    %365 = arith.mulf %364, %355 : vector<8x128xf32>
    %366 = arith.addf %363, %365 : vector<8x128xf32>
    %367 = math.tanh %366 : vector<8x128xf32>
    %368 = arith.mulf %361, %367 : vector<8x128xf32>
    %c5_i32_98 = arith.constant 5 : i32
    %c8_i32_99 = arith.constant 8 : i32
    %369 = arith.muli %c5_i32_98, %c8_i32_99 : i32
    %370 = tpu.assume_multiple %369, 8 : i32
    %371 = arith.index_cast %370 : i32 to index
    %c0_100 = arith.constant 0 : index
    %372 = vector.load %arg9[%371, %c0_100] : memref<64x512xf32, #tpu.memory_space<vmem>>, vector<8x512xf32>
    %cst_101 = arith.constant dense<0.000000e+00> : vector<8x512xf32>
    %373 = tpu.matmul %368, %233, %cst_101 {dimension_numbers = #tpu.dot_dimension_numbers<[1], [0], [0], [1], [0, 0, 1, 1], [], []>} : vector<8x128xf32>, vector<128x512xf32>, vector<8x512xf32> -> vector<8x512xf32>
    %374 = arith.addf %372, %373 : vector<8x512xf32>
    %375 = vector.extract_strided_slice %374 {offsets = [0, 0], sizes = [8, 256], strides = [1, 1]} : vector<8x512xf32> to vector<8x256xf32>
    %376 = arith.negf %375 : vector<8x256xf32>
    %377 = math.exp %376 : vector<8x256xf32>
    %cst_102 = arith.constant 1.000000e+00 : f32
    %378 = vector.broadcast %cst_102 : f32 to vector<8x256xf32>
    %379 = arith.addf %378, %377 : vector<8x256xf32>
    %380 = arith.divf %378, %379 : vector<8x256xf32>
    %381 = vector.extract_strided_slice %374 {offsets = [0, 256], sizes = [8, 128], strides = [1, 1]} : vector<8x512xf32> to vector<8x128xf32>
    %382 = math.tanh %381 : vector<8x128xf32>
    %383 = vector.extract_strided_slice %374 {offsets = [0, 384], sizes = [8, 128], strides = [1, 1]} : vector<8x512xf32> to vector<8x128xf32>
    %384 = arith.negf %383 : vector<8x128xf32>
    %385 = math.exp %384 : vector<8x128xf32>
    %cst_103 = arith.constant 1.000000e+00 : f32
    %386 = vector.broadcast %cst_103 : f32 to vector<8x128xf32>
    %387 = arith.addf %386, %385 : vector<8x128xf32>
    %388 = arith.divf %386, %387 : vector<8x128xf32>
    %389 = vector.extract_strided_slice %380 {offsets = [0, 128], sizes = [8, 128], strides = [1, 1]} : vector<8x256xf32> to vector<8x128xf32>
    %390 = arith.mulf %389, %366 : vector<8x128xf32>
    %391 = vector.extract_strided_slice %380 {offsets = [0, 0], sizes = [8, 128], strides = [1, 1]} : vector<8x256xf32> to vector<8x128xf32>
    %392 = arith.mulf %391, %382 : vector<8x128xf32>
    %393 = arith.addf %390, %392 : vector<8x128xf32>
    %394 = math.tanh %393 : vector<8x128xf32>
    %395 = arith.mulf %388, %394 : vector<8x128xf32>
    %c6_i32_104 = arith.constant 6 : i32
    %c8_i32_105 = arith.constant 8 : i32
    %396 = arith.muli %c6_i32_104, %c8_i32_105 : i32
    %397 = tpu.assume_multiple %396, 8 : i32
    %398 = arith.index_cast %397 : i32 to index
    %c0_106 = arith.constant 0 : index
    %399 = vector.load %arg9[%398, %c0_106] : memref<64x512xf32, #tpu.memory_space<vmem>>, vector<8x512xf32>
    %cst_107 = arith.constant dense<0.000000e+00> : vector<8x512xf32>
    %400 = tpu.matmul %395, %233, %cst_107 {dimension_numbers = #tpu.dot_dimension_numbers<[1], [0], [0], [1], [0, 0, 1, 1], [], []>} : vector<8x128xf32>, vector<128x512xf32>, vector<8x512xf32> -> vector<8x512xf32>
    %401 = arith.addf %399, %400 : vector<8x512xf32>
    %402 = vector.extract_strided_slice %401 {offsets = [0, 0], sizes = [8, 256], strides = [1, 1]} : vector<8x512xf32> to vector<8x256xf32>
    %403 = arith.negf %402 : vector<8x256xf32>
    %404 = math.exp %403 : vector<8x256xf32>
    %cst_108 = arith.constant 1.000000e+00 : f32
    %405 = vector.broadcast %cst_108 : f32 to vector<8x256xf32>
    %406 = arith.addf %405, %404 : vector<8x256xf32>
    %407 = arith.divf %405, %406 : vector<8x256xf32>
    %408 = vector.extract_strided_slice %401 {offsets = [0, 256], sizes = [8, 128], strides = [1, 1]} : vector<8x512xf32> to vector<8x128xf32>
    %409 = math.tanh %408 : vector<8x128xf32>
    %410 = vector.extract_strided_slice %401 {offsets = [0, 384], sizes = [8, 128], strides = [1, 1]} : vector<8x512xf32> to vector<8x128xf32>
    %411 = arith.negf %410 : vector<8x128xf32>
    %412 = math.exp %411 : vector<8x128xf32>
    %cst_109 = arith.constant 1.000000e+00 : f32
    %413 = vector.broadcast %cst_109 : f32 to vector<8x128xf32>
    %414 = arith.addf %413, %412 : vector<8x128xf32>
    %415 = arith.divf %413, %414 : vector<8x128xf32>
    %416 = vector.extract_strided_slice %407 {offsets = [0, 128], sizes = [8, 128], strides = [1, 1]} : vector<8x256xf32> to vector<8x128xf32>
    %417 = arith.mulf %416, %393 : vector<8x128xf32>
    %418 = vector.extract_strided_slice %407 {offsets = [0, 0], sizes = [8, 128], strides = [1, 1]} : vector<8x256xf32> to vector<8x128xf32>
    %419 = arith.mulf %418, %409 : vector<8x128xf32>
    %420 = arith.addf %417, %419 : vector<8x128xf32>
    %421 = math.tanh %420 : vector<8x128xf32>
    %422 = arith.mulf %415, %421 : vector<8x128xf32>
    %c7_i32_110 = arith.constant 7 : i32
    %c8_i32_111 = arith.constant 8 : i32
    %423 = arith.muli %c7_i32_110, %c8_i32_111 : i32
    %424 = tpu.assume_multiple %423, 8 : i32
    %425 = arith.index_cast %424 : i32 to index
    %c0_112 = arith.constant 0 : index
    %426 = vector.load %arg9[%425, %c0_112] : memref<64x512xf32, #tpu.memory_space<vmem>>, vector<8x512xf32>
    %cst_113 = arith.constant dense<0.000000e+00> : vector<8x512xf32>
    %427 = tpu.matmul %422, %233, %cst_113 {dimension_numbers = #tpu.dot_dimension_numbers<[1], [0], [0], [1], [0, 0, 1, 1], [], []>} : vector<8x128xf32>, vector<128x512xf32>, vector<8x512xf32> -> vector<8x512xf32>
    %428 = arith.addf %426, %427 : vector<8x512xf32>
    %429 = vector.extract_strided_slice %428 {offsets = [0, 0], sizes = [8, 256], strides = [1, 1]} : vector<8x512xf32> to vector<8x256xf32>
    %430 = arith.negf %429 : vector<8x256xf32>
    %431 = math.exp %430 : vector<8x256xf32>
    %cst_114 = arith.constant 1.000000e+00 : f32
    %432 = vector.broadcast %cst_114 : f32 to vector<8x256xf32>
    %433 = arith.addf %432, %431 : vector<8x256xf32>
    %434 = arith.divf %432, %433 : vector<8x256xf32>
    %435 = vector.extract_strided_slice %428 {offsets = [0, 256], sizes = [8, 128], strides = [1, 1]} : vector<8x512xf32> to vector<8x128xf32>
    %436 = math.tanh %435 : vector<8x128xf32>
    %437 = vector.extract_strided_slice %428 {offsets = [0, 384], sizes = [8, 128], strides = [1, 1]} : vector<8x512xf32> to vector<8x128xf32>
    %438 = arith.negf %437 : vector<8x128xf32>
    %439 = math.exp %438 : vector<8x128xf32>
    %cst_115 = arith.constant 1.000000e+00 : f32
    %440 = vector.broadcast %cst_115 : f32 to vector<8x128xf32>
    %441 = arith.addf %440, %439 : vector<8x128xf32>
    %442 = arith.divf %440, %441 : vector<8x128xf32>
    %443 = vector.extract_strided_slice %434 {offsets = [0, 128], sizes = [8, 128], strides = [1, 1]} : vector<8x256xf32> to vector<8x128xf32>
    %444 = arith.mulf %443, %420 : vector<8x128xf32>
    %445 = vector.extract_strided_slice %434 {offsets = [0, 0], sizes = [8, 128], strides = [1, 1]} : vector<8x256xf32> to vector<8x128xf32>
    %446 = arith.mulf %445, %436 : vector<8x128xf32>
    %447 = arith.addf %444, %446 : vector<8x128xf32>
    %448 = math.tanh %447 : vector<8x128xf32>
    %449 = arith.mulf %442, %448 : vector<8x128xf32>
    %c7_i32_116 = arith.constant 7 : i32
    %c0_117 = arith.constant 0 : index
    %c0_118 = arith.constant 0 : index
    %450 = vector.load %arg5[%c0_117, %c0_118] : memref<1x128xf32, #tpu.memory_space<vmem>>, vector<1x128xf32>
    %451 = vector.broadcast %450 : vector<1x128xf32> to vector<8x128xf32>
    %452 = arith.mulf %449, %451 : vector<8x128xf32>
    %cst_119 = arith.constant dense<0.000000e+00> : vector<8xf32>
    %453 = vector.multi_reduction <add>, %452, %cst_119 [1] : vector<8x128xf32> to vector<8xf32>
    %454 = vector.shape_cast %453 : vector<8xf32> to vector<8x1xf32>
    %c0_120 = arith.constant 0 : index
    %c0_121 = arith.constant 0 : index
    %455 = vector.load %arg6[%c0_120, %c0_121] : memref<1x1xf32, #tpu.memory_space<vmem>>, vector<1x1xf32>
    %456 = vector.broadcast %455 : vector<1x1xf32> to vector<8x1xf32>
    %457 = arith.addf %454, %456 : vector<8x1xf32>
    %c0_122 = arith.constant 0 : index
    %c0_123 = arith.constant 0 : index
    %458 = vector.load %arg7[%c0_122, %c0_123] : memref<8x1xf32, #tpu.memory_space<vmem>>, vector<8x1xf32>
    tpu.vector_store %arg7[%c0_122, %c0_123], %457 {strides = array<i32>} : memref<8x1xf32, #tpu.memory_space<vmem>>, vector<8x1xf32>,
    return
  }
  func.func @transform_0(%arg0: i32) -> (i32, i32, i32) {
    %c0_i32 = arith.constant 0 : i32
    %c0_i32_0 = arith.constant 0 : i32
    %c0_i32_1 = arith.constant 0 : i32
    return %c0_i32, %arg0, %c0_i32_0 : i32, i32, i32
  }
  func.func @transform_1(%arg0: i32) -> (i32, i32, i32) {
    %c0_i32 = arith.constant 0 : i32
    %c0_i32_0 = arith.constant 0 : i32
    %c0_i32_1 = arith.constant 0 : i32
    %c0_i32_2 = arith.constant 0 : i32
    return %c0_i32, %c0_i32_0, %c0_i32_1 : i32, i32, i32
  }
  func.func @transform_2(%arg0: i32) -> (i32, i32, i32) {
    %c0_i32 = arith.constant 0 : i32
    %c0_i32_0 = arith.constant 0 : i32
    %c0_i32_1 = arith.constant 0 : i32
    %c0_i32_2 = arith.constant 0 : i32
    return %c0_i32, %c0_i32_0, %c0_i32_1 : i32, i32, i32
  }
  func.func @transform_3(%arg0: i32) -> (i32, i32, i32) {
    %c0_i32 = arith.constant 0 : i32
    %c0_i32_0 = arith.constant 0 : i32
    %c0_i32_1 = arith.constant 0 : i32
    %c0_i32_2 = arith.constant 0 : i32
    return %c0_i32, %c0_i32_0, %c0_i32_1 : i32, i32, i32
  }
  func.func @transform_4(%arg0: i32) -> (i32, i32) {
    %c0_i32 = arith.constant 0 : i32
    %c0_i32_0 = arith.constant 0 : i32
    %c0_i32_1 = arith.constant 0 : i32
    return %c0_i32, %c0_i32_0 : i32, i32
  }
  func.func @transform_5(%arg0: i32) -> (i32, i32) {
    %c0_i32 = arith.constant 0 : i32
    %c0_i32_0 = arith.constant 0 : i32
    %c0_i32_1 = arith.constant 0 : i32
    return %c0_i32, %c0_i32_0 : i32, i32
  }
  func.func @transform_6(%arg0: i32) -> (i32, i32) {
    %c0_i32 = arith.constant 0 : i32
    %c0_i32_0 = arith.constant 0 : i32
    return %arg0, %c0_i32 : i32, i32
  }
}

module attributes {stable_mosaic.version = 11 : i64} {
  func.func @lstm_classifier_kernel(%arg0: i32, %arg1: memref<8x8x512xf32, #tpu.memory_space<vmem>>, %arg2: memref<1x128x512xf32, #tpu.memory_space<vmem>>, %arg3: memref<2x128x512xf32, #tpu.memory_space<vmem>>, %arg4: memref<1x1x512xf32, #tpu.memory_space<vmem>>, %arg5: memref<1x128xf32, #tpu.memory_space<vmem>>, %arg6: memref<1x1xf32, #tpu.memory_space<vmem>>, %arg7: memref<8x1xf32, #tpu.memory_space<vmem>>, %arg8: memref<64x128xf32, #tpu.memory_space<vmem>>, %arg9: memref<64x512xf32, #tpu.memory_space<vmem>>) attributes {dimension_semantics = [#tpu.dimension_semantics<parallel>], iteration_bounds = array<i64: 1>, scalar_prefetch = 0 : i64, scratch_operands = 2 : i64, tpu.core_type = #tpu.core_type<tc>, window_params = [{transform_indices = @transform_0, window_bounds = array<i64: 8, 8, 512>}, {pipeline_mode = #tpu.pipeline_mode<synchronous>, transform_indices = @transform_1, window_bounds = array<i64: 1, 128, 512>}, {pipeline_mode = #tpu.pipeline_mode<synchronous>, transform_indices = @transform_2, window_bounds = array<i64: 2, 128, 512>}, {pipeline_mode = #tpu.pipeline_mode<synchronous>, transform_indices = @transform_3, window_bounds = array<i64: 1, 1, 512>}, {pipeline_mode = #tpu.pipeline_mode<synchronous>, transform_indices = @transform_4, window_bounds = array<i64: 1, 128>}, {pipeline_mode = #tpu.pipeline_mode<synchronous>, transform_indices = @transform_5, window_bounds = array<i64: 1, 1>}, {transform_indices = @transform_6, window_bounds = array<i64: 8, 1>}]} {
    %c0 = arith.constant 0 : index
    %c0_0 = arith.constant 0 : index
    %c0_1 = arith.constant 0 : index
    %0 = vector.load %arg3[%c0, %c0_0, %c0_1] : memref<2x128x512xf32, #tpu.memory_space<vmem>>, vector<1x128x512xf32>
    %1 = vector.shape_cast %0 : vector<1x128x512xf32> to vector<128x512xf32>
    %c0_2 = arith.constant 0 : index
    %c0_3 = arith.constant 0 : index
    %c0_4 = arith.constant 0 : index
    %2 = vector.load %arg1[%c0_2, %c0_3, %c0_4] : memref<8x8x512xf32, #tpu.memory_space<vmem>>, vector<1x8x512xf32>
    %3 = vector.shape_cast %2 : vector<1x8x512xf32> to vector<8x512xf32>
    %4 = vector.extract_strided_slice %3 {offsets = [0, 0], sizes = [8, 128], strides = [1, 1]} : vector<8x512xf32> to vector<8x128xf32>
    %5 = arith.negf %4 : vector<8x128xf32>
    %6 = math.exp %5 : vector<8x128xf32>
    %cst = arith.constant 1.000000e+00 : f32
    %7 = vector.broadcast %cst : f32 to vector<8x128xf32>
    %8 = arith.addf %7, %6 : vector<8x128xf32>
    %9 = arith.divf %7, %8 : vector<8x128xf32>
    %10 = vector.extract_strided_slice %3 {offsets = [0, 256], sizes = [8, 128], strides = [1, 1]} : vector<8x512xf32> to vector<8x128xf32>
    %11 = math.tanh %10 : vector<8x128xf32>
    %12 = arith.mulf %9, %11 : vector<8x128xf32>
    %13 = vector.extract_strided_slice %3 {offsets = [0, 384], sizes = [8, 128], strides = [1, 1]} : vector<8x512xf32> to vector<8x128xf32>
    %14 = arith.negf %13 : vector<8x128xf32>
    %15 = math.exp %14 : vector<8x128xf32>
    %cst_5 = arith.constant 1.000000e+00 : f32
    %16 = vector.broadcast %cst_5 : f32 to vector<8x128xf32>
    %17 = arith.addf %16, %15 : vector<8x128xf32>
    %18 = arith.divf %16, %17 : vector<8x128xf32>
    %19 = math.tanh %12 : vector<8x128xf32>
    %20 = arith.mulf %18, %19 : vector<8x128xf32>
    %c0_6 = arith.constant 0 : index
    %c0_7 = arith.constant 0 : index
    %21 = vector.load %arg8[%c0_6, %c0_7] : memref<64x128xf32, #tpu.memory_space<vmem>>, vector<8x128xf32>
    tpu.vector_store %arg8[%c0_6, %c0_7], %20 {strides = array<i32>} : memref<64x128xf32, #tpu.memory_space<vmem>>, vector<8x128xf32>,
    %c1_i32 = arith.constant 1 : i32
    %c8_i32 = arith.constant 8 : i32
    %22 = arith.muli %c1_i32, %c8_i32 : i32
    %23 = tpu.assume_multiple %22, 8 : i32
    %24 = arith.index_cast %c1_i32 : i32 to index
    %c0_8 = arith.constant 0 : index
    %c0_9 = arith.constant 0 : index
    %25 = vector.load %arg1[%24, %c0_8, %c0_9] : memref<8x8x512xf32, #tpu.memory_space<vmem>>, vector<1x8x512xf32>
    %26 = vector.shape_cast %25 : vector<1x8x512xf32> to vector<8x512xf32>
    %cst_10 = arith.constant dense<0.000000e+00> : vector<8x512xf32>
    %27 = tpu.matmul %20, %1, %cst_10 {dimension_numbers = #tpu.dot_dimension_numbers<[1], [0], [0], [1], [0, 0, 1, 1], [], []>} : vector<8x128xf32>, vector<128x512xf32>, vector<8x512xf32> -> vector<8x512xf32>
    %28 = arith.addf %26, %27 : vector<8x512xf32>
    %29 = vector.extract_strided_slice %28 {offsets = [0, 0], sizes = [8, 256], strides = [1, 1]} : vector<8x512xf32> to vector<8x256xf32>
    %30 = arith.negf %29 : vector<8x256xf32>
    %31 = math.exp %30 : vector<8x256xf32>
    %cst_11 = arith.constant 1.000000e+00 : f32
    %32 = vector.broadcast %cst_11 : f32 to vector<8x256xf32>
    %33 = arith.addf %32, %31 : vector<8x256xf32>
    %34 = arith.divf %32, %33 : vector<8x256xf32>
    %35 = vector.extract_strided_slice %28 {offsets = [0, 256], sizes = [8, 128], strides = [1, 1]} : vector<8x512xf32> to vector<8x128xf32>
    %36 = math.tanh %35 : vector<8x128xf32>
    %37 = vector.extract_strided_slice %28 {offsets = [0, 384], sizes = [8, 128], strides = [1, 1]} : vector<8x512xf32> to vector<8x128xf32>
    %38 = arith.negf %37 : vector<8x128xf32>
    %39 = math.exp %38 : vector<8x128xf32>
    %cst_12 = arith.constant 1.000000e+00 : f32
    %40 = vector.broadcast %cst_12 : f32 to vector<8x128xf32>
    %41 = arith.addf %40, %39 : vector<8x128xf32>
    %42 = arith.divf %40, %41 : vector<8x128xf32>
    %43 = vector.extract_strided_slice %34 {offsets = [0, 128], sizes = [8, 128], strides = [1, 1]} : vector<8x256xf32> to vector<8x128xf32>
    %44 = arith.mulf %43, %12 : vector<8x128xf32>
    %45 = vector.extract_strided_slice %34 {offsets = [0, 0], sizes = [8, 128], strides = [1, 1]} : vector<8x256xf32> to vector<8x128xf32>
    %46 = arith.mulf %45, %36 : vector<8x128xf32>
    %47 = arith.addf %44, %46 : vector<8x128xf32>
    %48 = math.tanh %47 : vector<8x128xf32>
    %49 = arith.mulf %42, %48 : vector<8x128xf32>
    %50 = arith.index_cast %23 : i32 to index
    %c0_13 = arith.constant 0 : index
    %51 = vector.load %arg8[%50, %c0_13] : memref<64x128xf32, #tpu.memory_space<vmem>>, vector<8x128xf32>
    tpu.vector_store %arg8[%50, %c0_13], %49 {strides = array<i32>} : memref<64x128xf32, #tpu.memory_space<vmem>>, vector<8x128xf32>,
    %c2_i32 = arith.constant 2 : i32
    %c8_i32_14 = arith.constant 8 : i32
    %52 = arith.muli %c2_i32, %c8_i32_14 : i32
    %53 = tpu.assume_multiple %52, 8 : i32
    %54 = arith.index_cast %c2_i32 : i32 to index
    %c0_15 = arith.constant 0 : index
    %c0_16 = arith.constant 0 : index
    %55 = vector.load %arg1[%54, %c0_15, %c0_16] : memref<8x8x512xf32, #tpu.memory_space<vmem>>, vector<1x8x512xf32>
    %56 = vector.shape_cast %55 : vector<1x8x512xf32> to vector<8x512xf32>
    %cst_17 = arith.constant dense<0.000000e+00> : vector<8x512xf32>
    %57 = tpu.matmul %49, %1, %cst_17 {dimension_numbers = #tpu.dot_dimension_numbers<[1], [0], [0], [1], [0, 0, 1, 1], [], []>} : vector<8x128xf32>, vector<128x512xf32>, vector<8x512xf32> -> vector<8x512xf32>
    %58 = arith.addf %56, %57 : vector<8x512xf32>
    %59 = vector.extract_strided_slice %58 {offsets = [0, 0], sizes = [8, 256], strides = [1, 1]} : vector<8x512xf32> to vector<8x256xf32>
    %60 = arith.negf %59 : vector<8x256xf32>
    %61 = math.exp %60 : vector<8x256xf32>
    %cst_18 = arith.constant 1.000000e+00 : f32
    %62 = vector.broadcast %cst_18 : f32 to vector<8x256xf32>
    %63 = arith.addf %62, %61 : vector<8x256xf32>
    %64 = arith.divf %62, %63 : vector<8x256xf32>
    %65 = vector.extract_strided_slice %58 {offsets = [0, 256], sizes = [8, 128], strides = [1, 1]} : vector<8x512xf32> to vector<8x128xf32>
    %66 = math.tanh %65 : vector<8x128xf32>
    %67 = vector.extract_strided_slice %58 {offsets = [0, 384], sizes = [8, 128], strides = [1, 1]} : vector<8x512xf32> to vector<8x128xf32>
    %68 = arith.negf %67 : vector<8x128xf32>
    %69 = math.exp %68 : vector<8x128xf32>
    %cst_19 = arith.constant 1.000000e+00 : f32
    %70 = vector.broadcast %cst_19 : f32 to vector<8x128xf32>
    %71 = arith.addf %70, %69 : vector<8x128xf32>
    %72 = arith.divf %70, %71 : vector<8x128xf32>
    %73 = vector.extract_strided_slice %64 {offsets = [0, 128], sizes = [8, 128], strides = [1, 1]} : vector<8x256xf32> to vector<8x128xf32>
    %74 = arith.mulf %73, %47 : vector<8x128xf32>
    %75 = vector.extract_strided_slice %64 {offsets = [0, 0], sizes = [8, 128], strides = [1, 1]} : vector<8x256xf32> to vector<8x128xf32>
    %76 = arith.mulf %75, %66 : vector<8x128xf32>
    %77 = arith.addf %74, %76 : vector<8x128xf32>
    %78 = math.tanh %77 : vector<8x128xf32>
    %79 = arith.mulf %72, %78 : vector<8x128xf32>
    %80 = arith.index_cast %53 : i32 to index
    %c0_20 = arith.constant 0 : index
    %81 = vector.load %arg8[%80, %c0_20] : memref<64x128xf32, #tpu.memory_space<vmem>>, vector<8x128xf32>
    tpu.vector_store %arg8[%80, %c0_20], %79 {strides = array<i32>} : memref<64x128xf32, #tpu.memory_space<vmem>>, vector<8x128xf32>,
    %c3_i32 = arith.constant 3 : i32
    %c8_i32_21 = arith.constant 8 : i32
    %82 = arith.muli %c3_i32, %c8_i32_21 : i32
    %83 = tpu.assume_multiple %82, 8 : i32
    %84 = arith.index_cast %c3_i32 : i32 to index
    %c0_22 = arith.constant 0 : index
    %c0_23 = arith.constant 0 : index
    %85 = vector.load %arg1[%84, %c0_22, %c0_23] : memref<8x8x512xf32, #tpu.memory_space<vmem>>, vector<1x8x512xf32>
    %86 = vector.shape_cast %85 : vector<1x8x512xf32> to vector<8x512xf32>
    %cst_24 = arith.constant dense<0.000000e+00> : vector<8x512xf32>
    %87 = tpu.matmul %79, %1, %cst_24 {dimension_numbers = #tpu.dot_dimension_numbers<[1], [0], [0], [1], [0, 0, 1, 1], [], []>} : vector<8x128xf32>, vector<128x512xf32>, vector<8x512xf32> -> vector<8x512xf32>
    %88 = arith.addf %86, %87 : vector<8x512xf32>
    %89 = vector.extract_strided_slice %88 {offsets = [0, 0], sizes = [8, 256], strides = [1, 1]} : vector<8x512xf32> to vector<8x256xf32>
    %90 = arith.negf %89 : vector<8x256xf32>
    %91 = math.exp %90 : vector<8x256xf32>
    %cst_25 = arith.constant 1.000000e+00 : f32
    %92 = vector.broadcast %cst_25 : f32 to vector<8x256xf32>
    %93 = arith.addf %92, %91 : vector<8x256xf32>
    %94 = arith.divf %92, %93 : vector<8x256xf32>
    %95 = vector.extract_strided_slice %88 {offsets = [0, 256], sizes = [8, 128], strides = [1, 1]} : vector<8x512xf32> to vector<8x128xf32>
    %96 = math.tanh %95 : vector<8x128xf32>
    %97 = vector.extract_strided_slice %88 {offsets = [0, 384], sizes = [8, 128], strides = [1, 1]} : vector<8x512xf32> to vector<8x128xf32>
    %98 = arith.negf %97 : vector<8x128xf32>
    %99 = math.exp %98 : vector<8x128xf32>
    %cst_26 = arith.constant 1.000000e+00 : f32
    %100 = vector.broadcast %cst_26 : f32 to vector<8x128xf32>
    %101 = arith.addf %100, %99 : vector<8x128xf32>
    %102 = arith.divf %100, %101 : vector<8x128xf32>
    %103 = vector.extract_strided_slice %94 {offsets = [0, 128], sizes = [8, 128], strides = [1, 1]} : vector<8x256xf32> to vector<8x128xf32>
    %104 = arith.mulf %103, %77 : vector<8x128xf32>
    %105 = vector.extract_strided_slice %94 {offsets = [0, 0], sizes = [8, 128], strides = [1, 1]} : vector<8x256xf32> to vector<8x128xf32>
    %106 = arith.mulf %105, %96 : vector<8x128xf32>
    %107 = arith.addf %104, %106 : vector<8x128xf32>
    %108 = math.tanh %107 : vector<8x128xf32>
    %109 = arith.mulf %102, %108 : vector<8x128xf32>
    %110 = arith.index_cast %83 : i32 to index
    %c0_27 = arith.constant 0 : index
    %111 = vector.load %arg8[%110, %c0_27] : memref<64x128xf32, #tpu.memory_space<vmem>>, vector<8x128xf32>
    tpu.vector_store %arg8[%110, %c0_27], %109 {strides = array<i32>} : memref<64x128xf32, #tpu.memory_space<vmem>>, vector<8x128xf32>,
    %c4_i32 = arith.constant 4 : i32
    %c8_i32_28 = arith.constant 8 : i32
    %112 = arith.muli %c4_i32, %c8_i32_28 : i32
    %113 = tpu.assume_multiple %112, 8 : i32
    %114 = arith.index_cast %c4_i32 : i32 to index
    %c0_29 = arith.constant 0 : index
    %c0_30 = arith.constant 0 : index
    %115 = vector.load %arg1[%114, %c0_29, %c0_30] : memref<8x8x512xf32, #tpu.memory_space<vmem>>, vector<1x8x512xf32>
    %116 = vector.shape_cast %115 : vector<1x8x512xf32> to vector<8x512xf32>
    %cst_31 = arith.constant dense<0.000000e+00> : vector<8x512xf32>
    %117 = tpu.matmul %109, %1, %cst_31 {dimension_numbers = #tpu.dot_dimension_numbers<[1], [0], [0], [1], [0, 0, 1, 1], [], []>} : vector<8x128xf32>, vector<128x512xf32>, vector<8x512xf32> -> vector<8x512xf32>
    %118 = arith.addf %116, %117 : vector<8x512xf32>
    %119 = vector.extract_strided_slice %118 {offsets = [0, 0], sizes = [8, 256], strides = [1, 1]} : vector<8x512xf32> to vector<8x256xf32>
    %120 = arith.negf %119 : vector<8x256xf32>
    %121 = math.exp %120 : vector<8x256xf32>
    %cst_32 = arith.constant 1.000000e+00 : f32
    %122 = vector.broadcast %cst_32 : f32 to vector<8x256xf32>
    %123 = arith.addf %122, %121 : vector<8x256xf32>
    %124 = arith.divf %122, %123 : vector<8x256xf32>
    %125 = vector.extract_strided_slice %118 {offsets = [0, 256], sizes = [8, 128], strides = [1, 1]} : vector<8x512xf32> to vector<8x128xf32>
    %126 = math.tanh %125 : vector<8x128xf32>
    %127 = vector.extract_strided_slice %118 {offsets = [0, 384], sizes = [8, 128], strides = [1, 1]} : vector<8x512xf32> to vector<8x128xf32>
    %128 = arith.negf %127 : vector<8x128xf32>
    %129 = math.exp %128 : vector<8x128xf32>
    %cst_33 = arith.constant 1.000000e+00 : f32
    %130 = vector.broadcast %cst_33 : f32 to vector<8x128xf32>
    %131 = arith.addf %130, %129 : vector<8x128xf32>
    %132 = arith.divf %130, %131 : vector<8x128xf32>
    %133 = vector.extract_strided_slice %124 {offsets = [0, 128], sizes = [8, 128], strides = [1, 1]} : vector<8x256xf32> to vector<8x128xf32>
    %134 = arith.mulf %133, %107 : vector<8x128xf32>
    %135 = vector.extract_strided_slice %124 {offsets = [0, 0], sizes = [8, 128], strides = [1, 1]} : vector<8x256xf32> to vector<8x128xf32>
    %136 = arith.mulf %135, %126 : vector<8x128xf32>
    %137 = arith.addf %134, %136 : vector<8x128xf32>
    %138 = math.tanh %137 : vector<8x128xf32>
    %139 = arith.mulf %132, %138 : vector<8x128xf32>
    %140 = arith.index_cast %113 : i32 to index
    %c0_34 = arith.constant 0 : index
    %141 = vector.load %arg8[%140, %c0_34] : memref<64x128xf32, #tpu.memory_space<vmem>>, vector<8x128xf32>
    tpu.vector_store %arg8[%140, %c0_34], %139 {strides = array<i32>} : memref<64x128xf32, #tpu.memory_space<vmem>>, vector<8x128xf32>,
    %c5_i32 = arith.constant 5 : i32
    %c8_i32_35 = arith.constant 8 : i32
    %142 = arith.muli %c5_i32, %c8_i32_35 : i32
    %143 = tpu.assume_multiple %142, 8 : i32
    %144 = arith.index_cast %c5_i32 : i32 to index
    %c0_36 = arith.constant 0 : index
    %c0_37 = arith.constant 0 : index
    %145 = vector.load %arg1[%144, %c0_36, %c0_37] : memref<8x8x512xf32, #tpu.memory_space<vmem>>, vector<1x8x512xf32>
    %146 = vector.shape_cast %145 : vector<1x8x512xf32> to vector<8x512xf32>
    %cst_38 = arith.constant dense<0.000000e+00> : vector<8x512xf32>
    %147 = tpu.matmul %139, %1, %cst_38 {dimension_numbers = #tpu.dot_dimension_numbers<[1], [0], [0], [1], [0, 0, 1, 1], [], []>} : vector<8x128xf32>, vector<128x512xf32>, vector<8x512xf32> -> vector<8x512xf32>
    %148 = arith.addf %146, %147 : vector<8x512xf32>
    %149 = vector.extract_strided_slice %148 {offsets = [0, 0], sizes = [8, 256], strides = [1, 1]} : vector<8x512xf32> to vector<8x256xf32>
    %150 = arith.negf %149 : vector<8x256xf32>
    %151 = math.exp %150 : vector<8x256xf32>
    %cst_39 = arith.constant 1.000000e+00 : f32
    %152 = vector.broadcast %cst_39 : f32 to vector<8x256xf32>
    %153 = arith.addf %152, %151 : vector<8x256xf32>
    %154 = arith.divf %152, %153 : vector<8x256xf32>
    %155 = vector.extract_strided_slice %148 {offsets = [0, 256], sizes = [8, 128], strides = [1, 1]} : vector<8x512xf32> to vector<8x128xf32>
    %156 = math.tanh %155 : vector<8x128xf32>
    %157 = vector.extract_strided_slice %148 {offsets = [0, 384], sizes = [8, 128], strides = [1, 1]} : vector<8x512xf32> to vector<8x128xf32>
    %158 = arith.negf %157 : vector<8x128xf32>
    %159 = math.exp %158 : vector<8x128xf32>
    %cst_40 = arith.constant 1.000000e+00 : f32
    %160 = vector.broadcast %cst_40 : f32 to vector<8x128xf32>
    %161 = arith.addf %160, %159 : vector<8x128xf32>
    %162 = arith.divf %160, %161 : vector<8x128xf32>
    %163 = vector.extract_strided_slice %154 {offsets = [0, 128], sizes = [8, 128], strides = [1, 1]} : vector<8x256xf32> to vector<8x128xf32>
    %164 = arith.mulf %163, %137 : vector<8x128xf32>
    %165 = vector.extract_strided_slice %154 {offsets = [0, 0], sizes = [8, 128], strides = [1, 1]} : vector<8x256xf32> to vector<8x128xf32>
    %166 = arith.mulf %165, %156 : vector<8x128xf32>
    %167 = arith.addf %164, %166 : vector<8x128xf32>
    %168 = math.tanh %167 : vector<8x128xf32>
    %169 = arith.mulf %162, %168 : vector<8x128xf32>
    %170 = arith.index_cast %143 : i32 to index
    %c0_41 = arith.constant 0 : index
    %171 = vector.load %arg8[%170, %c0_41] : memref<64x128xf32, #tpu.memory_space<vmem>>, vector<8x128xf32>
    tpu.vector_store %arg8[%170, %c0_41], %169 {strides = array<i32>} : memref<64x128xf32, #tpu.memory_space<vmem>>, vector<8x128xf32>,
    %c6_i32 = arith.constant 6 : i32
    %c8_i32_42 = arith.constant 8 : i32
    %172 = arith.muli %c6_i32, %c8_i32_42 : i32
    %173 = tpu.assume_multiple %172, 8 : i32
    %174 = arith.index_cast %c6_i32 : i32 to index
    %c0_43 = arith.constant 0 : index
    %c0_44 = arith.constant 0 : index
    %175 = vector.load %arg1[%174, %c0_43, %c0_44] : memref<8x8x512xf32, #tpu.memory_space<vmem>>, vector<1x8x512xf32>
    %176 = vector.shape_cast %175 : vector<1x8x512xf32> to vector<8x512xf32>
    %cst_45 = arith.constant dense<0.000000e+00> : vector<8x512xf32>
    %177 = tpu.matmul %169, %1, %cst_45 {dimension_numbers = #tpu.dot_dimension_numbers<[1], [0], [0], [1], [0, 0, 1, 1], [], []>} : vector<8x128xf32>, vector<128x512xf32>, vector<8x512xf32> -> vector<8x512xf32>
    %178 = arith.addf %176, %177 : vector<8x512xf32>
    %179 = vector.extract_strided_slice %178 {offsets = [0, 0], sizes = [8, 256], strides = [1, 1]} : vector<8x512xf32> to vector<8x256xf32>
    %180 = arith.negf %179 : vector<8x256xf32>
    %181 = math.exp %180 : vector<8x256xf32>
    %cst_46 = arith.constant 1.000000e+00 : f32
    %182 = vector.broadcast %cst_46 : f32 to vector<8x256xf32>
    %183 = arith.addf %182, %181 : vector<8x256xf32>
    %184 = arith.divf %182, %183 : vector<8x256xf32>
    %185 = vector.extract_strided_slice %178 {offsets = [0, 256], sizes = [8, 128], strides = [1, 1]} : vector<8x512xf32> to vector<8x128xf32>
    %186 = math.tanh %185 : vector<8x128xf32>
    %187 = vector.extract_strided_slice %178 {offsets = [0, 384], sizes = [8, 128], strides = [1, 1]} : vector<8x512xf32> to vector<8x128xf32>
    %188 = arith.negf %187 : vector<8x128xf32>
    %189 = math.exp %188 : vector<8x128xf32>
    %cst_47 = arith.constant 1.000000e+00 : f32
    %190 = vector.broadcast %cst_47 : f32 to vector<8x128xf32>
    %191 = arith.addf %190, %189 : vector<8x128xf32>
    %192 = arith.divf %190, %191 : vector<8x128xf32>
    %193 = vector.extract_strided_slice %184 {offsets = [0, 128], sizes = [8, 128], strides = [1, 1]} : vector<8x256xf32> to vector<8x128xf32>
    %194 = arith.mulf %193, %167 : vector<8x128xf32>
    %195 = vector.extract_strided_slice %184 {offsets = [0, 0], sizes = [8, 128], strides = [1, 1]} : vector<8x256xf32> to vector<8x128xf32>
    %196 = arith.mulf %195, %186 : vector<8x128xf32>
    %197 = arith.addf %194, %196 : vector<8x128xf32>
    %198 = math.tanh %197 : vector<8x128xf32>
    %199 = arith.mulf %192, %198 : vector<8x128xf32>
    %200 = arith.index_cast %173 : i32 to index
    %c0_48 = arith.constant 0 : index
    %201 = vector.load %arg8[%200, %c0_48] : memref<64x128xf32, #tpu.memory_space<vmem>>, vector<8x128xf32>
    tpu.vector_store %arg8[%200, %c0_48], %199 {strides = array<i32>} : memref<64x128xf32, #tpu.memory_space<vmem>>, vector<8x128xf32>,
    %c7_i32 = arith.constant 7 : i32
    %c8_i32_49 = arith.constant 8 : i32
    %202 = arith.muli %c7_i32, %c8_i32_49 : i32
    %203 = tpu.assume_multiple %202, 8 : i32
    %204 = arith.index_cast %c7_i32 : i32 to index
    %c0_50 = arith.constant 0 : index
    %c0_51 = arith.constant 0 : index
    %205 = vector.load %arg1[%204, %c0_50, %c0_51] : memref<8x8x512xf32, #tpu.memory_space<vmem>>, vector<1x8x512xf32>
    %206 = vector.shape_cast %205 : vector<1x8x512xf32> to vector<8x512xf32>
    %cst_52 = arith.constant dense<0.000000e+00> : vector<8x512xf32>
    %207 = tpu.matmul %199, %1, %cst_52 {dimension_numbers = #tpu.dot_dimension_numbers<[1], [0], [0], [1], [0, 0, 1, 1], [], []>} : vector<8x128xf32>, vector<128x512xf32>, vector<8x512xf32> -> vector<8x512xf32>
    %208 = arith.addf %206, %207 : vector<8x512xf32>
    %209 = vector.extract_strided_slice %208 {offsets = [0, 0], sizes = [8, 256], strides = [1, 1]} : vector<8x512xf32> to vector<8x256xf32>
    %210 = arith.negf %209 : vector<8x256xf32>
    %211 = math.exp %210 : vector<8x256xf32>
    %cst_53 = arith.constant 1.000000e+00 : f32
    %212 = vector.broadcast %cst_53 : f32 to vector<8x256xf32>
    %213 = arith.addf %212, %211 : vector<8x256xf32>
    %214 = arith.divf %212, %213 : vector<8x256xf32>
    %215 = vector.extract_strided_slice %208 {offsets = [0, 256], sizes = [8, 128], strides = [1, 1]} : vector<8x512xf32> to vector<8x128xf32>
    %216 = math.tanh %215 : vector<8x128xf32>
    %217 = vector.extract_strided_slice %208 {offsets = [0, 384], sizes = [8, 128], strides = [1, 1]} : vector<8x512xf32> to vector<8x128xf32>
    %218 = arith.negf %217 : vector<8x128xf32>
    %219 = math.exp %218 : vector<8x128xf32>
    %cst_54 = arith.constant 1.000000e+00 : f32
    %220 = vector.broadcast %cst_54 : f32 to vector<8x128xf32>
    %221 = arith.addf %220, %219 : vector<8x128xf32>
    %222 = arith.divf %220, %221 : vector<8x128xf32>
    %223 = vector.extract_strided_slice %214 {offsets = [0, 128], sizes = [8, 128], strides = [1, 1]} : vector<8x256xf32> to vector<8x128xf32>
    %224 = arith.mulf %223, %197 : vector<8x128xf32>
    %225 = vector.extract_strided_slice %214 {offsets = [0, 0], sizes = [8, 128], strides = [1, 1]} : vector<8x256xf32> to vector<8x128xf32>
    %226 = arith.mulf %225, %216 : vector<8x128xf32>
    %227 = arith.addf %224, %226 : vector<8x128xf32>
    %228 = math.tanh %227 : vector<8x128xf32>
    %229 = arith.mulf %222, %228 : vector<8x128xf32>
    %230 = arith.index_cast %203 : i32 to index
    %c0_55 = arith.constant 0 : index
    %231 = vector.load %arg8[%230, %c0_55] : memref<64x128xf32, #tpu.memory_space<vmem>>, vector<8x128xf32>
    tpu.vector_store %arg8[%230, %c0_55], %229 {strides = array<i32>} : memref<64x128xf32, #tpu.memory_space<vmem>>, vector<8x128xf32>,
    %c7_i32_56 = arith.constant 7 : i32
    %c1 = arith.constant 1 : index
    %c0_57 = arith.constant 0 : index
    %c0_58 = arith.constant 0 : index
    %232 = vector.load %arg3[%c1, %c0_57, %c0_58] : memref<2x128x512xf32, #tpu.memory_space<vmem>>, vector<1x128x512xf32>
    %233 = vector.shape_cast %232 : vector<1x128x512xf32> to vector<128x512xf32>
    %c0_59 = arith.constant 0 : index
    %c0_60 = arith.constant 0 : index
    %c0_61 = arith.constant 0 : index
    %234 = vector.load %arg2[%c0_59, %c0_60, %c0_61] : memref<1x128x512xf32, #tpu.memory_space<vmem>>, vector<1x128x512xf32>
    %235 = vector.shape_cast %234 : vector<1x128x512xf32> to vector<128x512xf32>
    %c0_62 = arith.constant 0 : index
    %c0_63 = arith.constant 0 : index
    %236 = vector.load %arg8[%c0_62, %c0_63] : memref<64x128xf32, #tpu.memory_space<vmem>>, vector<64x128xf32>
    %cst_64 = arith.constant dense<0.000000e+00> : vector<64x512xf32>
    %237 = tpu.matmul %236, %235, %cst_64 {dimension_numbers = #tpu.dot_dimension_numbers<[1], [0], [0], [1], [0, 0, 1, 1], [], []>} : vector<64x128xf32>, vector<128x512xf32>, vector<64x512xf32> -> vector<64x512xf32>
    %c0_65 = arith.constant 0 : index
    %c0_66 = arith.constant 0 : index
    %c0_67 = arith.constant 0 : index
    %238 = vector.load %arg4[%c0_65, %c0_66, %c0_67] : memref<1x1x512xf32, #tpu.memory_space<vmem>>, vector<1x1x512xf32>
    %239 = vector.shape_cast %238 : vector<1x1x512xf32> to vector<1x512xf32>
    %240 = vector.broadcast %239 : vector<1x512xf32> to vector<64x512xf32>
    %241 = arith.addf %237, %240 : vector<64x512xf32>
    %c0_68 = arith.constant 0 : index
    %c0_69 = arith.constant 0 : index
    %242 = vector.load %arg9[%c0_68, %c0_69] : memref<64x512xf32, #tpu.memory_space<vmem>>, vector<64x512xf32>
    tpu.vector_store %arg9[%c0_68, %c0_69], %241 {strides = array<i32>} : memref<64x512xf32, #tpu.memory_space<vmem>>, vector<64x512xf32>,
    %c0_70 = arith.constant 0 : index
    %c0_71 = arith.constant 0 : index
    %243 = vector.load %arg9[%c0_70, %c0_71] : memref<64x512xf32, #tpu.memory_space<vmem>>, vector<8x512xf32>
    %244 = vector.extract_strided_slice %243 {offsets = [0, 0], sizes = [8, 128], strides = [1, 1]} : vector<8x512xf32> to vector<8x128xf32>
    %245 = arith.negf %244 : vector<8x128xf32>
    %246 = math.exp %245 : vector<8x128xf32>
    %cst_72 = arith.constant 1.000000e+00 : f32
    %247 = vector.broadcast %cst_72 : f32 to vector<8x128xf32>
    %248 = arith.addf %247, %246 : vector<8x128xf32>
    %249 = arith.divf %247, %248 : vector<8x128xf32>
    %250 = vector.extract_strided_slice %243 {offsets = [0, 256], sizes = [8, 128], strides = [1, 1]} : vector<8x512xf32> to vector<8x128xf32>
    %251 = math.tanh %250 : vector<8x128xf32>
    %252 = arith.mulf %249, %251 : vector<8x128xf32>
    %253 = vector.extract_strided_slice %243 {offsets = [0, 384], sizes = [8, 128], strides = [1, 1]} : vector<8x512xf32> to vector<8x128xf32>
    %254 = arith.negf %253 : vector<8x128xf32>
    %255 = math.exp %254 : vector<8x128xf32>
    %cst_73 = arith.constant 1.000000e+00 : f32
    %256 = vector.broadcast %cst_73 : f32 to vector<8x128xf32>
    %257 = arith.addf %256, %255 : vector<8x128xf32>
    %258 = arith.divf %256, %257 : vector<8x128xf32>
    %259 = math.tanh %252 : vector<8x128xf32>
    %260 = arith.mulf %258, %259 : vector<8x128xf32>
    %c1_i32_74 = arith.constant 1 : i32
    %c8_i32_75 = arith.constant 8 : i32
    %261 = arith.muli %c1_i32_74, %c8_i32_75 : i32
    %262 = tpu.assume_multiple %261, 8 : i32
    %263 = arith.index_cast %262 : i32 to index
    %c0_76 = arith.constant 0 : index
    %264 = vector.load %arg9[%263, %c0_76] : memref<64x512xf32, #tpu.memory_space<vmem>>, vector<8x512xf32>
    %cst_77 = arith.constant dense<0.000000e+00> : vector<8x512xf32>
    %265 = tpu.matmul %260, %233, %cst_77 {dimension_numbers = #tpu.dot_dimension_numbers<[1], [0], [0], [1], [0, 0, 1, 1], [], []>} : vector<8x128xf32>, vector<128x512xf32>, vector<8x512xf32> -> vector<8x512xf32>
    %266 = arith.addf %264, %265 : vector<8x512xf32>
    %267 = vector.extract_strided_slice %266 {offsets = [0, 0], sizes = [8, 256], strides = [1, 1]} : vector<8x512xf32> to vector<8x256xf32>
    %268 = arith.negf %267 : vector<8x256xf32>
    %269 = math.exp %268 : vector<8x256xf32>
    %cst_78 = arith.constant 1.000000e+00 : f32
    %270 = vector.broadcast %cst_78 : f32 to vector<8x256xf32>
    %271 = arith.addf %270, %269 : vector<8x256xf32>
    %272 = arith.divf %270, %271 : vector<8x256xf32>
    %273 = vector.extract_strided_slice %266 {offsets = [0, 256], sizes = [8, 128], strides = [1, 1]} : vector<8x512xf32> to vector<8x128xf32>
    %274 = math.tanh %273 : vector<8x128xf32>
    %275 = vector.extract_strided_slice %266 {offsets = [0, 384], sizes = [8, 128], strides = [1, 1]} : vector<8x512xf32> to vector<8x128xf32>
    %276 = arith.negf %275 : vector<8x128xf32>
    %277 = math.exp %276 : vector<8x128xf32>
    %cst_79 = arith.constant 1.000000e+00 : f32
    %278 = vector.broadcast %cst_79 : f32 to vector<8x128xf32>
    %279 = arith.addf %278, %277 : vector<8x128xf32>
    %280 = arith.divf %278, %279 : vector<8x128xf32>
    %281 = vector.extract_strided_slice %272 {offsets = [0, 128], sizes = [8, 128], strides = [1, 1]} : vector<8x256xf32> to vector<8x128xf32>
    %282 = arith.mulf %281, %252 : vector<8x128xf32>
    %283 = vector.extract_strided_slice %272 {offsets = [0, 0], sizes = [8, 128], strides = [1, 1]} : vector<8x256xf32> to vector<8x128xf32>
    %284 = arith.mulf %283, %274 : vector<8x128xf32>
    %285 = arith.addf %282, %284 : vector<8x128xf32>
    %286 = math.tanh %285 : vector<8x128xf32>
    %287 = arith.mulf %280, %286 : vector<8x128xf32>
    %c2_i32_80 = arith.constant 2 : i32
    %c8_i32_81 = arith.constant 8 : i32
    %288 = arith.muli %c2_i32_80, %c8_i32_81 : i32
    %289 = tpu.assume_multiple %288, 8 : i32
    %290 = arith.index_cast %289 : i32 to index
    %c0_82 = arith.constant 0 : index
    %291 = vector.load %arg9[%290, %c0_82] : memref<64x512xf32, #tpu.memory_space<vmem>>, vector<8x512xf32>
    %cst_83 = arith.constant dense<0.000000e+00> : vector<8x512xf32>
    %292 = tpu.matmul %287, %233, %cst_83 {dimension_numbers = #tpu.dot_dimension_numbers<[1], [0], [0], [1], [0, 0, 1, 1], [], []>} : vector<8x128xf32>, vector<128x512xf32>, vector<8x512xf32> -> vector<8x512xf32>
    %293 = arith.addf %291, %292 : vector<8x512xf32>
    %294 = vector.extract_strided_slice %293 {offsets = [0, 0], sizes = [8, 256], strides = [1, 1]} : vector<8x512xf32> to vector<8x256xf32>
    %295 = arith.negf %294 : vector<8x256xf32>
    %296 = math.exp %295 : vector<8x256xf32>
    %cst_84 = arith.constant 1.000000e+00 : f32
    %297 = vector.broadcast %cst_84 : f32 to vector<8x256xf32>
    %298 = arith.addf %297, %296 : vector<8x256xf32>
    %299 = arith.divf %297, %298 : vector<8x256xf32>
    %300 = vector.extract_strided_slice %293 {offsets = [0, 256], sizes = [8, 128], strides = [1, 1]} : vector<8x512xf32> to vector<8x128xf32>
    %301 = math.tanh %300 : vector<8x128xf32>
    %302 = vector.extract_strided_slice %293 {offsets = [0, 384], sizes = [8, 128], strides = [1, 1]} : vector<8x512xf32> to vector<8x128xf32>
    %303 = arith.negf %302 : vector<8x128xf32>
    %304 = math.exp %303 : vector<8x128xf32>
    %cst_85 = arith.constant 1.000000e+00 : f32
    %305 = vector.broadcast %cst_85 : f32 to vector<8x128xf32>
    %306 = arith.addf %305, %304 : vector<8x128xf32>
    %307 = arith.divf %305, %306 : vector<8x128xf32>
    %308 = vector.extract_strided_slice %299 {offsets = [0, 128], sizes = [8, 128], strides = [1, 1]} : vector<8x256xf32> to vector<8x128xf32>
    %309 = arith.mulf %308, %285 : vector<8x128xf32>
    %310 = vector.extract_strided_slice %299 {offsets = [0, 0], sizes = [8, 128], strides = [1, 1]} : vector<8x256xf32> to vector<8x128xf32>
    %311 = arith.mulf %310, %301 : vector<8x128xf32>
    %312 = arith.addf %309, %311 : vector<8x128xf32>
    %313 = math.tanh %312 : vector<8x128xf32>
    %314 = arith.mulf %307, %313 : vector<8x128xf32>
    %c3_i32_86 = arith.constant 3 : i32
    %c8_i32_87 = arith.constant 8 : i32
    %315 = arith.muli %c3_i32_86, %c8_i32_87 : i32
    %316 = tpu.assume_multiple %315, 8 : i32
    %317 = arith.index_cast %316 : i32 to index
    %c0_88 = arith.constant 0 : index
    %318 = vector.load %arg9[%317, %c0_88] : memref<64x512xf32, #tpu.memory_space<vmem>>, vector<8x512xf32>
    %cst_89 = arith.constant dense<0.000000e+00> : vector<8x512xf32>
    %319 = tpu.matmul %314, %233, %cst_89 {dimension_numbers = #tpu.dot_dimension_numbers<[1], [0], [0], [1], [0, 0, 1, 1], [], []>} : vector<8x128xf32>, vector<128x512xf32>, vector<8x512xf32> -> vector<8x512xf32>
    %320 = arith.addf %318, %319 : vector<8x512xf32>
    %321 = vector.extract_strided_slice %320 {offsets = [0, 0], sizes = [8, 256], strides = [1, 1]} : vector<8x512xf32> to vector<8x256xf32>
    %322 = arith.negf %321 : vector<8x256xf32>
    %323 = math.exp %322 : vector<8x256xf32>
    %cst_90 = arith.constant 1.000000e+00 : f32
    %324 = vector.broadcast %cst_90 : f32 to vector<8x256xf32>
    %325 = arith.addf %324, %323 : vector<8x256xf32>
    %326 = arith.divf %324, %325 : vector<8x256xf32>
    %327 = vector.extract_strided_slice %320 {offsets = [0, 256], sizes = [8, 128], strides = [1, 1]} : vector<8x512xf32> to vector<8x128xf32>
    %328 = math.tanh %327 : vector<8x128xf32>
    %329 = vector.extract_strided_slice %320 {offsets = [0, 384], sizes = [8, 128], strides = [1, 1]} : vector<8x512xf32> to vector<8x128xf32>
    %330 = arith.negf %329 : vector<8x128xf32>
    %331 = math.exp %330 : vector<8x128xf32>
    %cst_91 = arith.constant 1.000000e+00 : f32
    %332 = vector.broadcast %cst_91 : f32 to vector<8x128xf32>
    %333 = arith.addf %332, %331 : vector<8x128xf32>
    %334 = arith.divf %332, %333 : vector<8x128xf32>
    %335 = vector.extract_strided_slice %326 {offsets = [0, 128], sizes = [8, 128], strides = [1, 1]} : vector<8x256xf32> to vector<8x128xf32>
    %336 = arith.mulf %335, %312 : vector<8x128xf32>
    %337 = vector.extract_strided_slice %326 {offsets = [0, 0], sizes = [8, 128], strides = [1, 1]} : vector<8x256xf32> to vector<8x128xf32>
    %338 = arith.mulf %337, %328 : vector<8x128xf32>
    %339 = arith.addf %336, %338 : vector<8x128xf32>
    %340 = math.tanh %339 : vector<8x128xf32>
    %341 = arith.mulf %334, %340 : vector<8x128xf32>
    %c4_i32_92 = arith.constant 4 : i32
    %c8_i32_93 = arith.constant 8 : i32
    %342 = arith.muli %c4_i32_92, %c8_i32_93 : i32
    %343 = tpu.assume_multiple %342, 8 : i32
    %344 = arith.index_cast %343 : i32 to index
    %c0_94 = arith.constant 0 : index
    %345 = vector.load %arg9[%344, %c0_94] : memref<64x512xf32, #tpu.memory_space<vmem>>, vector<8x512xf32>
    %cst_95 = arith.constant dense<0.000000e+00> : vector<8x512xf32>
    %346 = tpu.matmul %341, %233, %cst_95 {dimension_numbers = #tpu.dot_dimension_numbers<[1], [0], [0], [1], [0, 0, 1, 1], [], []>} : vector<8x128xf32>, vector<128x512xf32>, vector<8x512xf32> -> vector<8x512xf32>
    %347 = arith.addf %345, %346 : vector<8x512xf32>
    %348 = vector.extract_strided_slice %347 {offsets = [0, 0], sizes = [8, 256], strides = [1, 1]} : vector<8x512xf32> to vector<8x256xf32>
    %349 = arith.negf %348 : vector<8x256xf32>
    %350 = math.exp %349 : vector<8x256xf32>
    %cst_96 = arith.constant 1.000000e+00 : f32
    %351 = vector.broadcast %cst_96 : f32 to vector<8x256xf32>
    %352 = arith.addf %351, %350 : vector<8x256xf32>
    %353 = arith.divf %351, %352 : vector<8x256xf32>
    %354 = vector.extract_strided_slice %347 {offsets = [0, 256], sizes = [8, 128], strides = [1, 1]} : vector<8x512xf32> to vector<8x128xf32>
    %355 = math.tanh %354 : vector<8x128xf32>
    %356 = vector.extract_strided_slice %347 {offsets = [0, 384], sizes = [8, 128], strides = [1, 1]} : vector<8x512xf32> to vector<8x128xf32>
    %357 = arith.negf %356 : vector<8x128xf32>
    %358 = math.exp %357 : vector<8x128xf32>
    %cst_97 = arith.constant 1.000000e+00 : f32
    %359 = vector.broadcast %cst_97 : f32 to vector<8x128xf32>
    %360 = arith.addf %359, %358 : vector<8x128xf32>
    %361 = arith.divf %359, %360 : vector<8x128xf32>
    %362 = vector.extract_strided_slice %353 {offsets = [0, 128], sizes = [8, 128], strides = [1, 1]} : vector<8x256xf32> to vector<8x128xf32>
    %363 = arith.mulf %362, %339 : vector<8x128xf32>
    %364 = vector.extract_strided_slice %353 {offsets = [0, 0], sizes = [8, 128], strides = [1, 1]} : vector<8x256xf32> to vector<8x128xf32>
    %365 = arith.mulf %364, %355 : vector<8x128xf32>
    %366 = arith.addf %363, %365 : vector<8x128xf32>
    %367 = math.tanh %366 : vector<8x128xf32>
    %368 = arith.mulf %361, %367 : vector<8x128xf32>
    %c5_i32_98 = arith.constant 5 : i32
    %c8_i32_99 = arith.constant 8 : i32
    %369 = arith.muli %c5_i32_98, %c8_i32_99 : i32
    %370 = tpu.assume_multiple %369, 8 : i32
    %371 = arith.index_cast %370 : i32 to index
    %c0_100 = arith.constant 0 : index
    %372 = vector.load %arg9[%371, %c0_100] : memref<64x512xf32, #tpu.memory_space<vmem>>, vector<8x512xf32>
    %cst_101 = arith.constant dense<0.000000e+00> : vector<8x512xf32>
    %373 = tpu.matmul %368, %233, %cst_101 {dimension_numbers = #tpu.dot_dimension_numbers<[1], [0], [0], [1], [0, 0, 1, 1], [], []>} : vector<8x128xf32>, vector<128x512xf32>, vector<8x512xf32> -> vector<8x512xf32>
    %374 = arith.addf %372, %373 : vector<8x512xf32>
    %375 = vector.extract_strided_slice %374 {offsets = [0, 0], sizes = [8, 256], strides = [1, 1]} : vector<8x512xf32> to vector<8x256xf32>
    %376 = arith.negf %375 : vector<8x256xf32>
    %377 = math.exp %376 : vector<8x256xf32>
    %cst_102 = arith.constant 1.000000e+00 : f32
    %378 = vector.broadcast %cst_102 : f32 to vector<8x256xf32>
    %379 = arith.addf %378, %377 : vector<8x256xf32>
    %380 = arith.divf %378, %379 : vector<8x256xf32>
    %381 = vector.extract_strided_slice %374 {offsets = [0, 256], sizes = [8, 128], strides = [1, 1]} : vector<8x512xf32> to vector<8x128xf32>
    %382 = math.tanh %381 : vector<8x128xf32>
    %383 = vector.extract_strided_slice %374 {offsets = [0, 384], sizes = [8, 128], strides = [1, 1]} : vector<8x512xf32> to vector<8x128xf32>
    %384 = arith.negf %383 : vector<8x128xf32>
    %385 = math.exp %384 : vector<8x128xf32>
    %cst_103 = arith.constant 1.000000e+00 : f32
    %386 = vector.broadcast %cst_103 : f32 to vector<8x128xf32>
    %387 = arith.addf %386, %385 : vector<8x128xf32>
    %388 = arith.divf %386, %387 : vector<8x128xf32>
    %389 = vector.extract_strided_slice %380 {offsets = [0, 128], sizes = [8, 128], strides = [1, 1]} : vector<8x256xf32> to vector<8x128xf32>
    %390 = arith.mulf %389, %366 : vector<8x128xf32>
    %391 = vector.extract_strided_slice %380 {offsets = [0, 0], sizes = [8, 128], strides = [1, 1]} : vector<8x256xf32> to vector<8x128xf32>
    %392 = arith.mulf %391, %382 : vector<8x128xf32>
    %393 = arith.addf %390, %392 : vector<8x128xf32>
    %394 = math.tanh %393 : vector<8x128xf32>
    %395 = arith.mulf %388, %394 : vector<8x128xf32>
    %c6_i32_104 = arith.constant 6 : i32
    %c8_i32_105 = arith.constant 8 : i32
    %396 = arith.muli %c6_i32_104, %c8_i32_105 : i32
    %397 = tpu.assume_multiple %396, 8 : i32
    %398 = arith.index_cast %397 : i32 to index
    %c0_106 = arith.constant 0 : index
    %399 = vector.load %arg9[%398, %c0_106] : memref<64x512xf32, #tpu.memory_space<vmem>>, vector<8x512xf32>
    %cst_107 = arith.constant dense<0.000000e+00> : vector<8x512xf32>
    %400 = tpu.matmul %395, %233, %cst_107 {dimension_numbers = #tpu.dot_dimension_numbers<[1], [0], [0], [1], [0, 0, 1, 1], [], []>} : vector<8x128xf32>, vector<128x512xf32>, vector<8x512xf32> -> vector<8x512xf32>
    %401 = arith.addf %399, %400 : vector<8x512xf32>
    %402 = vector.extract_strided_slice %401 {offsets = [0, 0], sizes = [8, 256], strides = [1, 1]} : vector<8x512xf32> to vector<8x256xf32>
    %403 = arith.negf %402 : vector<8x256xf32>
    %404 = math.exp %403 : vector<8x256xf32>
    %cst_108 = arith.constant 1.000000e+00 : f32
    %405 = vector.broadcast %cst_108 : f32 to vector<8x256xf32>
    %406 = arith.addf %405, %404 : vector<8x256xf32>
    %407 = arith.divf %405, %406 : vector<8x256xf32>
    %408 = vector.extract_strided_slice %401 {offsets = [0, 256], sizes = [8, 128], strides = [1, 1]} : vector<8x512xf32> to vector<8x128xf32>
    %409 = math.tanh %408 : vector<8x128xf32>
    %410 = vector.extract_strided_slice %401 {offsets = [0, 384], sizes = [8, 128], strides = [1, 1]} : vector<8x512xf32> to vector<8x128xf32>
    %411 = arith.negf %410 : vector<8x128xf32>
    %412 = math.exp %411 : vector<8x128xf32>
    %cst_109 = arith.constant 1.000000e+00 : f32
    %413 = vector.broadcast %cst_109 : f32 to vector<8x128xf32>
    %414 = arith.addf %413, %412 : vector<8x128xf32>
    %415 = arith.divf %413, %414 : vector<8x128xf32>
    %416 = vector.extract_strided_slice %407 {offsets = [0, 128], sizes = [8, 128], strides = [1, 1]} : vector<8x256xf32> to vector<8x128xf32>
    %417 = arith.mulf %416, %393 : vector<8x128xf32>
    %418 = vector.extract_strided_slice %407 {offsets = [0, 0], sizes = [8, 128], strides = [1, 1]} : vector<8x256xf32> to vector<8x128xf32>
    %419 = arith.mulf %418, %409 : vector<8x128xf32>
    %420 = arith.addf %417, %419 : vector<8x128xf32>
    %421 = math.tanh %420 : vector<8x128xf32>
    %422 = arith.mulf %415, %421 : vector<8x128xf32>
    %c7_i32_110 = arith.constant 7 : i32
    %c8_i32_111 = arith.constant 8 : i32
    %423 = arith.muli %c7_i32_110, %c8_i32_111 : i32
    %424 = tpu.assume_multiple %423, 8 : i32
    %425 = arith.index_cast %424 : i32 to index
    %c0_112 = arith.constant 0 : index
    %426 = vector.load %arg9[%425, %c0_112] : memref<64x512xf32, #tpu.memory_space<vmem>>, vector<8x512xf32>
    %cst_113 = arith.constant dense<0.000000e+00> : vector<8x512xf32>
    %427 = tpu.matmul %422, %233, %cst_113 {dimension_numbers = #tpu.dot_dimension_numbers<[1], [0], [0], [1], [0, 0, 1, 1], [], []>} : vector<8x128xf32>, vector<128x512xf32>, vector<8x512xf32> -> vector<8x512xf32>
    %428 = arith.addf %426, %427 : vector<8x512xf32>
    %429 = vector.extract_strided_slice %428 {offsets = [0, 0], sizes = [8, 256], strides = [1, 1]} : vector<8x512xf32> to vector<8x256xf32>
    %430 = arith.negf %429 : vector<8x256xf32>
    %431 = math.exp %430 : vector<8x256xf32>
    %cst_114 = arith.constant 1.000000e+00 : f32
    %432 = vector.broadcast %cst_114 : f32 to vector<8x256xf32>
    %433 = arith.addf %432, %431 : vector<8x256xf32>
    %434 = arith.divf %432, %433 : vector<8x256xf32>
    %435 = vector.extract_strided_slice %428 {offsets = [0, 256], sizes = [8, 128], strides = [1, 1]} : vector<8x512xf32> to vector<8x128xf32>
    %436 = math.tanh %435 : vector<8x128xf32>
    %437 = vector.extract_strided_slice %428 {offsets = [0, 384], sizes = [8, 128], strides = [1, 1]} : vector<8x512xf32> to vector<8x128xf32>
    %438 = arith.negf %437 : vector<8x128xf32>
    %439 = math.exp %438 : vector<8x128xf32>
    %cst_115 = arith.constant 1.000000e+00 : f32
    %440 = vector.broadcast %cst_115 : f32 to vector<8x128xf32>
    %441 = arith.addf %440, %439 : vector<8x128xf32>
    %442 = arith.divf %440, %441 : vector<8x128xf32>
    %443 = vector.extract_strided_slice %434 {offsets = [0, 128], sizes = [8, 128], strides = [1, 1]} : vector<8x256xf32> to vector<8x128xf32>
    %444 = arith.mulf %443, %420 : vector<8x128xf32>
    %445 = vector.extract_strided_slice %434 {offsets = [0, 0], sizes = [8, 128], strides = [1, 1]} : vector<8x256xf32> to vector<8x128xf32>
    %446 = arith.mulf %445, %436 : vector<8x128xf32>
    %447 = arith.addf %444, %446 : vector<8x128xf32>
    %448 = math.tanh %447 : vector<8x128xf32>
    %449 = arith.mulf %442, %448 : vector<8x128xf32>
    %c7_i32_116 = arith.constant 7 : i32
    %c0_117 = arith.constant 0 : index
    %c0_118 = arith.constant 0 : index
    %450 = vector.load %arg5[%c0_117, %c0_118] : memref<1x128xf32, #tpu.memory_space<vmem>>, vector<1x128xf32>
    %451 = vector.broadcast %450 : vector<1x128xf32> to vector<8x128xf32>
    %452 = arith.mulf %449, %451 : vector<8x128xf32>
    %cst_119 = arith.constant dense<0.000000e+00> : vector<8xf32>
    %453 = vector.multi_reduction <add>, %452, %cst_119 [1] : vector<8x128xf32> to vector<8xf32>
    %454 = vector.shape_cast %453 : vector<8xf32> to vector<8x1xf32>
    %c0_120 = arith.constant 0 : index
    %c0_121 = arith.constant 0 : index
    %455 = vector.load %arg6[%c0_120, %c0_121] : memref<1x1xf32, #tpu.memory_space<vmem>>, vector<1x1xf32>
    %456 = vector.broadcast %455 : vector<1x1xf32> to vector<8x1xf32>
    %457 = arith.addf %454, %456 : vector<8x1xf32>
    %c0_122 = arith.constant 0 : index
    %c0_123 = arith.constant 0 : index
    %458 = vector.load %arg7[%c0_122, %c0_123] : memref<8x1xf32, #tpu.memory_space<vmem>>, vector<8x1xf32>
    tpu.vector_store %arg7[%c0_122, %c0_123], %457 {strides = array<i32>} : memref<8x1xf32, #tpu.memory_space<vmem>>, vector<8x1xf32>,
    return
  }
  func.func @transform_0(%arg0: i32) -> (i32, i32, i32) {
    %c0_i32 = arith.constant 0 : i32
    %c0_i32_0 = arith.constant 0 : i32
    %c0_i32_1 = arith.constant 0 : i32
    return %c0_i32, %arg0, %c0_i32_0 : i32, i32, i32
  }
  func.func @transform_1(%arg0: i32) -> (i32, i32, i32) {
    %c0_i32 = arith.constant 0 : i32
    %c0_i32_0 = arith.constant 0 : i32
    %c0_i32_1 = arith.constant 0 : i32
    %c0_i32_2 = arith.constant 0 : i32
    return %c0_i32, %c0_i32_0, %c0_i32_1 : i32, i32, i32
  }
  func.func @transform_2(%arg0: i32) -> (i32, i32, i32) {
    %c0_i32 = arith.constant 0 : i32
    %c0_i32_0 = arith.constant 0 : i32
    %c0_i32_1 = arith.constant 0 : i32
    %c0_i32_2 = arith.constant 0 : i32
    return %c0_i32, %c0_i32_0, %c0_i32_1 : i32, i32, i32
  }
  func.func @transform_3(%arg0: i32) -> (i32, i32, i32) {
    %c0_i32 = arith.constant 0 : i32
    %c0_i32_0 = arith.constant 0 : i32
    %c0_i32_1 = arith.constant 0 : i32
    %c0_i32_2 = arith.constant 0 : i32
    return %c0_i32, %c0_i32_0, %c0_i32_1 : i32, i32, i32
  }
  func.func @transform_4(%arg0: i32) -> (i32, i32) {
    %c0_i32 = arith.constant 0 : i32
    %c0_i32_0 = arith.constant 0 : i32
    %c0_i32_1 = arith.constant 0 : i32
    return %c0_i32, %c0_i32_0 : i32, i32
  }
  func.func @transform_5(%arg0: i32) -> (i32, i32) {
    %c0_i32 = arith.constant 0 : i32
    %c0_i32_0 = arith.constant 0 : i32
    %c0_i32_1 = arith.constant 0 : i32
    return %c0_i32, %c0_i32_0 : i32, i32
  }
  func.func @transform_6(%arg0: i32) -> (i32, i32) {
    %c0_i32 = arith.constant 0 : i32
    %c0_i32_0 = arith.constant 0 : i32
    return %arg0, %c0_i32 : i32, i32
  }
}

</mosaic_0001>

<llo_original>
// kernel: tpu_custom_call.1
$region0: #{tpu_custom_call.1}
  #allocation0 [shape = 'u32[]', space=smem, size = 0x4, offset = 0x4, fixed_abs, tag = 'smem constant byte address 0x4 - core index']
  #allocation1 [shape = 'u32[144,128]{1,0:T(1,128)}', space=vmem, size = 0x12000, scoped, tag = 'internal scratch']
  #allocation2 [shape = 'f32[64,128]{1,0:T(8,128)}', space=vmem, size = 0x8000, scoped, tag = 'scratch operand']
  #allocation3 [shape = 'f32[64,512]{1,0:T(8,128)}', space=vmem, size = 0x20000, scoped, tag = 'scratch operand']
  #allocation4 [shape = 'f32[1,1]{1,0:T(1,128)S(1)}', space=vmem, size = 0x200, scoped, tag = 'scoped memory for tpu_custom_call.1']
  %s0 = inlined_call_operand.hbm [shape: f32[8,8,512], index: 0, kind: input, shape index: {}]
  %s1 = inlined_call_operand.hbm [shape: f32[1,128,512], index: 1, kind: input, shape index: {}]
  %s2 = inlined_call_operand.hbm [shape: f32[2,128,512], index: 2, kind: input, shape index: {}]
  %s3 = inlined_call_operand.vmem [shape: f32[1,1,512], index: 3, kind: input, shape index: {}]
  %s4 = inlined_call_operand.vmem [shape: f32[1,128], index: 4, kind: input, shape index: {}]
  %s5 = inlined_call_operand.<no memory space> [shape: f32[1,1], index: 5, kind: input, shape index: {}]
  %s6 = inlined_call_operand.vmem [shape: f32[8,1], index: 6, kind: output, shape index: {}]
  %s7 = sld [smem:[#allocation0]]
  $region46: #{tpu_custom_call.1} parent=0
    _
  %s9 = ssub.s32 1, %s7
  %s10 = scalar_select 0, %s9, %s7
  %v11 = vstv %s5
  %12 = vst [vmem:[#allocation4] sm:$0x1] %v11
  $region1: #{tpu_custom_call.1} parent=0
    #allocation5 [shape = 'u8[131072]{0}', space=vmem, size = 0x20000, scoped, tag = 'input window, operand 0, single buffered']
    #allocation6 [shape = 's32[1]{0}', space=sflag, size = 0x4, scoped, tag = 'scoped memory for tpu_custom_call.1']
    #allocation7 [shape = 'u8[262144]{0}', space=vmem, size = 0x40000, scoped, tag = 'input window, operand 1, single buffered']
    #allocation8 [shape = 's32[1]{0}', space=sflag, size = 0x4, scoped, tag = 'scoped memory for tpu_custom_call.1']
    #allocation9 [shape = 'u8[524288]{0}', space=vmem, size = 0x80000, scoped, tag = 'input window, operand 2, single buffered']
    %13 = vsyncpa [#allocation6], 0
    %14 = vsyncpa [#allocation8], 0
    // Predicated region
    $region2: #{tpu_custom_call.1} parent=1 // pred_check
      _
    $region3: #{tpu_custom_call.1} parent=1 // pred_check_branch
      %16 = sbr.rel (0) target = $region5
    $region4: #{tpu_custom_call.1} parent=1 // pred_region
      %s18 = ssub.s32 4096, 4096
      %19 = vsyncadd [#allocation6], %s18
      %s20 = sshll.u32 [#allocation5], 4
      %s21 = int_to_ptr.vmem [resolvable:$true] %s20
      %26 = dma.hbm_to_vmem [thread:$0]  %s0, 4096, %s21, [#allocation6], 512, 512, 32
    $region5: #{tpu_custom_call.1} parent=1 // pred_fallthru
      _
    // Predicated region
    $region6: #{tpu_custom_call.1} parent=1 // pred_check
      _
    $region7: #{tpu_custom_call.1} parent=1 // pred_check_branch
      %28 = sbr.rel (0) target = $region9
    $region8: #{tpu_custom_call.1} parent=1 // pred_region
      %s30 = ssub.s32 8192, 8192
      %31 = vsyncadd [#allocation8], %s30
      %s32 = sshll.u32 [#allocation7], 4
      %s33 = int_to_ptr.vmem [resolvable:$true] %s32
      %38 = dma.hbm_to_vmem [thread:$0]  %s1, 8192, %s33, [#allocation8], 512, 512, 32
    $region9: #{tpu_custom_call.1} parent=1 // pred_fallthru
      _
    // Predicated region
    $region10: #{tpu_custom_call.1} parent=1 // pred_check
      _
    $region11: #{tpu_custom_call.1} parent=1 // pred_check_branch
      %40 = sbr.rel (0) target = $region13
    $region12: #{tpu_custom_call.1} parent=1 // pred_region
      %s42 = ssub.s32 16384, 16384
      %43 = vsyncadd [#allocation8], %s42
      %s44 = sshll.u32 [#allocation9], 4
      %s45 = int_to_ptr.vmem [resolvable:$true] %s44
      %50 = dma.hbm_to_vmem [thread:$0]  %s2, 16384, %s45, [#allocation8], 512, 512, 32
    $region13: #{tpu_custom_call.1} parent=1 // pred_fallthru
      _
    // Predicated region
    $region14: #{tpu_custom_call.1} parent=1 // pred_check
      _
    $region15: #{tpu_custom_call.1} parent=1 // pred_check_branch
      %52 = sbr.rel (0) target = $region17
    $region16: #{tpu_custom_call.1} parent=1 // pred_region
      _
    $region17: #{tpu_custom_call.1} parent=1 // pred_fallthru
      _
    // Predicated region
    $region18: #{tpu_custom_call.1} parent=1 // pred_check
      _
    $region19: #{tpu_custom_call.1} parent=1 // pred_check_branch
      %54 = sbr.rel (0) target = $region21
    $region20: #{tpu_custom_call.1} parent=1 // pred_region
      _
    $region21: #{tpu_custom_call.1} parent=1 // pred_fallthru
      _
    // Predicated region
    $region22: #{tpu_custom_call.1} parent=1 // pred_check
      _
    $region23: #{tpu_custom_call.1} parent=1 // pred_check_branch
      %56 = sbr.rel (0) target = $region25
    $region24: #{tpu_custom_call.1} parent=1 // pred_region
      _
    $region25: #{tpu_custom_call.1} parent=1 // pred_fallthru
      _
    // Predicated region
    $region26: #{tpu_custom_call.1} parent=1 // pred_check
      _
    $region27: #{tpu_custom_call.1} parent=1 // pred_check_branch
      %58 = sbr.rel (0) target = $region29
    $region28: #{tpu_custom_call.1} parent=1 // pred_region
      %59 = dma.done [#allocation6], 4096
    $region29: #{tpu_custom_call.1} parent=1 // pred_fallthru
      _
    // Predicated region
    $region30: #{tpu_custom_call.1} parent=1 // pred_check
      _
    $region31: #{tpu_custom_call.1} parent=1 // pred_check_branch
      %61 = sbr.rel (0) target = $region33
    $region32: #{tpu_custom_call.1} parent=1 // pred_region
      %62 = dma.done [#allocation8], 8192
    $region33: #{tpu_custom_call.1} parent=1 // pred_fallthru
      _
    // Predicated region
    $region34: #{tpu_custom_call.1} parent=1 // pred_check
      _
    $region35: #{tpu_custom_call.1} parent=1 // pred_check_branch
      %64 = sbr.rel (0) target = $region37
    $region36: #{tpu_custom_call.1} parent=1 // pred_region
      %65 = dma.done [#allocation8], 16384
    $region37: #{tpu_custom_call.1} parent=1 // pred_fallthru
      _
    %v66 = vld [vmem:[#allocation9] sm:$0xff]
    %v67 = vld [vmem:[#allocation9 + $0x8] sm:$0xff]
    %v68 = vld [vmem:[#allocation9 + $0x10] sm:$0xff]
    %v69 = vld [vmem:[#allocation9 + $0x18] sm:$0xff]
    %v70 = vld [vmem:[#allocation9 + $0x20] sm:$0xff]
    %v71 = vld [vmem:[#allocation9 + $0x28] sm:$0xff]
    %v72 = vld [vmem:[#allocation9 + $0x30] sm:$0xff]
    %v73 = vld [vmem:[#allocation9 + $0x38] sm:$0xff]
    %v74 = vld [vmem:[#allocation9 + $0x40] sm:$0xff]
    %v75 = vld [vmem:[#allocation9 + $0x48] sm:$0xff]
    %v76 = vld [vmem:[#allocation9 + $0x50] sm:$0xff]
    %v77 = vld [vmem:[#allocation9 + $0x58] sm:$0xff]
    %v78 = vld [vmem:[#allocation9 + $0x60] sm:$0xff]
    %v79 = vld [vmem:[#allocation9 + $0x68] sm:$0xff]
    %v80 = vld [vmem:[#allocation9 + $0x70] sm:$0xff]
    %v81 = vld [vmem:[#allocation9 + $0x78] sm:$0xff]
    %v82 = vld [vmem:[#allocation9 + $0x80] sm:$0xff]
    %v83 = vld [vmem:[#allocation9 + $0x88] sm:$0xff]
    %v84 = vld [vmem:[#allocation9 + $0x90] sm:$0xff]
    %v85 = vld [vmem:[#allocation9 + $0x98] sm:$0xff]
    %v86 = vld [vmem:[#allocation9 + $0xa0] sm:$0xff]
    %v87 = vld [vmem:[#allocation9 + $0xa8] sm:$0xff]
    %v88 = vld [vmem:[#allocation9 + $0xb0] sm:$0xff]
    %v89 = vld [vmem:[#allocation9 + $0xb8] sm:$0xff]
    %v90 = vld [vmem:[#allocation9 + $0xc0] sm:$0xff]
    %v91 = vld [vmem:[#allocation9 + $0xc8] sm:$0xff]
    %v92 = vld [vmem:[#allocation9 + $0xd0] sm:$0xff]
    %v93 = vld [vmem:[#allocation9 + $0xd8] sm:$0xff]
    %v94 = vld [vmem:[#allocation9 + $0xe0] sm:$0xff]
    %v95 = vld [vmem:[#allocation9 + $0xe8] sm:$0xff]
    %v96 = vld [vmem:[#allocation9 + $0xf0] sm:$0xff]
    %v97 = vld [vmem:[#allocation9 + $0xf8] sm:$0xff]
    %v98 = vld [vmem:[#allocation9 + $0x100] sm:$0xff]
    %v99 = vld [vmem:[#allocation9 + $0x108] sm:$0xff]
    %v100 = vld [vmem:[#allocation9 + $0x110] sm:$0xff]
    %v101 = vld [vmem:[#allocation9 + $0x118] sm:$0xff]
    %v102 = vld [vmem:[#allocation9 + $0x120] sm:$0xff]
    %v103 = vld [vmem:[#allocation9 + $0x128] sm:$0xff]
    %v104 = vld [vmem:[#allocation9 + $0x130] sm:$0xff]
    %v105 = vld [vmem:[#allocation9 + $0x138] sm:$0xff]
    %v106 = vld [vmem:[#allocation9 + $0x140] sm:$0xff]
    %v107 = vld [vmem:[#allocation9 + $0x148] sm:$0xff]
    %v108 = vld [vmem:[#allocation9 + $0x150] sm:$0xff]
    %v109 = vld [vmem:[#allocation9 + $0x158] sm:$0xff]
    %v110 = vld [vmem:[#allocation9 + $0x160] sm:$0xff]
    %v111 = vld [vmem:[#allocation9 + $0x168] sm:$0xff]
    %v112 = vld [vmem:[#allocation9 + $0x170] sm:$0xff]
    %v113 = vld [vmem:[#allocation9 + $0x178] sm:$0xff]
    %v114 = vld [vmem:[#allocation9 + $0x180] sm:$0xff]
    %v115 = vld [vmem:[#allocation9 + $0x188] sm:$0xff]
    %v116 = vld [vmem:[#allocation9 + $0x190] sm:$0xff]
    %v117 = vld [vmem:[#allocation9 + $0x198] sm:$0xff]
    %v118 = vld [vmem:[#allocation9 + $0x1a0] sm:$0xff]
    %v119 = vld [vmem:[#allocation9 + $0x1a8] sm:$0xff]
    %v120 = vld [vmem:[#allocation9 + $0x1b0] sm:$0xff]
    %v121 = vld [vmem:[#allocation9 + $0x1b8] sm:$0xff]
    %v122 = vld [vmem:[#allocation9 + $0x1c0] sm:$0xff]
    %v123 = vld [vmem:[#allocation9 + $0x1c8] sm:$0xff]
    %v124 = vld [vmem:[#allocation9 + $0x1d0] sm:$0xff]
    %v125 = vld [vmem:[#allocation9 + $0x1d8] sm:$0xff]
    %v126 = vld [vmem:[#allocation9 + $0x1e0] sm:$0xff]
    %v127 = vld [vmem:[#allocation9 + $0x1e8] sm:$0xff]
    %v128 = vld [vmem:[#allocation9 + $0x1f0] sm:$0xff]
    %v129 = vld [vmem:[#allocation9 + $0x1f8] sm:$0xff]
    %v130 = vld [vmem:[#allocation5] sm:$0xff]
    %v131 = vld [vmem:[#allocation5 + $0x10] sm:$0xff]
    %v132 = vld [vmem:[#allocation5 + $0x18] sm:$0xff]
    %v133 = vxor.u32 %v130, 2147483648
    %v134 = vmul.f32 %v133, 1.442695
    %v135 = vpow.pop %v134
    %v136 = vadd.f32 %v135, 1.0
    %v137 = vrcp.pop %v136
    %v138 = vmul.f32 1.0, %v137
    %v139 = vtanh.pop %v131
    %v140 = vmul.f32 %v138, %v139
    %v141 = vxor.u32 %v132, 2147483648
    %v142 = vmul.f32 %v141, 1.442695
    %v143 = vpow.pop %v142
    %v144 = vadd.f32 %v143, 1.0
    %v145 = vrcp.pop %v144
    %v146 = vmul.f32 1.0, %v145
    %v147 = vtanh.pop %v140
    %v148 = vmul.f32 %v146, %v147
    %149 = vst [vmem:[#allocation2] sm:$0xff] %v148
    %s150 = scalar_lea.vmem [#allocation5], 32
    %v151 = vld [vmem:[%s150] sm:$0xff]
    %v152 = vld [vmem:[%s150 + $0x8] sm:$0xff]
    %v153 = vld [vmem:[%s150 + $0x10] sm:$0xff]
    %v154 = vld [vmem:[%s150 + $0x18] sm:$0xff]
    %155 = vmatprep.subr.mxu0 %v67
    %156 = vmatpush1.msra.mxu0 %v66
    %157 = vmatprep.subr.mxu0 %v71
    %158 = vmatpush1.msra.mxu0 %v70
    %159 = vmatprep.subr.mxu0 %v75
    %160 = vmatpush1.msra.mxu0 %v74
    %161 = vmatprep.subr.mxu0 %v79
    %162 = vmatpush1.msra.mxu0 %v78
    %163 = vmatprep.subr.mxu0 %v83
    %164 = vmatpush1.msra.mxu0 %v82
    %165 = vmatprep.subr.mxu0 %v87
    %166 = vmatpush1.msra.mxu0 %v86
    %167 = vmatprep.subr.mxu0 %v91
    %168 = vmatpush1.msra.mxu0 %v90
    %169 = vmatprep.subr.mxu0 %v95
    %170 = vmatpush1.msra.mxu0 %v94
    %171 = vmatprep.subr.mxu0 %v99
    %172 = vmatpush1.msra.mxu0 %v98
    %173 = vmatprep.subr.mxu0 %v103
    %174 = vmatpush1.msra.mxu0 %v102
    %175 = vmatprep.subr.mxu0 %v107
    %176 = vmatpush1.msra.mxu0 %v106
    %177 = vmatprep.subr.mxu0 %v111
    %178 = vmatpush1.msra.mxu0 %v110
    %179 = vmatprep.subr.mxu0 %v115
    %180 = vmatpush1.msra.mxu0 %v114
    %181 = vmatprep.subr.mxu0 %v119
    %182 = vmatpush1.msra.mxu0 %v118
    %183 = vmatprep.subr.mxu0 %v123
    %184 = vmatpush1.msra.mxu0 %v122
    %185 = vmatprep.subr.mxu0 %v127
    %186 = vmatpush1.msra.mxu0 %v126
    %187 = vmatprep.subr.mxu0 0.0
    %188 = vmatpush1.msra.mxu0 0.0
    %189 = vmatprep.subr.mxu0 0.0
    %190 = vmatpush1.msra.mxu0 0.0
    %191 = vmatprep.subr.mxu0 0.0
    %192 = vmatpush1.msra.mxu0 0.0
    %193 = vmatprep.subr.mxu0 0.0
    %194 = vmatpush1.msra.mxu0 0.0
    %195 = vmatprep.subr.mxu0 0.0
    %196 = vmatpush1.msra.mxu0 0.0
    %197 = vmatprep.subr.mxu0 0.0
    %198 = vmatpush1.msra.mxu0 0.0
    %199 = vmatprep.subr.mxu0 0.0
    %200 = vmatpush1.msra.mxu0 0.0
    %201 = vmatprep.subr.mxu0 0.0
    %202 = vmatpush1.msra.mxu0 0.0
    %203 = vmatprep.subr.mxu0 0.0
    %204 = vmatpush1.msra.mxu0 0.0
    %205 = vmatprep.subr.mxu0 0.0
    %206 = vmatpush1.msra.mxu0 0.0
    %207 = vmatprep.subr.mxu0 0.0
    %208 = vmatpush1.msra.mxu0 0.0
    %209 = vmatprep.subr.mxu0 0.0
    %210 = vmatpush1.msra.mxu0 0.0
    %211 = vmatprep.subr.mxu0 0.0
    %212 = vmatpush1.msra.mxu0 0.0
    %213 = vmatprep.subr.mxu0 0.0
    %214 = vmatpush1.msra.mxu0 0.0
    %215 = vmatprep.subr.mxu0 0.0
    %216 = vmatpush1.msra.mxu0 0.0
    %217 = vmatprep.subr.mxu0 0.0
    %218 = vmatpush1.msra.mxu0 0.0
    %219 = vmatprep.mubr.f32.mxu0 0.0
    %220 = vmatmul.mubr.f32.gmra.mrb[0].mxu0 %v148
    %v221 = vpop.f32.mrb[0].mxu0
    %v222 = vadd.f32 0.0, %v221
    %v223 = vpop.f32.mrb[0].mxu0
    %v224 = vadd.f32 0.0, %v223
    %225 = vdwg.mxu0
    %226 = vmatprep.subr.mxu0 %v69
    %227 = vmatpush1.msra.mxu0 %v68
    %228 = vmatprep.subr.mxu0 %v73
    %229 = vmatpush1.msra.mxu0 %v72
    %230 = vmatprep.subr.mxu0 %v77
    %231 = vmatpush1.msra.mxu0 %v76
    %232 = vmatprep.subr.mxu0 %v81
    %233 = vmatpush1.msra.mxu0 %v80
    %234 = vmatprep.subr.mxu0 %v85
    %235 = vmatpush1.msra.mxu0 %v84
    %236 = vmatprep.subr.mxu0 %v89
    %237 = vmatpush1.msra.mxu0 %v88
    %238 = vmatprep.subr.mxu0 %v93
    %239 = vmatpush1.msra.mxu0 %v92
    %240 = vmatprep.subr.mxu0 %v97
    %241 = vmatpush1.msra.mxu0 %v96
    %242 = vmatprep.subr.mxu0 %v101
    %243 = vmatpush1.msra.mxu0 %v100
    %244 = vmatprep.subr.mxu0 %v105
    %245 = vmatpush1.msra.mxu0 %v104
    %246 = vmatprep.subr.mxu0 %v109
    %247 = vmatpush1.msra.mxu0 %v108
    %248 = vmatprep.subr.mxu0 %v113
    %249 = vmatpush1.msra.mxu0 %v112
    %250 = vmatprep.subr.mxu0 %v117
    %251 = vmatpush1.msra.mxu0 %v116
    %252 = vmatprep.subr.mxu0 %v121
    %253 = vmatpush1.msra.mxu0 %v120
    %254 = vmatprep.subr.mxu0 %v125
    %255 = vmatpush1.msra.mxu0 %v124
    %256 = vmatprep.subr.mxu0 %v129
    %257 = vmatpush1.msra.mxu0 %v128
    %258 = vmatprep.subr.mxu0 0.0
    %259 = vmatpush1.msra.mxu0 0.0
    %260 = vmatprep.subr.mxu0 0.0
    %261 = vmatpush1.msra.mxu0 0.0
    %262 = vmatprep.subr.mxu0 0.0
    %263 = vmatpush1.msra.mxu0 0.0
    %264 = vmatprep.subr.mxu0 0.0
    %265 = vmatpush1.msra.mxu0 0.0
    %266 = vmatprep.subr.mxu0 0.0
    %267 = vmatpush1.msra.mxu0 0.0
    %268 = vmatprep.subr.mxu0 0.0
    %269 = vmatpush1.msra.mxu0 0.0
    %270 = vmatprep.subr.mxu0 0.0
    %271 = vmatpush1.msra.mxu0 0.0
    %272 = vmatprep.subr.mxu0 0.0
    %273 = vmatpush1.msra.mxu0 0.0
    %274 = vmatprep.subr.mxu0 0.0
    %275 = vmatpush1.msra.mxu0 0.0
    %276 = vmatprep.subr.mxu0 0.0
    %277 = vmatpush1.msra.mxu0 0.0
    %278 = vmatprep.subr.mxu0 0.0
    %279 = vmatpush1.msra.mxu0 0.0
    %280 = vmatprep.subr.mxu0 0.0
    %281 = vmatpush1.msra.mxu0 0.0
    %282 = vmatprep.subr.mxu0 0.0
    %283 = vmatpush1.msra.mxu0 0.0
    %284 = vmatprep.subr.mxu0 0.0
    %285 = vmatpush1.msra.mxu0 0.0
    %286 = vmatprep.subr.mxu0 0.0
    %287 = vmatpush1.msra.mxu0 0.0
    %288 = vmatprep.subr.mxu0 0.0
    %289 = vmatpush1.msra.mxu0 0.0
    %290 = vmatprep.mubr.f32.mxu0 0.0
    %291 = vmatmul.mubr.f32.gmra.mrb[0].mxu0 %v148
    %v292 = vpop.f32.mrb[0].mxu0
    %v293 = vadd.f32 0.0, %v292
    %v294 = vpop.f32.mrb[0].mxu0
    %v295 = vadd.f32 0.0, %v294
    %296 = vdwg.mxu0
    %v297 = vadd.f32 %v151, %v222
    %v298 = vadd.f32 %v152, %v224
    %v299 = vadd.f32 %v153, %v293
    %v300 = vadd.f32 %v154, %v295
    %v301 = vxor.u32 %v297, 2147483648
    %v302 = vxor.u32 %v298, 2147483648
    %v303 = vmul.f32 %v301, 1.442695
    %v304 = vpow.pop %v303
    %v305 = vmul.f32 %v302, 1.442695
    %v306 = vpow.pop %v305
    %v307 = vadd.f32 %v304, 1.0
    %v308 = vadd.f32 %v306, 1.0
    %v309 = vrcp.pop %v307
    %v310 = vmul.f32 1.0, %v309
    %v311 = vrcp.pop %v308
    %v312 = vmul.f32 1.0, %v311
    %v313 = vtanh.pop %v299
    %v314 = vxor.u32 %v300, 2147483648
    %v315 = vmul.f32 %v314, 1.442695
    %v316 = vpow.pop %v315
    %v317 = vadd.f32 %v316, 1.0
    %v318 = vrcp.pop %v317
    %v319 = vmul.f32 1.0, %v318
    %v320 = vmul.f32 %v312, %v140
    %v321 = vmul.f32 %v310, %v313
    %v322 = vadd.f32 %v320, %v321
    %v323 = vtanh.pop %v322
    %v324 = vmul.f32 %v319, %v323
    %s325 = scalar_lea.vmem [#allocation2], 8
    %326 = vst [vmem:[%s325] sm:$0xff] %v324
    %s327 = scalar_lea.vmem [#allocation5], 64
    %v328 = vld [vmem:[%s327] sm:$0xff]
    %v329 = vld [vmem:[%s327 + $0x8] sm:$0xff]
    %v330 = vld [vmem:[%s327 + $0x10] sm:$0xff]
    %v331 = vld [vmem:[%s327 + $0x18] sm:$0xff]
    %332 = vmatprep.subr.mxu0 %v67
    %333 = vmatpush1.msra.mxu0 %v66
    %334 = vmatprep.subr.mxu0 %v71
    %335 = vmatpush1.msra.mxu0 %v70
    %336 = vmatprep.subr.mxu0 %v75
    %337 = vmatpush1.msra.mxu0 %v74
    %338 = vmatprep.subr.mxu0 %v79
    %339 = vmatpush1.msra.mxu0 %v78
    %340 = vmatprep.subr.mxu0 %v83
    %341 = vmatpush1.msra.mxu0 %v82
    %342 = vmatprep.subr.mxu0 %v87
    %343 = vmatpush1.msra.mxu0 %v86
    %344 = vmatprep.subr.mxu0 %v91
    %345 = vmatpush1.msra.mxu0 %v90
    %346 = vmatprep.subr.mxu0 %v95
    %347 = vmatpush1.msra.mxu0 %v94
    %348 = vmatprep.subr.mxu0 %v99
    %349 = vmatpush1.msra.mxu0 %v98
    %350 = vmatprep.subr.mxu0 %v103
    %351 = vmatpush1.msra.mxu0 %v102
    %352 = vmatprep.subr.mxu0 %v107
    %353 = vmatpush1.msra.mxu0 %v106
    %354 = vmatprep.subr.mxu0 %v111
    %355 = vmatpush1.msra.mxu0 %v110
    %356 = vmatprep.subr.mxu0 %v115
    %357 = vmatpush1.msra.mxu0 %v114
    %358 = vmatprep.subr.mxu0 %v119
    %359 = vmatpush1.msra.mxu0 %v118
    %360 = vmatprep.subr.mxu0 %v123
    %361 = vmatpush1.msra.mxu0 %v122
    %362 = vmatprep.subr.mxu0 %v127
    %363 = vmatpush1.msra.mxu0 %v126
    %364 = vmatprep.subr.mxu0 0.0
    %365 = vmatpush1.msra.mxu0 0.0
    %366 = vmatprep.subr.mxu0 0.0
    %367 = vmatpush1.msra.mxu0 0.0
    %368 = vmatprep.subr.mxu0 0.0
    %369 = vmatpush1.msra.mxu0 0.0
    %370 = vmatprep.subr.mxu0 0.0
    %371 = vmatpush1.msra.mxu0 0.0
    %372 = vmatprep.subr.mxu0 0.0
    %373 = vmatpush1.msra.mxu0 0.0
    %374 = vmatprep.subr.mxu0 0.0
    %375 = vmatpush1.msra.mxu0 0.0
    %376 = vmatprep.subr.mxu0 0.0
    %377 = vmatpush1.msra.mxu0 0.0
    %378 = vmatprep.subr.mxu0 0.0
    %379 = vmatpush1.msra.mxu0 0.0
    %380 = vmatprep.subr.mxu0 0.0
    %381 = vmatpush1.msra.mxu0 0.0
    %382 = vmatprep.subr.mxu0 0.0
    %383 = vmatpush1.msra.mxu0 0.0
    %384 = vmatprep.subr.mxu0 0.0
    %385 = vmatpush1.msra.mxu0 0.0
    %386 = vmatprep.subr.mxu0 0.0
    %387 = vmatpush1.msra.mxu0 0.0
    %388 = vmatprep.subr.mxu0 0.0
    %389 = vmatpush1.msra.mxu0 0.0
    %390 = vmatprep.subr.mxu0 0.0
    %391 = vmatpush1.msra.mxu0 0.0
    %392 = vmatprep.subr.mxu0 0.0
    %393 = vmatpush1.msra.mxu0 0.0
    %394 = vmatprep.subr.mxu0 0.0
    %395 = vmatpush1.msra.mxu0 0.0
    %396 = vmatprep.mubr.f32.mxu0 0.0
    %397 = vmatmul.mubr.f32.gmra.mrb[0].mxu0 %v324
    %v398 = vpop.f32.mrb[0].mxu0
    %v399 = vadd.f32 0.0, %v398
    %v400 = vpop.f32.mrb[0].mxu0
    %v401 = vadd.f32 0.0, %v400
    %402 = vdwg.mxu0
    %403 = vmatprep.subr.mxu0 %v69
    %404 = vmatpush1.msra.mxu0 %v68
    %405 = vmatprep.subr.mxu0 %v73
    %406 = vmatpush1.msra.mxu0 %v72
    %407 = vmatprep.subr.mxu0 %v77
    %408 = vmatpush1.msra.mxu0 %v76
    %409 = vmatprep.subr.mxu0 %v81
    %410 = vmatpush1.msra.mxu0 %v80
    %411 = vmatprep.subr.mxu0 %v85
    %412 = vmatpush1.msra.mxu0 %v84
    %413 = vmatprep.subr.mxu0 %v89
    %414 = vmatpush1.msra.mxu0 %v88
    %415 = vmatprep.subr.mxu0 %v93
    %416 = vmatpush1.msra.mxu0 %v92
    %417 = vmatprep.subr.mxu0 %v97
    %418 = vmatpush1.msra.mxu0 %v96
    %419 = vmatprep.subr.mxu0 %v101
    %420 = vmatpush1.msra.mxu0 %v100
    %421 = vmatprep.subr.mxu0 %v105
    %422 = vmatpush1.msra.mxu0 %v104
    %423 = vmatprep.subr.mxu0 %v109
    %424 = vmatpush1.msra.mxu0 %v108
    %425 = vmatprep.subr.mxu0 %v113
    %426 = vmatpush1.msra.mxu0 %v112
    %427 = vmatprep.subr.mxu0 %v117
    %428 = vmatpush1.msra.mxu0 %v116
    %429 = vmatprep.subr.mxu0 %v121
    %430 = vmatpush1.msra.mxu0 %v120
    %431 = vmatprep.subr.mxu0 %v125
    %432 = vmatpush1.msra.mxu0 %v124
    %433 = vmatprep.subr.mxu0 %v129
    %434 = vmatpush1.msra.mxu0 %v128
    %435 = vmatprep.subr.mxu0 0.0
    %436 = vmatpush1.msra.mxu0 0.0
    %437 = vmatprep.subr.mxu0 0.0
    %438 = vmatpush1.msra.mxu0 0.0
    %439 = vmatprep.subr.mxu0 0.0
    %440 = vmatpush1.msra.mxu0 0.0
    %441 = vmatprep.subr.mxu0 0.0
    %442 = vmatpush1.msra.mxu0 0.0
    %443 = vmatprep.subr.mxu0 0.0
    %444 = vmatpush1.msra.mxu0 0.0
    %445 = vmatprep.subr.mxu0 0.0
    %446 = vmatpush1.msra.mxu0 0.0
    %447 = vmatprep.subr.mxu0 0.0
    %448 = vmatpush1.msra.mxu0 0.0
    %449 = vmatprep.subr.mxu0 0.0
    %450 = vmatpush1.msra.mxu0 0.0
    %451 = vmatprep.subr.mxu0 0.0
    %452 = vmatpush1.msra.mxu0 0.0
    %453 = vmatprep.subr.mxu0 0.0
    %454 = vmatpush1.msra.mxu0 0.0
    %455 = vmatprep.subr.mxu0 0.0
    %456 = vmatpush1.msra.mxu0 0.0
    %457 = vmatprep.subr.mxu0 0.0
    %458 = vmatpush1.msra.mxu0 0.0
    %459 = vmatprep.subr.mxu0 0.0
    %460 = vmatpush1.msra.mxu0 0.0
    %461 = vmatprep.subr.mxu0 0.0
    %462 = vmatpush1.msra.mxu0 0.0
    %463 = vmatprep.subr.mxu0 0.0
    %464 = vmatpush1.msra.mxu0 0.0
    %465 = vmatprep.subr.mxu0 0.0
    %466 = vmatpush1.msra.mxu0 0.0
    %467 = vmatprep.mubr.f32.mxu0 0.0
    %468 = vmatmul.mubr.f32.gmra.mrb[0].mxu0 %v324
    %v469 = vpop.f32.mrb[0].mxu0
    %v470 = vadd.f32 0.0, %v469
    %v471 = vpop.f32.mrb[0].mxu0
    %v472 = vadd.f32 0.0, %v471
    %473 = vdwg.mxu0
    %v474 = vadd.f32 %v328, %v399
    %v475 = vadd.f32 %v329, %v401
    %v476 = vadd.f32 %v330, %v470
    %v477 = vadd.f32 %v331, %v472
    %v478 = vxor.u32 %v474, 2147483648
    %v479 = vxor.u32 %v475, 2147483648
    %v480 = vmul.f32 %v478, 1.442695
    %v481 = vpow.pop %v480
    %v482 = vmul.f32 %v479, 1.442695
    %v483 = vpow.pop %v482
    %v484 = vadd.f32 %v481, 1.0
    %v485 = vadd.f32 %v483, 1.0
    %v486 = vrcp.pop %v484
    %v487 = vmul.f32 1.0, %v486
    %v488 = vrcp.pop %v485
    %v489 = vmul.f32 1.0, %v488
    %v490 = vtanh.pop %v476
    %v491 = vxor.u32 %v477, 2147483648
    %v492 = vmul.f32 %v491, 1.442695
    %v493 = vpow.pop %v492
    %v494 = vadd.f32 %v493, 1.0
    %v495 = vrcp.pop %v494
    %v496 = vmul.f32 1.0, %v495
    %v497 = vmul.f32 %v489, %v322
    %v498 = vmul.f32 %v487, %v490
    %v499 = vadd.f32 %v497, %v498
    %v500 = vtanh.pop %v499
    %v501 = vmul.f32 %v496, %v500
    %s502 = scalar_lea.vmem [#allocation2], 16
    %503 = vst [vmem:[%s502] sm:$0xff] %v501
    %s504 = scalar_lea.vmem [#allocation5], 96
    %v505 = vld [vmem:[%s504] sm:$0xff]
    %v506 = vld [vmem:[%s504 + $0x8] sm:$0xff]
    %v507 = vld [vmem:[%s504 + $0x10] sm:$0xff]
    %v508 = vld [vmem:[%s504 + $0x18] sm:$0xff]
    %509 = vmatprep.subr.mxu0 %v67
    %510 = vmatpush1.msra.mxu0 %v66
    %511 = vmatprep.subr.mxu0 %v71
    %512 = vmatpush1.msra.mxu0 %v70
    %513 = vmatprep.subr.mxu0 %v75
    %514 = vmatpush1.msra.mxu0 %v74
    %515 = vmatprep.subr.mxu0 %v79
    %516 = vmatpush1.msra.mxu0 %v78
    %517 = vmatprep.subr.mxu0 %v83
    %518 = vmatpush1.msra.mxu0 %v82
    %519 = vmatprep.subr.mxu0 %v87
    %520 = vmatpush1.msra.mxu0 %v86
    %521 = vmatprep.subr.mxu0 %v91
    %522 = vmatpush1.msra.mxu0 %v90
    %523 = vmatprep.subr.mxu0 %v95
    %524 = vmatpush1.msra.mxu0 %v94
    %525 = vmatprep.subr.mxu0 %v99
    %526 = vmatpush1.msra.mxu0 %v98
    %527 = vmatprep.subr.mxu0 %v103
    %528 = vmatpush1.msra.mxu0 %v102
    %529 = vmatprep.subr.mxu0 %v107
    %530 = vmatpush1.msra.mxu0 %v106
    %531 = vmatprep.subr.mxu0 %v111
    %532 = vmatpush1.msra.mxu0 %v110
    %533 = vmatprep.subr.mxu0 %v115
    %534 = vmatpush1.msra.mxu0 %v114
    %535 = vmatprep.subr.mxu0 %v119
    %536 = vmatpush1.msra.mxu0 %v118
    %537 = vmatprep.subr.mxu0 %v123
    %538 = vmatpush1.msra.mxu0 %v122
    %539 = vmatprep.subr.mxu0 %v127
    %540 = vmatpush1.msra.mxu0 %v126
    %541 = vmatprep.subr.mxu0 0.0
    %542 = vmatpush1.msra.mxu0 0.0
    %543 = vmatprep.subr.mxu0 0.0
    %544 = vmatpush1.msra.mxu0 0.0
    %545 = vmatprep.subr.mxu0 0.0
    %546 = vmatpush1.msra.mxu0 0.0
    %547 = vmatprep.subr.mxu0 0.0
    %548 = vmatpush1.msra.mxu0 0.0
    %549 = vmatprep.subr.mxu0 0.0
    %550 = vmatpush1.msra.mxu0 0.0
    %551 = vmatprep.subr.mxu0 0.0
    %552 = vmatpush1.msra.mxu0 0.0
    %553 = vmatprep.subr.mxu0 0.0
    %554 = vmatpush1.msra.mxu0 0.0
    %555 = vmatprep.subr.mxu0 0.0
    %556 = vmatpush1.msra.mxu0 0.0
    %557 = vmatprep.subr.mxu0 0.0
    %558 = vmatpush1.msra.mxu0 0.0
    %559 = vmatprep.subr.mxu0 0.0
    %560 = vmatpush1.msra.mxu0 0.0
    %561 = vmatprep.subr.mxu0 0.0
    %562 = vmatpush1.msra.mxu0 0.0
    %563 = vmatprep.subr.mxu0 0.0
    %564 = vmatpush1.msra.mxu0 0.0
    %565 = vmatprep.subr.mxu0 0.0
    %566 = vmatpush1.msra.mxu0 0.0
    %567 = vmatprep.subr.mxu0 0.0
    %568 = vmatpush1.msra.mxu0 0.0
    %569 = vmatprep.subr.mxu0 0.0
    %570 = vmatpush1.msra.mxu0 0.0
    %571 = vmatprep.subr.mxu0 0.0
    %572 = vmatpush1.msra.mxu0 0.0
    %573 = vmatprep.mubr.f32.mxu0 0.0
    %574 = vmatmul.mubr.f32.gmra.mrb[0].mxu0 %v501
    %v575 = vpop.f32.mrb[0].mxu0
    %v576 = vadd.f32 0.0, %v575
    %v577 = vpop.f32.mrb[0].mxu0
    %v578 = vadd.f32 0.0, %v577
    %579 = vdwg.mxu0
    %580 = vmatprep.subr.mxu0 %v69
    %581 = vmatpush1.msra.mxu0 %v68
    %582 = vmatprep.subr.mxu0 %v73
    %583 = vmatpush1.msra.mxu0 %v72
    %584 = vmatprep.subr.mxu0 %v77
    %585 = vmatpush1.msra.mxu0 %v76
    %586 = vmatprep.subr.mxu0 %v81
    %587 = vmatpush1.msra.mxu0 %v80
    %588 = vmatprep.subr.mxu0 %v85
    %589 = vmatpush1.msra.mxu0 %v84
    %590 = vmatprep.subr.mxu0 %v89
    %591 = vmatpush1.msra.mxu0 %v88
    %592 = vmatprep.subr.mxu0 %v93
    %593 = vmatpush1.msra.mxu0 %v92
    %594 = vmatprep.subr.mxu0 %v97
    %595 = vmatpush1.msra.mxu0 %v96
    %596 = vmatprep.subr.mxu0 %v101
    %597 = vmatpush1.msra.mxu0 %v100
    %598 = vmatprep.subr.mxu0 %v105
    %599 = vmatpush1.msra.mxu0 %v104
    %600 = vmatprep.subr.mxu0 %v109
    %601 = vmatpush1.msra.mxu0 %v108
    %602 = vmatprep.subr.mxu0 %v113
    %603 = vmatpush1.msra.mxu0 %v112
    %604 = vmatprep.subr.mxu0 %v117
    %605 = vmatpush1.msra.mxu0 %v116
    %606 = vmatprep.subr.mxu0 %v121
    %607 = vmatpush1.msra.mxu0 %v120
    %608 = vmatprep.subr.mxu0 %v125
    %609 = vmatpush1.msra.mxu0 %v124
    %610 = vmatprep.subr.mxu0 %v129
    %611 = vmatpush1.msra.mxu0 %v128
    %612 = vmatprep.subr.mxu0 0.0
    %613 = vmatpush1.msra.mxu0 0.0
    %614 = vmatprep.subr.mxu0 0.0
    %615 = vmatpush1.msra.mxu0 0.0
    %616 = vmatprep.subr.mxu0 0.0
    %617 = vmatpush1.msra.mxu0 0.0
    %618 = vmatprep.subr.mxu0 0.0
    %619 = vmatpush1.msra.mxu0 0.0
    %620 = vmatprep.subr.mxu0 0.0
    %621 = vmatpush1.msra.mxu0 0.0
    %622 = vmatprep.subr.mxu0 0.0
    %623 = vmatpush1.msra.mxu0 0.0
    %624 = vmatprep.subr.mxu0 0.0
    %625 = vmatpush1.msra.mxu0 0.0
    %626 = vmatprep.subr.mxu0 0.0
    %627 = vmatpush1.msra.mxu0 0.0
    %628 = vmatprep.subr.mxu0 0.0
    %629 = vmatpush1.msra.mxu0 0.0
    %630 = vmatprep.subr.mxu0 0.0
    %631 = vmatpush1.msra.mxu0 0.0
    %632 = vmatprep.subr.mxu0 0.0
    %633 = vmatpush1.msra.mxu0 0.0
    %634 = vmatprep.subr.mxu0 0.0
    %635 = vmatpush1.msra.mxu0 0.0
    %636 = vmatprep.subr.mxu0 0.0
    %637 = vmatpush1.msra.mxu0 0.0
    %638 = vmatprep.subr.mxu0 0.0
    %639 = vmatpush1.msra.mxu0 0.0
    %640 = vmatprep.subr.mxu0 0.0
    %641 = vmatpush1.msra.mxu0 0.0
    %642 = vmatprep.subr.mxu0 0.0
    %643 = vmatpush1.msra.mxu0 0.0
    %644 = vmatprep.mubr.f32.mxu0 0.0
    %645 = vmatmul.mubr.f32.gmra.mrb[0].mxu0 %v501
    %v646 = vpop.f32.mrb[0].mxu0
    %v647 = vadd.f32 0.0, %v646
    %v648 = vpop.f32.mrb[0].mxu0
    %v649 = vadd.f32 0.0, %v648
    %650 = vdwg.mxu0
    %v651 = vadd.f32 %v505, %v576
    %v652 = vadd.f32 %v506, %v578
    %v653 = vadd.f32 %v507, %v647
    %v654 = vadd.f32 %v508, %v649
    %v655 = vxor.u32 %v651, 2147483648
    %v656 = vxor.u32 %v652, 2147483648
    %v657 = vmul.f32 %v655, 1.442695
    %v658 = vpow.pop %v657
    %v659 = vmul.f32 %v656, 1.442695
    %v660 = vpow.pop %v659
    %v661 = vadd.f32 %v658, 1.0
    %v662 = vadd.f32 %v660, 1.0
    %v663 = vrcp.pop %v661
    %v664 = vmul.f32 1.0, %v663
    %v665 = vrcp.pop %v662
    %v666 = vmul.f32 1.0, %v665
    %v667 = vtanh.pop %v653
    %v668 = vxor.u32 %v654, 2147483648
    %v669 = vmul.f32 %v668, 1.442695
    %v670 = vpow.pop %v669
    %v671 = vadd.f32 %v670, 1.0
    %v672 = vrcp.pop %v671
    %v673 = vmul.f32 1.0, %v672
    %v674 = vmul.f32 %v666, %v499
    %v675 = vmul.f32 %v664, %v667
    %v676 = vadd.f32 %v674, %v675
    %v677 = vtanh.pop %v676
    %v678 = vmul.f32 %v673, %v677
    %s679 = scalar_lea.vmem [#allocation2], 24
    %680 = vst [vmem:[%s679] sm:$0xff] %v678
    %s681 = scalar_lea.vmem [#allocation5], 128
    %v682 = vld [vmem:[%s681] sm:$0xff]
    %v683 = vld [vmem:[%s681 + $0x8] sm:$0xff]
    %v684 = vld [vmem:[%s681 + $0x10] sm:$0xff]
    %v685 = vld [vmem:[%s681 + $0x18] sm:$0xff]
    %686 = vmatprep.subr.mxu0 %v67
    %687 = vmatpush1.msra.mxu0 %v66
    %688 = vmatprep.subr.mxu0 %v71
    %689 = vmatpush1.msra.mxu0 %v70
    %690 = vmatprep.subr.mxu0 %v75
    %691 = vmatpush1.msra.mxu0 %v74
    %692 = vmatprep.subr.mxu0 %v79
    %693 = vmatpush1.msra.mxu0 %v78
    %694 = vmatprep.subr.mxu0 %v83
    %695 = vmatpush1.msra.mxu0 %v82
    %696 = vmatprep.subr.mxu0 %v87
    %697 = vmatpush1.msra.mxu0 %v86
    %698 = vmatprep.subr.mxu0 %v91
    %699 = vmatpush1.msra.mxu0 %v90
    %700 = vmatprep.subr.mxu0 %v95
    %701 = vmatpush1.msra.mxu0 %v94
    %702 = vmatprep.subr.mxu0 %v99
    %703 = vmatpush1.msra.mxu0 %v98
    %704 = vmatprep.subr.mxu0 %v103
    %705 = vmatpush1.msra.mxu0 %v102
    %706 = vmatprep.subr.mxu0 %v107
    %707 = vmatpush1.msra.mxu0 %v106
    %708 = vmatprep.subr.mxu0 %v111
    %709 = vmatpush1.msra.mxu0 %v110
    %710 = vmatprep.subr.mxu0 %v115
    %711 = vmatpush1.msra.mxu0 %v114
    %712 = vmatprep.subr.mxu0 %v119
    %713 = vmatpush1.msra.mxu0 %v118
    %714 = vmatprep.subr.mxu0 %v123
    %715 = vmatpush1.msra.mxu0 %v122
    %716 = vmatprep.subr.mxu0 %v127
    %717 = vmatpush1.msra.mxu0 %v126
    %718 = vmatprep.subr.mxu0 0.0
    %719 = vmatpush1.msra.mxu0 0.0
    %720 = vmatprep.subr.mxu0 0.0
    %721 = vmatpush1.msra.mxu0 0.0
    %722 = vmatprep.subr.mxu0 0.0
    %723 = vmatpush1.msra.mxu0 0.0
    %724 = vmatprep.subr.mxu0 0.0
    %725 = vmatpush1.msra.mxu0 0.0
    %726 = vmatprep.subr.mxu0 0.0
    %727 = vmatpush1.msra.mxu0 0.0
    %728 = vmatprep.subr.mxu0 0.0
    %729 = vmatpush1.msra.mxu0 0.0
    %730 = vmatprep.subr.mxu0 0.0
    %731 = vmatpush1.msra.mxu0 0.0
    %732 = vmatprep.subr.mxu0 0.0
    %733 = vmatpush1.msra.mxu0 0.0
    %734 = vmatprep.subr.mxu0 0.0
    %735 = vmatpush1.msra.mxu0 0.0
    %736 = vmatprep.subr.mxu0 0.0
    %737 = vmatpush1.msra.mxu0 0.0
    %738 = vmatprep.subr.mxu0 0.0
    %739 = vmatpush1.msra.mxu0 0.0
    %740 = vmatprep.subr.mxu0 0.0
    %741 = vmatpush1.msra.mxu0 0.0
    %742 = vmatprep.subr.mxu0 0.0
    %743 = vmatpush1.msra.mxu0 0.0
    %744 = vmatprep.subr.mxu0 0.0
    %745 = vmatpush1.msra.mxu0 0.0
    %746 = vmatprep.subr.mxu0 0.0
    %747 = vmatpush1.msra.mxu0 0.0
    %748 = vmatprep.subr.mxu0 0.0
    %749 = vmatpush1.msra.mxu0 0.0
    %750 = vmatprep.mubr.f32.mxu0 0.0
    %751 = vmatmul.mubr.f32.gmra.mrb[0].mxu0 %v678
    %v752 = vpop.f32.mrb[0].mxu0
    %v753 = vadd.f32 0.0, %v752
    %v754 = vpop.f32.mrb[0].mxu0
    %v755 = vadd.f32 0.0, %v754
    %756 = vdwg.mxu0
    %757 = vmatprep.subr.mxu0 %v69
    %758 = vmatpush1.msra.mxu0 %v68
    %759 = vmatprep.subr.mxu0 %v73
    %760 = vmatpush1.msra.mxu0 %v72
    %761 = vmatprep.subr.mxu0 %v77
    %762 = vmatpush1.msra.mxu0 %v76
    %763 = vmatprep.subr.mxu0 %v81
    %764 = vmatpush1.msra.mxu0 %v80
    %765 = vmatprep.subr.mxu0 %v85
    %766 = vmatpush1.msra.mxu0 %v84
    %767 = vmatprep.subr.mxu0 %v89
    %768 = vmatpush1.msra.mxu0 %v88
    %769 = vmatprep.subr.mxu0 %v93
    %770 = vmatpush1.msra.mxu0 %v92
    %771 = vmatprep.subr.mxu0 %v97
    %772 = vmatpush1.msra.mxu0 %v96
    %773 = vmatprep.subr.mxu0 %v101
    %774 = vmatpush1.msra.mxu0 %v100
    %775 = vmatprep.subr.mxu0 %v105
    %776 = vmatpush1.msra.mxu0 %v104
    %777 = vmatprep.subr.mxu0 %v109
    %778 = vmatpush1.msra.mxu0 %v108
    %779 = vmatprep.subr.mxu0 %v113
    %780 = vmatpush1.msra.mxu0 %v112
    %781 = vmatprep.subr.mxu0 %v117
    %782 = vmatpush1.msra.mxu0 %v116
    %783 = vmatprep.subr.mxu0 %v121
    %784 = vmatpush1.msra.mxu0 %v120
    %785 = vmatprep.subr.mxu0 %v125
    %786 = vmatpush1.msra.mxu0 %v124
    %787 = vmatprep.subr.mxu0 %v129
    %788 = vmatpush1.msra.mxu0 %v128
    %789 = vmatprep.subr.mxu0 0.0
    %790 = vmatpush1.msra.mxu0 0.0
    %791 = vmatprep.subr.mxu0 0.0
    %792 = vmatpush1.msra.mxu0 0.0
    %793 = vmatprep.subr.mxu0 0.0
    %794 = vmatpush1.msra.mxu0 0.0
    %795 = vmatprep.subr.mxu0 0.0
    %796 = vmatpush1.msra.mxu0 0.0
    %797 = vmatprep.subr.mxu0 0.0
    %798 = vmatpush1.msra.mxu0 0.0
    %799 = vmatprep.subr.mxu0 0.0
    %800 = vmatpush1.msra.mxu0 0.0
    %801 = vmatprep.subr.mxu0 0.0
    %802 = vmatpush1.msra.mxu0 0.0
    %803 = vmatprep.subr.mxu0 0.0
    %804 = vmatpush1.msra.mxu0 0.0
    %805 = vmatprep.subr.mxu0 0.0
    %806 = vmatpush1.msra.mxu0 0.0
    %807 = vmatprep.subr.mxu0 0.0
    %808 = vmatpush1.msra.mxu0 0.0
    %809 = vmatprep.subr.mxu0 0.0
    %810 = vmatpush1.msra.mxu0 0.0
    %811 = vmatprep.subr.mxu0 0.0
    %812 = vmatpush1.msra.mxu0 0.0
    %813 = vmatprep.subr.mxu0 0.0
    %814 = vmatpush1.msra.mxu0 0.0
    %815 = vmatprep.subr.mxu0 0.0
    %816 = vmatpush1.msra.mxu0 0.0
    %817 = vmatprep.subr.mxu0 0.0
    %818 = vmatpush1.msra.mxu0 0.0
    %819 = vmatprep.subr.mxu0 0.0
    %820 = vmatpush1.msra.mxu0 0.0
    %821 = vmatprep.mubr.f32.mxu0 0.0
    %822 = vmatmul.mubr.f32.gmra.mrb[0].mxu0 %v678
    %v823 = vpop.f32.mrb[0].mxu0
    %v824 = vadd.f32 0.0, %v823
    %v825 = vpop.f32.mrb[0].mxu0
    %v826 = vadd.f32 0.0, %v825
    %827 = vdwg.mxu0
    %v828 = vadd.f32 %v682, %v753
    %v829 = vadd.f32 %v683, %v755
    %v830 = vadd.f32 %v684, %v824
    %v831 = vadd.f32 %v685, %v826
    %v832 = vxor.u32 %v828, 2147483648
    %v833 = vxor.u32 %v829, 2147483648
    %v834 = vmul.f32 %v832, 1.442695
    %v835 = vpow.pop %v834
    %v836 = vmul.f32 %v833, 1.442695
    %v837 = vpow.pop %v836
    %v838 = vadd.f32 %v835, 1.0
    %v839 = vadd.f32 %v837, 1.0
    %v840 = vrcp.pop %v838
    %v841 = vmul.f32 1.0, %v840
    %v842 = vrcp.pop %v839
    %v843 = vmul.f32 1.0, %v842
    %v844 = vtanh.pop %v830
    %v845 = vxor.u32 %v831, 2147483648
    %v846 = vmul.f32 %v845, 1.442695
    %v847 = vpow.pop %v846
    %v848 = vadd.f32 %v847, 1.0
    %v849 = vrcp.pop %v848
    %v850 = vmul.f32 1.0, %v849
    %v851 = vmul.f32 %v843, %v676
    %v852 = vmul.f32 %v841, %v844
    %v853 = vadd.f32 %v851, %v852
    %v854 = vtanh.pop %v853
    %v855 = vmul.f32 %v850, %v854
    %s856 = scalar_lea.vmem [#allocation2], 32
    %857 = vst [vmem:[%s856] sm:$0xff] %v855
    %s858 = scalar_lea.vmem [#allocation5], 160
    %v859 = vld [vmem:[%s858] sm:$0xff]
    %v860 = vld [vmem:[%s858 + $0x8] sm:$0xff]
    %v861 = vld [vmem:[%s858 + $0x10] sm:$0xff]
    %v862 = vld [vmem:[%s858 + $0x18] sm:$0xff]
    %863 = vmatprep.subr.mxu0 %v67
    %864 = vmatpush1.msra.mxu0 %v66
    %865 = vmatprep.subr.mxu0 %v71
    %866 = vmatpush1.msra.mxu0 %v70
    %867 = vmatprep.subr.mxu0 %v75
    %868 = vmatpush1.msra.mxu0 %v74
    %869 = vmatprep.subr.mxu0 %v79
    %870 = vmatpush1.msra.mxu0 %v78
    %871 = vmatprep.subr.mxu0 %v83
    %872 = vmatpush1.msra.mxu0 %v82
    %873 = vmatprep.subr.mxu0 %v87
    %874 = vmatpush1.msra.mxu0 %v86
    %875 = vmatprep.subr.mxu0 %v91
    %876 = vmatpush1.msra.mxu0 %v90
    %877 = vmatprep.subr.mxu0 %v95
    %878 = vmatpush1.msra.mxu0 %v94
    %879 = vmatprep.subr.mxu0 %v99
    %880 = vmatpush1.msra.mxu0 %v98
    %881 = vmatprep.subr.mxu0 %v103
    %882 = vmatpush1.msra.mxu0 %v102
    %883 = vmatprep.subr.mxu0 %v107
    %884 = vmatpush1.msra.mxu0 %v106
    %885 = vmatprep.subr.mxu0 %v111
    %886 = vmatpush1.msra.mxu0 %v110
    %887 = vmatprep.subr.mxu0 %v115
    %888 = vmatpush1.msra.mxu0 %v114
    %889 = vmatprep.subr.mxu0 %v119
    %890 = vmatpush1.msra.mxu0 %v118
    %891 = vmatprep.subr.mxu0 %v123
    %892 = vmatpush1.msra.mxu0 %v122
    %893 = vmatprep.subr.mxu0 %v127
    %894 = vmatpush1.msra.mxu0 %v126
    %895 = vmatprep.subr.mxu0 0.0
    %896 = vmatpush1.msra.mxu0 0.0
    %897 = vmatprep.subr.mxu0 0.0
    %898 = vmatpush1.msra.mxu0 0.0
    %899 = vmatprep.subr.mxu0 0.0
    %900 = vmatpush1.msra.mxu0 0.0
    %901 = vmatprep.subr.mxu0 0.0
    %902 = vmatpush1.msra.mxu0 0.0
    %903 = vmatprep.subr.mxu0 0.0
    %904 = vmatpush1.msra.mxu0 0.0
    %905 = vmatprep.subr.mxu0 0.0
    %906 = vmatpush1.msra.mxu0 0.0
    %907 = vmatprep.subr.mxu0 0.0
    %908 = vmatpush1.msra.mxu0 0.0
    %909 = vmatprep.subr.mxu0 0.0
    %910 = vmatpush1.msra.mxu0 0.0
    %911 = vmatprep.subr.mxu0 0.0
    %912 = vmatpush1.msra.mxu0 0.0
    %913 = vmatprep.subr.mxu0 0.0
    %914 = vmatpush1.msra.mxu0 0.0
    %915 = vmatprep.subr.mxu0 0.0
    %916 = vmatpush1.msra.mxu0 0.0
    %917 = vmatprep.subr.mxu0 0.0
    %918 = vmatpush1.msra.mxu0 0.0
    %919 = vmatprep.subr.mxu0 0.0
    %920 = vmatpush1.msra.mxu0 0.0
    %921 = vmatprep.subr.mxu0 0.0
    %922 = vmatpush1.msra.mxu0 0.0
    %923 = vmatprep.subr.mxu0 0.0
    %924 = vmatpush1.msra.mxu0 0.0
    %925 = vmatprep.subr.mxu0 0.0
    %926 = vmatpush1.msra.mxu0 0.0
    %927 = vmatprep.mubr.f32.mxu0 0.0
    %928 = vmatmul.mubr.f32.gmra.mrb[0].mxu0 %v855
    %v929 = vpop.f32.mrb[0].mxu0
    %v930 = vadd.f32 0.0, %v929
    %v931 = vpop.f32.mrb[0].mxu0
    %v932 = vadd.f32 0.0, %v931
    %933 = vdwg.mxu0
    %934 = vmatprep.subr.mxu0 %v69
    %935 = vmatpush1.msra.mxu0 %v68
    %936 = vmatprep.subr.mxu0 %v73
    %937 = vmatpush1.msra.mxu0 %v72
    %938 = vmatprep.subr.mxu0 %v77
    %939 = vmatpush1.msra.mxu0 %v76
    %940 = vmatprep.subr.mxu0 %v81
    %941 = vmatpush1.msra.mxu0 %v80
    %942 = vmatprep.subr.mxu0 %v85
    %943 = vmatpush1.msra.mxu0 %v84
    %944 = vmatprep.subr.mxu0 %v89
    %945 = vmatpush1.msra.mxu0 %v88
    %946 = vmatprep.subr.mxu0 %v93
    %947 = vmatpush1.msra.mxu0 %v92
    %948 = vmatprep.subr.mxu0 %v97
    %949 = vmatpush1.msra.mxu0 %v96
    %950 = vmatprep.subr.mxu0 %v101
    %951 = vmatpush1.msra.mxu0 %v100
    %952 = vmatprep.subr.mxu0 %v105
    %953 = vmatpush1.msra.mxu0 %v104
    %954 = vmatprep.subr.mxu0 %v109
    %955 = vmatpush1.msra.mxu0 %v108
    %956 = vmatprep.subr.mxu0 %v113
    %957 = vmatpush1.msra.mxu0 %v112
    %958 = vmatprep.subr.mxu0 %v117
    %959 = vmatpush1.msra.mxu0 %v116
    %960 = vmatprep.subr.mxu0 %v121
    %961 = vmatpush1.msra.mxu0 %v120
    %962 = vmatprep.subr.mxu0 %v125
    %963 = vmatpush1.msra.mxu0 %v124
    %964 = vmatprep.subr.mxu0 %v129
    %965 = vmatpush1.msra.mxu0 %v128
    %966 = vmatprep.subr.mxu0 0.0
    %967 = vmatpush1.msra.mxu0 0.0
    %968 = vmatprep.subr.mxu0 0.0
    %969 = vmatpush1.msra.mxu0 0.0
    %970 = vmatprep.subr.mxu0 0.0
    %971 = vmatpush1.msra.mxu0 0.0
    %972 = vmatprep.subr.mxu0 0.0
    %973 = vmatpush1.msra.mxu0 0.0
    %974 = vmatprep.subr.mxu0 0.0
    %975 = vmatpush1.msra.mxu0 0.0
    %976 = vmatprep.subr.mxu0 0.0
    %977 = vmatpush1.msra.mxu0 0.0
    %978 = vmatprep.subr.mxu0 0.0
    %979 = vmatpush1.msra.mxu0 0.0
    %980 = vmatprep.subr.mxu0 0.0
    %981 = vmatpush1.msra.mxu0 0.0
    %982 = vmatprep.subr.mxu0 0.0
    %983 = vmatpush1.msra.mxu0 0.0
    %984 = vmatprep.subr.mxu0 0.0
    %985 = vmatpush1.msra.mxu0 0.0
    %986 = vmatprep.subr.mxu0 0.0
    %987 = vmatpush1.msra.mxu0 0.0
    %988 = vmatprep.subr.mxu0 0.0
    %989 = vmatpush1.msra.mxu0 0.0
    %990 = vmatprep.subr.mxu0 0.0
    %991 = vmatpush1.msra.mxu0 0.0
    %992 = vmatprep.subr.mxu0 0.0
    %993 = vmatpush1.msra.mxu0 0.0
    %994 = vmatprep.subr.mxu0 0.0
    %995 = vmatpush1.msra.mxu0 0.0
    %996 = vmatprep.subr.mxu0 0.0
    %997 = vmatpush1.msra.mxu0 0.0
    %998 = vmatprep.mubr.f32.mxu0 0.0
    %999 = vmatmul.mubr.f32.gmra.mrb[0].mxu0 %v855
    %v1000 = vpop.f32.mrb[0].mxu0
    %v1001 = vadd.f32 0.0, %v1000
    %v1002 = vpop.f32.mrb[0].mxu0
    %v1003 = vadd.f32 0.0, %v1002
    %1004 = vdwg.mxu0
    %v1005 = vadd.f32 %v859, %v930
    %v1006 = vadd.f32 %v860, %v932
    %v1007 = vadd.f32 %v861, %v1001
    %v1008 = vadd.f32 %v862, %v1003
    %v1009 = vxor.u32 %v1005, 2147483648
    %v1010 = vxor.u32 %v1006, 2147483648
    %v1011 = vmul.f32 %v1009, 1.442695
    %v1012 = vpow.pop %v1011
    %v1013 = vmul.f32 %v1010, 1.442695
    %v1014 = vpow.pop %v1013
    %v1015 = vadd.f32 %v1012, 1.0
    %v1016 = vadd.f32 %v1014, 1.0
    %v1017 = vrcp.pop %v1015
    %v1018 = vmul.f32 1.0, %v1017
    %v1019 = vrcp.pop %v1016
    %v1020 = vmul.f32 1.0, %v1019
    %v1021 = vtanh.pop %v1007
    %v1022 = vxor.u32 %v1008, 2147483648
    %v1023 = vmul.f32 %v1022, 1.442695
    %v1024 = vpow.pop %v1023
    %v1025 = vadd.f32 %v1024, 1.0
    %v1026 = vrcp.pop %v1025
    %v1027 = vmul.f32 1.0, %v1026
    %v1028 = vmul.f32 %v1020, %v853
    %v1029 = vmul.f32 %v1018, %v1021
    %v1030 = vadd.f32 %v1028, %v1029
    %v1031 = vtanh.pop %v1030
    %v1032 = vmul.f32 %v1027, %v1031
    %s1033 = scalar_lea.vmem [#allocation2], 40
    %1034 = vst [vmem:[%s1033] sm:$0xff] %v1032
    %s1035 = scalar_lea.vmem [#allocation5], 192
    %v1036 = vld [vmem:[%s1035] sm:$0xff]
    %v1037 = vld [vmem:[%s1035 + $0x8] sm:$0xff]
    %v1038 = vld [vmem:[%s1035 + $0x10] sm:$0xff]
    %v1039 = vld [vmem:[%s1035 + $0x18] sm:$0xff]
    %1040 = vmatprep.subr.mxu0 %v67
    %1041 = vmatpush1.msra.mxu0 %v66
    %1042 = vmatprep.subr.mxu0 %v71
    %1043 = vmatpush1.msra.mxu0 %v70
    %1044 = vmatprep.subr.mxu0 %v75
    %1045 = vmatpush1.msra.mxu0 %v74
    %1046 = vmatprep.subr.mxu0 %v79
    %1047 = vmatpush1.msra.mxu0 %v78
    %1048 = vmatprep.subr.mxu0 %v83
    %1049 = vmatpush1.msra.mxu0 %v82
    %1050 = vmatprep.subr.mxu0 %v87
    %1051 = vmatpush1.msra.mxu0 %v86
    %1052 = vmatprep.subr.mxu0 %v91
    %1053 = vmatpush1.msra.mxu0 %v90
    %1054 = vmatprep.subr.mxu0 %v95
    %1055 = vmatpush1.msra.mxu0 %v94
    %1056 = vmatprep.subr.mxu0 %v99
    %1057 = vmatpush1.msra.mxu0 %v98
    %1058 = vmatprep.subr.mxu0 %v103
    %1059 = vmatpush1.msra.mxu0 %v102
    %1060 = vmatprep.subr.mxu0 %v107
    %1061 = vmatpush1.msra.mxu0 %v106
    %1062 = vmatprep.subr.mxu0 %v111
    %1063 = vmatpush1.msra.mxu0 %v110
    %1064 = vmatprep.subr.mxu0 %v115
    %1065 = vmatpush1.msra.mxu0 %v114
    %1066 = vmatprep.subr.mxu0 %v119
    %1067 = vmatpush1.msra.mxu0 %v118
    %1068 = vmatprep.subr.mxu0 %v123
    %1069 = vmatpush1.msra.mxu0 %v122
    %1070 = vmatprep.subr.mxu0 %v127
    %1071 = vmatpush1.msra.mxu0 %v126
    %1072 = vmatprep.subr.mxu0 0.0
    %1073 = vmatpush1.msra.mxu0 0.0
    %1074 = vmatprep.subr.mxu0 0.0
    %1075 = vmatpush1.msra.mxu0 0.0
    %1076 = vmatprep.subr.mxu0 0.0
    %1077 = vmatpush1.msra.mxu0 0.0
    %1078 = vmatprep.subr.mxu0 0.0
    %1079 = vmatpush1.msra.mxu0 0.0
    %1080 = vmatprep.subr.mxu0 0.0
    %1081 = vmatpush1.msra.mxu0 0.0
    %1082 = vmatprep.subr.mxu0 0.0
    %1083 = vmatpush1.msra.mxu0 0.0
    %1084 = vmatprep.subr.mxu0 0.0
    %1085 = vmatpush1.msra.mxu0 0.0
    %1086 = vmatprep.subr.mxu0 0.0
    %1087 = vmatpush1.msra.mxu0 0.0
    %1088 = vmatprep.subr.mxu0 0.0
    %1089 = vmatpush1.msra.mxu0 0.0
    %1090 = vmatprep.subr.mxu0 0.0
    %1091 = vmatpush1.msra.mxu0 0.0
    %1092 = vmatprep.subr.mxu0 0.0
    %1093 = vmatpush1.msra.mxu0 0.0
    %1094 = vmatprep.subr.mxu0 0.0
    %1095 = vmatpush1.msra.mxu0 0.0
    %1096 = vmatprep.subr.mxu0 0.0
    %1097 = vmatpush1.msra.mxu0 0.0
    %1098 = vmatprep.subr.mxu0 0.0
    %1099 = vmatpush1.msra.mxu0 0.0
    %1100 = vmatprep.subr.mxu0 0.0
    %1101 = vmatpush1.msra.mxu0 0.0
    %1102 = vmatprep.subr.mxu0 0.0
    %1103 = vmatpush1.msra.mxu0 0.0
    %1104 = vmatprep.mubr.f32.mxu0 0.0
    %1105 = vmatmul.mubr.f32.gmra.mrb[0].mxu0 %v1032
    %v1106 = vpop.f32.mrb[0].mxu0
    %v1107 = vadd.f32 0.0, %v1106
    %v1108 = vpop.f32.mrb[0].mxu0
    %v1109 = vadd.f32 0.0, %v1108
    %1110 = vdwg.mxu0
    %1111 = vmatprep.subr.mxu0 %v69
    %1112 = vmatpush1.msra.mxu0 %v68
    %1113 = vmatprep.subr.mxu0 %v73
    %1114 = vmatpush1.msra.mxu0 %v72
    %1115 = vmatprep.subr.mxu0 %v77
    %1116 = vmatpush1.msra.mxu0 %v76
    %1117 = vmatprep.subr.mxu0 %v81
    %1118 = vmatpush1.msra.mxu0 %v80
    %1119 = vmatprep.subr.mxu0 %v85
    %1120 = vmatpush1.msra.mxu0 %v84
    %1121 = vmatprep.subr.mxu0 %v89
    %1122 = vmatpush1.msra.mxu0 %v88
    %1123 = vmatprep.subr.mxu0 %v93
    %1124 = vmatpush1.msra.mxu0 %v92
    %1125 = vmatprep.subr.mxu0 %v97
    %1126 = vmatpush1.msra.mxu0 %v96
    %1127 = vmatprep.subr.mxu0 %v101
    %1128 = vmatpush1.msra.mxu0 %v100
    %1129 = vmatprep.subr.mxu0 %v105
    %1130 = vmatpush1.msra.mxu0 %v104
    %1131 = vmatprep.subr.mxu0 %v109
    %1132 = vmatpush1.msra.mxu0 %v108
    %1133 = vmatprep.subr.mxu0 %v113
    %1134 = vmatpush1.msra.mxu0 %v112
    %1135 = vmatprep.subr.mxu0 %v117
    %1136 = vmatpush1.msra.mxu0 %v116
    %1137 = vmatprep.subr.mxu0 %v121
    %1138 = vmatpush1.msra.mxu0 %v120
    %1139 = vmatprep.subr.mxu0 %v125
    %1140 = vmatpush1.msra.mxu0 %v124
    %1141 = vmatprep.subr.mxu0 %v129
    %1142 = vmatpush1.msra.mxu0 %v128
    %1143 = vmatprep.subr.mxu0 0.0
    %1144 = vmatpush1.msra.mxu0 0.0
    %1145 = vmatprep.subr.mxu0 0.0
    %1146 = vmatpush1.msra.mxu0 0.0
    %1147 = vmatprep.subr.mxu0 0.0
    %1148 = vmatpush1.msra.mxu0 0.0
    %1149 = vmatprep.subr.mxu0 0.0
    %1150 = vmatpush1.msra.mxu0 0.0
    %1151 = vmatprep.subr.mxu0 0.0
    %1152 = vmatpush1.msra.mxu0 0.0
    %1153 = vmatprep.subr.mxu0 0.0
    %1154 = vmatpush1.msra.mxu0 0.0
    %1155 = vmatprep.subr.mxu0 0.0
    %1156 = vmatpush1.msra.mxu0 0.0
    %1157 = vmatprep.subr.mxu0 0.0
    %1158 = vmatpush1.msra.mxu0 0.0
    %1159 = vmatprep.subr.mxu0 0.0
    %1160 = vmatpush1.msra.mxu0 0.0
    %1161 = vmatprep.subr.mxu0 0.0
    %1162 = vmatpush1.msra.mxu0 0.0
    %1163 = vmatprep.subr.mxu0 0.0
    %1164 = vmatpush1.msra.mxu0 0.0
    %1165 = vmatprep.subr.mxu0 0.0
    %1166 = vmatpush1.msra.mxu0 0.0
    %1167 = vmatprep.subr.mxu0 0.0
    %1168 = vmatpush1.msra.mxu0 0.0
    %1169 = vmatprep.subr.mxu0 0.0
    %1170 = vmatpush1.msra.mxu0 0.0
    %1171 = vmatprep.subr.mxu0 0.0
    %1172 = vmatpush1.msra.mxu0 0.0
    %1173 = vmatprep.subr.mxu0 0.0
    %1174 = vmatpush1.msra.mxu0 0.0
    %1175 = vmatprep.mubr.f32.mxu0 0.0
    %1176 = vmatmul.mubr.f32.gmra.mrb[0].mxu0 %v1032
    %v1177 = vpop.f32.mrb[0].mxu0
    %v1178 = vadd.f32 0.0, %v1177
    %v1179 = vpop.f32.mrb[0].mxu0
    %v1180 = vadd.f32 0.0, %v1179
    %1181 = vdwg.mxu0
    %v1182 = vadd.f32 %v1036, %v1107
    %v1183 = vadd.f32 %v1037, %v1109
    %v1184 = vadd.f32 %v1038, %v1178
    %v1185 = vadd.f32 %v1039, %v1180
    %v1186 = vxor.u32 %v1182, 2147483648
    %v1187 = vxor.u32 %v1183, 2147483648
    %v1188 = vmul.f32 %v1186, 1.442695
    %v1189 = vpow.pop %v1188
    %v1190 = vmul.f32 %v1187, 1.442695
    %v1191 = vpow.pop %v1190
    %v1192 = vadd.f32 %v1189, 1.0
    %v1193 = vadd.f32 %v1191, 1.0
    %v1194 = vrcp.pop %v1192
    %v1195 = vmul.f32 1.0, %v1194
    %v1196 = vrcp.pop %v1193
    %v1197 = vmul.f32 1.0, %v1196
    %v1198 = vtanh.pop %v1184
    %v1199 = vxor.u32 %v1185, 2147483648
    %v1200 = vmul.f32 %v1199, 1.442695
    %v1201 = vpow.pop %v1200
    %v1202 = vadd.f32 %v1201, 1.0
    %v1203 = vrcp.pop %v1202
    %v1204 = vmul.f32 1.0, %v1203
    %v1205 = vmul.f32 %v1197, %v1030
    %v1206 = vmul.f32 %v1195, %v1198
    %v1207 = vadd.f32 %v1205, %v1206
    %v1208 = vtanh.pop %v1207
    %v1209 = vmul.f32 %v1204, %v1208
    %s1210 = scalar_lea.vmem [#allocation2], 48
    %1211 = vst [vmem:[%s1210] sm:$0xff] %v1209
    %s1212 = scalar_lea.vmem [#allocation5], 224
    %v1213 = vld [vmem:[%s1212] sm:$0xff]
    %v1214 = vld [vmem:[%s1212 + $0x8] sm:$0xff]
    %v1215 = vld [vmem:[%s1212 + $0x10] sm:$0xff]
    %v1216 = vld [vmem:[%s1212 + $0x18] sm:$0xff]
    %1217 = vmatprep.subr.mxu0 %v67
    %1218 = vmatpush1.msra.mxu0 %v66
    %1219 = vmatprep.subr.mxu0 %v71
    %1220 = vmatpush1.msra.mxu0 %v70
    %1221 = vmatprep.subr.mxu0 %v75
    %1222 = vmatpush1.msra.mxu0 %v74
    %1223 = vmatprep.subr.mxu0 %v79
    %1224 = vmatpush1.msra.mxu0 %v78
    %1225 = vmatprep.subr.mxu0 %v83
    %1226 = vmatpush1.msra.mxu0 %v82
    %1227 = vmatprep.subr.mxu0 %v87
    %1228 = vmatpush1.msra.mxu0 %v86
    %1229 = vmatprep.subr.mxu0 %v91
    %1230 = vmatpush1.msra.mxu0 %v90
    %1231 = vmatprep.subr.mxu0 %v95
    %1232 = vmatpush1.msra.mxu0 %v94
    %1233 = vmatprep.subr.mxu0 %v99
    %1234 = vmatpush1.msra.mxu0 %v98
    %1235 = vmatprep.subr.mxu0 %v103
    %1236 = vmatpush1.msra.mxu0 %v102
    %1237 = vmatprep.subr.mxu0 %v107
    %1238 = vmatpush1.msra.mxu0 %v106
    %1239 = vmatprep.subr.mxu0 %v111
    %1240 = vmatpush1.msra.mxu0 %v110
    %1241 = vmatprep.subr.mxu0 %v115
    %1242 = vmatpush1.msra.mxu0 %v114
    %1243 = vmatprep.subr.mxu0 %v119
    %1244 = vmatpush1.msra.mxu0 %v118
    %1245 = vmatprep.subr.mxu0 %v123
    %1246 = vmatpush1.msra.mxu0 %v122
    %1247 = vmatprep.subr.mxu0 %v127
    %1248 = vmatpush1.msra.mxu0 %v126
    %1249 = vmatprep.subr.mxu0 0.0
    %1250 = vmatpush1.msra.mxu0 0.0
    %1251 = vmatprep.subr.mxu0 0.0
    %1252 = vmatpush1.msra.mxu0 0.0
    %1253 = vmatprep.subr.mxu0 0.0
    %1254 = vmatpush1.msra.mxu0 0.0
    %1255 = vmatprep.subr.mxu0 0.0
    %1256 = vmatpush1.msra.mxu0 0.0
    %1257 = vmatprep.subr.mxu0 0.0
    %1258 = vmatpush1.msra.mxu0 0.0
    %1259 = vmatprep.subr.mxu0 0.0
    %1260 = vmatpush1.msra.mxu0 0.0
    %1261 = vmatprep.subr.mxu0 0.0
    %1262 = vmatpush1.msra.mxu0 0.0
    %1263 = vmatprep.subr.mxu0 0.0
    %1264 = vmatpush1.msra.mxu0 0.0
    %1265 = vmatprep.subr.mxu0 0.0
    %1266 = vmatpush1.msra.mxu0 0.0
    %1267 = vmatprep.subr.mxu0 0.0
    %1268 = vmatpush1.msra.mxu0 0.0
    %1269 = vmatprep.subr.mxu0 0.0
    %1270 = vmatpush1.msra.mxu0 0.0
    %1271 = vmatprep.subr.mxu0 0.0
    %1272 = vmatpush1.msra.mxu0 0.0
    %1273 = vmatprep.subr.mxu0 0.0
    %1274 = vmatpush1.msra.mxu0 0.0
    %1275 = vmatprep.subr.mxu0 0.0
    %1276 = vmatpush1.msra.mxu0 0.0
    %1277 = vmatprep.subr.mxu0 0.0
    %1278 = vmatpush1.msra.mxu0 0.0
    %1279 = vmatprep.subr.mxu0 0.0
    %1280 = vmatpush1.msra.mxu0 0.0
    %1281 = vmatprep.mubr.f32.mxu0 0.0
    %1282 = vmatmul.mubr.f32.gmra.mrb[0].mxu0 %v1209
    %v1283 = vpop.f32.mrb[0].mxu0
    %v1284 = vadd.f32 0.0, %v1283
    %v1285 = vpop.f32.mrb[0].mxu0
    %v1286 = vadd.f32 0.0, %v1285
    %1287 = vdwg.mxu0
    %1288 = vmatprep.subr.mxu0 %v69
    %1289 = vmatpush1.msra.mxu0 %v68
    %1290 = vmatprep.subr.mxu0 %v73
    %1291 = vmatpush1.msra.mxu0 %v72
    %1292 = vmatprep.subr.mxu0 %v77
    %1293 = vmatpush1.msra.mxu0 %v76
    %1294 = vmatprep.subr.mxu0 %v81
    %1295 = vmatpush1.msra.mxu0 %v80
    %1296 = vmatprep.subr.mxu0 %v85
    %1297 = vmatpush1.msra.mxu0 %v84
    %1298 = vmatprep.subr.mxu0 %v89
    %1299 = vmatpush1.msra.mxu0 %v88
    %1300 = vmatprep.subr.mxu0 %v93
    %1301 = vmatpush1.msra.mxu0 %v92
    %1302 = vmatprep.subr.mxu0 %v97
    %1303 = vmatpush1.msra.mxu0 %v96
    %1304 = vmatprep.subr.mxu0 %v101
    %1305 = vmatpush1.msra.mxu0 %v100
    %1306 = vmatprep.subr.mxu0 %v105
    %1307 = vmatpush1.msra.mxu0 %v104
    %1308 = vmatprep.subr.mxu0 %v109
    %1309 = vmatpush1.msra.mxu0 %v108
    %1310 = vmatprep.subr.mxu0 %v113
    %1311 = vmatpush1.msra.mxu0 %v112
    %1312 = vmatprep.subr.mxu0 %v117
    %1313 = vmatpush1.msra.mxu0 %v116
    %1314 = vmatprep.subr.mxu0 %v121
    %1315 = vmatpush1.msra.mxu0 %v120
    %1316 = vmatprep.subr.mxu0 %v125
    %1317 = vmatpush1.msra.mxu0 %v124
    %1318 = vmatprep.subr.mxu0 %v129
    %1319 = vmatpush1.msra.mxu0 %v128
    %1320 = vmatprep.subr.mxu0 0.0
    %1321 = vmatpush1.msra.mxu0 0.0
    %1322 = vmatprep.subr.mxu0 0.0
    %1323 = vmatpush1.msra.mxu0 0.0
    %1324 = vmatprep.subr.mxu0 0.0
    %1325 = vmatpush1.msra.mxu0 0.0
    %1326 = vmatprep.subr.mxu0 0.0
    %1327 = vmatpush1.msra.mxu0 0.0
    %1328 = vmatprep.subr.mxu0 0.0
    %1329 = vmatpush1.msra.mxu0 0.0
    %1330 = vmatprep.subr.mxu0 0.0
    %1331 = vmatpush1.msra.mxu0 0.0
    %1332 = vmatprep.subr.mxu0 0.0
    %1333 = vmatpush1.msra.mxu0 0.0
    %1334 = vmatprep.subr.mxu0 0.0
    %1335 = vmatpush1.msra.mxu0 0.0
    %1336 = vmatprep.subr.mxu0 0.0
    %1337 = vmatpush1.msra.mxu0 0.0
    %1338 = vmatprep.subr.mxu0 0.0
    %1339 = vmatpush1.msra.mxu0 0.0
    %1340 = vmatprep.subr.mxu0 0.0
    %1341 = vmatpush1.msra.mxu0 0.0
    %1342 = vmatprep.subr.mxu0 0.0
    %1343 = vmatpush1.msra.mxu0 0.0
    %1344 = vmatprep.subr.mxu0 0.0
    %1345 = vmatpush1.msra.mxu0 0.0
    %1346 = vmatprep.subr.mxu0 0.0
    %1347 = vmatpush1.msra.mxu0 0.0
    %1348 = vmatprep.subr.mxu0 0.0
    %1349 = vmatpush1.msra.mxu0 0.0
    %1350 = vmatprep.subr.mxu0 0.0
    %1351 = vmatpush1.msra.mxu0 0.0
    %1352 = vmatprep.mubr.f32.mxu0 0.0
    %1353 = vmatmul.mubr.f32.gmra.mrb[0].mxu0 %v1209
    %v1354 = vpop.f32.mrb[0].mxu0
    %v1355 = vadd.f32 0.0, %v1354
    %v1356 = vpop.f32.mrb[0].mxu0
    %v1357 = vadd.f32 0.0, %v1356
    %1358 = vdwg.mxu0
    %v1359 = vadd.f32 %v1213, %v1284
    %v1360 = vadd.f32 %v1214, %v1286
    %v1361 = vadd.f32 %v1215, %v1355
    %v1362 = vadd.f32 %v1216, %v1357
    %v1363 = vxor.u32 %v1359, 2147483648
    %v1364 = vxor.u32 %v1360, 2147483648
    %v1365 = vmul.f32 %v1363, 1.442695
    %v1366 = vpow.pop %v1365
    %v1367 = vmul.f32 %v1364, 1.442695
    %v1368 = vpow.pop %v1367
    %v1369 = vadd.f32 %v1366, 1.0
    %v1370 = vadd.f32 %v1368, 1.0
    %v1371 = vrcp.pop %v1369
    %v1372 = vmul.f32 1.0, %v1371
    %v1373 = vrcp.pop %v1370
    %v1374 = vmul.f32 1.0, %v1373
    %v1375 = vtanh.pop %v1361
    %v1376 = vxor.u32 %v1362, 2147483648
    %v1377 = vmul.f32 %v1376, 1.442695
    %v1378 = vpow.pop %v1377
    %v1379 = vadd.f32 %v1378, 1.0
    %v1380 = vrcp.pop %v1379
    %v1381 = vmul.f32 1.0, %v1380
    %v1382 = vmul.f32 %v1374, %v1207
    %v1383 = vmul.f32 %v1372, %v1375
    %v1384 = vadd.f32 %v1382, %v1383
    %v1385 = vtanh.pop %v1384
    %v1386 = vmul.f32 %v1381, %v1385
    %s1387 = scalar_lea.vmem [#allocation2], 56
    %1388 = vst [vmem:[%s1387] sm:$0xff] %v1386
    %s1389 = scalar_lea.vmem [#allocation9], 512
    %v1390 = vld [vmem:[%s1389] sm:$0xff]
    %v1391 = vld [vmem:[%s1389 + $0x8] sm:$0xff]
    %v1392 = vld [vmem:[%s1389 + $0x10] sm:$0xff]
    %v1393 = vld [vmem:[%s1389 + $0x18] sm:$0xff]
    %v1394 = vld [vmem:[%s1389 + $0x20] sm:$0xff]
    %v1395 = vld [vmem:[%s1389 + $0x28] sm:$0xff]
    %v1396 = vld [vmem:[%s1389 + $0x30] sm:$0xff]
    %v1397 = vld [vmem:[%s1389 + $0x38] sm:$0xff]
    %v1398 = vld [vmem:[%s1389 + $0x40] sm:$0xff]
    %v1399 = vld [vmem:[%s1389 + $0x48] sm:$0xff]
    %v1400 = vld [vmem:[%s1389 + $0x50] sm:$0xff]
    %v1401 = vld [vmem:[%s1389 + $0x58] sm:$0xff]
    %v1402 = vld [vmem:[%s1389 + $0x60] sm:$0xff]
    %v1403 = vld [vmem:[%s1389 + $0x68] sm:$0xff]
    %v1404 = vld [vmem:[%s1389 + $0x70] sm:$0xff]
    %v1405 = vld [vmem:[%s1389 + $0x78] sm:$0xff]
    %v1406 = vld [vmem:[%s1389 + $0x80] sm:$0xff]
    %v1407 = vld [vmem:[%s1389 + $0x88] sm:$0xff]
    %v1408 = vld [vmem:[%s1389 + $0x90] sm:$0xff]
    %v1409 = vld [vmem:[%s1389 + $0x98] sm:$0xff]
    %v1410 = vld [vmem:[%s1389 + $0xa0] sm:$0xff]
    %v1411 = vld [vmem:[%s1389 + $0xa8] sm:$0xff]
    %v1412 = vld [vmem:[%s1389 + $0xb0] sm:$0xff]
    %v1413 = vld [vmem:[%s1389 + $0xb8] sm:$0xff]
    %v1414 = vld [vmem:[%s1389 + $0xc0] sm:$0xff]
    %v1415 = vld [vmem:[%s1389 + $0xc8] sm:$0xff]
    %v1416 = vld [vmem:[%s1389 + $0xd0] sm:$0xff]
    %v1417 = vld [vmem:[%s1389 + $0xd8] sm:$0xff]
    %v1418 = vld [vmem:[%s1389 + $0xe0] sm:$0xff]
    %v1419 = vld [vmem:[%s1389 + $0xe8] sm:$0xff]
    %v1420 = vld [vmem:[%s1389 + $0xf0] sm:$0xff]
    %v1421 = vld [vmem:[%s1389 + $0xf8] sm:$0xff]
    %v1422 = vld [vmem:[%s1389 + $0x100] sm:$0xff]
    %v1423 = vld [vmem:[%s1389 + $0x108] sm:$0xff]
    %v1424 = vld [vmem:[%s1389 + $0x110] sm:$0xff]
    %v1425 = vld [vmem:[%s1389 + $0x118] sm:$0xff]
    %v1426 = vld [vmem:[%s1389 + $0x120] sm:$0xff]
    %v1427 = vld [vmem:[%s1389 + $0x128] sm:$0xff]
    %v1428 = vld [vmem:[%s1389 + $0x130] sm:$0xff]
    %v1429 = vld [vmem:[%s1389 + $0x138] sm:$0xff]
    %v1430 = vld [vmem:[%s1389 + $0x140] sm:$0xff]
    %v1431 = vld [vmem:[%s1389 + $0x148] sm:$0xff]
    %v1432 = vld [vmem:[%s1389 + $0x150] sm:$0xff]
    %v1433 = vld [vmem:[%s1389 + $0x158] sm:$0xff]
    %v1434 = vld [vmem:[%s1389 + $0x160] sm:$0xff]
    %v1435 = vld [vmem:[%s1389 + $0x168] sm:$0xff]
    %v1436 = vld [vmem:[%s1389 + $0x170] sm:$0xff]
    %v1437 = vld [vmem:[%s1389 + $0x178] sm:$0xff]
    %v1438 = vld [vmem:[%s1389 + $0x180] sm:$0xff]
    %v1439 = vld [vmem:[%s1389 + $0x188] sm:$0xff]
    %v1440 = vld [vmem:[%s1389 + $0x190] sm:$0xff]
    %v1441 = vld [vmem:[%s1389 + $0x198] sm:$0xff]
    %v1442 = vld [vmem:[%s1389 + $0x1a0] sm:$0xff]
    %v1443 = vld [vmem:[%s1389 + $0x1a8] sm:$0xff]
    %v1444 = vld [vmem:[%s1389 + $0x1b0] sm:$0xff]
    %v1445 = vld [vmem:[%s1389 + $0x1b8] sm:$0xff]
    %v1446 = vld [vmem:[%s1389 + $0x1c0] sm:$0xff]
    %v1447 = vld [vmem:[%s1389 + $0x1c8] sm:$0xff]
    %v1448 = vld [vmem:[%s1389 + $0x1d0] sm:$0xff]
    %v1449 = vld [vmem:[%s1389 + $0x1d8] sm:$0xff]
    %v1450 = vld [vmem:[%s1389 + $0x1e0] sm:$0xff]
    %v1451 = vld [vmem:[%s1389 + $0x1e8] sm:$0xff]
    %v1452 = vld [vmem:[%s1389 + $0x1f0] sm:$0xff]
    %v1453 = vld [vmem:[%s1389 + $0x1f8] sm:$0xff]
    %v1454 = vld [vmem:[#allocation7] sm:$0xff]
    %v1455 = vld [vmem:[#allocation7 + $0x8] sm:$0xff]
    %v1456 = vld [vmem:[#allocation7 + $0x10] sm:$0xff]
    %v1457 = vld [vmem:[#allocation7 + $0x18] sm:$0xff]
    %v1458 = vld [vmem:[#allocation7 + $0x20] sm:$0xff]
    %v1459 = vld [vmem:[#allocation7 + $0x28] sm:$0xff]
    %v1460 = vld [vmem:[#allocation7 + $0x30] sm:$0xff]
    %v1461 = vld [vmem:[#allocation7 + $0x38] sm:$0xff]
    %v1462 = vld [vmem:[#allocation7 + $0x40] sm:$0xff]
    %v1463 = vld [vmem:[#allocation7 + $0x48] sm:$0xff]
    %v1464 = vld [vmem:[#allocation7 + $0x50] sm:$0xff]
    %v1465 = vld [vmem:[#allocation7 + $0x58] sm:$0xff]
    %v1466 = vld [vmem:[#allocation7 + $0x60] sm:$0xff]
    %v1467 = vld [vmem:[#allocation7 + $0x68] sm:$0xff]
    %v1468 = vld [vmem:[#allocation7 + $0x70] sm:$0xff]
    %v1469 = vld [vmem:[#allocation7 + $0x78] sm:$0xff]
    %v1470 = vld [vmem:[#allocation7 + $0x80] sm:$0xff]
    %v1471 = vld [vmem:[#allocation7 + $0x88] sm:$0xff]
    %v1472 = vld [vmem:[#allocation7 + $0x90] sm:$0xff]
    %v1473 = vld [vmem:[#allocation7 + $0x98] sm:$0xff]
    %v1474 = vld [vmem:[#allocation7 + $0xa0] sm:$0xff]
    %v1475 = vld [vmem:[#allocation7 + $0xa8] sm:$0xff]
    %v1476 = vld [vmem:[#allocation7 + $0xb0] sm:$0xff]
    %v1477 = vld [vmem:[#allocation7 + $0xb8] sm:$0xff]
    %v1478 = vld [vmem:[#allocation7 + $0xc0] sm:$0xff]
    %v1479 = vld [vmem:[#allocation7 + $0xc8] sm:$0xff]
    %v1480 = vld [vmem:[#allocation7 + $0xd0] sm:$0xff]
    %v1481 = vld [vmem:[#allocation7 + $0xd8] sm:$0xff]
    %v1482 = vld [vmem:[#allocation7 + $0xe0] sm:$0xff]
    %v1483 = vld [vmem:[#allocation7 + $0xe8] sm:$0xff]
    %v1484 = vld [vmem:[#allocation7 + $0xf0] sm:$0xff]
    %v1485 = vld [vmem:[#allocation7 + $0xf8] sm:$0xff]
    %v1486 = vld [vmem:[#allocation7 + $0x100] sm:$0xff]
    %v1487 = vld [vmem:[#allocation7 + $0x108] sm:$0xff]
    %v1488 = vld [vmem:[#allocation7 + $0x110] sm:$0xff]
    %v1489 = vld [vmem:[#allocation7 + $0x118] sm:$0xff]
    %v1490 = vld [vmem:[#allocation7 + $0x120] sm:$0xff]
    %v1491 = vld [vmem:[#allocation7 + $0x128] sm:$0xff]
    %v1492 = vld [vmem:[#allocation7 + $0x130] sm:$0xff]
    %v1493 = vld [vmem:[#allocation7 + $0x138] sm:$0xff]
    %v1494 = vld [vmem:[#allocation7 + $0x140] sm:$0xff]
    %v1495 = vld [vmem:[#allocation7 + $0x148] sm:$0xff]
    %v1496 = vld [vmem:[#allocation7 + $0x150] sm:$0xff]
    %v1497 = vld [vmem:[#allocation7 + $0x158] sm:$0xff]
    %v1498 = vld [vmem:[#allocation7 + $0x160] sm:$0xff]
    %v1499 = vld [vmem:[#allocation7 + $0x168] sm:$0xff]
    %v1500 = vld [vmem:[#allocation7 + $0x170] sm:$0xff]
    %v1501 = vld [vmem:[#allocation7 + $0x178] sm:$0xff]
    %v1502 = vld [vmem:[#allocation7 + $0x180] sm:$0xff]
    %v1503 = vld [vmem:[#allocation7 + $0x188] sm:$0xff]
    %v1504 = vld [vmem:[#allocation7 + $0x190] sm:$0xff]
    %v1505 = vld [vmem:[#allocation7 + $0x198] sm:$0xff]
    %v1506 = vld [vmem:[#allocation7 + $0x1a0] sm:$0xff]
    %v1507 = vld [vmem:[#allocation7 + $0x1a8] sm:$0xff]
    %v1508 = vld [vmem:[#allocation7 + $0x1b0] sm:$0xff]
    %v1509 = vld [vmem:[#allocation7 + $0x1b8] sm:$0xff]
    %v1510 = vld [vmem:[#allocation7 + $0x1c0] sm:$0xff]
    %v1511 = vld [vmem:[#allocation7 + $0x1c8] sm:$0xff]
    %v1512 = vld [vmem:[#allocation7 + $0x1d0] sm:$0xff]
    %v1513 = vld [vmem:[#allocation7 + $0x1d8] sm:$0xff]
    %v1514 = vld [vmem:[#allocation7 + $0x1e0] sm:$0xff]
    %v1515 = vld [vmem:[#allocation7 + $0x1e8] sm:$0xff]
    %v1516 = vld [vmem:[#allocation7 + $0x1f0] sm:$0xff]
    %v1517 = vld [vmem:[#allocation7 + $0x1f8] sm:$0xff]
    %v1518 = vld [vmem:[#allocation2] sm:$0xff]
    %v1519 = vld [vmem:[#allocation2 + $0x8] sm:$0xff]
    %v1520 = vld [vmem:[#allocation2 + $0x10] sm:$0xff]
    %v1521 = vld [vmem:[#allocation2 + $0x18] sm:$0xff]
    %v1522 = vld [vmem:[#allocation2 + $0x20] sm:$0xff]
    %v1523 = vld [vmem:[#allocation2 + $0x28] sm:$0xff]
    %v1524 = vld [vmem:[#allocation2 + $0x30] sm:$0xff]
    %v1525 = vld [vmem:[#allocation2 + $0x38] sm:$0xff]
    %v1526 = vld [vmem:[%s3] sm:$0xf]
    %v1528 = vlaneseq
    %v1529 = vshrl.u32 %v1528, 7
    %v1530 = vsub.s32 0, %v1529
    %v1531 = vrot.slane %v1526, %v1530
    %v1532 = vlaneseq
    %v1533 = vshrl.u32 %v1532, 7
    %v1534 = vsub.s32 1, %v1533
    %v1535 = vrot.slane %v1526, %v1534
    %v1536 = vlaneseq
    %v1537 = vshrl.u32 %v1536, 7
    %v1538 = vsub.s32 2, %v1537
    %v1539 = vrot.slane %v1526, %v1538
    %v1540 = vlaneseq
    %v1541 = vshrl.u32 %v1540, 7
    %v1542 = vsub.s32 3, %v1541
    %v1543 = vrot.slane %v1526, %v1542
    %1548 = vmatprep.subr.mxu0 %v1455
    %1549 = vmatpush1.msra.mxu0 %v1454
    %1550 = vmatprep.subr.mxu0 %v1459
    %1551 = vmatpush1.msra.mxu0 %v1458
    %1552 = vmatprep.subr.mxu0 %v1463
    %1553 = vmatpush1.msra.mxu0 %v1462
    %1554 = vmatprep.subr.mxu0 %v1467
    %1555 = vmatpush1.msra.mxu0 %v1466
    %1556 = vmatprep.subr.mxu0 %v1471
    %1557 = vmatpush1.msra.mxu0 %v1470
    %1558 = vmatprep.subr.mxu0 %v1475
    %1559 = vmatpush1.msra.mxu0 %v1474
    %1560 = vmatprep.subr.mxu0 %v1479
    %1561 = vmatpush1.msra.mxu0 %v1478
    %1562 = vmatprep.subr.mxu0 %v1483
    %1563 = vmatpush1.msra.mxu0 %v1482
    %1564 = vmatprep.subr.mxu0 %v1487
    %1565 = vmatpush1.msra.mxu0 %v1486
    %1566 = vmatprep.subr.mxu0 %v1491
    %1567 = vmatpush1.msra.mxu0 %v1490
    %1568 = vmatprep.subr.mxu0 %v1495
    %1569 = vmatpush1.msra.mxu0 %v1494
    %1570 = vmatprep.subr.mxu0 %v1499
    %1571 = vmatpush1.msra.mxu0 %v1498
    %1572 = vmatprep.subr.mxu0 %v1503
    %1573 = vmatpush1.msra.mxu0 %v1502
    %1574 = vmatprep.subr.mxu0 %v1507
    %1575 = vmatpush1.msra.mxu0 %v1506
    %1576 = vmatprep.subr.mxu0 %v1511
    %1577 = vmatpush1.msra.mxu0 %v1510
    %1578 = vmatprep.subr.mxu0 %v1515
    %1579 = vmatpush1.msra.mxu0 %v1514
    %1580 = vmatprep.subr.mxu0 0.0
    %1581 = vmatpush1.msra.mxu0 0.0
    %1582 = vmatprep.subr.mxu0 0.0
    %1583 = vmatpush1.msra.mxu0 0.0
    %1584 = vmatprep.subr.mxu0 0.0
    %1585 = vmatpush1.msra.mxu0 0.0
    %1586 = vmatprep.subr.mxu0 0.0
    %1587 = vmatpush1.msra.mxu0 0.0
    %1588 = vmatprep.subr.mxu0 0.0
    %1589 = vmatpush1.msra.mxu0 0.0
    %1590 = vmatprep.subr.mxu0 0.0
    %1591 = vmatpush1.msra.mxu0 0.0
    %1592 = vmatprep.subr.mxu0 0.0
    %1593 = vmatpush1.msra.mxu0 0.0
    %1594 = vmatprep.subr.mxu0 0.0
    %1595 = vmatpush1.msra.mxu0 0.0
    %1596 = vmatprep.subr.mxu0 0.0
    %1597 = vmatpush1.msra.mxu0 0.0
    %1598 = vmatprep.subr.mxu0 0.0
    %1599 = vmatpush1.msra.mxu0 0.0
    %1600 = vmatprep.subr.mxu0 0.0
    %1601 = vmatpush1.msra.mxu0 0.0
    %1602 = vmatprep.subr.mxu0 0.0
    %1603 = vmatpush1.msra.mxu0 0.0
    %1604 = vmatprep.subr.mxu0 0.0
    %1605 = vmatpush1.msra.mxu0 0.0
    %1606 = vmatprep.subr.mxu0 0.0
    %1607 = vmatpush1.msra.mxu0 0.0
    %1608 = vmatprep.subr.mxu0 0.0
    %1609 = vmatpush1.msra.mxu0 0.0
    %1610 = vmatprep.subr.mxu0 0.0
    %1611 = vmatpush1.msra.mxu0 0.0
    %1612 = vmatprep.mubr.f32.mxu0 0.0
    %1613 = vmatmul.mubr.f32.gmra.mrb[0].mxu0 %v1518
    %v1614 = vpop.f32.mrb[0].mxu0
    %v1615 = vadd.f32 %v1531, %v1614
    %v1616 = vpop.f32.mrb[0].mxu0
    %v1617 = vadd.f32 %v1535, %v1616
    %1618 = vmatprep.mubr.f32.mxu0 0.0
    %1619 = vmatmul.mubr.f32.gmra.mrb[0].mxu0 %v1519
    %v1620 = vpop.f32.mrb[0].mxu0
    %v1621 = vadd.f32 %v1531, %v1620
    %v1622 = vpop.f32.mrb[0].mxu0
    %v1623 = vadd.f32 %v1535, %v1622
    %1624 = vmatprep.mubr.f32.mxu0 0.0
    %1625 = vmatmul.mubr.f32.gmra.mrb[0].mxu0 %v1520
    %v1626 = vpop.f32.mrb[0].mxu0
    %v1627 = vadd.f32 %v1531, %v1626
    %v1628 = vpop.f32.mrb[0].mxu0
    %v1629 = vadd.f32 %v1535, %v1628
    %1630 = vmatprep.mubr.f32.mxu0 0.0
    %1631 = vmatmul.mubr.f32.gmra.mrb[0].mxu0 %v1521
    %v1632 = vpop.f32.mrb[0].mxu0
    %v1633 = vadd.f32 %v1531, %v1632
    %v1634 = vpop.f32.mrb[0].mxu0
    %v1635 = vadd.f32 %v1535, %v1634
    %1636 = vmatprep.mubr.f32.mxu0 0.0
    %1637 = vmatmul.mubr.f32.gmra.mrb[0].mxu0 %v1522
    %v1638 = vpop.f32.mrb[0].mxu0
    %v1639 = vadd.f32 %v1531, %v1638
    %v1640 = vpop.f32.mrb[0].mxu0
    %v1641 = vadd.f32 %v1535, %v1640
    %1642 = vmatprep.mubr.f32.mxu0 0.0
    %1643 = vmatmul.mubr.f32.gmra.mrb[0].mxu0 %v1523
    %v1644 = vpop.f32.mrb[0].mxu0
    %v1645 = vadd.f32 %v1531, %v1644
    %v1646 = vpop.f32.mrb[0].mxu0
    %v1647 = vadd.f32 %v1535, %v1646
    %1648 = vmatprep.mubr.f32.mxu0 0.0
    %1649 = vmatmul.mubr.f32.gmra.mrb[0].mxu0 %v1524
    %v1650 = vpop.f32.mrb[0].mxu0
    %v1651 = vadd.f32 %v1531, %v1650
    %v1652 = vpop.f32.mrb[0].mxu0
    %v1653 = vadd.f32 %v1535, %v1652
    %1654 = vmatprep.mubr.f32.mxu0 0.0
    %1655 = vmatmul.mubr.f32.gmra.mrb[0].mxu0 %v1525
    %v1656 = vpop.f32.mrb[0].mxu0
    %v1657 = vadd.f32 %v1531, %v1656
    %v1658 = vpop.f32.mrb[0].mxu0
    %v1659 = vadd.f32 %v1535, %v1658
    %1660 = vdwg.mxu0
    %1661 = vmatprep.subr.mxu0 %v1457
    %1662 = vmatpush1.msra.mxu0 %v1456
    %1663 = vmatprep.subr.mxu0 %v1461
    %1664 = vmatpush1.msra.mxu0 %v1460
    %1665 = vmatprep.subr.mxu0 %v1465
    %1666 = vmatpush1.msra.mxu0 %v1464
    %1667 = vmatprep.subr.mxu0 %v1469
    %1668 = vmatpush1.msra.mxu0 %v1468
    %1669 = vmatprep.subr.mxu0 %v1473
    %1670 = vmatpush1.msra.mxu0 %v1472
    %1671 = vmatprep.subr.mxu0 %v1477
    %1672 = vmatpush1.msra.mxu0 %v1476
    %1673 = vmatprep.subr.mxu0 %v1481
    %1674 = vmatpush1.msra.mxu0 %v1480
    %1675 = vmatprep.subr.mxu0 %v1485
    %1676 = vmatpush1.msra.mxu0 %v1484
    %1677 = vmatprep.subr.mxu0 %v1489
    %1678 = vmatpush1.msra.mxu0 %v1488
    %1679 = vmatprep.subr.mxu0 %v1493
    %1680 = vmatpush1.msra.mxu0 %v1492
    %1681 = vmatprep.subr.mxu0 %v1497
    %1682 = vmatpush1.msra.mxu0 %v1496
    %1683 = vmatprep.subr.mxu0 %v1501
    %1684 = vmatpush1.msra.mxu0 %v1500
    %1685 = vmatprep.subr.mxu0 %v1505
    %1686 = vmatpush1.msra.mxu0 %v1504
    %1687 = vmatprep.subr.mxu0 %v1509
    %1688 = vmatpush1.msra.mxu0 %v1508
    %1689 = vmatprep.subr.mxu0 %v1513
    %1690 = vmatpush1.msra.mxu0 %v1512
    %1691 = vmatprep.subr.mxu0 %v1517
    %1692 = vmatpush1.msra.mxu0 %v1516
    %1693 = vmatprep.subr.mxu0 0.0
    %1694 = vmatpush1.msra.mxu0 0.0
    %1695 = vmatprep.subr.mxu0 0.0
    %1696 = vmatpush1.msra.mxu0 0.0
    %1697 = vmatprep.subr.mxu0 0.0
    %1698 = vmatpush1.msra.mxu0 0.0
    %1699 = vmatprep.subr.mxu0 0.0
    %1700 = vmatpush1.msra.mxu0 0.0
    %1701 = vmatprep.subr.mxu0 0.0
    %1702 = vmatpush1.msra.mxu0 0.0
    %1703 = vmatprep.subr.mxu0 0.0
    %1704 = vmatpush1.msra.mxu0 0.0
    %1705 = vmatprep.subr.mxu0 0.0
    %1706 = vmatpush1.msra.mxu0 0.0
    %1707 = vmatprep.subr.mxu0 0.0
    %1708 = vmatpush1.msra.mxu0 0.0
    %1709 = vmatprep.subr.mxu0 0.0
    %1710 = vmatpush1.msra.mxu0 0.0
    %1711 = vmatprep.subr.mxu0 0.0
    %1712 = vmatpush1.msra.mxu0 0.0
    %1713 = vmatprep.subr.mxu0 0.0
    %1714 = vmatpush1.msra.mxu0 0.0
    %1715 = vmatprep.subr.mxu0 0.0
    %1716 = vmatpush1.msra.mxu0 0.0
    %1717 = vmatprep.subr.mxu0 0.0
    %1718 = vmatpush1.msra.mxu0 0.0
    %1719 = vmatprep.subr.mxu0 0.0
    %1720 = vmatpush1.msra.mxu0 0.0
    %1721 = vmatprep.subr.mxu0 0.0
    %1722 = vmatpush1.msra.mxu0 0.0
    %1723 = vmatprep.subr.mxu0 0.0
    %1724 = vmatpush1.msra.mxu0 0.0
    %1725 = vmatprep.mubr.f32.mxu0 0.0
    %1726 = vmatmul.mubr.f32.gmra.mrb[0].mxu0 %v1518
    %v1727 = vpop.f32.mrb[0].mxu0
    %v1728 = vadd.f32 %v1539, %v1727
    %v1729 = vpop.f32.mrb[0].mxu0
    %v1730 = vadd.f32 %v1543, %v1729
    %1731 = vmatprep.mubr.f32.mxu0 0.0
    %1732 = vmatmul.mubr.f32.gmra.mrb[0].mxu0 %v1519
    %v1733 = vpop.f32.mrb[0].mxu0
    %v1734 = vadd.f32 %v1539, %v1733
    %v1735 = vpop.f32.mrb[0].mxu0
    %v1736 = vadd.f32 %v1543, %v1735
    %1737 = vmatprep.mubr.f32.mxu0 0.0
    %1738 = vmatmul.mubr.f32.gmra.mrb[0].mxu0 %v1520
    %v1739 = vpop.f32.mrb[0].mxu0
    %v1740 = vadd.f32 %v1539, %v1739
    %v1741 = vpop.f32.mrb[0].mxu0
    %v1742 = vadd.f32 %v1543, %v1741
    %1743 = vmatprep.mubr.f32.mxu0 0.0
    %1744 = vmatmul.mubr.f32.gmra.mrb[0].mxu0 %v1521
    %v1745 = vpop.f32.mrb[0].mxu0
    %v1746 = vadd.f32 %v1539, %v1745
    %v1747 = vpop.f32.mrb[0].mxu0
    %v1748 = vadd.f32 %v1543, %v1747
    %1749 = vmatprep.mubr.f32.mxu0 0.0
    %1750 = vmatmul.mubr.f32.gmra.mrb[0].mxu0 %v1522
    %v1751 = vpop.f32.mrb[0].mxu0
    %v1752 = vadd.f32 %v1539, %v1751
    %v1753 = vpop.f32.mrb[0].mxu0
    %v1754 = vadd.f32 %v1543, %v1753
    %1755 = vmatprep.mubr.f32.mxu0 0.0
    %1756 = vmatmul.mubr.f32.gmra.mrb[0].mxu0 %v1523
    %v1757 = vpop.f32.mrb[0].mxu0
    %v1758 = vadd.f32 %v1539, %v1757
    %v1759 = vpop.f32.mrb[0].mxu0
    %v1760 = vadd.f32 %v1543, %v1759
    %1761 = vmatprep.mubr.f32.mxu0 0.0
    %1762 = vmatmul.mubr.f32.gmra.mrb[0].mxu0 %v1524
    %v1763 = vpop.f32.mrb[0].mxu0
    %v1764 = vadd.f32 %v1539, %v1763
    %v1765 = vpop.f32.mrb[0].mxu0
    %v1766 = vadd.f32 %v1543, %v1765
    %1767 = vmatprep.mubr.f32.mxu0 0.0
    %1768 = vmatmul.mubr.f32.gmra.mrb[0].mxu0 %v1525
    %v1769 = vpop.f32.mrb[0].mxu0
    %v1770 = vadd.f32 %v1539, %v1769
    %v1771 = vpop.f32.mrb[0].mxu0
    %v1772 = vadd.f32 %v1543, %v1771
    %1773 = vdwg.mxu0
    %1774 = vst [vmem:[#allocation3] sm:$0xff] %v1615
    %1775 = vst [vmem:[#allocation3 + $0x8] sm:$0xff] %v1617
    %1776 = vst [vmem:[#allocation3 + $0x10] sm:$0xff] %v1728
    %1777 = vst [vmem:[#allocation3 + $0x18] sm:$0xff] %v1730
    %1778 = vst [vmem:[#allocation3 + $0x20] sm:$0xff] %v1621
    %1779 = vst [vmem:[#allocation3 + $0x28] sm:$0xff] %v1623
    %1780 = vst [vmem:[#allocation3 + $0x30] sm:$0xff] %v1734
    %1781 = vst [vmem:[#allocation3 + $0x38] sm:$0xff] %v1736
    %1782 = vst [vmem:[#allocation3 + $0x40] sm:$0xff] %v1627
    %1783 = vst [vmem:[#allocation3 + $0x48] sm:$0xff] %v1629
    %1784 = vst [vmem:[#allocation3 + $0x50] sm:$0xff] %v1740
    %1785 = vst [vmem:[#allocation3 + $0x58] sm:$0xff] %v1742
    %1786 = vst [vmem:[#allocation3 + $0x60] sm:$0xff] %v1633
    %1787 = vst [vmem:[#allocation3 + $0x68] sm:$0xff] %v1635
    %1788 = vst [vmem:[#allocation3 + $0x70] sm:$0xff] %v1746
    %1789 = vst [vmem:[#allocation3 + $0x78] sm:$0xff] %v1748
    %1790 = vst [vmem:[#allocation3 + $0x80] sm:$0xff] %v1639
    %1791 = vst [vmem:[#allocation3 + $0x88] sm:$0xff] %v1641
    %1792 = vst [vmem:[#allocation3 + $0x90] sm:$0xff] %v1752
    %1793 = vst [vmem:[#allocation3 + $0x98] sm:$0xff] %v1754
    %1794 = vst [vmem:[#allocation3 + $0xa0] sm:$0xff] %v1645
    %1795 = vst [vmem:[#allocation3 + $0xa8] sm:$0xff] %v1647
    %1796 = vst [vmem:[#allocation3 + $0xb0] sm:$0xff] %v1758
    %1797 = vst [vmem:[#allocation3 + $0xb8] sm:$0xff] %v1760
    %1798 = vst [vmem:[#allocation3 + $0xc0] sm:$0xff] %v1651
    %1799 = vst [vmem:[#allocation3 + $0xc8] sm:$0xff] %v1653
    %1800 = vst [vmem:[#allocation3 + $0xd0] sm:$0xff] %v1764
    %1801 = vst [vmem:[#allocation3 + $0xd8] sm:$0xff] %v1766
    %1802 = vst [vmem:[#allocation3 + $0xe0] sm:$0xff] %v1657
    %1803 = vst [vmem:[#allocation3 + $0xe8] sm:$0xff] %v1659
    %1804 = vst [vmem:[#allocation3 + $0xf0] sm:$0xff] %v1770
    %1805 = vst [vmem:[#allocation3 + $0xf8] sm:$0xff] %v1772
    %v1806 = vld [vmem:[#allocation3] sm:$0xff]
    %v1807 = vld [vmem:[#allocation3 + $0x10] sm:$0xff]
    %v1808 = vld [vmem:[#allocation3 + $0x18] sm:$0xff]
    %v1809 = vxor.u32 %v1806, 2147483648
    %v1810 = vmul.f32 %v1809, 1.442695
    %v1811 = vpow.pop %v1810
    %v1812 = vadd.f32 %v1811, 1.0
    %v1813 = vrcp.pop %v1812
    %v1814 = vmul.f32 1.0, %v1813
    %v1815 = vtanh.pop %v1807
    %v1816 = vmul.f32 %v1814, %v1815
    %v1817 = vxor.u32 %v1808, 2147483648
    %v1818 = vmul.f32 %v1817, 1.442695
    %v1819 = vpow.pop %v1818
    %v1820 = vadd.f32 %v1819, 1.0
    %v1821 = vrcp.pop %v1820
    %v1822 = vmul.f32 1.0, %v1821
    %v1823 = vtanh.pop %v1816
    %v1824 = vmul.f32 %v1822, %v1823
    %s1825 = smul.u32 1, 4
    %s1826 = smul.addr %s1825, 8
    %s1827 = scalar_lea.vmem [#allocation3], %s1826
    %v1828 = vld [vmem:[%s1827] sm:$0xff]
    %v1829 = vld [vmem:[%s1827 + $0x8] sm:$0xff]
    %v1830 = vld [vmem:[%s1827 + $0x10] sm:$0xff]
    %v1831 = vld [vmem:[%s1827 + $0x18] sm:$0xff]
    %1832 = vmatprep.subr.mxu0 %v1391
    %1833 = vmatpush1.msra.mxu0 %v1390
    %1834 = vmatprep.subr.mxu0 %v1395
    %1835 = vmatpush1.msra.mxu0 %v1394
    %1836 = vmatprep.subr.mxu0 %v1399
    %1837 = vmatpush1.msra.mxu0 %v1398
    %1838 = vmatprep.subr.mxu0 %v1403
    %1839 = vmatpush1.msra.mxu0 %v1402
    %1840 = vmatprep.subr.mxu0 %v1407
    %1841 = vmatpush1.msra.mxu0 %v1406
    %1842 = vmatprep.subr.mxu0 %v1411
    %1843 = vmatpush1.msra.mxu0 %v1410
    %1844 = vmatprep.subr.mxu0 %v1415
    %1845 = vmatpush1.msra.mxu0 %v1414
    %1846 = vmatprep.subr.mxu0 %v1419
    %1847 = vmatpush1.msra.mxu0 %v1418
    %1848 = vmatprep.subr.mxu0 %v1423
    %1849 = vmatpush1.msra.mxu0 %v1422
    %1850 = vmatprep.subr.mxu0 %v1427
    %1851 = vmatpush1.msra.mxu0 %v1426
    %1852 = vmatprep.subr.mxu0 %v1431
    %1853 = vmatpush1.msra.mxu0 %v1430
    %1854 = vmatprep.subr.mxu0 %v1435
    %1855 = vmatpush1.msra.mxu0 %v1434
    %1856 = vmatprep.subr.mxu0 %v1439
    %1857 = vmatpush1.msra.mxu0 %v1438
    %1858 = vmatprep.subr.mxu0 %v1443
    %1859 = vmatpush1.msra.mxu0 %v1442
    %1860 = vmatprep.subr.mxu0 %v1447
    %1861 = vmatpush1.msra.mxu0 %v1446
    %1862 = vmatprep.subr.mxu0 %v1451
    %1863 = vmatpush1.msra.mxu0 %v1450
    %1864 = vmatprep.subr.mxu0 0.0
    %1865 = vmatpush1.msra.mxu0 0.0
    %1866 = vmatprep.subr.mxu0 0.0
    %1867 = vmatpush1.msra.mxu0 0.0
    %1868 = vmatprep.subr.mxu0 0.0
    %1869 = vmatpush1.msra.mxu0 0.0
    %1870 = vmatprep.subr.mxu0 0.0
    %1871 = vmatpush1.msra.mxu0 0.0
    %1872 = vmatprep.subr.mxu0 0.0
    %1873 = vmatpush1.msra.mxu0 0.0
    %1874 = vmatprep.subr.mxu0 0.0
    %1875 = vmatpush1.msra.mxu0 0.0
    %1876 = vmatprep.subr.mxu0 0.0
    %1877 = vmatpush1.msra.mxu0 0.0
    %1878 = vmatprep.subr.mxu0 0.0
    %1879 = vmatpush1.msra.mxu0 0.0
    %1880 = vmatprep.subr.mxu0 0.0
    %1881 = vmatpush1.msra.mxu0 0.0
    %1882 = vmatprep.subr.mxu0 0.0
    %1883 = vmatpush1.msra.mxu0 0.0
    %1884 = vmatprep.subr.mxu0 0.0
    %1885 = vmatpush1.msra.mxu0 0.0
    %1886 = vmatprep.subr.mxu0 0.0
    %1887 = vmatpush1.msra.mxu0 0.0
    %1888 = vmatprep.subr.mxu0 0.0
    %1889 = vmatpush1.msra.mxu0 0.0
    %1890 = vmatprep.subr.mxu0 0.0
    %1891 = vmatpush1.msra.mxu0 0.0
    %1892 = vmatprep.subr.mxu0 0.0
    %1893 = vmatpush1.msra.mxu0 0.0
    %1894 = vmatprep.subr.mxu0 0.0
    %1895 = vmatpush1.msra.mxu0 0.0
    %1896 = vmatprep.mubr.f32.mxu0 0.0
    %1897 = vmatmul.mubr.f32.gmra.mrb[0].mxu0 %v1824
    %v1898 = vpop.f32.mrb[0].mxu0
    %v1899 = vadd.f32 0.0, %v1898
    %v1900 = vpop.f32.mrb[0].mxu0
    %v1901 = vadd.f32 0.0, %v1900
    %1902 = vdwg.mxu0
    %1903 = vmatprep.subr.mxu0 %v1393
    %1904 = vmatpush1.msra.mxu0 %v1392
    %1905 = vmatprep.subr.mxu0 %v1397
    %1906 = vmatpush1.msra.mxu0 %v1396
    %1907 = vmatprep.subr.mxu0 %v1401
    %1908 = vmatpush1.msra.mxu0 %v1400
    %1909 = vmatprep.subr.mxu0 %v1405
    %1910 = vmatpush1.msra.mxu0 %v1404
    %1911 = vmatprep.subr.mxu0 %v1409
    %1912 = vmatpush1.msra.mxu0 %v1408
    %1913 = vmatprep.subr.mxu0 %v1413
    %1914 = vmatpush1.msra.mxu0 %v1412
    %1915 = vmatprep.subr.mxu0 %v1417
    %1916 = vmatpush1.msra.mxu0 %v1416
    %1917 = vmatprep.subr.mxu0 %v1421
    %1918 = vmatpush1.msra.mxu0 %v1420
    %1919 = vmatprep.subr.mxu0 %v1425
    %1920 = vmatpush1.msra.mxu0 %v1424
    %1921 = vmatprep.subr.mxu0 %v1429
    %1922 = vmatpush1.msra.mxu0 %v1428
    %1923 = vmatprep.subr.mxu0 %v1433
    %1924 = vmatpush1.msra.mxu0 %v1432
    %1925 = vmatprep.subr.mxu0 %v1437
    %1926 = vmatpush1.msra.mxu0 %v1436
    %1927 = vmatprep.subr.mxu0 %v1441
    %1928 = vmatpush1.msra.mxu0 %v1440
    %1929 = vmatprep.subr.mxu0 %v1445
    %1930 = vmatpush1.msra.mxu0 %v1444
    %1931 = vmatprep.subr.mxu0 %v1449
    %1932 = vmatpush1.msra.mxu0 %v1448
    %1933 = vmatprep.subr.mxu0 %v1453
    %1934 = vmatpush1.msra.mxu0 %v1452
    %1935 = vmatprep.subr.mxu0 0.0
    %1936 = vmatpush1.msra.mxu0 0.0
    %1937 = vmatprep.subr.mxu0 0.0
    %1938 = vmatpush1.msra.mxu0 0.0
    %1939 = vmatprep.subr.mxu0 0.0
    %1940 = vmatpush1.msra.mxu0 0.0
    %1941 = vmatprep.subr.mxu0 0.0
    %1942 = vmatpush1.msra.mxu0 0.0
    %1943 = vmatprep.subr.mxu0 0.0
    %1944 = vmatpush1.msra.mxu0 0.0
    %1945 = vmatprep.subr.mxu0 0.0
    %1946 = vmatpush1.msra.mxu0 0.0
    %1947 = vmatprep.subr.mxu0 0.0
    %1948 = vmatpush1.msra.mxu0 0.0
    %1949 = vmatprep.subr.mxu0 0.0
    %1950 = vmatpush1.msra.mxu0 0.0
    %1951 = vmatprep.subr.mxu0 0.0
    %1952 = vmatpush1.msra.mxu0 0.0
    %1953 = vmatprep.subr.mxu0 0.0
    %1954 = vmatpush1.msra.mxu0 0.0
    %1955 = vmatprep.subr.mxu0 0.0
    %1956 = vmatpush1.msra.mxu0 0.0
    %1957 = vmatprep.subr.mxu0 0.0
    %1958 = vmatpush1.msra.mxu0 0.0
    %1959 = vmatprep.subr.mxu0 0.0
    %1960 = vmatpush1.msra.mxu0 0.0
    %1961 = vmatprep.subr.mxu0 0.0
    %1962 = vmatpush1.msra.mxu0 0.0
    %1963 = vmatprep.subr.mxu0 0.0
    %1964 = vmatpush1.msra.mxu0 0.0
    %1965 = vmatprep.subr.mxu0 0.0
    %1966 = vmatpush1.msra.mxu0 0.0
    %1967 = vmatprep.mubr.f32.mxu0 0.0
    %1968 = vmatmul.mubr.f32.gmra.mrb[0].mxu0 %v1824
    %v1969 = vpop.f32.mrb[0].mxu0
    %v1970 = vadd.f32 0.0, %v1969
    %v1971 = vpop.f32.mrb[0].mxu0
    %v1972 = vadd.f32 0.0, %v1971
    %1973 = vdwg.mxu0
    %v1974 = vadd.f32 %v1828, %v1899
    %v1975 = vadd.f32 %v1829, %v1901
    %v1976 = vadd.f32 %v1830, %v1970
    %v1977 = vadd.f32 %v1831, %v1972
    %v1978 = vxor.u32 %v1974, 2147483648
    %v1979 = vxor.u32 %v1975, 2147483648
    %v1980 = vmul.f32 %v1978, 1.442695
    %v1981 = vpow.pop %v1980
    %v1982 = vmul.f32 %v1979, 1.442695
    %v1983 = vpow.pop %v1982
    %v1984 = vadd.f32 %v1981, 1.0
    %v1985 = vadd.f32 %v1983, 1.0
    %v1986 = vrcp.pop %v1984
    %v1987 = vmul.f32 1.0, %v1986
    %v1988 = vrcp.pop %v1985
    %v1989 = vmul.f32 1.0, %v1988
    %v1990 = vtanh.pop %v1976
    %v1991 = vxor.u32 %v1977, 2147483648
    %v1992 = vmul.f32 %v1991, 1.442695
    %v1993 = vpow.pop %v1992
    %v1994 = vadd.f32 %v1993, 1.0
    %v1995 = vrcp.pop %v1994
    %v1996 = vmul.f32 1.0, %v1995
    %v1997 = vmul.f32 %v1989, %v1816
    %v1998 = vmul.f32 %v1987, %v1990
    %v1999 = vadd.f32 %v1997, %v1998
    %v2000 = vtanh.pop %v1999
    %v2001 = vmul.f32 %v1996, %v2000
    %s2002 = smul.u32 2, 4
    %s2003 = smul.addr %s2002, 8
    %s2004 = scalar_lea.vmem [#allocation3], %s2003
    %v2005 = vld [vmem:[%s2004] sm:$0xff]
    %v2006 = vld [vmem:[%s2004 + $0x8] sm:$0xff]
    %v2007 = vld [vmem:[%s2004 + $0x10] sm:$0xff]
    %v2008 = vld [vmem:[%s2004 + $0x18] sm:$0xff]
    %2009 = vmatprep.subr.mxu0 %v1391
    %2010 = vmatpush1.msra.mxu0 %v1390
    %2011 = vmatprep.subr.mxu0 %v1395
    %2012 = vmatpush1.msra.mxu0 %v1394
    %2013 = vmatprep.subr.mxu0 %v1399
    %2014 = vmatpush1.msra.mxu0 %v1398
    %2015 = vmatprep.subr.mxu0 %v1403
    %2016 = vmatpush1.msra.mxu0 %v1402
    %2017 = vmatprep.subr.mxu0 %v1407
    %2018 = vmatpush1.msra.mxu0 %v1406
    %2019 = vmatprep.subr.mxu0 %v1411
    %2020 = vmatpush1.msra.mxu0 %v1410
    %2021 = vmatprep.subr.mxu0 %v1415
    %2022 = vmatpush1.msra.mxu0 %v1414
    %2023 = vmatprep.subr.mxu0 %v1419
    %2024 = vmatpush1.msra.mxu0 %v1418
    %2025 = vmatprep.subr.mxu0 %v1423
    %2026 = vmatpush1.msra.mxu0 %v1422
    %2027 = vmatprep.subr.mxu0 %v1427
    %2028 = vmatpush1.msra.mxu0 %v1426
    %2029 = vmatprep.subr.mxu0 %v1431
    %2030 = vmatpush1.msra.mxu0 %v1430
    %2031 = vmatprep.subr.mxu0 %v1435
    %2032 = vmatpush1.msra.mxu0 %v1434
    %2033 = vmatprep.subr.mxu0 %v1439
    %2034 = vmatpush1.msra.mxu0 %v1438
    %2035 = vmatprep.subr.mxu0 %v1443
    %2036 = vmatpush1.msra.mxu0 %v1442
    %2037 = vmatprep.subr.mxu0 %v1447
    %2038 = vmatpush1.msra.mxu0 %v1446
    %2039 = vmatprep.subr.mxu0 %v1451
    %2040 = vmatpush1.msra.mxu0 %v1450
    %2041 = vmatprep.subr.mxu0 0.0
    %2042 = vmatpush1.msra.mxu0 0.0
    %2043 = vmatprep.subr.mxu0 0.0
    %2044 = vmatpush1.msra.mxu0 0.0
    %2045 = vmatprep.subr.mxu0 0.0
    %2046 = vmatpush1.msra.mxu0 0.0
    %2047 = vmatprep.subr.mxu0 0.0
    %2048 = vmatpush1.msra.mxu0 0.0
    %2049 = vmatprep.subr.mxu0 0.0
    %2050 = vmatpush1.msra.mxu0 0.0
    %2051 = vmatprep.subr.mxu0 0.0
    %2052 = vmatpush1.msra.mxu0 0.0
    %2053 = vmatprep.subr.mxu0 0.0
    %2054 = vmatpush1.msra.mxu0 0.0
    %2055 = vmatprep.subr.mxu0 0.0
    %2056 = vmatpush1.msra.mxu0 0.0
    %2057 = vmatprep.subr.mxu0 0.0
    %2058 = vmatpush1.msra.mxu0 0.0
    %2059 = vmatprep.subr.mxu0 0.0
    %2060 = vmatpush1.msra.mxu0 0.0
    %2061 = vmatprep.subr.mxu0 0.0
    %2062 = vmatpush1.msra.mxu0 0.0
    %2063 = vmatprep.subr.mxu0 0.0
    %2064 = vmatpush1.msra.mxu0 0.0
    %2065 = vmatprep.subr.mxu0 0.0
    %2066 = vmatpush1.msra.mxu0 0.0
    %2067 = vmatprep.subr.mxu0 0.0
    %2068 = vmatpush1.msra.mxu0 0.0
    %2069 = vmatprep.subr.mxu0 0.0
    %2070 = vmatpush1.msra.mxu0 0.0
    %2071 = vmatprep.subr.mxu0 0.0
    %2072 = vmatpush1.msra.mxu0 0.0
    %2073 = vmatprep.mubr.f32.mxu0 0.0
    %2074 = vmatmul.mubr.f32.gmra.mrb[0].mxu0 %v2001
    %v2075 = vpop.f32.mrb[0].mxu0
    %v2076 = vadd.f32 0.0, %v2075
    %v2077 = vpop.f32.mrb[0].mxu0
    %v2078 = vadd.f32 0.0, %v2077
    %2079 = vdwg.mxu0
    %2080 = vmatprep.subr.mxu0 %v1393
    %2081 = vmatpush1.msra.mxu0 %v1392
    %2082 = vmatprep.subr.mxu0 %v1397
    %2083 = vmatpush1.msra.mxu0 %v1396
    %2084 = vmatprep.subr.mxu0 %v1401
    %2085 = vmatpush1.msra.mxu0 %v1400
    %2086 = vmatprep.subr.mxu0 %v1405
    %2087 = vmatpush1.msra.mxu0 %v1404
    %2088 = vmatprep.subr.mxu0 %v1409
    %2089 = vmatpush1.msra.mxu0 %v1408
    %2090 = vmatprep.subr.mxu0 %v1413
    %2091 = vmatpush1.msra.mxu0 %v1412
    %2092 = vmatprep.subr.mxu0 %v1417
    %2093 = vmatpush1.msra.mxu0 %v1416
    %2094 = vmatprep.subr.mxu0 %v1421
    %2095 = vmatpush1.msra.mxu0 %v1420
    %2096 = vmatprep.subr.mxu0 %v1425
    %2097 = vmatpush1.msra.mxu0 %v1424
    %2098 = vmatprep.subr.mxu0 %v1429
    %2099 = vmatpush1.msra.mxu0 %v1428
    %2100 = vmatprep.subr.mxu0 %v1433
    %2101 = vmatpush1.msra.mxu0 %v1432
    %2102 = vmatprep.subr.mxu0 %v1437
    %2103 = vmatpush1.msra.mxu0 %v1436
    %2104 = vmatprep.subr.mxu0 %v1441
    %2105 = vmatpush1.msra.mxu0 %v1440
    %2106 = vmatprep.subr.mxu0 %v1445
    %2107 = vmatpush1.msra.mxu0 %v1444
    %2108 = vmatprep.subr.mxu0 %v1449
    %2109 = vmatpush1.msra.mxu0 %v1448
    %2110 = vmatprep.subr.mxu0 %v1453
    %2111 = vmatpush1.msra.mxu0 %v1452
    %2112 = vmatprep.subr.mxu0 0.0
    %2113 = vmatpush1.msra.mxu0 0.0
    %2114 = vmatprep.subr.mxu0 0.0
    %2115 = vmatpush1.msra.mxu0 0.0
    %2116 = vmatprep.subr.mxu0 0.0
    %2117 = vmatpush1.msra.mxu0 0.0
    %2118 = vmatprep.subr.mxu0 0.0
    %2119 = vmatpush1.msra.mxu0 0.0
    %2120 = vmatprep.subr.mxu0 0.0
    %2121 = vmatpush1.msra.mxu0 0.0
    %2122 = vmatprep.subr.mxu0 0.0
    %2123 = vmatpush1.msra.mxu0 0.0
    %2124 = vmatprep.subr.mxu0 0.0
    %2125 = vmatpush1.msra.mxu0 0.0
    %2126 = vmatprep.subr.mxu0 0.0
    %2127 = vmatpush1.msra.mxu0 0.0
    %2128 = vmatprep.subr.mxu0 0.0
    %2129 = vmatpush1.msra.mxu0 0.0
    %2130 = vmatprep.subr.mxu0 0.0
    %2131 = vmatpush1.msra.mxu0 0.0
    %2132 = vmatprep.subr.mxu0 0.0
    %2133 = vmatpush1.msra.mxu0 0.0
    %2134 = vmatprep.subr.mxu0 0.0
    %2135 = vmatpush1.msra.mxu0 0.0
    %2136 = vmatprep.subr.mxu0 0.0
    %2137 = vmatpush1.msra.mxu0 0.0
    %2138 = vmatprep.subr.mxu0 0.0
    %2139 = vmatpush1.msra.mxu0 0.0
    %2140 = vmatprep.subr.mxu0 0.0
    %2141 = vmatpush1.msra.mxu0 0.0
    %2142 = vmatprep.subr.mxu0 0.0
    %2143 = vmatpush1.msra.mxu0 0.0
    %2144 = vmatprep.mubr.f32.mxu0 0.0
    %2145 = vmatmul.mubr.f32.gmra.mrb[0].mxu0 %v2001
    %v2146 = vpop.f32.mrb[0].mxu0
    %v2147 = vadd.f32 0.0, %v2146
    %v2148 = vpop.f32.mrb[0].mxu0
    %v2149 = vadd.f32 0.0, %v2148
    %2150 = vdwg.mxu0
    %v2151 = vadd.f32 %v2005, %v2076
    %v2152 = vadd.f32 %v2006, %v2078
    %v2153 = vadd.f32 %v2007, %v2147
    %v2154 = vadd.f32 %v2008, %v2149
    %v2155 = vxor.u32 %v2151, 2147483648
    %v2156 = vxor.u32 %v2152, 2147483648
    %v2157 = vmul.f32 %v2155, 1.442695
    %v2158 = vpow.pop %v2157
    %v2159 = vmul.f32 %v2156, 1.442695
    %v2160 = vpow.pop %v2159
    %v2161 = vadd.f32 %v2158, 1.0
    %v2162 = vadd.f32 %v2160, 1.0
    %v2163 = vrcp.pop %v2161
    %v2164 = vmul.f32 1.0, %v2163
    %v2165 = vrcp.pop %v2162
    %v2166 = vmul.f32 1.0, %v2165
    %v2167 = vtanh.pop %v2153
    %v2168 = vxor.u32 %v2154, 2147483648
    %v2169 = vmul.f32 %v2168, 1.442695
    %v2170 = vpow.pop %v2169
    %v2171 = vadd.f32 %v2170, 1.0
    %v2172 = vrcp.pop %v2171
    %v2173 = vmul.f32 1.0, %v2172
    %v2174 = vmul.f32 %v2166, %v1999
    %v2175 = vmul.f32 %v2164, %v2167
    %v2176 = vadd.f32 %v2174, %v2175
    %v2177 = vtanh.pop %v2176
    %v2178 = vmul.f32 %v2173, %v2177
    %s2179 = smul.u32 3, 4
    %s2180 = smul.addr %s2179, 8
    %s2181 = scalar_lea.vmem [#allocation3], %s2180
    %v2182 = vld [vmem:[%s2181] sm:$0xff]
    %v2183 = vld [vmem:[%s2181 + $0x8] sm:$0xff]
    %v2184 = vld [vmem:[%s2181 + $0x10] sm:$0xff]
    %v2185 = vld [vmem:[%s2181 + $0x18] sm:$0xff]
    %2186 = vmatprep.subr.mxu0 %v1391
    %2187 = vmatpush1.msra.mxu0 %v1390
    %2188 = vmatprep.subr.mxu0 %v1395
    %2189 = vmatpush1.msra.mxu0 %v1394
    %2190 = vmatprep.subr.mxu0 %v1399
    %2191 = vmatpush1.msra.mxu0 %v1398
    %2192 = vmatprep.subr.mxu0 %v1403
    %2193 = vmatpush1.msra.mxu0 %v1402
    %2194 = vmatprep.subr.mxu0 %v1407
    %2195 = vmatpush1.msra.mxu0 %v1406
    %2196 = vmatprep.subr.mxu0 %v1411
    %2197 = vmatpush1.msra.mxu0 %v1410
    %2198 = vmatprep.subr.mxu0 %v1415
    %2199 = vmatpush1.msra.mxu0 %v1414
    %2200 = vmatprep.subr.mxu0 %v1419
    %2201 = vmatpush1.msra.mxu0 %v1418
    %2202 = vmatprep.subr.mxu0 %v1423
    %2203 = vmatpush1.msra.mxu0 %v1422
    %2204 = vmatprep.subr.mxu0 %v1427
    %2205 = vmatpush1.msra.mxu0 %v1426
    %2206 = vmatprep.subr.mxu0 %v1431
    %2207 = vmatpush1.msra.mxu0 %v1430
    %2208 = vmatprep.subr.mxu0 %v1435
    %2209 = vmatpush1.msra.mxu0 %v1434
    %2210 = vmatprep.subr.mxu0 %v1439
    %2211 = vmatpush1.msra.mxu0 %v1438
    %2212 = vmatprep.subr.mxu0 %v1443
    %2213 = vmatpush1.msra.mxu0 %v1442
    %2214 = vmatprep.subr.mxu0 %v1447
    %2215 = vmatpush1.msra.mxu0 %v1446
    %2216 = vmatprep.subr.mxu0 %v1451
    %2217 = vmatpush1.msra.mxu0 %v1450
    %2218 = vmatprep.subr.mxu0 0.0
    %2219 = vmatpush1.msra.mxu0 0.0
    %2220 = vmatprep.subr.mxu0 0.0
    %2221 = vmatpush1.msra.mxu0 0.0
    %2222 = vmatprep.subr.mxu0 0.0
    %2223 = vmatpush1.msra.mxu0 0.0
    %2224 = vmatprep.subr.mxu0 0.0
    %2225 = vmatpush1.msra.mxu0 0.0
    %2226 = vmatprep.subr.mxu0 0.0
    %2227 = vmatpush1.msra.mxu0 0.0
    %2228 = vmatprep.subr.mxu0 0.0
    %2229 = vmatpush1.msra.mxu0 0.0
    %2230 = vmatprep.subr.mxu0 0.0
    %2231 = vmatpush1.msra.mxu0 0.0
    %2232 = vmatprep.subr.mxu0 0.0
    %2233 = vmatpush1.msra.mxu0 0.0
    %2234 = vmatprep.subr.mxu0 0.0
    %2235 = vmatpush1.msra.mxu0 0.0
    %2236 = vmatprep.subr.mxu0 0.0
    %2237 = vmatpush1.msra.mxu0 0.0
    %2238 = vmatprep.subr.mxu0 0.0
    %2239 = vmatpush1.msra.mxu0 0.0
    %2240 = vmatprep.subr.mxu0 0.0
    %2241 = vmatpush1.msra.mxu0 0.0
    %2242 = vmatprep.subr.mxu0 0.0
    %2243 = vmatpush1.msra.mxu0 0.0
    %2244 = vmatprep.subr.mxu0 0.0
    %2245 = vmatpush1.msra.mxu0 0.0
    %2246 = vmatprep.subr.mxu0 0.0
    %2247 = vmatpush1.msra.mxu0 0.0
    %2248 = vmatprep.subr.mxu0 0.0
    %2249 = vmatpush1.msra.mxu0 0.0
    %2250 = vmatprep.mubr.f32.mxu0 0.0
    %2251 = vmatmul.mubr.f32.gmra.mrb[0].mxu0 %v2178
    %v2252 = vpop.f32.mrb[0].mxu0
    %v2253 = vadd.f32 0.0, %v2252
    %v2254 = vpop.f32.mrb[0].mxu0
    %v2255 = vadd.f32 0.0, %v2254
    %2256 = vdwg.mxu0
    %2257 = vmatprep.subr.mxu0 %v1393
    %2258 = vmatpush1.msra.mxu0 %v1392
    %2259 = vmatprep.subr.mxu0 %v1397
    %2260 = vmatpush1.msra.mxu0 %v1396
    %2261 = vmatprep.subr.mxu0 %v1401
    %2262 = vmatpush1.msra.mxu0 %v1400
    %2263 = vmatprep.subr.mxu0 %v1405
    %2264 = vmatpush1.msra.mxu0 %v1404
    %2265 = vmatprep.subr.mxu0 %v1409
    %2266 = vmatpush1.msra.mxu0 %v1408
    %2267 = vmatprep.subr.mxu0 %v1413
    %2268 = vmatpush1.msra.mxu0 %v1412
    %2269 = vmatprep.subr.mxu0 %v1417
    %2270 = vmatpush1.msra.mxu0 %v1416
    %2271 = vmatprep.subr.mxu0 %v1421
    %2272 = vmatpush1.msra.mxu0 %v1420
    %2273 = vmatprep.subr.mxu0 %v1425
    %2274 = vmatpush1.msra.mxu0 %v1424
    %2275 = vmatprep.subr.mxu0 %v1429
    %2276 = vmatpush1.msra.mxu0 %v1428
    %2277 = vmatprep.subr.mxu0 %v1433
    %2278 = vmatpush1.msra.mxu0 %v1432
    %2279 = vmatprep.subr.mxu0 %v1437
    %2280 = vmatpush1.msra.mxu0 %v1436
    %2281 = vmatprep.subr.mxu0 %v1441
    %2282 = vmatpush1.msra.mxu0 %v1440
    %2283 = vmatprep.subr.mxu0 %v1445
    %2284 = vmatpush1.msra.mxu0 %v1444
    %2285 = vmatprep.subr.mxu0 %v1449
    %2286 = vmatpush1.msra.mxu0 %v1448
    %2287 = vmatprep.subr.mxu0 %v1453
    %2288 = vmatpush1.msra.mxu0 %v1452
    %2289 = vmatprep.subr.mxu0 0.0
    %2290 = vmatpush1.msra.mxu0 0.0
    %2291 = vmatprep.subr.mxu0 0.0
    %2292 = vmatpush1.msra.mxu0 0.0
    %2293 = vmatprep.subr.mxu0 0.0
    %2294 = vmatpush1.msra.mxu0 0.0
    %2295 = vmatprep.subr.mxu0 0.0
    %2296 = vmatpush1.msra.mxu0 0.0
    %2297 = vmatprep.subr.mxu0 0.0
    %2298 = vmatpush1.msra.mxu0 0.0
    %2299 = vmatprep.subr.mxu0 0.0
    %2300 = vmatpush1.msra.mxu0 0.0
    %2301 = vmatprep.subr.mxu0 0.0
    %2302 = vmatpush1.msra.mxu0 0.0
    %2303 = vmatprep.subr.mxu0 0.0
    %2304 = vmatpush1.msra.mxu0 0.0
    %2305 = vmatprep.subr.mxu0 0.0
    %2306 = vmatpush1.msra.mxu0 0.0
    %2307 = vmatprep.subr.mxu0 0.0
    %2308 = vmatpush1.msra.mxu0 0.0
    %2309 = vmatprep.subr.mxu0 0.0
    %2310 = vmatpush1.msra.mxu0 0.0
    %2311 = vmatprep.subr.mxu0 0.0
    %2312 = vmatpush1.msra.mxu0 0.0
    %2313 = vmatprep.subr.mxu0 0.0
    %2314 = vmatpush1.msra.mxu0 0.0
    %2315 = vmatprep.subr.mxu0 0.0
    %2316 = vmatpush1.msra.mxu0 0.0
    %2317 = vmatprep.subr.mxu0 0.0
    %2318 = vmatpush1.msra.mxu0 0.0
    %2319 = vmatprep.subr.mxu0 0.0
    %2320 = vmatpush1.msra.mxu0 0.0
    %2321 = vmatprep.mubr.f32.mxu0 0.0
    %2322 = vmatmul.mubr.f32.gmra.mrb[0].mxu0 %v2178
    %v2323 = vpop.f32.mrb[0].mxu0
    %v2324 = vadd.f32 0.0, %v2323
    %v2325 = vpop.f32.mrb[0].mxu0
    %v2326 = vadd.f32 0.0, %v2325
    %2327 = vdwg.mxu0
    %v2328 = vadd.f32 %v2182, %v2253
    %v2329 = vadd.f32 %v2183, %v2255
    %v2330 = vadd.f32 %v2184, %v2324
    %v2331 = vadd.f32 %v2185, %v2326
    %v2332 = vxor.u32 %v2328, 2147483648
    %v2333 = vxor.u32 %v2329, 2147483648
    %v2334 = vmul.f32 %v2332, 1.442695
    %v2335 = vpow.pop %v2334
    %v2336 = vmul.f32 %v2333, 1.442695
    %v2337 = vpow.pop %v2336
    %v2338 = vadd.f32 %v2335, 1.0
    %v2339 = vadd.f32 %v2337, 1.0
    %v2340 = vrcp.pop %v2338
    %v2341 = vmul.f32 1.0, %v2340
    %v2342 = vrcp.pop %v2339
    %v2343 = vmul.f32 1.0, %v2342
    %v2344 = vtanh.pop %v2330
    %v2345 = vxor.u32 %v2331, 2147483648
    %v2346 = vmul.f32 %v2345, 1.442695
    %v2347 = vpow.pop %v2346
    %v2348 = vadd.f32 %v2347, 1.0
    %v2349 = vrcp.pop %v2348
    %v2350 = vmul.f32 1.0, %v2349
    %v2351 = vmul.f32 %v2343, %v2176
    %v2352 = vmul.f32 %v2341, %v2344
    %v2353 = vadd.f32 %v2351, %v2352
    %v2354 = vtanh.pop %v2353
    %v2355 = vmul.f32 %v2350, %v2354
    %s2356 = smul.u32 4, 4
    %s2357 = smul.addr %s2356, 8
    %s2358 = scalar_lea.vmem [#allocation3], %s2357
    %v2359 = vld [vmem:[%s2358] sm:$0xff]
    %v2360 = vld [vmem:[%s2358 + $0x8] sm:$0xff]
    %v2361 = vld [vmem:[%s2358 + $0x10] sm:$0xff]
    %v2362 = vld [vmem:[%s2358 + $0x18] sm:$0xff]
    %2363 = vmatprep.subr.mxu0 %v1391
    %2364 = vmatpush1.msra.mxu0 %v1390
    %2365 = vmatprep.subr.mxu0 %v1395
    %2366 = vmatpush1.msra.mxu0 %v1394
    %2367 = vmatprep.subr.mxu0 %v1399
    %2368 = vmatpush1.msra.mxu0 %v1398
    %2369 = vmatprep.subr.mxu0 %v1403
    %2370 = vmatpush1.msra.mxu0 %v1402
    %2371 = vmatprep.subr.mxu0 %v1407
    %2372 = vmatpush1.msra.mxu0 %v1406
    %2373 = vmatprep.subr.mxu0 %v1411
    %2374 = vmatpush1.msra.mxu0 %v1410
    %2375 = vmatprep.subr.mxu0 %v1415
    %2376 = vmatpush1.msra.mxu0 %v1414
    %2377 = vmatprep.subr.mxu0 %v1419
    %2378 = vmatpush1.msra.mxu0 %v1418
    %2379 = vmatprep.subr.mxu0 %v1423
    %2380 = vmatpush1.msra.mxu0 %v1422
    %2381 = vmatprep.subr.mxu0 %v1427
    %2382 = vmatpush1.msra.mxu0 %v1426
    %2383 = vmatprep.subr.mxu0 %v1431
    %2384 = vmatpush1.msra.mxu0 %v1430
    %2385 = vmatprep.subr.mxu0 %v1435
    %2386 = vmatpush1.msra.mxu0 %v1434
    %2387 = vmatprep.subr.mxu0 %v1439
    %2388 = vmatpush1.msra.mxu0 %v1438
    %2389 = vmatprep.subr.mxu0 %v1443
    %2390 = vmatpush1.msra.mxu0 %v1442
    %2391 = vmatprep.subr.mxu0 %v1447
    %2392 = vmatpush1.msra.mxu0 %v1446
    %2393 = vmatprep.subr.mxu0 %v1451
    %2394 = vmatpush1.msra.mxu0 %v1450
    %2395 = vmatprep.subr.mxu0 0.0
    %2396 = vmatpush1.msra.mxu0 0.0
    %2397 = vmatprep.subr.mxu0 0.0
    %2398 = vmatpush1.msra.mxu0 0.0
    %2399 = vmatprep.subr.mxu0 0.0
    %2400 = vmatpush1.msra.mxu0 0.0
    %2401 = vmatprep.subr.mxu0 0.0
    %2402 = vmatpush1.msra.mxu0 0.0
    %2403 = vmatprep.subr.mxu0 0.0
    %2404 = vmatpush1.msra.mxu0 0.0
    %2405 = vmatprep.subr.mxu0 0.0
    %2406 = vmatpush1.msra.mxu0 0.0
    %2407 = vmatprep.subr.mxu0 0.0
    %2408 = vmatpush1.msra.mxu0 0.0
    %2409 = vmatprep.subr.mxu0 0.0
    %2410 = vmatpush1.msra.mxu0 0.0
    %2411 = vmatprep.subr.mxu0 0.0
    %2412 = vmatpush1.msra.mxu0 0.0
    %2413 = vmatprep.subr.mxu0 0.0
    %2414 = vmatpush1.msra.mxu0 0.0
    %2415 = vmatprep.subr.mxu0 0.0
    %2416 = vmatpush1.msra.mxu0 0.0
    %2417 = vmatprep.subr.mxu0 0.0
    %2418 = vmatpush1.msra.mxu0 0.0
    %2419 = vmatprep.subr.mxu0 0.0
    %2420 = vmatpush1.msra.mxu0 0.0
    %2421 = vmatprep.subr.mxu0 0.0
    %2422 = vmatpush1.msra.mxu0 0.0
    %2423 = vmatprep.subr.mxu0 0.0
    %2424 = vmatpush1.msra.mxu0 0.0
    %2425 = vmatprep.subr.mxu0 0.0
    %2426 = vmatpush1.msra.mxu0 0.0
    %2427 = vmatprep.mubr.f32.mxu0 0.0
    %2428 = vmatmul.mubr.f32.gmra.mrb[0].mxu0 %v2355
    %v2429 = vpop.f32.mrb[0].mxu0
    %v2430 = vadd.f32 0.0, %v2429
    %v2431 = vpop.f32.mrb[0].mxu0
    %v2432 = vadd.f32 0.0, %v2431
    %2433 = vdwg.mxu0
    %2434 = vmatprep.subr.mxu0 %v1393
    %2435 = vmatpush1.msra.mxu0 %v1392
    %2436 = vmatprep.subr.mxu0 %v1397
    %2437 = vmatpush1.msra.mxu0 %v1396
    %2438 = vmatprep.subr.mxu0 %v1401
    %2439 = vmatpush1.msra.mxu0 %v1400
    %2440 = vmatprep.subr.mxu0 %v1405
    %2441 = vmatpush1.msra.mxu0 %v1404
    %2442 = vmatprep.subr.mxu0 %v1409
    %2443 = vmatpush1.msra.mxu0 %v1408
    %2444 = vmatprep.subr.mxu0 %v1413
    %2445 = vmatpush1.msra.mxu0 %v1412
    %2446 = vmatprep.subr.mxu0 %v1417
    %2447 = vmatpush1.msra.mxu0 %v1416
    %2448 = vmatprep.subr.mxu0 %v1421
    %2449 = vmatpush1.msra.mxu0 %v1420
    %2450 = vmatprep.subr.mxu0 %v1425
    %2451 = vmatpush1.msra.mxu0 %v1424
    %2452 = vmatprep.subr.mxu0 %v1429
    %2453 = vmatpush1.msra.mxu0 %v1428
    %2454 = vmatprep.subr.mxu0 %v1433
    %2455 = vmatpush1.msra.mxu0 %v1432
    %2456 = vmatprep.subr.mxu0 %v1437
    %2457 = vmatpush1.msra.mxu0 %v1436
    %2458 = vmatprep.subr.mxu0 %v1441
    %2459 = vmatpush1.msra.mxu0 %v1440
    %2460 = vmatprep.subr.mxu0 %v1445
    %2461 = vmatpush1.msra.mxu0 %v1444
    %2462 = vmatprep.subr.mxu0 %v1449
    %2463 = vmatpush1.msra.mxu0 %v1448
    %2464 = vmatprep.subr.mxu0 %v1453
    %2465 = vmatpush1.msra.mxu0 %v1452
    %2466 = vmatprep.subr.mxu0 0.0
    %2467 = vmatpush1.msra.mxu0 0.0
    %2468 = vmatprep.subr.mxu0 0.0
    %2469 = vmatpush1.msra.mxu0 0.0
    %2470 = vmatprep.subr.mxu0 0.0
    %2471 = vmatpush1.msra.mxu0 0.0
    %2472 = vmatprep.subr.mxu0 0.0
    %2473 = vmatpush1.msra.mxu0 0.0
    %2474 = vmatprep.subr.mxu0 0.0
    %2475 = vmatpush1.msra.mxu0 0.0
    %2476 = vmatprep.subr.mxu0 0.0
    %2477 = vmatpush1.msra.mxu0 0.0
    %2478 = vmatprep.subr.mxu0 0.0
    %2479 = vmatpush1.msra.mxu0 0.0
    %2480 = vmatprep.subr.mxu0 0.0
    %2481 = vmatpush1.msra.mxu0 0.0
    %2482 = vmatprep.subr.mxu0 0.0
    %2483 = vmatpush1.msra.mxu0 0.0
    %2484 = vmatprep.subr.mxu0 0.0
    %2485 = vmatpush1.msra.mxu0 0.0
    %2486 = vmatprep.subr.mxu0 0.0
    %2487 = vmatpush1.msra.mxu0 0.0
    %2488 = vmatprep.subr.mxu0 0.0
    %2489 = vmatpush1.msra.mxu0 0.0
    %2490 = vmatprep.subr.mxu0 0.0
    %2491 = vmatpush1.msra.mxu0 0.0
    %2492 = vmatprep.subr.mxu0 0.0
    %2493 = vmatpush1.msra.mxu0 0.0
    %2494 = vmatprep.subr.mxu0 0.0
    %2495 = vmatpush1.msra.mxu0 0.0
    %2496 = vmatprep.subr.mxu0 0.0
    %2497 = vmatpush1.msra.mxu0 0.0
    %2498 = vmatprep.mubr.f32.mxu0 0.0
    %2499 = vmatmul.mubr.f32.gmra.mrb[0].mxu0 %v2355
    %v2500 = vpop.f32.mrb[0].mxu0
    %v2501 = vadd.f32 0.0, %v2500
    %v2502 = vpop.f32.mrb[0].mxu0
    %v2503 = vadd.f32 0.0, %v2502
    %2504 = vdwg.mxu0
    %v2505 = vadd.f32 %v2359, %v2430
    %v2506 = vadd.f32 %v2360, %v2432
    %v2507 = vadd.f32 %v2361, %v2501
    %v2508 = vadd.f32 %v2362, %v2503
    %v2509 = vxor.u32 %v2505, 2147483648
    %v2510 = vxor.u32 %v2506, 2147483648
    %v2511 = vmul.f32 %v2509, 1.442695
    %v2512 = vpow.pop %v2511
    %v2513 = vmul.f32 %v2510, 1.442695
    %v2514 = vpow.pop %v2513
    %v2515 = vadd.f32 %v2512, 1.0
    %v2516 = vadd.f32 %v2514, 1.0
    %v2517 = vrcp.pop %v2515
    %v2518 = vmul.f32 1.0, %v2517
    %v2519 = vrcp.pop %v2516
    %v2520 = vmul.f32 1.0, %v2519
    %v2521 = vtanh.pop %v2507
    %v2522 = vxor.u32 %v2508, 2147483648
    %v2523 = vmul.f32 %v2522, 1.442695
    %v2524 = vpow.pop %v2523
    %v2525 = vadd.f32 %v2524, 1.0
    %v2526 = vrcp.pop %v2525
    %v2527 = vmul.f32 1.0, %v2526
    %v2528 = vmul.f32 %v2520, %v2353
    %v2529 = vmul.f32 %v2518, %v2521
    %v2530 = vadd.f32 %v2528, %v2529
    %v2531 = vtanh.pop %v2530
    %v2532 = vmul.f32 %v2527, %v2531
    %s2533 = smul.u32 5, 4
    %s2534 = smul.addr %s2533, 8
    %s2535 = scalar_lea.vmem [#allocation3], %s2534
    %v2536 = vld [vmem:[%s2535] sm:$0xff]
    %v2537 = vld [vmem:[%s2535 + $0x8] sm:$0xff]
    %v2538 = vld [vmem:[%s2535 + $0x10] sm:$0xff]
    %v2539 = vld [vmem:[%s2535 + $0x18] sm:$0xff]
    %2540 = vmatprep.subr.mxu0 %v1391
    %2541 = vmatpush1.msra.mxu0 %v1390
    %2542 = vmatprep.subr.mxu0 %v1395
    %2543 = vmatpush1.msra.mxu0 %v1394
    %2544 = vmatprep.subr.mxu0 %v1399
    %2545 = vmatpush1.msra.mxu0 %v1398
    %2546 = vmatprep.subr.mxu0 %v1403
    %2547 = vmatpush1.msra.mxu0 %v1402
    %2548 = vmatprep.subr.mxu0 %v1407
    %2549 = vmatpush1.msra.mxu0 %v1406
    %2550 = vmatprep.subr.mxu0 %v1411
    %2551 = vmatpush1.msra.mxu0 %v1410
    %2552 = vmatprep.subr.mxu0 %v1415
    %2553 = vmatpush1.msra.mxu0 %v1414
    %2554 = vmatprep.subr.mxu0 %v1419
    %2555 = vmatpush1.msra.mxu0 %v1418
    %2556 = vmatprep.subr.mxu0 %v1423
    %2557 = vmatpush1.msra.mxu0 %v1422
    %2558 = vmatprep.subr.mxu0 %v1427
    %2559 = vmatpush1.msra.mxu0 %v1426
    %2560 = vmatprep.subr.mxu0 %v1431
    %2561 = vmatpush1.msra.mxu0 %v1430
    %2562 = vmatprep.subr.mxu0 %v1435
    %2563 = vmatpush1.msra.mxu0 %v1434
    %2564 = vmatprep.subr.mxu0 %v1439
    %2565 = vmatpush1.msra.mxu0 %v1438
    %2566 = vmatprep.subr.mxu0 %v1443
    %2567 = vmatpush1.msra.mxu0 %v1442
    %2568 = vmatprep.subr.mxu0 %v1447
    %2569 = vmatpush1.msra.mxu0 %v1446
    %2570 = vmatprep.subr.mxu0 %v1451
    %2571 = vmatpush1.msra.mxu0 %v1450
    %2572 = vmatprep.subr.mxu0 0.0
    %2573 = vmatpush1.msra.mxu0 0.0
    %2574 = vmatprep.subr.mxu0 0.0
    %2575 = vmatpush1.msra.mxu0 0.0
    %2576 = vmatprep.subr.mxu0 0.0
    %2577 = vmatpush1.msra.mxu0 0.0
    %2578 = vmatprep.subr.mxu0 0.0
    %2579 = vmatpush1.msra.mxu0 0.0
    %2580 = vmatprep.subr.mxu0 0.0
    %2581 = vmatpush1.msra.mxu0 0.0
    %2582 = vmatprep.subr.mxu0 0.0
    %2583 = vmatpush1.msra.mxu0 0.0
    %2584 = vmatprep.subr.mxu0 0.0
    %2585 = vmatpush1.msra.mxu0 0.0
    %2586 = vmatprep.subr.mxu0 0.0
    %2587 = vmatpush1.msra.mxu0 0.0
    %2588 = vmatprep.subr.mxu0 0.0
    %2589 = vmatpush1.msra.mxu0 0.0
    %2590 = vmatprep.subr.mxu0 0.0
    %2591 = vmatpush1.msra.mxu0 0.0
    %2592 = vmatprep.subr.mxu0 0.0
    %2593 = vmatpush1.msra.mxu0 0.0
    %2594 = vmatprep.subr.mxu0 0.0
    %2595 = vmatpush1.msra.mxu0 0.0
    %2596 = vmatprep.subr.mxu0 0.0
    %2597 = vmatpush1.msra.mxu0 0.0
    %2598 = vmatprep.subr.mxu0 0.0
    %2599 = vmatpush1.msra.mxu0 0.0
    %2600 = vmatprep.subr.mxu0 0.0
    %2601 = vmatpush1.msra.mxu0 0.0
    %2602 = vmatprep.subr.mxu0 0.0
    %2603 = vmatpush1.msra.mxu0 0.0
    %2604 = vmatprep.mubr.f32.mxu0 0.0
    %2605 = vmatmul.mubr.f32.gmra.mrb[0].mxu0 %v2532
    %v2606 = vpop.f32.mrb[0].mxu0
    %v2607 = vadd.f32 0.0, %v2606
    %v2608 = vpop.f32.mrb[0].mxu0
    %v2609 = vadd.f32 0.0, %v2608
    %2610 = vdwg.mxu0
    %2611 = vmatprep.subr.mxu0 %v1393
    %2612 = vmatpush1.msra.mxu0 %v1392
    %2613 = vmatprep.subr.mxu0 %v1397
    %2614 = vmatpush1.msra.mxu0 %v1396
    %2615 = vmatprep.subr.mxu0 %v1401
    %2616 = vmatpush1.msra.mxu0 %v1400
    %2617 = vmatprep.subr.mxu0 %v1405
    %2618 = vmatpush1.msra.mxu0 %v1404
    %2619 = vmatprep.subr.mxu0 %v1409
    %2620 = vmatpush1.msra.mxu0 %v1408
    %2621 = vmatprep.subr.mxu0 %v1413
    %2622 = vmatpush1.msra.mxu0 %v1412
    %2623 = vmatprep.subr.mxu0 %v1417
    %2624 = vmatpush1.msra.mxu0 %v1416
    %2625 = vmatprep.subr.mxu0 %v1421
    %2626 = vmatpush1.msra.mxu0 %v1420
    %2627 = vmatprep.subr.mxu0 %v1425
    %2628 = vmatpush1.msra.mxu0 %v1424
    %2629 = vmatprep.subr.mxu0 %v1429
    %2630 = vmatpush1.msra.mxu0 %v1428
    %2631 = vmatprep.subr.mxu0 %v1433
    %2632 = vmatpush1.msra.mxu0 %v1432
    %2633 = vmatprep.subr.mxu0 %v1437
    %2634 = vmatpush1.msra.mxu0 %v1436
    %2635 = vmatprep.subr.mxu0 %v1441
    %2636 = vmatpush1.msra.mxu0 %v1440
    %2637 = vmatprep.subr.mxu0 %v1445
    %2638 = vmatpush1.msra.mxu0 %v1444
    %2639 = vmatprep.subr.mxu0 %v1449
    %2640 = vmatpush1.msra.mxu0 %v1448
    %2641 = vmatprep.subr.mxu0 %v1453
    %2642 = vmatpush1.msra.mxu0 %v1452
    %2643 = vmatprep.subr.mxu0 0.0
    %2644 = vmatpush1.msra.mxu0 0.0
    %2645 = vmatprep.subr.mxu0 0.0
    %2646 = vmatpush1.msra.mxu0 0.0
    %2647 = vmatprep.subr.mxu0 0.0
    %2648 = vmatpush1.msra.mxu0 0.0
    %2649 = vmatprep.subr.mxu0 0.0
    %2650 = vmatpush1.msra.mxu0 0.0
    %2651 = vmatprep.subr.mxu0 0.0
    %2652 = vmatpush1.msra.mxu0 0.0
    %2653 = vmatprep.subr.mxu0 0.0
    %2654 = vmatpush1.msra.mxu0 0.0
    %2655 = vmatprep.subr.mxu0 0.0
    %2656 = vmatpush1.msra.mxu0 0.0
    %2657 = vmatprep.subr.mxu0 0.0
    %2658 = vmatpush1.msra.mxu0 0.0
    %2659 = vmatprep.subr.mxu0 0.0
    %2660 = vmatpush1.msra.mxu0 0.0
    %2661 = vmatprep.subr.mxu0 0.0
    %2662 = vmatpush1.msra.mxu0 0.0
    %2663 = vmatprep.subr.mxu0 0.0
    %2664 = vmatpush1.msra.mxu0 0.0
    %2665 = vmatprep.subr.mxu0 0.0
    %2666 = vmatpush1.msra.mxu0 0.0
    %2667 = vmatprep.subr.mxu0 0.0
    %2668 = vmatpush1.msra.mxu0 0.0
    %2669 = vmatprep.subr.mxu0 0.0
    %2670 = vmatpush1.msra.mxu0 0.0
    %2671 = vmatprep.subr.mxu0 0.0
    %2672 = vmatpush1.msra.mxu0 0.0
    %2673 = vmatprep.subr.mxu0 0.0
    %2674 = vmatpush1.msra.mxu0 0.0
    %2675 = vmatprep.mubr.f32.mxu0 0.0
    %2676 = vmatmul.mubr.f32.gmra.mrb[0].mxu0 %v2532
    %v2677 = vpop.f32.mrb[0].mxu0
    %v2678 = vadd.f32 0.0, %v2677
    %v2679 = vpop.f32.mrb[0].mxu0
    %v2680 = vadd.f32 0.0, %v2679
    %2681 = vdwg.mxu0
    %v2682 = vadd.f32 %v2536, %v2607
    %v2683 = vadd.f32 %v2537, %v2609
    %v2684 = vadd.f32 %v2538, %v2678
    %v2685 = vadd.f32 %v2539, %v2680
    %v2686 = vxor.u32 %v2682, 2147483648
    %v2687 = vxor.u32 %v2683, 2147483648
    %v2688 = vmul.f32 %v2686, 1.442695
    %v2689 = vpow.pop %v2688
    %v2690 = vmul.f32 %v2687, 1.442695
    %v2691 = vpow.pop %v2690
    %v2692 = vadd.f32 %v2689, 1.0
    %v2693 = vadd.f32 %v2691, 1.0
    %v2694 = vrcp.pop %v2692
    %v2695 = vmul.f32 1.0, %v2694
    %v2696 = vrcp.pop %v2693
    %v2697 = vmul.f32 1.0, %v2696
    %v2698 = vtanh.pop %v2684
    %v2699 = vxor.u32 %v2685, 2147483648
    %v2700 = vmul.f32 %v2699, 1.442695
    %v2701 = vpow.pop %v2700
    %v2702 = vadd.f32 %v2701, 1.0
    %v2703 = vrcp.pop %v2702
    %v2704 = vmul.f32 1.0, %v2703
    %v2705 = vmul.f32 %v2697, %v2530
    %v2706 = vmul.f32 %v2695, %v2698
    %v2707 = vadd.f32 %v2705, %v2706
    %v2708 = vtanh.pop %v2707
    %v2709 = vmul.f32 %v2704, %v2708
    %s2710 = smul.u32 6, 4
    %s2711 = smul.addr %s2710, 8
    %s2712 = scalar_lea.vmem [#allocation3], %s2711
    %v2713 = vld [vmem:[%s2712] sm:$0xff]
    %v2714 = vld [vmem:[%s2712 + $0x8] sm:$0xff]
    %v2715 = vld [vmem:[%s2712 + $0x10] sm:$0xff]
    %v2716 = vld [vmem:[%s2712 + $0x18] sm:$0xff]
    %2717 = vmatprep.subr.mxu0 %v1391
    %2718 = vmatpush1.msra.mxu0 %v1390
    %2719 = vmatprep.subr.mxu0 %v1395
    %2720 = vmatpush1.msra.mxu0 %v1394
    %2721 = vmatprep.subr.mxu0 %v1399
    %2722 = vmatpush1.msra.mxu0 %v1398
    %2723 = vmatprep.subr.mxu0 %v1403
    %2724 = vmatpush1.msra.mxu0 %v1402
    %2725 = vmatprep.subr.mxu0 %v1407
    %2726 = vmatpush1.msra.mxu0 %v1406
    %2727 = vmatprep.subr.mxu0 %v1411
    %2728 = vmatpush1.msra.mxu0 %v1410
    %2729 = vmatprep.subr.mxu0 %v1415
    %2730 = vmatpush1.msra.mxu0 %v1414
    %2731 = vmatprep.subr.mxu0 %v1419
    %2732 = vmatpush1.msra.mxu0 %v1418
    %2733 = vmatprep.subr.mxu0 %v1423
    %2734 = vmatpush1.msra.mxu0 %v1422
    %2735 = vmatprep.subr.mxu0 %v1427
    %2736 = vmatpush1.msra.mxu0 %v1426
    %2737 = vmatprep.subr.mxu0 %v1431
    %2738 = vmatpush1.msra.mxu0 %v1430
    %2739 = vmatprep.subr.mxu0 %v1435
    %2740 = vmatpush1.msra.mxu0 %v1434
    %2741 = vmatprep.subr.mxu0 %v1439
    %2742 = vmatpush1.msra.mxu0 %v1438
    %2743 = vmatprep.subr.mxu0 %v1443
    %2744 = vmatpush1.msra.mxu0 %v1442
    %2745 = vmatprep.subr.mxu0 %v1447
    %2746 = vmatpush1.msra.mxu0 %v1446
    %2747 = vmatprep.subr.mxu0 %v1451
    %2748 = vmatpush1.msra.mxu0 %v1450
    %2749 = vmatprep.subr.mxu0 0.0
    %2750 = vmatpush1.msra.mxu0 0.0
    %2751 = vmatprep.subr.mxu0 0.0
    %2752 = vmatpush1.msra.mxu0 0.0
    %2753 = vmatprep.subr.mxu0 0.0
    %2754 = vmatpush1.msra.mxu0 0.0
    %2755 = vmatprep.subr.mxu0 0.0
    %2756 = vmatpush1.msra.mxu0 0.0
    %2757 = vmatprep.subr.mxu0 0.0
    %2758 = vmatpush1.msra.mxu0 0.0
    %2759 = vmatprep.subr.mxu0 0.0
    %2760 = vmatpush1.msra.mxu0 0.0
    %2761 = vmatprep.subr.mxu0 0.0
    %2762 = vmatpush1.msra.mxu0 0.0
    %2763 = vmatprep.subr.mxu0 0.0
    %2764 = vmatpush1.msra.mxu0 0.0
    %2765 = vmatprep.subr.mxu0 0.0
    %2766 = vmatpush1.msra.mxu0 0.0
    %2767 = vmatprep.subr.mxu0 0.0
    %2768 = vmatpush1.msra.mxu0 0.0
    %2769 = vmatprep.subr.mxu0 0.0
    %2770 = vmatpush1.msra.mxu0 0.0
    %2771 = vmatprep.subr.mxu0 0.0
    %2772 = vmatpush1.msra.mxu0 0.0
    %2773 = vmatprep.subr.mxu0 0.0
    %2774 = vmatpush1.msra.mxu0 0.0
    %2775 = vmatprep.subr.mxu0 0.0
    %2776 = vmatpush1.msra.mxu0 0.0
    %2777 = vmatprep.subr.mxu0 0.0
    %2778 = vmatpush1.msra.mxu0 0.0
    %2779 = vmatprep.subr.mxu0 0.0
    %2780 = vmatpush1.msra.mxu0 0.0
    %2781 = vmatprep.mubr.f32.mxu0 0.0
    %2782 = vmatmul.mubr.f32.gmra.mrb[0].mxu0 %v2709
    %v2783 = vpop.f32.mrb[0].mxu0
    %v2784 = vadd.f32 0.0, %v2783
    %v2785 = vpop.f32.mrb[0].mxu0
    %v2786 = vadd.f32 0.0, %v2785
    %2787 = vdwg.mxu0
    %2788 = vmatprep.subr.mxu0 %v1393
    %2789 = vmatpush1.msra.mxu0 %v1392
    %2790 = vmatprep.subr.mxu0 %v1397
    %2791 = vmatpush1.msra.mxu0 %v1396
    %2792 = vmatprep.subr.mxu0 %v1401
    %2793 = vmatpush1.msra.mxu0 %v1400
    %2794 = vmatprep.subr.mxu0 %v1405
    %2795 = vmatpush1.msra.mxu0 %v1404
    %2796 = vmatprep.subr.mxu0 %v1409
    %2797 = vmatpush1.msra.mxu0 %v1408
    %2798 = vmatprep.subr.mxu0 %v1413
    %2799 = vmatpush1.msra.mxu0 %v1412
    %2800 = vmatprep.subr.mxu0 %v1417
    %2801 = vmatpush1.msra.mxu0 %v1416
    %2802 = vmatprep.subr.mxu0 %v1421
    %2803 = vmatpush1.msra.mxu0 %v1420
    %2804 = vmatprep.subr.mxu0 %v1425
    %2805 = vmatpush1.msra.mxu0 %v1424
    %2806 = vmatprep.subr.mxu0 %v1429
    %2807 = vmatpush1.msra.mxu0 %v1428
    %2808 = vmatprep.subr.mxu0 %v1433
    %2809 = vmatpush1.msra.mxu0 %v1432
    %2810 = vmatprep.subr.mxu0 %v1437
    %2811 = vmatpush1.msra.mxu0 %v1436
    %2812 = vmatprep.subr.mxu0 %v1441
    %2813 = vmatpush1.msra.mxu0 %v1440
    %2814 = vmatprep.subr.mxu0 %v1445
    %2815 = vmatpush1.msra.mxu0 %v1444
    %2816 = vmatprep.subr.mxu0 %v1449
    %2817 = vmatpush1.msra.mxu0 %v1448
    %2818 = vmatprep.subr.mxu0 %v1453
    %2819 = vmatpush1.msra.mxu0 %v1452
    %2820 = vmatprep.subr.mxu0 0.0
    %2821 = vmatpush1.msra.mxu0 0.0
    %2822 = vmatprep.subr.mxu0 0.0
    %2823 = vmatpush1.msra.mxu0 0.0
    %2824 = vmatprep.subr.mxu0 0.0
    %2825 = vmatpush1.msra.mxu0 0.0
    %2826 = vmatprep.subr.mxu0 0.0
    %2827 = vmatpush1.msra.mxu0 0.0
    %2828 = vmatprep.subr.mxu0 0.0
    %2829 = vmatpush1.msra.mxu0 0.0
    %2830 = vmatprep.subr.mxu0 0.0
    %2831 = vmatpush1.msra.mxu0 0.0
    %2832 = vmatprep.subr.mxu0 0.0
    %2833 = vmatpush1.msra.mxu0 0.0
    %2834 = vmatprep.subr.mxu0 0.0
    %2835 = vmatpush1.msra.mxu0 0.0
    %2836 = vmatprep.subr.mxu0 0.0
    %2837 = vmatpush1.msra.mxu0 0.0
    %2838 = vmatprep.subr.mxu0 0.0
    %2839 = vmatpush1.msra.mxu0 0.0
    %2840 = vmatprep.subr.mxu0 0.0
    %2841 = vmatpush1.msra.mxu0 0.0
    %2842 = vmatprep.subr.mxu0 0.0
    %2843 = vmatpush1.msra.mxu0 0.0
    %2844 = vmatprep.subr.mxu0 0.0
    %2845 = vmatpush1.msra.mxu0 0.0
    %2846 = vmatprep.subr.mxu0 0.0
    %2847 = vmatpush1.msra.mxu0 0.0
    %2848 = vmatprep.subr.mxu0 0.0
    %2849 = vmatpush1.msra.mxu0 0.0
    %2850 = vmatprep.subr.mxu0 0.0
    %2851 = vmatpush1.msra.mxu0 0.0
    %2852 = vmatprep.mubr.f32.mxu0 0.0
    %2853 = vmatmul.mubr.f32.gmra.mrb[0].mxu0 %v2709
    %v2854 = vpop.f32.mrb[0].mxu0
    %v2855 = vadd.f32 0.0, %v2854
    %v2856 = vpop.f32.mrb[0].mxu0
    %v2857 = vadd.f32 0.0, %v2856
    %2858 = vdwg.mxu0
    %v2859 = vadd.f32 %v2713, %v2784
    %v2860 = vadd.f32 %v2714, %v2786
    %v2861 = vadd.f32 %v2715, %v2855
    %v2862 = vadd.f32 %v2716, %v2857
    %v2863 = vxor.u32 %v2859, 2147483648
    %v2864 = vxor.u32 %v2860, 2147483648
    %v2865 = vmul.f32 %v2863, 1.442695
    %v2866 = vpow.pop %v2865
    %v2867 = vmul.f32 %v2864, 1.442695
    %v2868 = vpow.pop %v2867
    %v2869 = vadd.f32 %v2866, 1.0
    %v2870 = vadd.f32 %v2868, 1.0
    %v2871 = vrcp.pop %v2869
    %v2872 = vmul.f32 1.0, %v2871
    %v2873 = vrcp.pop %v2870
    %v2874 = vmul.f32 1.0, %v2873
    %v2875 = vtanh.pop %v2861
    %v2876 = vxor.u32 %v2862, 2147483648
    %v2877 = vmul.f32 %v2876, 1.442695
    %v2878 = vpow.pop %v2877
    %v2879 = vadd.f32 %v2878, 1.0
    %v2880 = vrcp.pop %v2879
    %v2881 = vmul.f32 1.0, %v2880
    %v2882 = vmul.f32 %v2874, %v2707
    %v2883 = vmul.f32 %v2872, %v2875
    %v2884 = vadd.f32 %v2882, %v2883
    %v2885 = vtanh.pop %v2884
    %v2886 = vmul.f32 %v2881, %v2885
    %s2887 = smul.u32 7, 4
    %s2888 = smul.addr %s2887, 8
    %s2889 = scalar_lea.vmem [#allocation3], %s2888
    %v2890 = vld [vmem:[%s2889] sm:$0xff]
    %v2891 = vld [vmem:[%s2889 + $0x8] sm:$0xff]
    %v2892 = vld [vmem:[%s2889 + $0x10] sm:$0xff]
    %v2893 = vld [vmem:[%s2889 + $0x18] sm:$0xff]
    %2894 = vmatprep.subr.mxu0 %v1391
    %2895 = vmatpush1.msra.mxu0 %v1390
    %2896 = vmatprep.subr.mxu0 %v1395
    %2897 = vmatpush1.msra.mxu0 %v1394
    %2898 = vmatprep.subr.mxu0 %v1399
    %2899 = vmatpush1.msra.mxu0 %v1398
    %2900 = vmatprep.subr.mxu0 %v1403
    %2901 = vmatpush1.msra.mxu0 %v1402
    %2902 = vmatprep.subr.mxu0 %v1407
    %2903 = vmatpush1.msra.mxu0 %v1406
    %2904 = vmatprep.subr.mxu0 %v1411
    %2905 = vmatpush1.msra.mxu0 %v1410
    %2906 = vmatprep.subr.mxu0 %v1415
    %2907 = vmatpush1.msra.mxu0 %v1414
    %2908 = vmatprep.subr.mxu0 %v1419
    %2909 = vmatpush1.msra.mxu0 %v1418
    %2910 = vmatprep.subr.mxu0 %v1423
    %2911 = vmatpush1.msra.mxu0 %v1422
    %2912 = vmatprep.subr.mxu0 %v1427
    %2913 = vmatpush1.msra.mxu0 %v1426
    %2914 = vmatprep.subr.mxu0 %v1431
    %2915 = vmatpush1.msra.mxu0 %v1430
    %2916 = vmatprep.subr.mxu0 %v1435
    %2917 = vmatpush1.msra.mxu0 %v1434
    %2918 = vmatprep.subr.mxu0 %v1439
    %2919 = vmatpush1.msra.mxu0 %v1438
    %2920 = vmatprep.subr.mxu0 %v1443
    %2921 = vmatpush1.msra.mxu0 %v1442
    %2922 = vmatprep.subr.mxu0 %v1447
    %2923 = vmatpush1.msra.mxu0 %v1446
    %2924 = vmatprep.subr.mxu0 %v1451
    %2925 = vmatpush1.msra.mxu0 %v1450
    %2926 = vmatprep.subr.mxu0 0.0
    %2927 = vmatpush1.msra.mxu0 0.0
    %2928 = vmatprep.subr.mxu0 0.0
    %2929 = vmatpush1.msra.mxu0 0.0
    %2930 = vmatprep.subr.mxu0 0.0
    %2931 = vmatpush1.msra.mxu0 0.0
    %2932 = vmatprep.subr.mxu0 0.0
    %2933 = vmatpush1.msra.mxu0 0.0
    %2934 = vmatprep.subr.mxu0 0.0
    %2935 = vmatpush1.msra.mxu0 0.0
    %2936 = vmatprep.subr.mxu0 0.0
    %2937 = vmatpush1.msra.mxu0 0.0
    %2938 = vmatprep.subr.mxu0 0.0
    %2939 = vmatpush1.msra.mxu0 0.0
    %2940 = vmatprep.subr.mxu0 0.0
    %2941 = vmatpush1.msra.mxu0 0.0
    %2942 = vmatprep.subr.mxu0 0.0
    %2943 = vmatpush1.msra.mxu0 0.0
    %2944 = vmatprep.subr.mxu0 0.0
    %2945 = vmatpush1.msra.mxu0 0.0
    %2946 = vmatprep.subr.mxu0 0.0
    %2947 = vmatpush1.msra.mxu0 0.0
    %2948 = vmatprep.subr.mxu0 0.0
    %2949 = vmatpush1.msra.mxu0 0.0
    %2950 = vmatprep.subr.mxu0 0.0
    %2951 = vmatpush1.msra.mxu0 0.0
    %2952 = vmatprep.subr.mxu0 0.0
    %2953 = vmatpush1.msra.mxu0 0.0
    %2954 = vmatprep.subr.mxu0 0.0
    %2955 = vmatpush1.msra.mxu0 0.0
    %2956 = vmatprep.subr.mxu0 0.0
    %2957 = vmatpush1.msra.mxu0 0.0
    %2958 = vmatprep.mubr.f32.mxu0 0.0
    %2959 = vmatmul.mubr.f32.gmra.mrb[0].mxu0 %v2886
    %v2960 = vpop.f32.mrb[0].mxu0
    %v2961 = vadd.f32 0.0, %v2960
    %v2962 = vpop.f32.mrb[0].mxu0
    %v2963 = vadd.f32 0.0, %v2962
    %2964 = vdwg.mxu0
    %2965 = vmatprep.subr.mxu0 %v1393
    %2966 = vmatpush1.msra.mxu0 %v1392
    %2967 = vmatprep.subr.mxu0 %v1397
    %2968 = vmatpush1.msra.mxu0 %v1396
    %2969 = vmatprep.subr.mxu0 %v1401
    %2970 = vmatpush1.msra.mxu0 %v1400
    %2971 = vmatprep.subr.mxu0 %v1405
    %2972 = vmatpush1.msra.mxu0 %v1404
    %2973 = vmatprep.subr.mxu0 %v1409
    %2974 = vmatpush1.msra.mxu0 %v1408
    %2975 = vmatprep.subr.mxu0 %v1413
    %2976 = vmatpush1.msra.mxu0 %v1412
    %2977 = vmatprep.subr.mxu0 %v1417
    %2978 = vmatpush1.msra.mxu0 %v1416
    %2979 = vmatprep.subr.mxu0 %v1421
    %2980 = vmatpush1.msra.mxu0 %v1420
    %2981 = vmatprep.subr.mxu0 %v1425
    %2982 = vmatpush1.msra.mxu0 %v1424
    %2983 = vmatprep.subr.mxu0 %v1429
    %2984 = vmatpush1.msra.mxu0 %v1428
    %2985 = vmatprep.subr.mxu0 %v1433
    %2986 = vmatpush1.msra.mxu0 %v1432
    %2987 = vmatprep.subr.mxu0 %v1437
    %2988 = vmatpush1.msra.mxu0 %v1436
    %2989 = vmatprep.subr.mxu0 %v1441
    %2990 = vmatpush1.msra.mxu0 %v1440
    %2991 = vmatprep.subr.mxu0 %v1445
    %2992 = vmatpush1.msra.mxu0 %v1444
    %2993 = vmatprep.subr.mxu0 %v1449
    %2994 = vmatpush1.msra.mxu0 %v1448
    %2995 = vmatprep.subr.mxu0 %v1453
    %2996 = vmatpush1.msra.mxu0 %v1452
    %2997 = vmatprep.subr.mxu0 0.0
    %2998 = vmatpush1.msra.mxu0 0.0
    %2999 = vmatprep.subr.mxu0 0.0
    %3000 = vmatpush1.msra.mxu0 0.0
    %3001 = vmatprep.subr.mxu0 0.0
    %3002 = vmatpush1.msra.mxu0 0.0
    %3003 = vmatprep.subr.mxu0 0.0
    %3004 = vmatpush1.msra.mxu0 0.0
    %3005 = vmatprep.subr.mxu0 0.0
    %3006 = vmatpush1.msra.mxu0 0.0
    %3007 = vmatprep.subr.mxu0 0.0
    %3008 = vmatpush1.msra.mxu0 0.0
    %3009 = vmatprep.subr.mxu0 0.0
    %3010 = vmatpush1.msra.mxu0 0.0
    %3011 = vmatprep.subr.mxu0 0.0
    %3012 = vmatpush1.msra.mxu0 0.0
    %3013 = vmatprep.subr.mxu0 0.0
    %3014 = vmatpush1.msra.mxu0 0.0
    %3015 = vmatprep.subr.mxu0 0.0
    %3016 = vmatpush1.msra.mxu0 0.0
    %3017 = vmatprep.subr.mxu0 0.0
    %3018 = vmatpush1.msra.mxu0 0.0
    %3019 = vmatprep.subr.mxu0 0.0
    %3020 = vmatpush1.msra.mxu0 0.0
    %3021 = vmatprep.subr.mxu0 0.0
    %3022 = vmatpush1.msra.mxu0 0.0
    %3023 = vmatprep.subr.mxu0 0.0
    %3024 = vmatpush1.msra.mxu0 0.0
    %3025 = vmatprep.subr.mxu0 0.0
    %3026 = vmatpush1.msra.mxu0 0.0
    %3027 = vmatprep.subr.mxu0 0.0
    %3028 = vmatpush1.msra.mxu0 0.0
    %3029 = vmatprep.mubr.f32.mxu0 0.0
    %3030 = vmatmul.mubr.f32.gmra.mrb[0].mxu0 %v2886
    %v3031 = vpop.f32.mrb[0].mxu0
    %v3032 = vadd.f32 0.0, %v3031
    %v3033 = vpop.f32.mrb[0].mxu0
    %v3034 = vadd.f32 0.0, %v3033
    %3035 = vdwg.mxu0
    %v3036 = vadd.f32 %v2890, %v2961
    %v3037 = vadd.f32 %v2891, %v2963
    %v3038 = vadd.f32 %v2892, %v3032
    %v3039 = vadd.f32 %v2893, %v3034
    %v3040 = vxor.u32 %v3036, 2147483648
    %v3041 = vxor.u32 %v3037, 2147483648
    %v3042 = vmul.f32 %v3040, 1.442695
    %v3043 = vpow.pop %v3042
    %v3044 = vmul.f32 %v3041, 1.442695
    %v3045 = vpow.pop %v3044
    %v3046 = vadd.f32 %v3043, 1.0
    %v3047 = vadd.f32 %v3045, 1.0
    %v3048 = vrcp.pop %v3046
    %v3049 = vmul.f32 1.0, %v3048
    %v3050 = vrcp.pop %v3047
    %v3051 = vmul.f32 1.0, %v3050
    %v3052 = vtanh.pop %v3038
    %v3053 = vxor.u32 %v3039, 2147483648
    %v3054 = vmul.f32 %v3053, 1.442695
    %v3055 = vpow.pop %v3054
    %v3056 = vadd.f32 %v3055, 1.0
    %v3057 = vrcp.pop %v3056
    %v3058 = vmul.f32 1.0, %v3057
    %v3059 = vmul.f32 %v3051, %v2884
    %v3060 = vmul.f32 %v3049, %v3052
    %v3061 = vadd.f32 %v3059, %v3060
    %v3062 = vtanh.pop %v3061
    %v3063 = vmul.f32 %v3058, %v3062
    %v3064 = vld [vmem:[%s4] sm:$0x1]
    %v3066 = vlaneseq
    %v3067 = vshrl.u32 %v3066, 7
    %v3068 = vsub.s32 0, %v3067
    %v3069 = vrot.slane %v3064, %v3068
    %v3071 = vmul.f32 %v3063, %v3069
    %3072 = vadd.xlane.f32.xlu0 %v3071
    %v3073 = vpop.xlane.xlu0 %3072
    %v3074 = vld [vmem:[#allocation4] sm:$0x1]
    %v3076 = vlaneseq
    %v3077 = vshrl.u32 %v3076, 7
    %v3078 = vsub.s32 0, %v3077
    %v3079 = vrot.slane %v3074, %v3078
    %v3081 = vadd.f32 %v3073, %v3079
    %vm3082 = vcmask 7168
    %3083 = vst.msk [vmem:[%s6] sm:$0xff] %vm3082, %v3081
    // Predicated region
    $region38: #{tpu_custom_call.1} parent=1 // pred_check
      _
    $region39: #{tpu_custom_call.1} parent=1 // pred_check_branch
      %3085 = sbr.rel (0) target = $region41
    $region40: #{tpu_custom_call.1} parent=1 // pred_region
      _
    $region41: #{tpu_custom_call.1} parent=1 // pred_fallthru
      _
    // Predicated region
    $region42: #{tpu_custom_call.1} parent=1 // pred_check
      _
    $region43: #{tpu_custom_call.1} parent=1 // pred_check_branch
      %3087 = sbr.rel (0) target = $region45
    $region44: #{tpu_custom_call.1} parent=1 // pred_region
      _
    $region45: #{tpu_custom_call.1} parent=1 // pred_fallthru
      _
    %3088 = vsyncpa [#allocation6], 1
    %3089 = vsyncpa [#allocation8], 1

// kernel: tpu_custom_call.1
$region0: #{tpu_custom_call.1}
  #allocation0 [shape = 'u32[]', space=smem, size = 0x4, offset = 0x4, fixed_abs, tag = 'smem constant byte address 0x4 - core index']
  #allocation1 [shape = 'u32[144,128]{1,0:T(1,128)}', space=vmem, size = 0x12000, scoped, tag = 'internal scratch']
  #allocation2 [shape = 'f32[64,128]{1,0:T(8,128)}', space=vmem, size = 0x8000, scoped, tag = 'scratch operand']
  #allocation3 [shape = 'f32[64,512]{1,0:T(8,128)}', space=vmem, size = 0x20000, scoped, tag = 'scratch operand']
  #allocation4 [shape = 'f32[1,1]{1,0:T(1,128)S(1)}', space=vmem, size = 0x200, scoped, tag = 'scoped memory for tpu_custom_call.1']
  %s0 = inlined_call_operand.hbm [shape: f32[8,8,512], index: 0, kind: input, shape index: {}]
  %s1 = inlined_call_operand.hbm [shape: f32[1,128,512], index: 1, kind: input, shape index: {}]
  %s2 = inlined_call_operand.hbm [shape: f32[2,128,512], index: 2, kind: input, shape index: {}]
  %s3 = inlined_call_operand.vmem [shape: f32[1,1,512], index: 3, kind: input, shape index: {}]
  %s4 = inlined_call_operand.vmem [shape: f32[1,128], index: 4, kind: input, shape index: {}]
  %s5 = inlined_call_operand.<no memory space> [shape: f32[1,1], index: 5, kind: input, shape index: {}]
  %s6 = inlined_call_operand.vmem [shape: f32[8,1], index: 6, kind: output, shape index: {}]
  %s7 = sld [smem:[#allocation0]]
  $region46: #{tpu_custom_call.1} parent=0
    _
  %s9 = ssub.s32 1, %s7
  %s10 = scalar_select 0, %s9, %s7
  %v11 = vstv %s5
  %12 = vst [vmem:[#allocation4] sm:$0x1] %v11
  $region1: #{tpu_custom_call.1} parent=0
    #allocation5 [shape = 'u8[131072]{0}', space=vmem, size = 0x20000, scoped, tag = 'input window, operand 0, single buffered']
    #allocation6 [shape = 's32[1]{0}', space=sflag, size = 0x4, scoped, tag = 'scoped memory for tpu_custom_call.1']
    #allocation7 [shape = 'u8[262144]{0}', space=vmem, size = 0x40000, scoped, tag = 'input window, operand 1, single buffered']
    #allocation8 [shape = 's32[1]{0}', space=sflag, size = 0x4, scoped, tag = 'scoped memory for tpu_custom_call.1']
    #allocation9 [shape = 'u8[524288]{0}', space=vmem, size = 0x80000, scoped, tag = 'input window, operand 2, single buffered']
    %13 = vsyncpa [#allocation6], 0
    %14 = vsyncpa [#allocation8], 0
    // Predicated region
    $region2: #{tpu_custom_call.1} parent=1 // pred_check
      _
    $region3: #{tpu_custom_call.1} parent=1 // pred_check_branch
      %16 = sbr.rel (0) target = $region5
    $region4: #{tpu_custom_call.1} parent=1 // pred_region
      %s18 = ssub.s32 4096, 4096
      %19 = vsyncadd [#allocation6], %s18
      %s20 = sshll.u32 [#allocation5], 4
      %s21 = int_to_ptr.vmem [resolvable:$true] %s20
      %26 = dma.hbm_to_vmem [thread:$0]  %s0, 4096, %s21, [#allocation6], 512, 512, 32
    $region5: #{tpu_custom_call.1} parent=1 // pred_fallthru
      _
    // Predicated region
    $region6: #{tpu_custom_call.1} parent=1 // pred_check
      _
    $region7: #{tpu_custom_call.1} parent=1 // pred_check_branch
      %28 = sbr.rel (0) target = $region9
    $region8: #{tpu_custom_call.1} parent=1 // pred_region
      %s30 = ssub.s32 8192, 8192
      %31 = vsyncadd [#allocation8], %s30
      %s32 = sshll.u32 [#allocation7], 4
      %s33 = int_to_ptr.vmem [resolvable:$true] %s32
      %38 = dma.hbm_to_vmem [thread:$0]  %s1, 8192, %s33, [#allocation8], 512, 512, 32
    $region9: #{tpu_custom_call.1} parent=1 // pred_fallthru
      _
    // Predicated region
    $region10: #{tpu_custom_call.1} parent=1 // pred_check
      _
    $region11: #{tpu_custom_call.1} parent=1 // pred_check_branch
      %40 = sbr.rel (0) target = $region13
    $region12: #{tpu_custom_call.1} parent=1 // pred_region
      %s42 = ssub.s32 16384, 16384
      %43 = vsyncadd [#allocation8], %s42
      %s44 = sshll.u32 [#allocation9], 4
      %s45 = int_to_ptr.vmem [resolvable:$true] %s44
      %50 = dma.hbm_to_vmem [thread:$0]  %s2, 16384, %s45, [#allocation8], 512, 512, 32
    $region13: #{tpu_custom_call.1} parent=1 // pred_fallthru
      _
    // Predicated region
    $region14: #{tpu_custom_call.1} parent=1 // pred_check
      _
    $region15: #{tpu_custom_call.1} parent=1 // pred_check_branch
      %52 = sbr.rel (0) target = $region17
    $region16: #{tpu_custom_call.1} parent=1 // pred_region
      _
    $region17: #{tpu_custom_call.1} parent=1 // pred_fallthru
      _
    // Predicated region
    $region18: #{tpu_custom_call.1} parent=1 // pred_check
      _
    $region19: #{tpu_custom_call.1} parent=1 // pred_check_branch
      %54 = sbr.rel (0) target = $region21
    $region20: #{tpu_custom_call.1} parent=1 // pred_region
      _
    $region21: #{tpu_custom_call.1} parent=1 // pred_fallthru
      _
    // Predicated region
    $region22: #{tpu_custom_call.1} parent=1 // pred_check
      _
    $region23: #{tpu_custom_call.1} parent=1 // pred_check_branch
      %56 = sbr.rel (0) target = $region25
    $region24: #{tpu_custom_call.1} parent=1 // pred_region
      _
    $region25: #{tpu_custom_call.1} parent=1 // pred_fallthru
      _
    // Predicated region
    $region26: #{tpu_custom_call.1} parent=1 // pred_check
      _
    $region27: #{tpu_custom_call.1} parent=1 // pred_check_branch
      %58 = sbr.rel (0) target = $region29
    $region28: #{tpu_custom_call.1} parent=1 // pred_region
      %59 = dma.done [#allocation6], 4096
    $region29: #{tpu_custom_call.1} parent=1 // pred_fallthru
      _
    // Predicated region
    $region30: #{tpu_custom_call.1} parent=1 // pred_check
      _
    $region31: #{tpu_custom_call.1} parent=1 // pred_check_branch
      %61 = sbr.rel (0) target = $region33
    $region32: #{tpu_custom_call.1} parent=1 // pred_region
      %62 = dma.done [#allocation8], 8192
    $region33: #{tpu_custom_call.1} parent=1 // pred_fallthru
      _
    // Predicated region
    $region34: #{tpu_custom_call.1} parent=1 // pred_check
      _
    $region35: #{tpu_custom_call.1} parent=1 // pred_check_branch
      %64 = sbr.rel (0) target = $region37
    $region36: #{tpu_custom_call.1} parent=1 // pred_region
      %65 = dma.done [#allocation8], 16384
    $region37: #{tpu_custom_call.1} parent=1 // pred_fallthru
      _
    %v66 = vld [vmem:[#allocation9] sm:$0xff]
    %v67 = vld [vmem:[#allocation9 + $0x8] sm:$0xff]
    %v68 = vld [vmem:[#allocation9 + $0x10] sm:$0xff]
    %v69 = vld [vmem:[#allocation9 + $0x18] sm:$0xff]
    %v70 = vld [vmem:[#allocation9 + $0x20] sm:$0xff]
    %v71 = vld [vmem:[#allocation9 + $0x28] sm:$0xff]
    %v72 = vld [vmem:[#allocation9 + $0x30] sm:$0xff]
    %v73 = vld [vmem:[#allocation9 + $0x38] sm:$0xff]
    %v74 = vld [vmem:[#allocation9 + $0x40] sm:$0xff]
    %v75 = vld [vmem:[#allocation9 + $0x48] sm:$0xff]
    %v76 = vld [vmem:[#allocation9 + $0x50] sm:$0xff]
    %v77 = vld [vmem:[#allocation9 + $0x58] sm:$0xff]
    %v78 = vld [vmem:[#allocation9 + $0x60] sm:$0xff]
    %v79 = vld [vmem:[#allocation9 + $0x68] sm:$0xff]
    %v80 = vld [vmem:[#allocation9 + $0x70] sm:$0xff]
    %v81 = vld [vmem:[#allocation9 + $0x78] sm:$0xff]
    %v82 = vld [vmem:[#allocation9 + $0x80] sm:$0xff]
    %v83 = vld [vmem:[#allocation9 + $0x88] sm:$0xff]
    %v84 = vld [vmem:[#allocation9 + $0x90] sm:$0xff]
    %v85 = vld [vmem:[#allocation9 + $0x98] sm:$0xff]
    %v86 = vld [vmem:[#allocation9 + $0xa0] sm:$0xff]
    %v87 = vld [vmem:[#allocation9 + $0xa8] sm:$0xff]
    %v88 = vld [vmem:[#allocation9 + $0xb0] sm:$0xff]
    %v89 = vld [vmem:[#allocation9 + $0xb8] sm:$0xff]
    %v90 = vld [vmem:[#allocation9 + $0xc0] sm:$0xff]
    %v91 = vld [vmem:[#allocation9 + $0xc8] sm:$0xff]
    %v92 = vld [vmem:[#allocation9 + $0xd0] sm:$0xff]
    %v93 = vld [vmem:[#allocation9 + $0xd8] sm:$0xff]
    %v94 = vld [vmem:[#allocation9 + $0xe0] sm:$0xff]
    %v95 = vld [vmem:[#allocation9 + $0xe8] sm:$0xff]
    %v96 = vld [vmem:[#allocation9 + $0xf0] sm:$0xff]
    %v97 = vld [vmem:[#allocation9 + $0xf8] sm:$0xff]
    %v98 = vld [vmem:[#allocation9 + $0x100] sm:$0xff]
    %v99 = vld [vmem:[#allocation9 + $0x108] sm:$0xff]
    %v100 = vld [vmem:[#allocation9 + $0x110] sm:$0xff]
    %v101 = vld [vmem:[#allocation9 + $0x118] sm:$0xff]
    %v102 = vld [vmem:[#allocation9 + $0x120] sm:$0xff]
    %v103 = vld [vmem:[#allocation9 + $0x128] sm:$0xff]
    %v104 = vld [vmem:[#allocation9 + $0x130] sm:$0xff]
    %v105 = vld [vmem:[#allocation9 + $0x138] sm:$0xff]
    %v106 = vld [vmem:[#allocation9 + $0x140] sm:$0xff]
    %v107 = vld [vmem:[#allocation9 + $0x148] sm:$0xff]
    %v108 = vld [vmem:[#allocation9 + $0x150] sm:$0xff]
    %v109 = vld [vmem:[#allocation9 + $0x158] sm:$0xff]
    %v110 = vld [vmem:[#allocation9 + $0x160] sm:$0xff]
    %v111 = vld [vmem:[#allocation9 + $0x168] sm:$0xff]
    %v112 = vld [vmem:[#allocation9 + $0x170] sm:$0xff]
    %v113 = vld [vmem:[#allocation9 + $0x178] sm:$0xff]
    %v114 = vld [vmem:[#allocation9 + $0x180] sm:$0xff]
    %v115 = vld [vmem:[#allocation9 + $0x188] sm:$0xff]
    %v116 = vld [vmem:[#allocation9 + $0x190] sm:$0xff]
    %v117 = vld [vmem:[#allocation9 + $0x198] sm:$0xff]
    %v118 = vld [vmem:[#allocation9 + $0x1a0] sm:$0xff]
    %v119 = vld [vmem:[#allocation9 + $0x1a8] sm:$0xff]
    %v120 = vld [vmem:[#allocation9 + $0x1b0] sm:$0xff]
    %v121 = vld [vmem:[#allocation9 + $0x1b8] sm:$0xff]
    %v122 = vld [vmem:[#allocation9 + $0x1c0] sm:$0xff]
    %v123 = vld [vmem:[#allocation9 + $0x1c8] sm:$0xff]
    %v124 = vld [vmem:[#allocation9 + $0x1d0] sm:$0xff]
    %v125 = vld [vmem:[#allocation9 + $0x1d8] sm:$0xff]
    %v126 = vld [vmem:[#allocation9 + $0x1e0] sm:$0xff]
    %v127 = vld [vmem:[#allocation9 + $0x1e8] sm:$0xff]
    %v128 = vld [vmem:[#allocation9 + $0x1f0] sm:$0xff]
    %v129 = vld [vmem:[#allocation9 + $0x1f8] sm:$0xff]
    %v130 = vld [vmem:[#allocation5] sm:$0xff]
    %v131 = vld [vmem:[#allocation5 + $0x10] sm:$0xff]
    %v132 = vld [vmem:[#allocation5 + $0x18] sm:$0xff]
    %v133 = vxor.u32 %v130, 2147483648
    %v134 = vmul.f32 %v133, 1.442695
    %v135 = vpow.pop %v134
    %v136 = vadd.f32 %v135, 1.0
    %v137 = vrcp.pop %v136
    %v138 = vmul.f32 1.0, %v137
    %v139 = vtanh.pop %v131
    %v140 = vmul.f32 %v138, %v139
    %v141 = vxor.u32 %v132, 2147483648
    %v142 = vmul.f32 %v141, 1.442695
    %v143 = vpow.pop %v142
    %v144 = vadd.f32 %v143, 1.0
    %v145 = vrcp.pop %v144
    %v146 = vmul.f32 1.0, %v145
    %v147 = vtanh.pop %v140
    %v148 = vmul.f32 %v146, %v147
    %149 = vst [vmem:[#allocation2] sm:$0xff] %v148
    %s150 = scalar_lea.vmem [#allocation5], 32
    %v151 = vld [vmem:[%s150] sm:$0xff]
    %v152 = vld [vmem:[%s150 + $0x8] sm:$0xff]
    %v153 = vld [vmem:[%s150 + $0x10] sm:$0xff]
    %v154 = vld [vmem:[%s150 + $0x18] sm:$0xff]
    %155 = vmatprep.subr.mxu0 %v67
    %156 = vmatpush1.msra.mxu0 %v66
    %157 = vmatprep.subr.mxu0 %v71
    %158 = vmatpush1.msra.mxu0 %v70
    %159 = vmatprep.subr.mxu0 %v75
    %160 = vmatpush1.msra.mxu0 %v74
    %161 = vmatprep.subr.mxu0 %v79
    %162 = vmatpush1.msra.mxu0 %v78
    %163 = vmatprep.subr.mxu0 %v83
    %164 = vmatpush1.msra.mxu0 %v82
    %165 = vmatprep.subr.mxu0 %v87
    %166 = vmatpush1.msra.mxu0 %v86
    %167 = vmatprep.subr.mxu0 %v91
    %168 = vmatpush1.msra.mxu0 %v90
    %169 = vmatprep.subr.mxu0 %v95
    %170 = vmatpush1.msra.mxu0 %v94
    %171 = vmatprep.subr.mxu0 %v99
    %172 = vmatpush1.msra.mxu0 %v98
    %173 = vmatprep.subr.mxu0 %v103
    %174 = vmatpush1.msra.mxu0 %v102
    %175 = vmatprep.subr.mxu0 %v107
    %176 = vmatpush1.msra.mxu0 %v106
    %177 = vmatprep.subr.mxu0 %v111
    %178 = vmatpush1.msra.mxu0 %v110
    %179 = vmatprep.subr.mxu0 %v115
    %180 = vmatpush1.msra.mxu0 %v114
    %181 = vmatprep.subr.mxu0 %v119
    %182 = vmatpush1.msra.mxu0 %v118
    %183 = vmatprep.subr.mxu0 %v123
    %184 = vmatpush1.msra.mxu0 %v122
    %185 = vmatprep.subr.mxu0 %v127
    %186 = vmatpush1.msra.mxu0 %v126
    %187 = vmatprep.subr.mxu0 0.0
    %188 = vmatpush1.msra.mxu0 0.0
    %189 = vmatprep.subr.mxu0 0.0
    %190 = vmatpush1.msra.mxu0 0.0
    %191 = vmatprep.subr.mxu0 0.0
    %192 = vmatpush1.msra.mxu0 0.0
    %193 = vmatprep.subr.mxu0 0.0
    %194 = vmatpush1.msra.mxu0 0.0
    %195 = vmatprep.subr.mxu0 0.0
    %196 = vmatpush1.msra.mxu0 0.0
    %197 = vmatprep.subr.mxu0 0.0
    %198 = vmatpush1.msra.mxu0 0.0
    %199 = vmatprep.subr.mxu0 0.0
    %200 = vmatpush1.msra.mxu0 0.0
    %201 = vmatprep.subr.mxu0 0.0
    %202 = vmatpush1.msra.mxu0 0.0
    %203 = vmatprep.subr.mxu0 0.0
    %204 = vmatpush1.msra.mxu0 0.0
    %205 = vmatprep.subr.mxu0 0.0
    %206 = vmatpush1.msra.mxu0 0.0
    %207 = vmatprep.subr.mxu0 0.0
    %208 = vmatpush1.msra.mxu0 0.0
    %209 = vmatprep.subr.mxu0 0.0
    %210 = vmatpush1.msra.mxu0 0.0
    %211 = vmatprep.subr.mxu0 0.0
    %212 = vmatpush1.msra.mxu0 0.0
    %213 = vmatprep.subr.mxu0 0.0
    %214 = vmatpush1.msra.mxu0 0.0
    %215 = vmatprep.subr.mxu0 0.0
    %216 = vmatpush1.msra.mxu0 0.0
    %217 = vmatprep.subr.mxu0 0.0
    %218 = vmatpush1.msra.mxu0 0.0
    %219 = vmatprep.mubr.f32.mxu0 0.0
    %220 = vmatmul.mubr.f32.gmra.mrb[0].mxu0 %v148
    %v221 = vpop.f32.mrb[0].mxu0
    %v222 = vadd.f32 0.0, %v221
    %v223 = vpop.f32.mrb[0].mxu0
    %v224 = vadd.f32 0.0, %v223
    %225 = vdwg.mxu0
    %226 = vmatprep.subr.mxu0 %v69
    %227 = vmatpush1.msra.mxu0 %v68
    %228 = vmatprep.subr.mxu0 %v73
    %229 = vmatpush1.msra.mxu0 %v72
    %230 = vmatprep.subr.mxu0 %v77
    %231 = vmatpush1.msra.mxu0 %v76
    %232 = vmatprep.subr.mxu0 %v81
    %233 = vmatpush1.msra.mxu0 %v80
    %234 = vmatprep.subr.mxu0 %v85
    %235 = vmatpush1.msra.mxu0 %v84
    %236 = vmatprep.subr.mxu0 %v89
    %237 = vmatpush1.msra.mxu0 %v88
    %238 = vmatprep.subr.mxu0 %v93
    %239 = vmatpush1.msra.mxu0 %v92
    %240 = vmatprep.subr.mxu0 %v97
    %241 = vmatpush1.msra.mxu0 %v96
    %242 = vmatprep.subr.mxu0 %v101
    %243 = vmatpush1.msra.mxu0 %v100
    %244 = vmatprep.subr.mxu0 %v105
    %245 = vmatpush1.msra.mxu0 %v104
    %246 = vmatprep.subr.mxu0 %v109
    %247 = vmatpush1.msra.mxu0 %v108
    %248 = vmatprep.subr.mxu0 %v113
    %249 = vmatpush1.msra.mxu0 %v112
    %250 = vmatprep.subr.mxu0 %v117
    %251 = vmatpush1.msra.mxu0 %v116
    %252 = vmatprep.subr.mxu0 %v121
    %253 = vmatpush1.msra.mxu0 %v120
    %254 = vmatprep.subr.mxu0 %v125
    %255 = vmatpush1.msra.mxu0 %v124
    %256 = vmatprep.subr.mxu0 %v129
    %257 = vmatpush1.msra.mxu0 %v128
    %258 = vmatprep.subr.mxu0 0.0
    %259 = vmatpush1.msra.mxu0 0.0
    %260 = vmatprep.subr.mxu0 0.0
    %261 = vmatpush1.msra.mxu0 0.0
    %262 = vmatprep.subr.mxu0 0.0
    %263 = vmatpush1.msra.mxu0 0.0
    %264 = vmatprep.subr.mxu0 0.0
    %265 = vmatpush1.msra.mxu0 0.0
    %266 = vmatprep.subr.mxu0 0.0
    %267 = vmatpush1.msra.mxu0 0.0
    %268 = vmatprep.subr.mxu0 0.0
    %269 = vmatpush1.msra.mxu0 0.0
    %270 = vmatprep.subr.mxu0 0.0
    %271 = vmatpush1.msra.mxu0 0.0
    %272 = vmatprep.subr.mxu0 0.0
    %273 = vmatpush1.msra.mxu0 0.0
    %274 = vmatprep.subr.mxu0 0.0
    %275 = vmatpush1.msra.mxu0 0.0
    %276 = vmatprep.subr.mxu0 0.0
    %277 = vmatpush1.msra.mxu0 0.0
    %278 = vmatprep.subr.mxu0 0.0
    %279 = vmatpush1.msra.mxu0 0.0
    %280 = vmatprep.subr.mxu0 0.0
    %281 = vmatpush1.msra.mxu0 0.0
    %282 = vmatprep.subr.mxu0 0.0
    %283 = vmatpush1.msra.mxu0 0.0
    %284 = vmatprep.subr.mxu0 0.0
    %285 = vmatpush1.msra.mxu0 0.0
    %286 = vmatprep.subr.mxu0 0.0
    %287 = vmatpush1.msra.mxu0 0.0
    %288 = vmatprep.subr.mxu0 0.0
    %289 = vmatpush1.msra.mxu0 0.0
    %290 = vmatprep.mubr.f32.mxu0 0.0
    %291 = vmatmul.mubr.f32.gmra.mrb[0].mxu0 %v148
    %v292 = vpop.f32.mrb[0].mxu0
    %v293 = vadd.f32 0.0, %v292
    %v294 = vpop.f32.mrb[0].mxu0
    %v295 = vadd.f32 0.0, %v294
    %296 = vdwg.mxu0
    %v297 = vadd.f32 %v151, %v222
    %v298 = vadd.f32 %v152, %v224
    %v299 = vadd.f32 %v153, %v293
    %v300 = vadd.f32 %v154, %v295
    %v301 = vxor.u32 %v297, 2147483648
    %v302 = vxor.u32 %v298, 2147483648
    %v303 = vmul.f32 %v301, 1.442695
    %v304 = vpow.pop %v303
    %v305 = vmul.f32 %v302, 1.442695
    %v306 = vpow.pop %v305
    %v307 = vadd.f32 %v304, 1.0
    %v308 = vadd.f32 %v306, 1.0
    %v309 = vrcp.pop %v307
    %v310 = vmul.f32 1.0, %v309
    %v311 = vrcp.pop %v308
    %v312 = vmul.f32 1.0, %v311
    %v313 = vtanh.pop %v299
    %v314 = vxor.u32 %v300, 2147483648
    %v315 = vmul.f32 %v314, 1.442695
    %v316 = vpow.pop %v315
    %v317 = vadd.f32 %v316, 1.0
    %v318 = vrcp.pop %v317
    %v319 = vmul.f32 1.0, %v318
    %v320 = vmul.f32 %v312, %v140
    %v321 = vmul.f32 %v310, %v313
    %v322 = vadd.f32 %v320, %v321
    %v323 = vtanh.pop %v322
    %v324 = vmul.f32 %v319, %v323
    %s325 = scalar_lea.vmem [#allocation2], 8
    %326 = vst [vmem:[%s325] sm:$0xff] %v324
    %s327 = scalar_lea.vmem [#allocation5], 64
    %v328 = vld [vmem:[%s327] sm:$0xff]
    %v329 = vld [vmem:[%s327 + $0x8] sm:$0xff]
    %v330 = vld [vmem:[%s327 + $0x10] sm:$0xff]
    %v331 = vld [vmem:[%s327 + $0x18] sm:$0xff]
    %332 = vmatprep.subr.mxu0 %v67
    %333 = vmatpush1.msra.mxu0 %v66
    %334 = vmatprep.subr.mxu0 %v71
    %335 = vmatpush1.msra.mxu0 %v70
    %336 = vmatprep.subr.mxu0 %v75
    %337 = vmatpush1.msra.mxu0 %v74
    %338 = vmatprep.subr.mxu0 %v79
    %339 = vmatpush1.msra.mxu0 %v78
    %340 = vmatprep.subr.mxu0 %v83
    %341 = vmatpush1.msra.mxu0 %v82
    %342 = vmatprep.subr.mxu0 %v87
    %343 = vmatpush1.msra.mxu0 %v86
    %344 = vmatprep.subr.mxu0 %v91
    %345 = vmatpush1.msra.mxu0 %v90
    %346 = vmatprep.subr.mxu0 %v95
    %347 = vmatpush1.msra.mxu0 %v94
    %348 = vmatprep.subr.mxu0 %v99
    %349 = vmatpush1.msra.mxu0 %v98
    %350 = vmatprep.subr.mxu0 %v103
    %351 = vmatpush1.msra.mxu0 %v102
    %352 = vmatprep.subr.mxu0 %v107
    %353 = vmatpush1.msra.mxu0 %v106
    %354 = vmatprep.subr.mxu0 %v111
    %355 = vmatpush1.msra.mxu0 %v110
    %356 = vmatprep.subr.mxu0 %v115
    %357 = vmatpush1.msra.mxu0 %v114
    %358 = vmatprep.subr.mxu0 %v119
    %359 = vmatpush1.msra.mxu0 %v118
    %360 = vmatprep.subr.mxu0 %v123
    %361 = vmatpush1.msra.mxu0 %v122
    %362 = vmatprep.subr.mxu0 %v127
    %363 = vmatpush1.msra.mxu0 %v126
    %364 = vmatprep.subr.mxu0 0.0
    %365 = vmatpush1.msra.mxu0 0.0
    %366 = vmatprep.subr.mxu0 0.0
    %367 = vmatpush1.msra.mxu0 0.0
    %368 = vmatprep.subr.mxu0 0.0
    %369 = vmatpush1.msra.mxu0 0.0
    %370 = vmatprep.subr.mxu0 0.0
    %371 = vmatpush1.msra.mxu0 0.0
    %372 = vmatprep.subr.mxu0 0.0
    %373 = vmatpush1.msra.mxu0 0.0
    %374 = vmatprep.subr.mxu0 0.0
    %375 = vmatpush1.msra.mxu0 0.0
    %376 = vmatprep.subr.mxu0 0.0
    %377 = vmatpush1.msra.mxu0 0.0
    %378 = vmatprep.subr.mxu0 0.0
    %379 = vmatpush1.msra.mxu0 0.0
    %380 = vmatprep.subr.mxu0 0.0
    %381 = vmatpush1.msra.mxu0 0.0
    %382 = vmatprep.subr.mxu0 0.0
    %383 = vmatpush1.msra.mxu0 0.0
    %384 = vmatprep.subr.mxu0 0.0
    %385 = vmatpush1.msra.mxu0 0.0
    %386 = vmatprep.subr.mxu0 0.0
    %387 = vmatpush1.msra.mxu0 0.0
    %388 = vmatprep.subr.mxu0 0.0
    %389 = vmatpush1.msra.mxu0 0.0
    %390 = vmatprep.subr.mxu0 0.0
    %391 = vmatpush1.msra.mxu0 0.0
    %392 = vmatprep.subr.mxu0 0.0
    %393 = vmatpush1.msra.mxu0 0.0
    %394 = vmatprep.subr.mxu0 0.0
    %395 = vmatpush1.msra.mxu0 0.0
    %396 = vmatprep.mubr.f32.mxu0 0.0
    %397 = vmatmul.mubr.f32.gmra.mrb[0].mxu0 %v324
    %v398 = vpop.f32.mrb[0].mxu0
    %v399 = vadd.f32 0.0, %v398
    %v400 = vpop.f32.mrb[0].mxu0
    %v401 = vadd.f32 0.0, %v400
    %402 = vdwg.mxu0
    %403 = vmatprep.subr.mxu0 %v69
    %404 = vmatpush1.msra.mxu0 %v68
    %405 = vmatprep.subr.mxu0 %v73
    %406 = vmatpush1.msra.mxu0 %v72
    %407 = vmatprep.subr.mxu0 %v77
    %408 = vmatpush1.msra.mxu0 %v76
    %409 = vmatprep.subr.mxu0 %v81
    %410 = vmatpush1.msra.mxu0 %v80
    %411 = vmatprep.subr.mxu0 %v85
    %412 = vmatpush1.msra.mxu0 %v84
    %413 = vmatprep.subr.mxu0 %v89
    %414 = vmatpush1.msra.mxu0 %v88
    %415 = vmatprep.subr.mxu0 %v93
    %416 = vmatpush1.msra.mxu0 %v92
    %417 = vmatprep.subr.mxu0 %v97
    %418 = vmatpush1.msra.mxu0 %v96
    %419 = vmatprep.subr.mxu0 %v101
    %420 = vmatpush1.msra.mxu0 %v100
    %421 = vmatprep.subr.mxu0 %v105
    %422 = vmatpush1.msra.mxu0 %v104
    %423 = vmatprep.subr.mxu0 %v109
    %424 = vmatpush1.msra.mxu0 %v108
    %425 = vmatprep.subr.mxu0 %v113
    %426 = vmatpush1.msra.mxu0 %v112
    %427 = vmatprep.subr.mxu0 %v117
    %428 = vmatpush1.msra.mxu0 %v116
    %429 = vmatprep.subr.mxu0 %v121
    %430 = vmatpush1.msra.mxu0 %v120
    %431 = vmatprep.subr.mxu0 %v125
    %432 = vmatpush1.msra.mxu0 %v124
    %433 = vmatprep.subr.mxu0 %v129
    %434 = vmatpush1.msra.mxu0 %v128
    %435 = vmatprep.subr.mxu0 0.0
    %436 = vmatpush1.msra.mxu0 0.0
    %437 = vmatprep.subr.mxu0 0.0
    %438 = vmatpush1.msra.mxu0 0.0
    %439 = vmatprep.subr.mxu0 0.0
    %440 = vmatpush1.msra.mxu0 0.0
    %441 = vmatprep.subr.mxu0 0.0
    %442 = vmatpush1.msra.mxu0 0.0
    %443 = vmatprep.subr.mxu0 0.0
    %444 = vmatpush1.msra.mxu0 0.0
    %445 = vmatprep.subr.mxu0 0.0
    %446 = vmatpush1.msra.mxu0 0.0
    %447 = vmatprep.subr.mxu0 0.0
    %448 = vmatpush1.msra.mxu0 0.0
    %449 = vmatprep.subr.mxu0 0.0
    %450 = vmatpush1.msra.mxu0 0.0
    %451 = vmatprep.subr.mxu0 0.0
    %452 = vmatpush1.msra.mxu0 0.0
    %453 = vmatprep.subr.mxu0 0.0
    %454 = vmatpush1.msra.mxu0 0.0
    %455 = vmatprep.subr.mxu0 0.0
    %456 = vmatpush1.msra.mxu0 0.0
    %457 = vmatprep.subr.mxu0 0.0
    %458 = vmatpush1.msra.mxu0 0.0
    %459 = vmatprep.subr.mxu0 0.0
    %460 = vmatpush1.msra.mxu0 0.0
    %461 = vmatprep.subr.mxu0 0.0
    %462 = vmatpush1.msra.mxu0 0.0
    %463 = vmatprep.subr.mxu0 0.0
    %464 = vmatpush1.msra.mxu0 0.0
    %465 = vmatprep.subr.mxu0 0.0
    %466 = vmatpush1.msra.mxu0 0.0
    %467 = vmatprep.mubr.f32.mxu0 0.0
    %468 = vmatmul.mubr.f32.gmra.mrb[0].mxu0 %v324
    %v469 = vpop.f32.mrb[0].mxu0
    %v470 = vadd.f32 0.0, %v469
    %v471 = vpop.f32.mrb[0].mxu0
    %v472 = vadd.f32 0.0, %v471
    %473 = vdwg.mxu0
    %v474 = vadd.f32 %v328, %v399
    %v475 = vadd.f32 %v329, %v401
    %v476 = vadd.f32 %v330, %v470
    %v477 = vadd.f32 %v331, %v472
    %v478 = vxor.u32 %v474, 2147483648
    %v479 = vxor.u32 %v475, 2147483648
    %v480 = vmul.f32 %v478, 1.442695
    %v481 = vpow.pop %v480
    %v482 = vmul.f32 %v479, 1.442695
    %v483 = vpow.pop %v482
    %v484 = vadd.f32 %v481, 1.0
    %v485 = vadd.f32 %v483, 1.0
    %v486 = vrcp.pop %v484
    %v487 = vmul.f32 1.0, %v486
    %v488 = vrcp.pop %v485
    %v489 = vmul.f32 1.0, %v488
    %v490 = vtanh.pop %v476
    %v491 = vxor.u32 %v477, 2147483648
    %v492 = vmul.f32 %v491, 1.442695
    %v493 = vpow.pop %v492
    %v494 = vadd.f32 %v493, 1.0
    %v495 = vrcp.pop %v494
    %v496 = vmul.f32 1.0, %v495
    %v497 = vmul.f32 %v489, %v322
    %v498 = vmul.f32 %v487, %v490
    %v499 = vadd.f32 %v497, %v498
    %v500 = vtanh.pop %v499
    %v501 = vmul.f32 %v496, %v500
    %s502 = scalar_lea.vmem [#allocation2], 16
    %503 = vst [vmem:[%s502] sm:$0xff] %v501
    %s504 = scalar_lea.vmem [#allocation5], 96
    %v505 = vld [vmem:[%s504] sm:$0xff]
    %v506 = vld [vmem:[%s504 + $0x8] sm:$0xff]
    %v507 = vld [vmem:[%s504 + $0x10] sm:$0xff]
    %v508 = vld [vmem:[%s504 + $0x18] sm:$0xff]
    %509 = vmatprep.subr.mxu0 %v67
    %510 = vmatpush1.msra.mxu0 %v66
    %511 = vmatprep.subr.mxu0 %v71
    %512 = vmatpush1.msra.mxu0 %v70
    %513 = vmatprep.subr.mxu0 %v75
    %514 = vmatpush1.msra.mxu0 %v74
    %515 = vmatprep.subr.mxu0 %v79
    %516 = vmatpush1.msra.mxu0 %v78
    %517 = vmatprep.subr.mxu0 %v83
    %518 = vmatpush1.msra.mxu0 %v82
    %519 = vmatprep.subr.mxu0 %v87
    %520 = vmatpush1.msra.mxu0 %v86
    %521 = vmatprep.subr.mxu0 %v91
    %522 = vmatpush1.msra.mxu0 %v90
    %523 = vmatprep.subr.mxu0 %v95
    %524 = vmatpush1.msra.mxu0 %v94
    %525 = vmatprep.subr.mxu0 %v99
    %526 = vmatpush1.msra.mxu0 %v98
    %527 = vmatprep.subr.mxu0 %v103
    %528 = vmatpush1.msra.mxu0 %v102
    %529 = vmatprep.subr.mxu0 %v107
    %530 = vmatpush1.msra.mxu0 %v106
    %531 = vmatprep.subr.mxu0 %v111
    %532 = vmatpush1.msra.mxu0 %v110
    %533 = vmatprep.subr.mxu0 %v115
    %534 = vmatpush1.msra.mxu0 %v114
    %535 = vmatprep.subr.mxu0 %v119
    %536 = vmatpush1.msra.mxu0 %v118
    %537 = vmatprep.subr.mxu0 %v123
    %538 = vmatpush1.msra.mxu0 %v122
    %539 = vmatprep.subr.mxu0 %v127
    %540 = vmatpush1.msra.mxu0 %v126
    %541 = vmatprep.subr.mxu0 0.0
    %542 = vmatpush1.msra.mxu0 0.0
    %543 = vmatprep.subr.mxu0 0.0
    %544 = vmatpush1.msra.mxu0 0.0
    %545 = vmatprep.subr.mxu0 0.0
    %546 = vmatpush1.msra.mxu0 0.0
    %547 = vmatprep.subr.mxu0 0.0
    %548 = vmatpush1.msra.mxu0 0.0
    %549 = vmatprep.subr.mxu0 0.0
    %550 = vmatpush1.msra.mxu0 0.0
    %551 = vmatprep.subr.mxu0 0.0
    %552 = vmatpush1.msra.mxu0 0.0
    %553 = vmatprep.subr.mxu0 0.0
    %554 = vmatpush1.msra.mxu0 0.0
    %555 = vmatprep.subr.mxu0 0.0
    %556 = vmatpush1.msra.mxu0 0.0
    %557 = vmatprep.subr.mxu0 0.0
    %558 = vmatpush1.msra.mxu0 0.0
    %559 = vmatprep.subr.mxu0 0.0
    %560 = vmatpush1.msra.mxu0 0.0
    %561 = vmatprep.subr.mxu0 0.0
    %562 = vmatpush1.msra.mxu0 0.0
    %563 = vmatprep.subr.mxu0 0.0
    %564 = vmatpush1.msra.mxu0 0.0
    %565 = vmatprep.subr.mxu0 0.0
    %566 = vmatpush1.msra.mxu0 0.0
    %567 = vmatprep.subr.mxu0 0.0
    %568 = vmatpush1.msra.mxu0 0.0
    %569 = vmatprep.subr.mxu0 0.0
    %570 = vmatpush1.msra.mxu0 0.0
    %571 = vmatprep.subr.mxu0 0.0
    %572 = vmatpush1.msra.mxu0 0.0
    %573 = vmatprep.mubr.f32.mxu0 0.0
    %574 = vmatmul.mubr.f32.gmra.mrb[0].mxu0 %v501
    %v575 = vpop.f32.mrb[0].mxu0
    %v576 = vadd.f32 0.0, %v575
    %v577 = vpop.f32.mrb[0].mxu0
    %v578 = vadd.f32 0.0, %v577
    %579 = vdwg.mxu0
    %580 = vmatprep.subr.mxu0 %v69
    %581 = vmatpush1.msra.mxu0 %v68
    %582 = vmatprep.subr.mxu0 %v73
    %583 = vmatpush1.msra.mxu0 %v72
    %584 = vmatprep.subr.mxu0 %v77
    %585 = vmatpush1.msra.mxu0 %v76
    %586 = vmatprep.subr.mxu0 %v81
    %587 = vmatpush1.msra.mxu0 %v80
    %588 = vmatprep.subr.mxu0 %v85
    %589 = vmatpush1.msra.mxu0 %v84
    %590 = vmatprep.subr.mxu0 %v89
    %591 = vmatpush1.msra.mxu0 %v88
    %592 = vmatprep.subr.mxu0 %v93
    %593 = vmatpush1.msra.mxu0 %v92
    %594 = vmatprep.subr.mxu0 %v97
    %595 = vmatpush1.msra.mxu0 %v96
    %596 = vmatprep.subr.mxu0 %v101
    %597 = vmatpush1.msra.mxu0 %v100
    %598 = vmatprep.subr.mxu0 %v105
    %599 = vmatpush1.msra.mxu0 %v104
    %600 = vmatprep.subr.mxu0 %v109
    %601 = vmatpush1.msra.mxu0 %v108
    %602 = vmatprep.subr.mxu0 %v113
    %603 = vmatpush1.msra.mxu0 %v112
    %604 = vmatprep.subr.mxu0 %v117
    %605 = vmatpush1.msra.mxu0 %v116
    %606 = vmatprep.subr.mxu0 %v121
    %607 = vmatpush1.msra.mxu0 %v120
    %608 = vmatprep.subr.mxu0 %v125
    %609 = vmatpush1.msra.mxu0 %v124
    %610 = vmatprep.subr.mxu0 %v129
    %611 = vmatpush1.msra.mxu0 %v128
    %612 = vmatprep.subr.mxu0 0.0
    %613 = vmatpush1.msra.mxu0 0.0
    %614 = vmatprep.subr.mxu0 0.0
    %615 = vmatpush1.msra.mxu0 0.0
    %616 = vmatprep.subr.mxu0 0.0
    %617 = vmatpush1.msra.mxu0 0.0
    %618 = vmatprep.subr.mxu0 0.0
    %619 = vmatpush1.msra.mxu0 0.0
    %620 = vmatprep.subr.mxu0 0.0
    %621 = vmatpush1.msra.mxu0 0.0
    %622 = vmatprep.subr.mxu0 0.0
    %623 = vmatpush1.msra.mxu0 0.0
    %624 = vmatprep.subr.mxu0 0.0
    %625 = vmatpush1.msra.mxu0 0.0
    %626 = vmatprep.subr.mxu0 0.0
    %627 = vmatpush1.msra.mxu0 0.0
    %628 = vmatprep.subr.mxu0 0.0
    %629 = vmatpush1.msra.mxu0 0.0
    %630 = vmatprep.subr.mxu0 0.0
    %631 = vmatpush1.msra.mxu0 0.0
    %632 = vmatprep.subr.mxu0 0.0
    %633 = vmatpush1.msra.mxu0 0.0
    %634 = vmatprep.subr.mxu0 0.0
    %635 = vmatpush1.msra.mxu0 0.0
    %636 = vmatprep.subr.mxu0 0.0
    %637 = vmatpush1.msra.mxu0 0.0
    %638 = vmatprep.subr.mxu0 0.0
    %639 = vmatpush1.msra.mxu0 0.0
    %640 = vmatprep.subr.mxu0 0.0
    %641 = vmatpush1.msra.mxu0 0.0
    %642 = vmatprep.subr.mxu0 0.0
    %643 = vmatpush1.msra.mxu0 0.0
    %644 = vmatprep.mubr.f32.mxu0 0.0
    %645 = vmatmul.mubr.f32.gmra.mrb[0].mxu0 %v501
    %v646 = vpop.f32.mrb[0].mxu0
    %v647 = vadd.f32 0.0, %v646
    %v648 = vpop.f32.mrb[0].mxu0
    %v649 = vadd.f32 0.0, %v648
    %650 = vdwg.mxu0
    %v651 = vadd.f32 %v505, %v576
    %v652 = vadd.f32 %v506, %v578
    %v653 = vadd.f32 %v507, %v647
    %v654 = vadd.f32 %v508, %v649
    %v655 = vxor.u32 %v651, 2147483648
    %v656 = vxor.u32 %v652, 2147483648
    %v657 = vmul.f32 %v655, 1.442695
    %v658 = vpow.pop %v657
    %v659 = vmul.f32 %v656, 1.442695
    %v660 = vpow.pop %v659
    %v661 = vadd.f32 %v658, 1.0
    %v662 = vadd.f32 %v660, 1.0
    %v663 = vrcp.pop %v661
    %v664 = vmul.f32 1.0, %v663
    %v665 = vrcp.pop %v662
    %v666 = vmul.f32 1.0, %v665
    %v667 = vtanh.pop %v653
    %v668 = vxor.u32 %v654, 2147483648
    %v669 = vmul.f32 %v668, 1.442695
    %v670 = vpow.pop %v669
    %v671 = vadd.f32 %v670, 1.0
    %v672 = vrcp.pop %v671
    %v673 = vmul.f32 1.0, %v672
    %v674 = vmul.f32 %v666, %v499
    %v675 = vmul.f32 %v664, %v667
    %v676 = vadd.f32 %v674, %v675
    %v677 = vtanh.pop %v676
    %v678 = vmul.f32 %v673, %v677
    %s679 = scalar_lea.vmem [#allocation2], 24
    %680 = vst [vmem:[%s679] sm:$0xff] %v678
    %s681 = scalar_lea.vmem [#allocation5], 128
    %v682 = vld [vmem:[%s681] sm:$0xff]
    %v683 = vld [vmem:[%s681 + $0x8] sm:$0xff]
    %v684 = vld [vmem:[%s681 + $0x10] sm:$0xff]
    %v685 = vld [vmem:[%s681 + $0x18] sm:$0xff]
    %686 = vmatprep.subr.mxu0 %v67
    %687 = vmatpush1.msra.mxu0 %v66
    %688 = vmatprep.subr.mxu0 %v71
    %689 = vmatpush1.msra.mxu0 %v70
    %690 = vmatprep.subr.mxu0 %v75
    %691 = vmatpush1.msra.mxu0 %v74
    %692 = vmatprep.subr.mxu0 %v79
    %693 = vmatpush1.msra.mxu0 %v78
    %694 = vmatprep.subr.mxu0 %v83
    %695 = vmatpush1.msra.mxu0 %v82
    %696 = vmatprep.subr.mxu0 %v87
    %697 = vmatpush1.msra.mxu0 %v86
    %698 = vmatprep.subr.mxu0 %v91
    %699 = vmatpush1.msra.mxu0 %v90
    %700 = vmatprep.subr.mxu0 %v95
    %701 = vmatpush1.msra.mxu0 %v94
    %702 = vmatprep.subr.mxu0 %v99
    %703 = vmatpush1.msra.mxu0 %v98
    %704 = vmatprep.subr.mxu0 %v103
    %705 = vmatpush1.msra.mxu0 %v102
    %706 = vmatprep.subr.mxu0 %v107
    %707 = vmatpush1.msra.mxu0 %v106
    %708 = vmatprep.subr.mxu0 %v111
    %709 = vmatpush1.msra.mxu0 %v110
    %710 = vmatprep.subr.mxu0 %v115
    %711 = vmatpush1.msra.mxu0 %v114
    %712 = vmatprep.subr.mxu0 %v119
    %713 = vmatpush1.msra.mxu0 %v118
    %714 = vmatprep.subr.mxu0 %v123
    %715 = vmatpush1.msra.mxu0 %v122
    %716 = vmatprep.subr.mxu0 %v127
    %717 = vmatpush1.msra.mxu0 %v126
    %718 = vmatprep.subr.mxu0 0.0
    %719 = vmatpush1.msra.mxu0 0.0
    %720 = vmatprep.subr.mxu0 0.0
    %721 = vmatpush1.msra.mxu0 0.0
    %722 = vmatprep.subr.mxu0 0.0
    %723 = vmatpush1.msra.mxu0 0.0
    %724 = vmatprep.subr.mxu0 0.0
    %725 = vmatpush1.msra.mxu0 0.0
    %726 = vmatprep.subr.mxu0 0.0
    %727 = vmatpush1.msra.mxu0 0.0
    %728 = vmatprep.subr.mxu0 0.0
    %729 = vmatpush1.msra.mxu0 0.0
    %730 = vmatprep.subr.mxu0 0.0
    %731 = vmatpush1.msra.mxu0 0.0
    %732 = vmatprep.subr.mxu0 0.0
    %733 = vmatpush1.msra.mxu0 0.0
    %734 = vmatprep.subr.mxu0 0.0
    %735 = vmatpush1.msra.mxu0 0.0
    %736 = vmatprep.subr.mxu0 0.0
    %737 = vmatpush1.msra.mxu0 0.0
    %738 = vmatprep.subr.mxu0 0.0
    %739 = vmatpush1.msra.mxu0 0.0
    %740 = vmatprep.subr.mxu0 0.0
    %741 = vmatpush1.msra.mxu0 0.0
    %742 = vmatprep.subr.mxu0 0.0
    %743 = vmatpush1.msra.mxu0 0.0
    %744 = vmatprep.subr.mxu0 0.0
    %745 = vmatpush1.msra.mxu0 0.0
    %746 = vmatprep.subr.mxu0 0.0
    %747 = vmatpush1.msra.mxu0 0.0
    %748 = vmatprep.subr.mxu0 0.0
    %749 = vmatpush1.msra.mxu0 0.0
    %750 = vmatprep.mubr.f32.mxu0 0.0
    %751 = vmatmul.mubr.f32.gmra.mrb[0].mxu0 %v678
    %v752 = vpop.f32.mrb[0].mxu0
    %v753 = vadd.f32 0.0, %v752
    %v754 = vpop.f32.mrb[0].mxu0
    %v755 = vadd.f32 0.0, %v754
    %756 = vdwg.mxu0
    %757 = vmatprep.subr.mxu0 %v69
    %758 = vmatpush1.msra.mxu0 %v68
    %759 = vmatprep.subr.mxu0 %v73
    %760 = vmatpush1.msra.mxu0 %v72
    %761 = vmatprep.subr.mxu0 %v77
    %762 = vmatpush1.msra.mxu0 %v76
    %763 = vmatprep.subr.mxu0 %v81
    %764 = vmatpush1.msra.mxu0 %v80
    %765 = vmatprep.subr.mxu0 %v85
    %766 = vmatpush1.msra.mxu0 %v84
    %767 = vmatprep.subr.mxu0 %v89
    %768 = vmatpush1.msra.mxu0 %v88
    %769 = vmatprep.subr.mxu0 %v93
    %770 = vmatpush1.msra.mxu0 %v92
    %771 = vmatprep.subr.mxu0 %v97
    %772 = vmatpush1.msra.mxu0 %v96
    %773 = vmatprep.subr.mxu0 %v101
    %774 = vmatpush1.msra.mxu0 %v100
    %775 = vmatprep.subr.mxu0 %v105
    %776 = vmatpush1.msra.mxu0 %v104
    %777 = vmatprep.subr.mxu0 %v109
    %778 = vmatpush1.msra.mxu0 %v108
    %779 = vmatprep.subr.mxu0 %v113
    %780 = vmatpush1.msra.mxu0 %v112
    %781 = vmatprep.subr.mxu0 %v117
    %782 = vmatpush1.msra.mxu0 %v116
    %783 = vmatprep.subr.mxu0 %v121
    %784 = vmatpush1.msra.mxu0 %v120
    %785 = vmatprep.subr.mxu0 %v125
    %786 = vmatpush1.msra.mxu0 %v124
    %787 = vmatprep.subr.mxu0 %v129
    %788 = vmatpush1.msra.mxu0 %v128
    %789 = vmatprep.subr.mxu0 0.0
    %790 = vmatpush1.msra.mxu0 0.0
    %791 = vmatprep.subr.mxu0 0.0
    %792 = vmatpush1.msra.mxu0 0.0
    %793 = vmatprep.subr.mxu0 0.0
    %794 = vmatpush1.msra.mxu0 0.0
    %795 = vmatprep.subr.mxu0 0.0
    %796 = vmatpush1.msra.mxu0 0.0
    %797 = vmatprep.subr.mxu0 0.0
    %798 = vmatpush1.msra.mxu0 0.0
    %799 = vmatprep.subr.mxu0 0.0
    %800 = vmatpush1.msra.mxu0 0.0
    %801 = vmatprep.subr.mxu0 0.0
    %802 = vmatpush1.msra.mxu0 0.0
    %803 = vmatprep.subr.mxu0 0.0
    %804 = vmatpush1.msra.mxu0 0.0
    %805 = vmatprep.subr.mxu0 0.0
    %806 = vmatpush1.msra.mxu0 0.0
    %807 = vmatprep.subr.mxu0 0.0
    %808 = vmatpush1.msra.mxu0 0.0
    %809 = vmatprep.subr.mxu0 0.0
    %810 = vmatpush1.msra.mxu0 0.0
    %811 = vmatprep.subr.mxu0 0.0
    %812 = vmatpush1.msra.mxu0 0.0
    %813 = vmatprep.subr.mxu0 0.0
    %814 = vmatpush1.msra.mxu0 0.0
    %815 = vmatprep.subr.mxu0 0.0
    %816 = vmatpush1.msra.mxu0 0.0
    %817 = vmatprep.subr.mxu0 0.0
    %818 = vmatpush1.msra.mxu0 0.0
    %819 = vmatprep.subr.mxu0 0.0
    %820 = vmatpush1.msra.mxu0 0.0
    %821 = vmatprep.mubr.f32.mxu0 0.0
    %822 = vmatmul.mubr.f32.gmra.mrb[0].mxu0 %v678
    %v823 = vpop.f32.mrb[0].mxu0
    %v824 = vadd.f32 0.0, %v823
    %v825 = vpop.f32.mrb[0].mxu0
    %v826 = vadd.f32 0.0, %v825
    %827 = vdwg.mxu0
    %v828 = vadd.f32 %v682, %v753
    %v829 = vadd.f32 %v683, %v755
    %v830 = vadd.f32 %v684, %v824
    %v831 = vadd.f32 %v685, %v826
    %v832 = vxor.u32 %v828, 2147483648
    %v833 = vxor.u32 %v829, 2147483648
    %v834 = vmul.f32 %v832, 1.442695
    %v835 = vpow.pop %v834
    %v836 = vmul.f32 %v833, 1.442695
    %v837 = vpow.pop %v836
    %v838 = vadd.f32 %v835, 1.0
    %v839 = vadd.f32 %v837, 1.0
    %v840 = vrcp.pop %v838
    %v841 = vmul.f32 1.0, %v840
    %v842 = vrcp.pop %v839
    %v843 = vmul.f32 1.0, %v842
    %v844 = vtanh.pop %v830
    %v845 = vxor.u32 %v831, 2147483648
    %v846 = vmul.f32 %v845, 1.442695
    %v847 = vpow.pop %v846
    %v848 = vadd.f32 %v847, 1.0
    %v849 = vrcp.pop %v848
    %v850 = vmul.f32 1.0, %v849
    %v851 = vmul.f32 %v843, %v676
    %v852 = vmul.f32 %v841, %v844
    %v853 = vadd.f32 %v851, %v852
    %v854 = vtanh.pop %v853
    %v855 = vmul.f32 %v850, %v854
    %s856 = scalar_lea.vmem [#allocation2], 32
    %857 = vst [vmem:[%s856] sm:$0xff] %v855
    %s858 = scalar_lea.vmem [#allocation5], 160
    %v859 = vld [vmem:[%s858] sm:$0xff]
    %v860 = vld [vmem:[%s858 + $0x8] sm:$0xff]
    %v861 = vld [vmem:[%s858 + $0x10] sm:$0xff]
    %v862 = vld [vmem:[%s858 + $0x18] sm:$0xff]
    %863 = vmatprep.subr.mxu0 %v67
    %864 = vmatpush1.msra.mxu0 %v66
    %865 = vmatprep.subr.mxu0 %v71
    %866 = vmatpush1.msra.mxu0 %v70
    %867 = vmatprep.subr.mxu0 %v75
    %868 = vmatpush1.msra.mxu0 %v74
    %869 = vmatprep.subr.mxu0 %v79
    %870 = vmatpush1.msra.mxu0 %v78
    %871 = vmatprep.subr.mxu0 %v83
    %872 = vmatpush1.msra.mxu0 %v82
    %873 = vmatprep.subr.mxu0 %v87
    %874 = vmatpush1.msra.mxu0 %v86
    %875 = vmatprep.subr.mxu0 %v91
    %876 = vmatpush1.msra.mxu0 %v90
    %877 = vmatprep.subr.mxu0 %v95
    %878 = vmatpush1.msra.mxu0 %v94
    %879 = vmatprep.subr.mxu0 %v99
    %880 = vmatpush1.msra.mxu0 %v98
    %881 = vmatprep.subr.mxu0 %v103
    %882 = vmatpush1.msra.mxu0 %v102
    %883 = vmatprep.subr.mxu0 %v107
    %884 = vmatpush1.msra.mxu0 %v106
    %885 = vmatprep.subr.mxu0 %v111
    %886 = vmatpush1.msra.mxu0 %v110
    %887 = vmatprep.subr.mxu0 %v115
    %888 = vmatpush1.msra.mxu0 %v114
    %889 = vmatprep.subr.mxu0 %v119
    %890 = vmatpush1.msra.mxu0 %v118
    %891 = vmatprep.subr.mxu0 %v123
    %892 = vmatpush1.msra.mxu0 %v122
    %893 = vmatprep.subr.mxu0 %v127
    %894 = vmatpush1.msra.mxu0 %v126
    %895 = vmatprep.subr.mxu0 0.0
    %896 = vmatpush1.msra.mxu0 0.0
    %897 = vmatprep.subr.mxu0 0.0
    %898 = vmatpush1.msra.mxu0 0.0
    %899 = vmatprep.subr.mxu0 0.0
    %900 = vmatpush1.msra.mxu0 0.0
    %901 = vmatprep.subr.mxu0 0.0
    %902 = vmatpush1.msra.mxu0 0.0
    %903 = vmatprep.subr.mxu0 0.0
    %904 = vmatpush1.msra.mxu0 0.0
    %905 = vmatprep.subr.mxu0 0.0
    %906 = vmatpush1.msra.mxu0 0.0
    %907 = vmatprep.subr.mxu0 0.0
    %908 = vmatpush1.msra.mxu0 0.0
    %909 = vmatprep.subr.mxu0 0.0
    %910 = vmatpush1.msra.mxu0 0.0
    %911 = vmatprep.subr.mxu0 0.0
    %912 = vmatpush1.msra.mxu0 0.0
    %913 = vmatprep.subr.mxu0 0.0
    %914 = vmatpush1.msra.mxu0 0.0
    %915 = vmatprep.subr.mxu0 0.0
    %916 = vmatpush1.msra.mxu0 0.0
    %917 = vmatprep.subr.mxu0 0.0
    %918 = vmatpush1.msra.mxu0 0.0
    %919 = vmatprep.subr.mxu0 0.0
    %920 = vmatpush1.msra.mxu0 0.0
    %921 = vmatprep.subr.mxu0 0.0
    %922 = vmatpush1.msra.mxu0 0.0
    %923 = vmatprep.subr.mxu0 0.0
    %924 = vmatpush1.msra.mxu0 0.0
    %925 = vmatprep.subr.mxu0 0.0
    %926 = vmatpush1.msra.mxu0 0.0
    %927 = vmatprep.mubr.f32.mxu0 0.0
    %928 = vmatmul.mubr.f32.gmra.mrb[0].mxu0 %v855
    %v929 = vpop.f32.mrb[0].mxu0
    %v930 = vadd.f32 0.0, %v929
    %v931 = vpop.f32.mrb[0].mxu0
    %v932 = vadd.f32 0.0, %v931
    %933 = vdwg.mxu0
    %934 = vmatprep.subr.mxu0 %v69
    %935 = vmatpush1.msra.mxu0 %v68
    %936 = vmatprep.subr.mxu0 %v73
    %937 = vmatpush1.msra.mxu0 %v72
    %938 = vmatprep.subr.mxu0 %v77
    %939 = vmatpush1.msra.mxu0 %v76
    %940 = vmatprep.subr.mxu0 %v81
    %941 = vmatpush1.msra.mxu0 %v80
    %942 = vmatprep.subr.mxu0 %v85
    %943 = vmatpush1.msra.mxu0 %v84
    %944 = vmatprep.subr.mxu0 %v89
    %945 = vmatpush1.msra.mxu0 %v88
    %946 = vmatprep.subr.mxu0 %v93
    %947 = vmatpush1.msra.mxu0 %v92
    %948 = vmatprep.subr.mxu0 %v97
    %949 = vmatpush1.msra.mxu0 %v96
    %950 = vmatprep.subr.mxu0 %v101
    %951 = vmatpush1.msra.mxu0 %v100
    %952 = vmatprep.subr.mxu0 %v105
    %953 = vmatpush1.msra.mxu0 %v104
    %954 = vmatprep.subr.mxu0 %v109
    %955 = vmatpush1.msra.mxu0 %v108
    %956 = vmatprep.subr.mxu0 %v113
    %957 = vmatpush1.msra.mxu0 %v112
    %958 = vmatprep.subr.mxu0 %v117
    %959 = vmatpush1.msra.mxu0 %v116
    %960 = vmatprep.subr.mxu0 %v121
    %961 = vmatpush1.msra.mxu0 %v120
    %962 = vmatprep.subr.mxu0 %v125
    %963 = vmatpush1.msra.mxu0 %v124
    %964 = vmatprep.subr.mxu0 %v129
    %965 = vmatpush1.msra.mxu0 %v128
    %966 = vmatprep.subr.mxu0 0.0
    %967 = vmatpush1.msra.mxu0 0.0
    %968 = vmatprep.subr.mxu0 0.0
    %969 = vmatpush1.msra.mxu0 0.0
    %970 = vmatprep.subr.mxu0 0.0
    %971 = vmatpush1.msra.mxu0 0.0
    %972 = vmatprep.subr.mxu0 0.0
    %973 = vmatpush1.msra.mxu0 0.0
    %974 = vmatprep.subr.mxu0 0.0
    %975 = vmatpush1.msra.mxu0 0.0
    %976 = vmatprep.subr.mxu0 0.0
    %977 = vmatpush1.msra.mxu0 0.0
    %978 = vmatprep.subr.mxu0 0.0
    %979 = vmatpush1.msra.mxu0 0.0
    %980 = vmatprep.subr.mxu0 0.0
    %981 = vmatpush1.msra.mxu0 0.0
    %982 = vmatprep.subr.mxu0 0.0
    %983 = vmatpush1.msra.mxu0 0.0
    %984 = vmatprep.subr.mxu0 0.0
    %985 = vmatpush1.msra.mxu0 0.0
    %986 = vmatprep.subr.mxu0 0.0
    %987 = vmatpush1.msra.mxu0 0.0
    %988 = vmatprep.subr.mxu0 0.0
    %989 = vmatpush1.msra.mxu0 0.0
    %990 = vmatprep.subr.mxu0 0.0
    %991 = vmatpush1.msra.mxu0 0.0
    %992 = vmatprep.subr.mxu0 0.0
    %993 = vmatpush1.msra.mxu0 0.0
    %994 = vmatprep.subr.mxu0 0.0
    %995 = vmatpush1.msra.mxu0 0.0
    %996 = vmatprep.subr.mxu0 0.0
    %997 = vmatpush1.msra.mxu0 0.0
    %998 = vmatprep.mubr.f32.mxu0 0.0
    %999 = vmatmul.mubr.f32.gmra.mrb[0].mxu0 %v855
    %v1000 = vpop.f32.mrb[0].mxu0
    %v1001 = vadd.f32 0.0, %v1000
    %v1002 = vpop.f32.mrb[0].mxu0
    %v1003 = vadd.f32 0.0, %v1002
    %1004 = vdwg.mxu0
    %v1005 = vadd.f32 %v859, %v930
    %v1006 = vadd.f32 %v860, %v932
    %v1007 = vadd.f32 %v861, %v1001
    %v1008 = vadd.f32 %v862, %v1003
    %v1009 = vxor.u32 %v1005, 2147483648
    %v1010 = vxor.u32 %v1006, 2147483648
    %v1011 = vmul.f32 %v1009, 1.442695
    %v1012 = vpow.pop %v1011
    %v1013 = vmul.f32 %v1010, 1.442695
    %v1014 = vpow.pop %v1013
    %v1015 = vadd.f32 %v1012, 1.0
    %v1016 = vadd.f32 %v1014, 1.0
    %v1017 = vrcp.pop %v1015
    %v1018 = vmul.f32 1.0, %v1017
    %v1019 = vrcp.pop %v1016
    %v1020 = vmul.f32 1.0, %v1019
    %v1021 = vtanh.pop %v1007
    %v1022 = vxor.u32 %v1008, 2147483648
    %v1023 = vmul.f32 %v1022, 1.442695
    %v1024 = vpow.pop %v1023
    %v1025 = vadd.f32 %v1024, 1.0
    %v1026 = vrcp.pop %v1025
    %v1027 = vmul.f32 1.0, %v1026
    %v1028 = vmul.f32 %v1020, %v853
    %v1029 = vmul.f32 %v1018, %v1021
    %v1030 = vadd.f32 %v1028, %v1029
    %v1031 = vtanh.pop %v1030
    %v1032 = vmul.f32 %v1027, %v1031
    %s1033 = scalar_lea.vmem [#allocation2], 40
    %1034 = vst [vmem:[%s1033] sm:$0xff] %v1032
    %s1035 = scalar_lea.vmem [#allocation5], 192
    %v1036 = vld [vmem:[%s1035] sm:$0xff]
    %v1037 = vld [vmem:[%s1035 + $0x8] sm:$0xff]
    %v1038 = vld [vmem:[%s1035 + $0x10] sm:$0xff]
    %v1039 = vld [vmem:[%s1035 + $0x18] sm:$0xff]
    %1040 = vmatprep.subr.mxu0 %v67
    %1041 = vmatpush1.msra.mxu0 %v66
    %1042 = vmatprep.subr.mxu0 %v71
    %1043 = vmatpush1.msra.mxu0 %v70
    %1044 = vmatprep.subr.mxu0 %v75
    %1045 = vmatpush1.msra.mxu0 %v74
    %1046 = vmatprep.subr.mxu0 %v79
    %1047 = vmatpush1.msra.mxu0 %v78
    %1048 = vmatprep.subr.mxu0 %v83
    %1049 = vmatpush1.msra.mxu0 %v82
    %1050 = vmatprep.subr.mxu0 %v87
    %1051 = vmatpush1.msra.mxu0 %v86
    %1052 = vmatprep.subr.mxu0 %v91
    %1053 = vmatpush1.msra.mxu0 %v90
    %1054 = vmatprep.subr.mxu0 %v95
    %1055 = vmatpush1.msra.mxu0 %v94
    %1056 = vmatprep.subr.mxu0 %v99
    %1057 = vmatpush1.msra.mxu0 %v98
    %1058 = vmatprep.subr.mxu0 %v103
    %1059 = vmatpush1.msra.mxu0 %v102
    %1060 = vmatprep.subr.mxu0 %v107
    %1061 = vmatpush1.msra.mxu0 %v106
    %1062 = vmatprep.subr.mxu0 %v111
    %1063 = vmatpush1.msra.mxu0 %v110
    %1064 = vmatprep.subr.mxu0 %v115
    %1065 = vmatpush1.msra.mxu0 %v114
    %1066 = vmatprep.subr.mxu0 %v119
    %1067 = vmatpush1.msra.mxu0 %v118
    %1068 = vmatprep.subr.mxu0 %v123
    %1069 = vmatpush1.msra.mxu0 %v122
    %1070 = vmatprep.subr.mxu0 %v127
    %1071 = vmatpush1.msra.mxu0 %v126
    %1072 = vmatprep.subr.mxu0 0.0
    %1073 = vmatpush1.msra.mxu0 0.0
    %1074 = vmatprep.subr.mxu0 0.0
    %1075 = vmatpush1.msra.mxu0 0.0
    %1076 = vmatprep.subr.mxu0 0.0
    %1077 = vmatpush1.msra.mxu0 0.0
    %1078 = vmatprep.subr.mxu0 0.0
    %1079 = vmatpush1.msra.mxu0 0.0
    %1080 = vmatprep.subr.mxu0 0.0
    %1081 = vmatpush1.msra.mxu0 0.0
    %1082 = vmatprep.subr.mxu0 0.0
    %1083 = vmatpush1.msra.mxu0 0.0
    %1084 = vmatprep.subr.mxu0 0.0
    %1085 = vmatpush1.msra.mxu0 0.0
    %1086 = vmatprep.subr.mxu0 0.0
    %1087 = vmatpush1.msra.mxu0 0.0
    %1088 = vmatprep.subr.mxu0 0.0
    %1089 = vmatpush1.msra.mxu0 0.0
    %1090 = vmatprep.subr.mxu0 0.0
    %1091 = vmatpush1.msra.mxu0 0.0
    %1092 = vmatprep.subr.mxu0 0.0
    %1093 = vmatpush1.msra.mxu0 0.0
    %1094 = vmatprep.subr.mxu0 0.0
    %1095 = vmatpush1.msra.mxu0 0.0
    %1096 = vmatprep.subr.mxu0 0.0
    %1097 = vmatpush1.msra.mxu0 0.0
    %1098 = vmatprep.subr.mxu0 0.0
    %1099 = vmatpush1.msra.mxu0 0.0
    %1100 = vmatprep.subr.mxu0 0.0
    %1101 = vmatpush1.msra.mxu0 0.0
    %1102 = vmatprep.subr.mxu0 0.0
    %1103 = vmatpush1.msra.mxu0 0.0
    %1104 = vmatprep.mubr.f32.mxu0 0.0
    %1105 = vmatmul.mubr.f32.gmra.mrb[0].mxu0 %v1032
    %v1106 = vpop.f32.mrb[0].mxu0
    %v1107 = vadd.f32 0.0, %v1106
    %v1108 = vpop.f32.mrb[0].mxu0
    %v1109 = vadd.f32 0.0, %v1108
    %1110 = vdwg.mxu0
    %1111 = vmatprep.subr.mxu0 %v69
    %1112 = vmatpush1.msra.mxu0 %v68
    %1113 = vmatprep.subr.mxu0 %v73
    %1114 = vmatpush1.msra.mxu0 %v72
    %1115 = vmatprep.subr.mxu0 %v77
    %1116 = vmatpush1.msra.mxu0 %v76
    %1117 = vmatprep.subr.mxu0 %v81
    %1118 = vmatpush1.msra.mxu0 %v80
    %1119 = vmatprep.subr.mxu0 %v85
    %1120 = vmatpush1.msra.mxu0 %v84
    %1121 = vmatprep.subr.mxu0 %v89
    %1122 = vmatpush1.msra.mxu0 %v88
    %1123 = vmatprep.subr.mxu0 %v93
    %1124 = vmatpush1.msra.mxu0 %v92
    %1125 = vmatprep.subr.mxu0 %v97
    %1126 = vmatpush1.msra.mxu0 %v96
    %1127 = vmatprep.subr.mxu0 %v101
    %1128 = vmatpush1.msra.mxu0 %v100
    %1129 = vmatprep.subr.mxu0 %v105
    %1130 = vmatpush1.msra.mxu0 %v104
    %1131 = vmatprep.subr.mxu0 %v109
    %1132 = vmatpush1.msra.mxu0 %v108
    %1133 = vmatprep.subr.mxu0 %v113
    %1134 = vmatpush1.msra.mxu0 %v112
    %1135 = vmatprep.subr.mxu0 %v117
    %1136 = vmatpush1.msra.mxu0 %v116
    %1137 = vmatprep.subr.mxu0 %v121
    %1138 = vmatpush1.msra.mxu0 %v120
    %1139 = vmatprep.subr.mxu0 %v125
    %1140 = vmatpush1.msra.mxu0 %v124
    %1141 = vmatprep.subr.mxu0 %v129
    %1142 = vmatpush1.msra.mxu0 %v128
    %1143 = vmatprep.subr.mxu0 0.0
    %1144 = vmatpush1.msra.mxu0 0.0
    %1145 = vmatprep.subr.mxu0 0.0
    %1146 = vmatpush1.msra.mxu0 0.0
    %1147 = vmatprep.subr.mxu0 0.0
    %1148 = vmatpush1.msra.mxu0 0.0
    %1149 = vmatprep.subr.mxu0 0.0
    %1150 = vmatpush1.msra.mxu0 0.0
    %1151 = vmatprep.subr.mxu0 0.0
    %1152 = vmatpush1.msra.mxu0 0.0
    %1153 = vmatprep.subr.mxu0 0.0
    %1154 = vmatpush1.msra.mxu0 0.0
    %1155 = vmatprep.subr.mxu0 0.0
    %1156 = vmatpush1.msra.mxu0 0.0
    %1157 = vmatprep.subr.mxu0 0.0
    %1158 = vmatpush1.msra.mxu0 0.0
    %1159 = vmatprep.subr.mxu0 0.0
    %1160 = vmatpush1.msra.mxu0 0.0
    %1161 = vmatprep.subr.mxu0 0.0
    %1162 = vmatpush1.msra.mxu0 0.0
    %1163 = vmatprep.subr.mxu0 0.0
    %1164 = vmatpush1.msra.mxu0 0.0
    %1165 = vmatprep.subr.mxu0 0.0
    %1166 = vmatpush1.msra.mxu0 0.0
    %1167 = vmatprep.subr.mxu0 0.0
    %1168 = vmatpush1.msra.mxu0 0.0
    %1169 = vmatprep.subr.mxu0 0.0
    %1170 = vmatpush1.msra.mxu0 0.0
    %1171 = vmatprep.subr.mxu0 0.0
    %1172 = vmatpush1.msra.mxu0 0.0
    %1173 = vmatprep.subr.mxu0 0.0
    %1174 = vmatpush1.msra.mxu0 0.0
    %1175 = vmatprep.mubr.f32.mxu0 0.0
    %1176 = vmatmul.mubr.f32.gmra.mrb[0].mxu0 %v1032
    %v1177 = vpop.f32.mrb[0].mxu0
    %v1178 = vadd.f32 0.0, %v1177
    %v1179 = vpop.f32.mrb[0].mxu0
    %v1180 = vadd.f32 0.0, %v1179
    %1181 = vdwg.mxu0
    %v1182 = vadd.f32 %v1036, %v1107
    %v1183 = vadd.f32 %v1037, %v1109
    %v1184 = vadd.f32 %v1038, %v1178
    %v1185 = vadd.f32 %v1039, %v1180
    %v1186 = vxor.u32 %v1182, 2147483648
    %v1187 = vxor.u32 %v1183, 2147483648
    %v1188 = vmul.f32 %v1186, 1.442695
    %v1189 = vpow.pop %v1188
    %v1190 = vmul.f32 %v1187, 1.442695
    %v1191 = vpow.pop %v1190
    %v1192 = vadd.f32 %v1189, 1.0
    %v1193 = vadd.f32 %v1191, 1.0
    %v1194 = vrcp.pop %v1192
    %v1195 = vmul.f32 1.0, %v1194
    %v1196 = vrcp.pop %v1193
    %v1197 = vmul.f32 1.0, %v1196
    %v1198 = vtanh.pop %v1184
    %v1199 = vxor.u32 %v1185, 2147483648
    %v1200 = vmul.f32 %v1199, 1.442695
    %v1201 = vpow.pop %v1200
    %v1202 = vadd.f32 %v1201, 1.0
    %v1203 = vrcp.pop %v1202
    %v1204 = vmul.f32 1.0, %v1203
    %v1205 = vmul.f32 %v1197, %v1030
    %v1206 = vmul.f32 %v1195, %v1198
    %v1207 = vadd.f32 %v1205, %v1206
    %v1208 = vtanh.pop %v1207
    %v1209 = vmul.f32 %v1204, %v1208
    %s1210 = scalar_lea.vmem [#allocation2], 48
    %1211 = vst [vmem:[%s1210] sm:$0xff] %v1209
    %s1212 = scalar_lea.vmem [#allocation5], 224
    %v1213 = vld [vmem:[%s1212] sm:$0xff]
    %v1214 = vld [vmem:[%s1212 + $0x8] sm:$0xff]
    %v1215 = vld [vmem:[%s1212 + $0x10] sm:$0xff]
    %v1216 = vld [vmem:[%s1212 + $0x18] sm:$0xff]
    %1217 = vmatprep.subr.mxu0 %v67
    %1218 = vmatpush1.msra.mxu0 %v66
    %1219 = vmatprep.subr.mxu0 %v71
    %1220 = vmatpush1.msra.mxu0 %v70
    %1221 = vmatprep.subr.mxu0 %v75
    %1222 = vmatpush1.msra.mxu0 %v74
    %1223 = vmatprep.subr.mxu0 %v79
    %1224 = vmatpush1.msra.mxu0 %v78
    %1225 = vmatprep.subr.mxu0 %v83
    %1226 = vmatpush1.msra.mxu0 %v82
    %1227 = vmatprep.subr.mxu0 %v87
    %1228 = vmatpush1.msra.mxu0 %v86
    %1229 = vmatprep.subr.mxu0 %v91
    %1230 = vmatpush1.msra.mxu0 %v90
    %1231 = vmatprep.subr.mxu0 %v95
    %1232 = vmatpush1.msra.mxu0 %v94
    %1233 = vmatprep.subr.mxu0 %v99
    %1234 = vmatpush1.msra.mxu0 %v98
    %1235 = vmatprep.subr.mxu0 %v103
    %1236 = vmatpush1.msra.mxu0 %v102
    %1237 = vmatprep.subr.mxu0 %v107
    %1238 = vmatpush1.msra.mxu0 %v106
    %1239 = vmatprep.subr.mxu0 %v111
    %1240 = vmatpush1.msra.mxu0 %v110
    %1241 = vmatprep.subr.mxu0 %v115
    %1242 = vmatpush1.msra.mxu0 %v114
    %1243 = vmatprep.subr.mxu0 %v119
    %1244 = vmatpush1.msra.mxu0 %v118
    %1245 = vmatprep.subr.mxu0 %v123
    %1246 = vmatpush1.msra.mxu0 %v122
    %1247 = vmatprep.subr.mxu0 %v127
    %1248 = vmatpush1.msra.mxu0 %v126
    %1249 = vmatprep.subr.mxu0 0.0
    %1250 = vmatpush1.msra.mxu0 0.0
    %1251 = vmatprep.subr.mxu0 0.0
    %1252 = vmatpush1.msra.mxu0 0.0
    %1253 = vmatprep.subr.mxu0 0.0
    %1254 = vmatpush1.msra.mxu0 0.0
    %1255 = vmatprep.subr.mxu0 0.0
    %1256 = vmatpush1.msra.mxu0 0.0
    %1257 = vmatprep.subr.mxu0 0.0
    %1258 = vmatpush1.msra.mxu0 0.0
    %1259 = vmatprep.subr.mxu0 0.0
    %1260 = vmatpush1.msra.mxu0 0.0
    %1261 = vmatprep.subr.mxu0 0.0
    %1262 = vmatpush1.msra.mxu0 0.0
    %1263 = vmatprep.subr.mxu0 0.0
    %1264 = vmatpush1.msra.mxu0 0.0
    %1265 = vmatprep.subr.mxu0 0.0
    %1266 = vmatpush1.msra.mxu0 0.0
    %1267 = vmatprep.subr.mxu0 0.0
    %1268 = vmatpush1.msra.mxu0 0.0
    %1269 = vmatprep.subr.mxu0 0.0
    %1270 = vmatpush1.msra.mxu0 0.0
    %1271 = vmatprep.subr.mxu0 0.0
    %1272 = vmatpush1.msra.mxu0 0.0
    %1273 = vmatprep.subr.mxu0 0.0
    %1274 = vmatpush1.msra.mxu0 0.0
    %1275 = vmatprep.subr.mxu0 0.0
    %1276 = vmatpush1.msra.mxu0 0.0
    %1277 = vmatprep.subr.mxu0 0.0
    %1278 = vmatpush1.msra.mxu0 0.0
    %1279 = vmatprep.subr.mxu0 0.0
    %1280 = vmatpush1.msra.mxu0 0.0
    %1281 = vmatprep.mubr.f32.mxu0 0.0
    %1282 = vmatmul.mubr.f32.gmra.mrb[0].mxu0 %v1209
    %v1283 = vpop.f32.mrb[0].mxu0
    %v1284 = vadd.f32 0.0, %v1283
    %v1285 = vpop.f32.mrb[0].mxu0
    %v1286 = vadd.f32 0.0, %v1285
    %1287 = vdwg.mxu0
    %1288 = vmatprep.subr.mxu0 %v69
    %1289 = vmatpush1.msra.mxu0 %v68
    %1290 = vmatprep.subr.mxu0 %v73
    %1291 = vmatpush1.msra.mxu0 %v72
    %1292 = vmatprep.subr.mxu0 %v77
    %1293 = vmatpush1.msra.mxu0 %v76
    %1294 = vmatprep.subr.mxu0 %v81
    %1295 = vmatpush1.msra.mxu0 %v80
    %1296 = vmatprep.subr.mxu0 %v85
    %1297 = vmatpush1.msra.mxu0 %v84
    %1298 = vmatprep.subr.mxu0 %v89
    %1299 = vmatpush1.msra.mxu0 %v88
    %1300 = vmatprep.subr.mxu0 %v93
    %1301 = vmatpush1.msra.mxu0 %v92
    %1302 = vmatprep.subr.mxu0 %v97
    %1303 = vmatpush1.msra.mxu0 %v96
    %1304 = vmatprep.subr.mxu0 %v101
    %1305 = vmatpush1.msra.mxu0 %v100
    %1306 = vmatprep.subr.mxu0 %v105
    %1307 = vmatpush1.msra.mxu0 %v104
    %1308 = vmatprep.subr.mxu0 %v109
    %1309 = vmatpush1.msra.mxu0 %v108
    %1310 = vmatprep.subr.mxu0 %v113
    %1311 = vmatpush1.msra.mxu0 %v112
    %1312 = vmatprep.subr.mxu0 %v117
    %1313 = vmatpush1.msra.mxu0 %v116
    %1314 = vmatprep.subr.mxu0 %v121
    %1315 = vmatpush1.msra.mxu0 %v120
    %1316 = vmatprep.subr.mxu0 %v125
    %1317 = vmatpush1.msra.mxu0 %v124
    %1318 = vmatprep.subr.mxu0 %v129
    %1319 = vmatpush1.msra.mxu0 %v128
    %1320 = vmatprep.subr.mxu0 0.0
    %1321 = vmatpush1.msra.mxu0 0.0
    %1322 = vmatprep.subr.mxu0 0.0
    %1323 = vmatpush1.msra.mxu0 0.0
    %1324 = vmatprep.subr.mxu0 0.0
    %1325 = vmatpush1.msra.mxu0 0.0
    %1326 = vmatprep.subr.mxu0 0.0
    %1327 = vmatpush1.msra.mxu0 0.0
    %1328 = vmatprep.subr.mxu0 0.0
    %1329 = vmatpush1.msra.mxu0 0.0
    %1330 = vmatprep.subr.mxu0 0.0
    %1331 = vmatpush1.msra.mxu0 0.0
    %1332 = vmatprep.subr.mxu0 0.0
    %1333 = vmatpush1.msra.mxu0 0.0
    %1334 = vmatprep.subr.mxu0 0.0
    %1335 = vmatpush1.msra.mxu0 0.0
    %1336 = vmatprep.subr.mxu0 0.0
    %1337 = vmatpush1.msra.mxu0 0.0
    %1338 = vmatprep.subr.mxu0 0.0
    %1339 = vmatpush1.msra.mxu0 0.0
    %1340 = vmatprep.subr.mxu0 0.0
    %1341 = vmatpush1.msra.mxu0 0.0
    %1342 = vmatprep.subr.mxu0 0.0
    %1343 = vmatpush1.msra.mxu0 0.0
    %1344 = vmatprep.subr.mxu0 0.0
    %1345 = vmatpush1.msra.mxu0 0.0
    %1346 = vmatprep.subr.mxu0 0.0
    %1347 = vmatpush1.msra.mxu0 0.0
    %1348 = vmatprep.subr.mxu0 0.0
    %1349 = vmatpush1.msra.mxu0 0.0
    %1350 = vmatprep.subr.mxu0 0.0
    %1351 = vmatpush1.msra.mxu0 0.0
    %1352 = vmatprep.mubr.f32.mxu0 0.0
    %1353 = vmatmul.mubr.f32.gmra.mrb[0].mxu0 %v1209
    %v1354 = vpop.f32.mrb[0].mxu0
    %v1355 = vadd.f32 0.0, %v1354
    %v1356 = vpop.f32.mrb[0].mxu0
    %v1357 = vadd.f32 0.0, %v1356
    %1358 = vdwg.mxu0
    %v1359 = vadd.f32 %v1213, %v1284
    %v1360 = vadd.f32 %v1214, %v1286
    %v1361 = vadd.f32 %v1215, %v1355
    %v1362 = vadd.f32 %v1216, %v1357
    %v1363 = vxor.u32 %v1359, 2147483648
    %v1364 = vxor.u32 %v1360, 2147483648
    %v1365 = vmul.f32 %v1363, 1.442695
    %v1366 = vpow.pop %v1365
    %v1367 = vmul.f32 %v1364, 1.442695
    %v1368 = vpow.pop %v1367
    %v1369 = vadd.f32 %v1366, 1.0
    %v1370 = vadd.f32 %v1368, 1.0
    %v1371 = vrcp.pop %v1369
    %v1372 = vmul.f32 1.0, %v1371
    %v1373 = vrcp.pop %v1370
    %v1374 = vmul.f32 1.0, %v1373
    %v1375 = vtanh.pop %v1361
    %v1376 = vxor.u32 %v1362, 2147483648
    %v1377 = vmul.f32 %v1376, 1.442695
    %v1378 = vpow.pop %v1377
    %v1379 = vadd.f32 %v1378, 1.0
    %v1380 = vrcp.pop %v1379
    %v1381 = vmul.f32 1.0, %v1380
    %v1382 = vmul.f32 %v1374, %v1207
    %v1383 = vmul.f32 %v1372, %v1375
    %v1384 = vadd.f32 %v1382, %v1383
    %v1385 = vtanh.pop %v1384
    %v1386 = vmul.f32 %v1381, %v1385
    %s1387 = scalar_lea.vmem [#allocation2], 56
    %1388 = vst [vmem:[%s1387] sm:$0xff] %v1386
    %s1389 = scalar_lea.vmem [#allocation9], 512
    %v1390 = vld [vmem:[%s1389] sm:$0xff]
    %v1391 = vld [vmem:[%s1389 + $0x8] sm:$0xff]
    %v1392 = vld [vmem:[%s1389 + $0x10] sm:$0xff]
    %v1393 = vld [vmem:[%s1389 + $0x18] sm:$0xff]
    %v1394 = vld [vmem:[%s1389 + $0x20] sm:$0xff]
    %v1395 = vld [vmem:[%s1389 + $0x28] sm:$0xff]
    %v1396 = vld [vmem:[%s1389 + $0x30] sm:$0xff]
    %v1397 = vld [vmem:[%s1389 + $0x38] sm:$0xff]
    %v1398 = vld [vmem:[%s1389 + $0x40] sm:$0xff]
    %v1399 = vld [vmem:[%s1389 + $0x48] sm:$0xff]
    %v1400 = vld [vmem:[%s1389 + $0x50] sm:$0xff]
    %v1401 = vld [vmem:[%s1389 + $0x58] sm:$0xff]
    %v1402 = vld [vmem:[%s1389 + $0x60] sm:$0xff]
    %v1403 = vld [vmem:[%s1389 + $0x68] sm:$0xff]
    %v1404 = vld [vmem:[%s1389 + $0x70] sm:$0xff]
    %v1405 = vld [vmem:[%s1389 + $0x78] sm:$0xff]
    %v1406 = vld [vmem:[%s1389 + $0x80] sm:$0xff]
    %v1407 = vld [vmem:[%s1389 + $0x88] sm:$0xff]
    %v1408 = vld [vmem:[%s1389 + $0x90] sm:$0xff]
    %v1409 = vld [vmem:[%s1389 + $0x98] sm:$0xff]
    %v1410 = vld [vmem:[%s1389 + $0xa0] sm:$0xff]
    %v1411 = vld [vmem:[%s1389 + $0xa8] sm:$0xff]
    %v1412 = vld [vmem:[%s1389 + $0xb0] sm:$0xff]
    %v1413 = vld [vmem:[%s1389 + $0xb8] sm:$0xff]
    %v1414 = vld [vmem:[%s1389 + $0xc0] sm:$0xff]
    %v1415 = vld [vmem:[%s1389 + $0xc8] sm:$0xff]
    %v1416 = vld [vmem:[%s1389 + $0xd0] sm:$0xff]
    %v1417 = vld [vmem:[%s1389 + $0xd8] sm:$0xff]
    %v1418 = vld [vmem:[%s1389 + $0xe0] sm:$0xff]
    %v1419 = vld [vmem:[%s1389 + $0xe8] sm:$0xff]
    %v1420 = vld [vmem:[%s1389 + $0xf0] sm:$0xff]
    %v1421 = vld [vmem:[%s1389 + $0xf8] sm:$0xff]
    %v1422 = vld [vmem:[%s1389 + $0x100] sm:$0xff]
    %v1423 = vld [vmem:[%s1389 + $0x108] sm:$0xff]
    %v1424 = vld [vmem:[%s1389 + $0x110] sm:$0xff]
    %v1425 = vld [vmem:[%s1389 + $0x118] sm:$0xff]
    %v1426 = vld [vmem:[%s1389 + $0x120] sm:$0xff]
    %v1427 = vld [vmem:[%s1389 + $0x128] sm:$0xff]
    %v1428 = vld [vmem:[%s1389 + $0x130] sm:$0xff]
    %v1429 = vld [vmem:[%s1389 + $0x138] sm:$0xff]
    %v1430 = vld [vmem:[%s1389 + $0x140] sm:$0xff]
    %v1431 = vld [vmem:[%s1389 + $0x148] sm:$0xff]
    %v1432 = vld [vmem:[%s1389 + $0x150] sm:$0xff]
    %v1433 = vld [vmem:[%s1389 + $0x158] sm:$0xff]
    %v1434 = vld [vmem:[%s1389 + $0x160] sm:$0xff]
    %v1435 = vld [vmem:[%s1389 + $0x168] sm:$0xff]
    %v1436 = vld [vmem:[%s1389 + $0x170] sm:$0xff]
    %v1437 = vld [vmem:[%s1389 + $0x178] sm:$0xff]
    %v1438 = vld [vmem:[%s1389 + $0x180] sm:$0xff]
    %v1439 = vld [vmem:[%s1389 + $0x188] sm:$0xff]
    %v1440 = vld [vmem:[%s1389 + $0x190] sm:$0xff]
    %v1441 = vld [vmem:[%s1389 + $0x198] sm:$0xff]
    %v1442 = vld [vmem:[%s1389 + $0x1a0] sm:$0xff]
    %v1443 = vld [vmem:[%s1389 + $0x1a8] sm:$0xff]
    %v1444 = vld [vmem:[%s1389 + $0x1b0] sm:$0xff]
    %v1445 = vld [vmem:[%s1389 + $0x1b8] sm:$0xff]
    %v1446 = vld [vmem:[%s1389 + $0x1c0] sm:$0xff]
    %v1447 = vld [vmem:[%s1389 + $0x1c8] sm:$0xff]
    %v1448 = vld [vmem:[%s1389 + $0x1d0] sm:$0xff]
    %v1449 = vld [vmem:[%s1389 + $0x1d8] sm:$0xff]
    %v1450 = vld [vmem:[%s1389 + $0x1e0] sm:$0xff]
    %v1451 = vld [vmem:[%s1389 + $0x1e8] sm:$0xff]
    %v1452 = vld [vmem:[%s1389 + $0x1f0] sm:$0xff]
    %v1453 = vld [vmem:[%s1389 + $0x1f8] sm:$0xff]
    %v1454 = vld [vmem:[#allocation7] sm:$0xff]
    %v1455 = vld [vmem:[#allocation7 + $0x8] sm:$0xff]
    %v1456 = vld [vmem:[#allocation7 + $0x10] sm:$0xff]
    %v1457 = vld [vmem:[#allocation7 + $0x18] sm:$0xff]
    %v1458 = vld [vmem:[#allocation7 + $0x20] sm:$0xff]
    %v1459 = vld [vmem:[#allocation7 + $0x28] sm:$0xff]
    %v1460 = vld [vmem:[#allocation7 + $0x30] sm:$0xff]
    %v1461 = vld [vmem:[#allocation7 + $0x38] sm:$0xff]
    %v1462 = vld [vmem:[#allocation7 + $0x40] sm:$0xff]
    %v1463 = vld [vmem:[#allocation7 + $0x48] sm:$0xff]
    %v1464 = vld [vmem:[#allocation7 + $0x50] sm:$0xff]
    %v1465 = vld [vmem:[#allocation7 + $0x58] sm:$0xff]
    %v1466 = vld [vmem:[#allocation7 + $0x60] sm:$0xff]
    %v1467 = vld [vmem:[#allocation7 + $0x68] sm:$0xff]
    %v1468 = vld [vmem:[#allocation7 + $0x70] sm:$0xff]
    %v1469 = vld [vmem:[#allocation7 + $0x78] sm:$0xff]
    %v1470 = vld [vmem:[#allocation7 + $0x80] sm:$0xff]
    %v1471 = vld [vmem:[#allocation7 + $0x88] sm:$0xff]
    %v1472 = vld [vmem:[#allocation7 + $0x90] sm:$0xff]
    %v1473 = vld [vmem:[#allocation7 + $0x98] sm:$0xff]
    %v1474 = vld [vmem:[#allocation7 + $0xa0] sm:$0xff]
    %v1475 = vld [vmem:[#allocation7 + $0xa8] sm:$0xff]
    %v1476 = vld [vmem:[#allocation7 + $0xb0] sm:$0xff]
    %v1477 = vld [vmem:[#allocation7 + $0xb8] sm:$0xff]
    %v1478 = vld [vmem:[#allocation7 + $0xc0] sm:$0xff]
    %v1479 = vld [vmem:[#allocation7 + $0xc8] sm:$0xff]
    %v1480 = vld [vmem:[#allocation7 + $0xd0] sm:$0xff]
    %v1481 = vld [vmem:[#allocation7 + $0xd8] sm:$0xff]
    %v1482 = vld [vmem:[#allocation7 + $0xe0] sm:$0xff]
    %v1483 = vld [vmem:[#allocation7 + $0xe8] sm:$0xff]
    %v1484 = vld [vmem:[#allocation7 + $0xf0] sm:$0xff]
    %v1485 = vld [vmem:[#allocation7 + $0xf8] sm:$0xff]
    %v1486 = vld [vmem:[#allocation7 + $0x100] sm:$0xff]
    %v1487 = vld [vmem:[#allocation7 + $0x108] sm:$0xff]
    %v1488 = vld [vmem:[#allocation7 + $0x110] sm:$0xff]
    %v1489 = vld [vmem:[#allocation7 + $0x118] sm:$0xff]
    %v1490 = vld [vmem:[#allocation7 + $0x120] sm:$0xff]
    %v1491 = vld [vmem:[#allocation7 + $0x128] sm:$0xff]
    %v1492 = vld [vmem:[#allocation7 + $0x130] sm:$0xff]
    %v1493 = vld [vmem:[#allocation7 + $0x138] sm:$0xff]
    %v1494 = vld [vmem:[#allocation7 + $0x140] sm:$0xff]
    %v1495 = vld [vmem:[#allocation7 + $0x148] sm:$0xff]
    %v1496 = vld [vmem:[#allocation7 + $0x150] sm:$0xff]
    %v1497 = vld [vmem:[#allocation7 + $0x158] sm:$0xff]
    %v1498 = vld [vmem:[#allocation7 + $0x160] sm:$0xff]
    %v1499 = vld [vmem:[#allocation7 + $0x168] sm:$0xff]
    %v1500 = vld [vmem:[#allocation7 + $0x170] sm:$0xff]
    %v1501 = vld [vmem:[#allocation7 + $0x178] sm:$0xff]
    %v1502 = vld [vmem:[#allocation7 + $0x180] sm:$0xff]
    %v1503 = vld [vmem:[#allocation7 + $0x188] sm:$0xff]
    %v1504 = vld [vmem:[#allocation7 + $0x190] sm:$0xff]
    %v1505 = vld [vmem:[#allocation7 + $0x198] sm:$0xff]
    %v1506 = vld [vmem:[#allocation7 + $0x1a0] sm:$0xff]
    %v1507 = vld [vmem:[#allocation7 + $0x1a8] sm:$0xff]
    %v1508 = vld [vmem:[#allocation7 + $0x1b0] sm:$0xff]
    %v1509 = vld [vmem:[#allocation7 + $0x1b8] sm:$0xff]
    %v1510 = vld [vmem:[#allocation7 + $0x1c0] sm:$0xff]
    %v1511 = vld [vmem:[#allocation7 + $0x1c8] sm:$0xff]
    %v1512 = vld [vmem:[#allocation7 + $0x1d0] sm:$0xff]
    %v1513 = vld [vmem:[#allocation7 + $0x1d8] sm:$0xff]
    %v1514 = vld [vmem:[#allocation7 + $0x1e0] sm:$0xff]
    %v1515 = vld [vmem:[#allocation7 + $0x1e8] sm:$0xff]
    %v1516 = vld [vmem:[#allocation7 + $0x1f0] sm:$0xff]
    %v1517 = vld [vmem:[#allocation7 + $0x1f8] sm:$0xff]
    %v1518 = vld [vmem:[#allocation2] sm:$0xff]
    %v1519 = vld [vmem:[#allocation2 + $0x8] sm:$0xff]
    %v1520 = vld [vmem:[#allocation2 + $0x10] sm:$0xff]
    %v1521 = vld [vmem:[#allocation2 + $0x18] sm:$0xff]
    %v1522 = vld [vmem:[#allocation2 + $0x20] sm:$0xff]
    %v1523 = vld [vmem:[#allocation2 + $0x28] sm:$0xff]
    %v1524 = vld [vmem:[#allocation2 + $0x30] sm:$0xff]
    %v1525 = vld [vmem:[#allocation2 + $0x38] sm:$0xff]
    %v1526 = vld [vmem:[%s3] sm:$0xf]
    %v1528 = vlaneseq
    %v1529 = vshrl.u32 %v1528, 7
    %v1530 = vsub.s32 0, %v1529
    %v1531 = vrot.slane %v1526, %v1530
    %v1532 = vlaneseq
    %v1533 = vshrl.u32 %v1532, 7
    %v1534 = vsub.s32 1, %v1533
    %v1535 = vrot.slane %v1526, %v1534
    %v1536 = vlaneseq
    %v1537 = vshrl.u32 %v1536, 7
    %v1538 = vsub.s32 2, %v1537
    %v1539 = vrot.slane %v1526, %v1538
    %v1540 = vlaneseq
    %v1541 = vshrl.u32 %v1540, 7
    %v1542 = vsub.s32 3, %v1541
    %v1543 = vrot.slane %v1526, %v1542
    %1548 = vmatprep.subr.mxu0 %v1455
    %1549 = vmatpush1.msra.mxu0 %v1454
    %1550 = vmatprep.subr.mxu0 %v1459
    %1551 = vmatpush1.msra.mxu0 %v1458
    %1552 = vmatprep.subr.mxu0 %v1463
    %1553 = vmatpush1.msra.mxu0 %v1462
    %1554 = vmatprep.subr.mxu0 %v1467
    %1555 = vmatpush1.msra.mxu0 %v1466
    %1556 = vmatprep.subr.mxu0 %v1471
    %1557 = vmatpush1.msra.mxu0 %v1470
    %1558 = vmatprep.subr.mxu0 %v1475
    %1559 = vmatpush1.msra.mxu0 %v1474
    %1560 = vmatprep.subr.mxu0 %v1479
    %1561 = vmatpush1.msra.mxu0 %v1478
    %1562 = vmatprep.subr.mxu0 %v1483
    %1563 = vmatpush1.msra.mxu0 %v1482
    %1564 = vmatprep.subr.mxu0 %v1487
    %1565 = vmatpush1.msra.mxu0 %v1486
    %1566 = vmatprep.subr.mxu0 %v1491
    %1567 = vmatpush1.msra.mxu0 %v1490
    %1568 = vmatprep.subr.mxu0 %v1495
    %1569 = vmatpush1.msra.mxu0 %v1494
    %1570 = vmatprep.subr.mxu0 %v1499
    %1571 = vmatpush1.msra.mxu0 %v1498
    %1572 = vmatprep.subr.mxu0 %v1503
    %1573 = vmatpush1.msra.mxu0 %v1502
    %1574 = vmatprep.subr.mxu0 %v1507
    %1575 = vmatpush1.msra.mxu0 %v1506
    %1576 = vmatprep.subr.mxu0 %v1511
    %1577 = vmatpush1.msra.mxu0 %v1510
    %1578 = vmatprep.subr.mxu0 %v1515
    %1579 = vmatpush1.msra.mxu0 %v1514
    %1580 = vmatprep.subr.mxu0 0.0
    %1581 = vmatpush1.msra.mxu0 0.0
    %1582 = vmatprep.subr.mxu0 0.0
    %1583 = vmatpush1.msra.mxu0 0.0
    %1584 = vmatprep.subr.mxu0 0.0
    %1585 = vmatpush1.msra.mxu0 0.0
    %1586 = vmatprep.subr.mxu0 0.0
    %1587 = vmatpush1.msra.mxu0 0.0
    %1588 = vmatprep.subr.mxu0 0.0
    %1589 = vmatpush1.msra.mxu0 0.0
    %1590 = vmatprep.subr.mxu0 0.0
    %1591 = vmatpush1.msra.mxu0 0.0
    %1592 = vmatprep.subr.mxu0 0.0
    %1593 = vmatpush1.msra.mxu0 0.0
    %1594 = vmatprep.subr.mxu0 0.0
    %1595 = vmatpush1.msra.mxu0 0.0
    %1596 = vmatprep.subr.mxu0 0.0
    %1597 = vmatpush1.msra.mxu0 0.0
    %1598 = vmatprep.subr.mxu0 0.0
    %1599 = vmatpush1.msra.mxu0 0.0
    %1600 = vmatprep.subr.mxu0 0.0
    %1601 = vmatpush1.msra.mxu0 0.0
    %1602 = vmatprep.subr.mxu0 0.0
    %1603 = vmatpush1.msra.mxu0 0.0
    %1604 = vmatprep.subr.mxu0 0.0
    %1605 = vmatpush1.msra.mxu0 0.0
    %1606 = vmatprep.subr.mxu0 0.0
    %1607 = vmatpush1.msra.mxu0 0.0
    %1608 = vmatprep.subr.mxu0 0.0
    %1609 = vmatpush1.msra.mxu0 0.0
    %1610 = vmatprep.subr.mxu0 0.0
    %1611 = vmatpush1.msra.mxu0 0.0
    %1612 = vmatprep.mubr.f32.mxu0 0.0
    %1613 = vmatmul.mubr.f32.gmra.mrb[0].mxu0 %v1518
    %v1614 = vpop.f32.mrb[0].mxu0
    %v1615 = vadd.f32 %v1531, %v1614
    %v1616 = vpop.f32.mrb[0].mxu0
    %v1617 = vadd.f32 %v1535, %v1616
    %1618 = vmatprep.mubr.f32.mxu0 0.0
    %1619 = vmatmul.mubr.f32.gmra.mrb[0].mxu0 %v1519
    %v1620 = vpop.f32.mrb[0].mxu0
    %v1621 = vadd.f32 %v1531, %v1620
    %v1622 = vpop.f32.mrb[0].mxu0
    %v1623 = vadd.f32 %v1535, %v1622
    %1624 = vmatprep.mubr.f32.mxu0 0.0
    %1625 = vmatmul.mubr.f32.gmra.mrb[0].mxu0 %v1520
    %v1626 = vpop.f32.mrb[0].mxu0
    %v1627 = vadd.f32 %v1531, %v1626
    %v1628 = vpop.f32.mrb[0].mxu0
    %v1629 = vadd.f32 %v1535, %v1628
    %1630 = vmatprep.mubr.f32.mxu0 0.0
    %1631 = vmatmul.mubr.f32.gmra.mrb[0].mxu0 %v1521
    %v1632 = vpop.f32.mrb[0].mxu0
    %v1633 = vadd.f32 %v1531, %v1632
    %v1634 = vpop.f32.mrb[0].mxu0
    %v1635 = vadd.f32 %v1535, %v1634
    %1636 = vmatprep.mubr.f32.mxu0 0.0
    %1637 = vmatmul.mubr.f32.gmra.mrb[0].mxu0 %v1522
    %v1638 = vpop.f32.mrb[0].mxu0
    %v1639 = vadd.f32 %v1531, %v1638
    %v1640 = vpop.f32.mrb[0].mxu0
    %v1641 = vadd.f32 %v1535, %v1640
    %1642 = vmatprep.mubr.f32.mxu0 0.0
    %1643 = vmatmul.mubr.f32.gmra.mrb[0].mxu0 %v1523
    %v1644 = vpop.f32.mrb[0].mxu0
    %v1645 = vadd.f32 %v1531, %v1644
    %v1646 = vpop.f32.mrb[0].mxu0
    %v1647 = vadd.f32 %v1535, %v1646
    %1648 = vmatprep.mubr.f32.mxu0 0.0
    %1649 = vmatmul.mubr.f32.gmra.mrb[0].mxu0 %v1524
    %v1650 = vpop.f32.mrb[0].mxu0
    %v1651 = vadd.f32 %v1531, %v1650
    %v1652 = vpop.f32.mrb[0].mxu0
    %v1653 = vadd.f32 %v1535, %v1652
    %1654 = vmatprep.mubr.f32.mxu0 0.0
    %1655 = vmatmul.mubr.f32.gmra.mrb[0].mxu0 %v1525
    %v1656 = vpop.f32.mrb[0].mxu0
    %v1657 = vadd.f32 %v1531, %v1656
    %v1658 = vpop.f32.mrb[0].mxu0
    %v1659 = vadd.f32 %v1535, %v1658
    %1660 = vdwg.mxu0
    %1661 = vmatprep.subr.mxu0 %v1457
    %1662 = vmatpush1.msra.mxu0 %v1456
    %1663 = vmatprep.subr.mxu0 %v1461
    %1664 = vmatpush1.msra.mxu0 %v1460
    %1665 = vmatprep.subr.mxu0 %v1465
    %1666 = vmatpush1.msra.mxu0 %v1464
    %1667 = vmatprep.subr.mxu0 %v1469
    %1668 = vmatpush1.msra.mxu0 %v1468
    %1669 = vmatprep.subr.mxu0 %v1473
    %1670 = vmatpush1.msra.mxu0 %v1472
    %1671 = vmatprep.subr.mxu0 %v1477
    %1672 = vmatpush1.msra.mxu0 %v1476
    %1673 = vmatprep.subr.mxu0 %v1481
    %1674 = vmatpush1.msra.mxu0 %v1480
    %1675 = vmatprep.subr.mxu0 %v1485
    %1676 = vmatpush1.msra.mxu0 %v1484
    %1677 = vmatprep.subr.mxu0 %v1489
    %1678 = vmatpush1.msra.mxu0 %v1488
    %1679 = vmatprep.subr.mxu0 %v1493
    %1680 = vmatpush1.msra.mxu0 %v1492
    %1681 = vmatprep.subr.mxu0 %v1497
    %1682 = vmatpush1.msra.mxu0 %v1496
    %1683 = vmatprep.subr.mxu0 %v1501
    %1684 = vmatpush1.msra.mxu0 %v1500
    %1685 = vmatprep.subr.mxu0 %v1505
    %1686 = vmatpush1.msra.mxu0 %v1504
    %1687 = vmatprep.subr.mxu0 %v1509
    %1688 = vmatpush1.msra.mxu0 %v1508
    %1689 = vmatprep.subr.mxu0 %v1513
    %1690 = vmatpush1.msra.mxu0 %v1512
    %1691 = vmatprep.subr.mxu0 %v1517
    %1692 = vmatpush1.msra.mxu0 %v1516
    %1693 = vmatprep.subr.mxu0 0.0
    %1694 = vmatpush1.msra.mxu0 0.0
    %1695 = vmatprep.subr.mxu0 0.0
    %1696 = vmatpush1.msra.mxu0 0.0
    %1697 = vmatprep.subr.mxu0 0.0
    %1698 = vmatpush1.msra.mxu0 0.0
    %1699 = vmatprep.subr.mxu0 0.0
    %1700 = vmatpush1.msra.mxu0 0.0
    %1701 = vmatprep.subr.mxu0 0.0
    %1702 = vmatpush1.msra.mxu0 0.0
    %1703 = vmatprep.subr.mxu0 0.0
    %1704 = vmatpush1.msra.mxu0 0.0
    %1705 = vmatprep.subr.mxu0 0.0
    %1706 = vmatpush1.msra.mxu0 0.0
    %1707 = vmatprep.subr.mxu0 0.0
    %1708 = vmatpush1.msra.mxu0 0.0
    %1709 = vmatprep.subr.mxu0 0.0
    %1710 = vmatpush1.msra.mxu0 0.0
    %1711 = vmatprep.subr.mxu0 0.0
    %1712 = vmatpush1.msra.mxu0 0.0
    %1713 = vmatprep.subr.mxu0 0.0
    %1714 = vmatpush1.msra.mxu0 0.0
    %1715 = vmatprep.subr.mxu0 0.0
    %1716 = vmatpush1.msra.mxu0 0.0
    %1717 = vmatprep.subr.mxu0 0.0
    %1718 = vmatpush1.msra.mxu0 0.0
    %1719 = vmatprep.subr.mxu0 0.0
    %1720 = vmatpush1.msra.mxu0 0.0
    %1721 = vmatprep.subr.mxu0 0.0
    %1722 = vmatpush1.msra.mxu0 0.0
    %1723 = vmatprep.subr.mxu0 0.0
    %1724 = vmatpush1.msra.mxu0 0.0
    %1725 = vmatprep.mubr.f32.mxu0 0.0
    %1726 = vmatmul.mubr.f32.gmra.mrb[0].mxu0 %v1518
    %v1727 = vpop.f32.mrb[0].mxu0
    %v1728 = vadd.f32 %v1539, %v1727
    %v1729 = vpop.f32.mrb[0].mxu0
    %v1730 = vadd.f32 %v1543, %v1729
    %1731 = vmatprep.mubr.f32.mxu0 0.0
    %1732 = vmatmul.mubr.f32.gmra.mrb[0].mxu0 %v1519
    %v1733 = vpop.f32.mrb[0].mxu0
    %v1734 = vadd.f32 %v1539, %v1733
    %v1735 = vpop.f32.mrb[0].mxu0
    %v1736 = vadd.f32 %v1543, %v1735
    %1737 = vmatprep.mubr.f32.mxu0 0.0
    %1738 = vmatmul.mubr.f32.gmra.mrb[0].mxu0 %v1520
    %v1739 = vpop.f32.mrb[0].mxu0
    %v1740 = vadd.f32 %v1539, %v1739
    %v1741 = vpop.f32.mrb[0].mxu0
    %v1742 = vadd.f32 %v1543, %v1741
    %1743 = vmatprep.mubr.f32.mxu0 0.0
    %1744 = vmatmul.mubr.f32.gmra.mrb[0].mxu0 %v1521
    %v1745 = vpop.f32.mrb[0].mxu0
    %v1746 = vadd.f32 %v1539, %v1745
    %v1747 = vpop.f32.mrb[0].mxu0
    %v1748 = vadd.f32 %v1543, %v1747
    %1749 = vmatprep.mubr.f32.mxu0 0.0
    %1750 = vmatmul.mubr.f32.gmra.mrb[0].mxu0 %v1522
    %v1751 = vpop.f32.mrb[0].mxu0
    %v1752 = vadd.f32 %v1539, %v1751
    %v1753 = vpop.f32.mrb[0].mxu0
    %v1754 = vadd.f32 %v1543, %v1753
    %1755 = vmatprep.mubr.f32.mxu0 0.0
    %1756 = vmatmul.mubr.f32.gmra.mrb[0].mxu0 %v1523
    %v1757 = vpop.f32.mrb[0].mxu0
    %v1758 = vadd.f32 %v1539, %v1757
    %v1759 = vpop.f32.mrb[0].mxu0
    %v1760 = vadd.f32 %v1543, %v1759
    %1761 = vmatprep.mubr.f32.mxu0 0.0
    %1762 = vmatmul.mubr.f32.gmra.mrb[0].mxu0 %v1524
    %v1763 = vpop.f32.mrb[0].mxu0
    %v1764 = vadd.f32 %v1539, %v1763
    %v1765 = vpop.f32.mrb[0].mxu0
    %v1766 = vadd.f32 %v1543, %v1765
    %1767 = vmatprep.mubr.f32.mxu0 0.0
    %1768 = vmatmul.mubr.f32.gmra.mrb[0].mxu0 %v1525
    %v1769 = vpop.f32.mrb[0].mxu0
    %v1770 = vadd.f32 %v1539, %v1769
    %v1771 = vpop.f32.mrb[0].mxu0
    %v1772 = vadd.f32 %v1543, %v1771
    %1773 = vdwg.mxu0
    %1774 = vst [vmem:[#allocation3] sm:$0xff] %v1615
    %1775 = vst [vmem:[#allocation3 + $0x8] sm:$0xff] %v1617
    %1776 = vst [vmem:[#allocation3 + $0x10] sm:$0xff] %v1728
    %1777 = vst [vmem:[#allocation3 + $0x18] sm:$0xff] %v1730
    %1778 = vst [vmem:[#allocation3 + $0x20] sm:$0xff] %v1621
    %1779 = vst [vmem:[#allocation3 + $0x28] sm:$0xff] %v1623
    %1780 = vst [vmem:[#allocation3 + $0x30] sm:$0xff] %v1734
    %1781 = vst [vmem:[#allocation3 + $0x38] sm:$0xff] %v1736
    %1782 = vst [vmem:[#allocation3 + $0x40] sm:$0xff] %v1627
    %1783 = vst [vmem:[#allocation3 + $0x48] sm:$0xff] %v1629
    %1784 = vst [vmem:[#allocation3 + $0x50] sm:$0xff] %v1740
    %1785 = vst [vmem:[#allocation3 + $0x58] sm:$0xff] %v1742
    %1786 = vst [vmem:[#allocation3 + $0x60] sm:$0xff] %v1633
    %1787 = vst [vmem:[#allocation3 + $0x68] sm:$0xff] %v1635
    %1788 = vst [vmem:[#allocation3 + $0x70] sm:$0xff] %v1746
    %1789 = vst [vmem:[#allocation3 + $0x78] sm:$0xff] %v1748
    %1790 = vst [vmem:[#allocation3 + $0x80] sm:$0xff] %v1639
    %1791 = vst [vmem:[#allocation3 + $0x88] sm:$0xff] %v1641
    %1792 = vst [vmem:[#allocation3 + $0x90] sm:$0xff] %v1752
    %1793 = vst [vmem:[#allocation3 + $0x98] sm:$0xff] %v1754
    %1794 = vst [vmem:[#allocation3 + $0xa0] sm:$0xff] %v1645
    %1795 = vst [vmem:[#allocation3 + $0xa8] sm:$0xff] %v1647
    %1796 = vst [vmem:[#allocation3 + $0xb0] sm:$0xff] %v1758
    %1797 = vst [vmem:[#allocation3 + $0xb8] sm:$0xff] %v1760
    %1798 = vst [vmem:[#allocation3 + $0xc0] sm:$0xff] %v1651
    %1799 = vst [vmem:[#allocation3 + $0xc8] sm:$0xff] %v1653
    %1800 = vst [vmem:[#allocation3 + $0xd0] sm:$0xff] %v1764
    %1801 = vst [vmem:[#allocation3 + $0xd8] sm:$0xff] %v1766
    %1802 = vst [vmem:[#allocation3 + $0xe0] sm:$0xff] %v1657
    %1803 = vst [vmem:[#allocation3 + $0xe8] sm:$0xff] %v1659
    %1804 = vst [vmem:[#allocation3 + $0xf0] sm:$0xff] %v1770
    %1805 = vst [vmem:[#allocation3 + $0xf8] sm:$0xff] %v1772
    %v1806 = vld [vmem:[#allocation3] sm:$0xff]
    %v1807 = vld [vmem:[#allocation3 + $0x10] sm:$0xff]
    %v1808 = vld [vmem:[#allocation3 + $0x18] sm:$0xff]
    %v1809 = vxor.u32 %v1806, 2147483648
    %v1810 = vmul.f32 %v1809, 1.442695
    %v1811 = vpow.pop %v1810
    %v1812 = vadd.f32 %v1811, 1.0
    %v1813 = vrcp.pop %v1812
    %v1814 = vmul.f32 1.0, %v1813
    %v1815 = vtanh.pop %v1807
    %v1816 = vmul.f32 %v1814, %v1815
    %v1817 = vxor.u32 %v1808, 2147483648
    %v1818 = vmul.f32 %v1817, 1.442695
    %v1819 = vpow.pop %v1818
    %v1820 = vadd.f32 %v1819, 1.0
    %v1821 = vrcp.pop %v1820
    %v1822 = vmul.f32 1.0, %v1821
    %v1823 = vtanh.pop %v1816
    %v1824 = vmul.f32 %v1822, %v1823
    %s1825 = smul.u32 1, 4
    %s1826 = smul.addr %s1825, 8
    %s1827 = scalar_lea.vmem [#allocation3], %s1826
    %v1828 = vld [vmem:[%s1827] sm:$0xff]
    %v1829 = vld [vmem:[%s1827 + $0x8] sm:$0xff]
    %v1830 = vld [vmem:[%s1827 + $0x10] sm:$0xff]
    %v1831 = vld [vmem:[%s1827 + $0x18] sm:$0xff]
    %1832 = vmatprep.subr.mxu0 %v1391
    %1833 = vmatpush1.msra.mxu0 %v1390
    %1834 = vmatprep.subr.mxu0 %v1395
    %1835 = vmatpush1.msra.mxu0 %v1394
    %1836 = vmatprep.subr.mxu0 %v1399
    %1837 = vmatpush1.msra.mxu0 %v1398
    %1838 = vmatprep.subr.mxu0 %v1403
    %1839 = vmatpush1.msra.mxu0 %v1402
    %1840 = vmatprep.subr.mxu0 %v1407
    %1841 = vmatpush1.msra.mxu0 %v1406
    %1842 = vmatprep.subr.mxu0 %v1411
    %1843 = vmatpush1.msra.mxu0 %v1410
    %1844 = vmatprep.subr.mxu0 %v1415
    %1845 = vmatpush1.msra.mxu0 %v1414
    %1846 = vmatprep.subr.mxu0 %v1419
    %1847 = vmatpush1.msra.mxu0 %v1418
    %1848 = vmatprep.subr.mxu0 %v1423
    %1849 = vmatpush1.msra.mxu0 %v1422
    %1850 = vmatprep.subr.mxu0 %v1427
    %1851 = vmatpush1.msra.mxu0 %v1426
    %1852 = vmatprep.subr.mxu0 %v1431
    %1853 = vmatpush1.msra.mxu0 %v1430
    %1854 = vmatprep.subr.mxu0 %v1435
    %1855 = vmatpush1.msra.mxu0 %v1434
    %1856 = vmatprep.subr.mxu0 %v1439
    %1857 = vmatpush1.msra.mxu0 %v1438
    %1858 = vmatprep.subr.mxu0 %v1443
    %1859 = vmatpush1.msra.mxu0 %v1442
    %1860 = vmatprep.subr.mxu0 %v1447
    %1861 = vmatpush1.msra.mxu0 %v1446
    %1862 = vmatprep.subr.mxu0 %v1451
    %1863 = vmatpush1.msra.mxu0 %v1450
    %1864 = vmatprep.subr.mxu0 0.0
    %1865 = vmatpush1.msra.mxu0 0.0
    %1866 = vmatprep.subr.mxu0 0.0
    %1867 = vmatpush1.msra.mxu0 0.0
    %1868 = vmatprep.subr.mxu0 0.0
    %1869 = vmatpush1.msra.mxu0 0.0
    %1870 = vmatprep.subr.mxu0 0.0
    %1871 = vmatpush1.msra.mxu0 0.0
    %1872 = vmatprep.subr.mxu0 0.0
    %1873 = vmatpush1.msra.mxu0 0.0
    %1874 = vmatprep.subr.mxu0 0.0
    %1875 = vmatpush1.msra.mxu0 0.0
    %1876 = vmatprep.subr.mxu0 0.0
    %1877 = vmatpush1.msra.mxu0 0.0
    %1878 = vmatprep.subr.mxu0 0.0
    %1879 = vmatpush1.msra.mxu0 0.0
    %1880 = vmatprep.subr.mxu0 0.0
    %1881 = vmatpush1.msra.mxu0 0.0
    %1882 = vmatprep.subr.mxu0 0.0
    %1883 = vmatpush1.msra.mxu0 0.0
    %1884 = vmatprep.subr.mxu0 0.0
    %1885 = vmatpush1.msra.mxu0 0.0
    %1886 = vmatprep.subr.mxu0 0.0
    %1887 = vmatpush1.msra.mxu0 0.0
    %1888 = vmatprep.subr.mxu0 0.0
    %1889 = vmatpush1.msra.mxu0 0.0
    %1890 = vmatprep.subr.mxu0 0.0
    %1891 = vmatpush1.msra.mxu0 0.0
    %1892 = vmatprep.subr.mxu0 0.0
    %1893 = vmatpush1.msra.mxu0 0.0
    %1894 = vmatprep.subr.mxu0 0.0
    %1895 = vmatpush1.msra.mxu0 0.0
    %1896 = vmatprep.mubr.f32.mxu0 0.0
    %1897 = vmatmul.mubr.f32.gmra.mrb[0].mxu0 %v1824
    %v1898 = vpop.f32.mrb[0].mxu0
    %v1899 = vadd.f32 0.0, %v1898
    %v1900 = vpop.f32.mrb[0].mxu0
    %v1901 = vadd.f32 0.0, %v1900
    %1902 = vdwg.mxu0
    %1903 = vmatprep.subr.mxu0 %v1393
    %1904 = vmatpush1.msra.mxu0 %v1392
    %1905 = vmatprep.subr.mxu0 %v1397
    %1906 = vmatpush1.msra.mxu0 %v1396
    %1907 = vmatprep.subr.mxu0 %v1401
    %1908 = vmatpush1.msra.mxu0 %v1400
    %1909 = vmatprep.subr.mxu0 %v1405
    %1910 = vmatpush1.msra.mxu0 %v1404
    %1911 = vmatprep.subr.mxu0 %v1409
    %1912 = vmatpush1.msra.mxu0 %v1408
    %1913 = vmatprep.subr.mxu0 %v1413
    %1914 = vmatpush1.msra.mxu0 %v1412
    %1915 = vmatprep.subr.mxu0 %v1417
    %1916 = vmatpush1.msra.mxu0 %v1416
    %1917 = vmatprep.subr.mxu0 %v1421
    %1918 = vmatpush1.msra.mxu0 %v1420
    %1919 = vmatprep.subr.mxu0 %v1425
    %1920 = vmatpush1.msra.mxu0 %v1424
    %1921 = vmatprep.subr.mxu0 %v1429
    %1922 = vmatpush1.msra.mxu0 %v1428
    %1923 = vmatprep.subr.mxu0 %v1433
    %1924 = vmatpush1.msra.mxu0 %v1432
    %1925 = vmatprep.subr.mxu0 %v1437
    %1926 = vmatpush1.msra.mxu0 %v1436
    %1927 = vmatprep.subr.mxu0 %v1441
    %1928 = vmatpush1.msra.mxu0 %v1440
    %1929 = vmatprep.subr.mxu0 %v1445
    %1930 = vmatpush1.msra.mxu0 %v1444
    %1931 = vmatprep.subr.mxu0 %v1449
    %1932 = vmatpush1.msra.mxu0 %v1448
    %1933 = vmatprep.subr.mxu0 %v1453
    %1934 = vmatpush1.msra.mxu0 %v1452
    %1935 = vmatprep.subr.mxu0 0.0
    %1936 = vmatpush1.msra.mxu0 0.0
    %1937 = vmatprep.subr.mxu0 0.0
    %1938 = vmatpush1.msra.mxu0 0.0
    %1939 = vmatprep.subr.mxu0 0.0
    %1940 = vmatpush1.msra.mxu0 0.0
    %1941 = vmatprep.subr.mxu0 0.0
    %1942 = vmatpush1.msra.mxu0 0.0
    %1943 = vmatprep.subr.mxu0 0.0
    %1944 = vmatpush1.msra.mxu0 0.0
    %1945 = vmatprep.subr.mxu0 0.0
    %1946 = vmatpush1.msra.mxu0 0.0
    %1947 = vmatprep.subr.mxu0 0.0
    %1948 = vmatpush1.msra.mxu0 0.0
    %1949 = vmatprep.subr.mxu0 0.0
    %1950 = vmatpush1.msra.mxu0 0.0
    %1951 = vmatprep.subr.mxu0 0.0
    %1952 = vmatpush1.msra.mxu0 0.0
    %1953 = vmatprep.subr.mxu0 0.0
    %1954 = vmatpush1.msra.mxu0 0.0
    %1955 = vmatprep.subr.mxu0 0.0
    %1956 = vmatpush1.msra.mxu0 0.0
    %1957 = vmatprep.subr.mxu0 0.0
    %1958 = vmatpush1.msra.mxu0 0.0
    %1959 = vmatprep.subr.mxu0 0.0
    %1960 = vmatpush1.msra.mxu0 0.0
    %1961 = vmatprep.subr.mxu0 0.0
    %1962 = vmatpush1.msra.mxu0 0.0
    %1963 = vmatprep.subr.mxu0 0.0
    %1964 = vmatpush1.msra.mxu0 0.0
    %1965 = vmatprep.subr.mxu0 0.0
    %1966 = vmatpush1.msra.mxu0 0.0
    %1967 = vmatprep.mubr.f32.mxu0 0.0
    %1968 = vmatmul.mubr.f32.gmra.mrb[0].mxu0 %v1824
    %v1969 = vpop.f32.mrb[0].mxu0
    %v1970 = vadd.f32 0.0, %v1969
    %v1971 = vpop.f32.mrb[0].mxu0
    %v1972 = vadd.f32 0.0, %v1971
    %1973 = vdwg.mxu0
    %v1974 = vadd.f32 %v1828, %v1899
    %v1975 = vadd.f32 %v1829, %v1901
    %v1976 = vadd.f32 %v1830, %v1970
    %v1977 = vadd.f32 %v1831, %v1972
    %v1978 = vxor.u32 %v1974, 2147483648
    %v1979 = vxor.u32 %v1975, 2147483648
    %v1980 = vmul.f32 %v1978, 1.442695
    %v1981 = vpow.pop %v1980
    %v1982 = vmul.f32 %v1979, 1.442695
    %v1983 = vpow.pop %v1982
    %v1984 = vadd.f32 %v1981, 1.0
    %v1985 = vadd.f32 %v1983, 1.0
    %v1986 = vrcp.pop %v1984
    %v1987 = vmul.f32 1.0, %v1986
    %v1988 = vrcp.pop %v1985
    %v1989 = vmul.f32 1.0, %v1988
    %v1990 = vtanh.pop %v1976
    %v1991 = vxor.u32 %v1977, 2147483648
    %v1992 = vmul.f32 %v1991, 1.442695
    %v1993 = vpow.pop %v1992
    %v1994 = vadd.f32 %v1993, 1.0
    %v1995 = vrcp.pop %v1994
    %v1996 = vmul.f32 1.0, %v1995
    %v1997 = vmul.f32 %v1989, %v1816
    %v1998 = vmul.f32 %v1987, %v1990
    %v1999 = vadd.f32 %v1997, %v1998
    %v2000 = vtanh.pop %v1999
    %v2001 = vmul.f32 %v1996, %v2000
    %s2002 = smul.u32 2, 4
    %s2003 = smul.addr %s2002, 8
    %s2004 = scalar_lea.vmem [#allocation3], %s2003
    %v2005 = vld [vmem:[%s2004] sm:$0xff]
    %v2006 = vld [vmem:[%s2004 + $0x8] sm:$0xff]
    %v2007 = vld [vmem:[%s2004 + $0x10] sm:$0xff]
    %v2008 = vld [vmem:[%s2004 + $0x18] sm:$0xff]
    %2009 = vmatprep.subr.mxu0 %v1391
    %2010 = vmatpush1.msra.mxu0 %v1390
    %2011 = vmatprep.subr.mxu0 %v1395
    %2012 = vmatpush1.msra.mxu0 %v1394
    %2013 = vmatprep.subr.mxu0 %v1399
    %2014 = vmatpush1.msra.mxu0 %v1398
    %2015 = vmatprep.subr.mxu0 %v1403
    %2016 = vmatpush1.msra.mxu0 %v1402
    %2017 = vmatprep.subr.mxu0 %v1407
    %2018 = vmatpush1.msra.mxu0 %v1406
    %2019 = vmatprep.subr.mxu0 %v1411
    %2020 = vmatpush1.msra.mxu0 %v1410
    %2021 = vmatprep.subr.mxu0 %v1415
    %2022 = vmatpush1.msra.mxu0 %v1414
    %2023 = vmatprep.subr.mxu0 %v1419
    %2024 = vmatpush1.msra.mxu0 %v1418
    %2025 = vmatprep.subr.mxu0 %v1423
    %2026 = vmatpush1.msra.mxu0 %v1422
    %2027 = vmatprep.subr.mxu0 %v1427
    %2028 = vmatpush1.msra.mxu0 %v1426
    %2029 = vmatprep.subr.mxu0 %v1431
    %2030 = vmatpush1.msra.mxu0 %v1430
    %2031 = vmatprep.subr.mxu0 %v1435
    %2032 = vmatpush1.msra.mxu0 %v1434
    %2033 = vmatprep.subr.mxu0 %v1439
    %2034 = vmatpush1.msra.mxu0 %v1438
    %2035 = vmatprep.subr.mxu0 %v1443
    %2036 = vmatpush1.msra.mxu0 %v1442
    %2037 = vmatprep.subr.mxu0 %v1447
    %2038 = vmatpush1.msra.mxu0 %v1446
    %2039 = vmatprep.subr.mxu0 %v1451
    %2040 = vmatpush1.msra.mxu0 %v1450
    %2041 = vmatprep.subr.mxu0 0.0
    %2042 = vmatpush1.msra.mxu0 0.0
    %2043 = vmatprep.subr.mxu0 0.0
    %2044 = vmatpush1.msra.mxu0 0.0
    %2045 = vmatprep.subr.mxu0 0.0
    %2046 = vmatpush1.msra.mxu0 0.0
    %2047 = vmatprep.subr.mxu0 0.0
    %2048 = vmatpush1.msra.mxu0 0.0
    %2049 = vmatprep.subr.mxu0 0.0
    %2050 = vmatpush1.msra.mxu0 0.0
    %2051 = vmatprep.subr.mxu0 0.0
    %2052 = vmatpush1.msra.mxu0 0.0
    %2053 = vmatprep.subr.mxu0 0.0
    %2054 = vmatpush1.msra.mxu0 0.0
    %2055 = vmatprep.subr.mxu0 0.0
    %2056 = vmatpush1.msra.mxu0 0.0
    %2057 = vmatprep.subr.mxu0 0.0
    %2058 = vmatpush1.msra.mxu0 0.0
    %2059 = vmatprep.subr.mxu0 0.0
    %2060 = vmatpush1.msra.mxu0 0.0
    %2061 = vmatprep.subr.mxu0 0.0
    %2062 = vmatpush1.msra.mxu0 0.0
    %2063 = vmatprep.subr.mxu0 0.0
    %2064 = vmatpush1.msra.mxu0 0.0
    %2065 = vmatprep.subr.mxu0 0.0
    %2066 = vmatpush1.msra.mxu0 0.0
    %2067 = vmatprep.subr.mxu0 0.0
    %2068 = vmatpush1.msra.mxu0 0.0
    %2069 = vmatprep.subr.mxu0 0.0
    %2070 = vmatpush1.msra.mxu0 0.0
    %2071 = vmatprep.subr.mxu0 0.0
    %2072 = vmatpush1.msra.mxu0 0.0
    %2073 = vmatprep.mubr.f32.mxu0 0.0
    %2074 = vmatmul.mubr.f32.gmra.mrb[0].mxu0 %v2001
    %v2075 = vpop.f32.mrb[0].mxu0
    %v2076 = vadd.f32 0.0, %v2075
    %v2077 = vpop.f32.mrb[0].mxu0
    %v2078 = vadd.f32 0.0, %v2077
    %2079 = vdwg.mxu0
    %2080 = vmatprep.subr.mxu0 %v1393
    %2081 = vmatpush1.msra.mxu0 %v1392
    %2082 = vmatprep.subr.mxu0 %v1397
    %2083 = vmatpush1.msra.mxu0 %v1396
    %2084 = vmatprep.subr.mxu0 %v1401
    %2085 = vmatpush1.msra.mxu0 %v1400
    %2086 = vmatprep.subr.mxu0 %v1405
    %2087 = vmatpush1.msra.mxu0 %v1404
    %2088 = vmatprep.subr.mxu0 %v1409
    %2089 = vmatpush1.msra.mxu0 %v1408
    %2090 = vmatprep.subr.mxu0 %v1413
    %2091 = vmatpush1.msra.mxu0 %v1412
    %2092 = vmatprep.subr.mxu0 %v1417
    %2093 = vmatpush1.msra.mxu0 %v1416
    %2094 = vmatprep.subr.mxu0 %v1421
    %2095 = vmatpush1.msra.mxu0 %v1420
    %2096 = vmatprep.subr.mxu0 %v1425
    %2097 = vmatpush1.msra.mxu0 %v1424
    %2098 = vmatprep.subr.mxu0 %v1429
    %2099 = vmatpush1.msra.mxu0 %v1428
    %2100 = vmatprep.subr.mxu0 %v1433
    %2101 = vmatpush1.msra.mxu0 %v1432
    %2102 = vmatprep.subr.mxu0 %v1437
    %2103 = vmatpush1.msra.mxu0 %v1436
    %2104 = vmatprep.subr.mxu0 %v1441
    %2105 = vmatpush1.msra.mxu0 %v1440
    %2106 = vmatprep.subr.mxu0 %v1445
    %2107 = vmatpush1.msra.mxu0 %v1444
    %2108 = vmatprep.subr.mxu0 %v1449
    %2109 = vmatpush1.msra.mxu0 %v1448
    %2110 = vmatprep.subr.mxu0 %v1453
    %2111 = vmatpush1.msra.mxu0 %v1452
    %2112 = vmatprep.subr.mxu0 0.0
    %2113 = vmatpush1.msra.mxu0 0.0
    %2114 = vmatprep.subr.mxu0 0.0
    %2115 = vmatpush1.msra.mxu0 0.0
    %2116 = vmatprep.subr.mxu0 0.0
    %2117 = vmatpush1.msra.mxu0 0.0
    %2118 = vmatprep.subr.mxu0 0.0
    %2119 = vmatpush1.msra.mxu0 0.0
    %2120 = vmatprep.subr.mxu0 0.0
    %2121 = vmatpush1.msra.mxu0 0.0
    %2122 = vmatprep.subr.mxu0 0.0
    %2123 = vmatpush1.msra.mxu0 0.0
    %2124 = vmatprep.subr.mxu0 0.0
    %2125 = vmatpush1.msra.mxu0 0.0
    %2126 = vmatprep.subr.mxu0 0.0
    %2127 = vmatpush1.msra.mxu0 0.0
    %2128 = vmatprep.subr.mxu0 0.0
    %2129 = vmatpush1.msra.mxu0 0.0
    %2130 = vmatprep.subr.mxu0 0.0
    %2131 = vmatpush1.msra.mxu0 0.0
    %2132 = vmatprep.subr.mxu0 0.0
    %2133 = vmatpush1.msra.mxu0 0.0
    %2134 = vmatprep.subr.mxu0 0.0
    %2135 = vmatpush1.msra.mxu0 0.0
    %2136 = vmatprep.subr.mxu0 0.0
    %2137 = vmatpush1.msra.mxu0 0.0
    %2138 = vmatprep.subr.mxu0 0.0
    %2139 = vmatpush1.msra.mxu0 0.0
    %2140 = vmatprep.subr.mxu0 0.0
    %2141 = vmatpush1.msra.mxu0 0.0
    %2142 = vmatprep.subr.mxu0 0.0
    %2143 = vmatpush1.msra.mxu0 0.0
    %2144 = vmatprep.mubr.f32.mxu0 0.0
    %2145 = vmatmul.mubr.f32.gmra.mrb[0].mxu0 %v2001
    %v2146 = vpop.f32.mrb[0].mxu0
    %v2147 = vadd.f32 0.0, %v2146
    %v2148 = vpop.f32.mrb[0].mxu0
    %v2149 = vadd.f32 0.0, %v2148
    %2150 = vdwg.mxu0
    %v2151 = vadd.f32 %v2005, %v2076
    %v2152 = vadd.f32 %v2006, %v2078
    %v2153 = vadd.f32 %v2007, %v2147
    %v2154 = vadd.f32 %v2008, %v2149
    %v2155 = vxor.u32 %v2151, 2147483648
    %v2156 = vxor.u32 %v2152, 2147483648
    %v2157 = vmul.f32 %v2155, 1.442695
    %v2158 = vpow.pop %v2157
    %v2159 = vmul.f32 %v2156, 1.442695
    %v2160 = vpow.pop %v2159
    %v2161 = vadd.f32 %v2158, 1.0
    %v2162 = vadd.f32 %v2160, 1.0
    %v2163 = vrcp.pop %v2161
    %v2164 = vmul.f32 1.0, %v2163
    %v2165 = vrcp.pop %v2162
    %v2166 = vmul.f32 1.0, %v2165
    %v2167 = vtanh.pop %v2153
    %v2168 = vxor.u32 %v2154, 2147483648
    %v2169 = vmul.f32 %v2168, 1.442695
    %v2170 = vpow.pop %v2169
    %v2171 = vadd.f32 %v2170, 1.0
    %v2172 = vrcp.pop %v2171
    %v2173 = vmul.f32 1.0, %v2172
    %v2174 = vmul.f32 %v2166, %v1999
    %v2175 = vmul.f32 %v2164, %v2167
    %v2176 = vadd.f32 %v2174, %v2175
    %v2177 = vtanh.pop %v2176
    %v2178 = vmul.f32 %v2173, %v2177
    %s2179 = smul.u32 3, 4
    %s2180 = smul.addr %s2179, 8
    %s2181 = scalar_lea.vmem [#allocation3], %s2180
    %v2182 = vld [vmem:[%s2181] sm:$0xff]
    %v2183 = vld [vmem:[%s2181 + $0x8] sm:$0xff]
    %v2184 = vld [vmem:[%s2181 + $0x10] sm:$0xff]
    %v2185 = vld [vmem:[%s2181 + $0x18] sm:$0xff]
    %2186 = vmatprep.subr.mxu0 %v1391
    %2187 = vmatpush1.msra.mxu0 %v1390
    %2188 = vmatprep.subr.mxu0 %v1395
    %2189 = vmatpush1.msra.mxu0 %v1394
    %2190 = vmatprep.subr.mxu0 %v1399
    %2191 = vmatpush1.msra.mxu0 %v1398
    %2192 = vmatprep.subr.mxu0 %v1403
    %2193 = vmatpush1.msra.mxu0 %v1402
    %2194 = vmatprep.subr.mxu0 %v1407
    %2195 = vmatpush1.msra.mxu0 %v1406
    %2196 = vmatprep.subr.mxu0 %v1411
    %2197 = vmatpush1.msra.mxu0 %v1410
    %2198 = vmatprep.subr.mxu0 %v1415
    %2199 = vmatpush1.msra.mxu0 %v1414
    %2200 = vmatprep.subr.mxu0 %v1419
    %2201 = vmatpush1.msra.mxu0 %v1418
    %2202 = vmatprep.subr.mxu0 %v1423
    %2203 = vmatpush1.msra.mxu0 %v1422
    %2204 = vmatprep.subr.mxu0 %v1427
    %2205 = vmatpush1.msra.mxu0 %v1426
    %2206 = vmatprep.subr.mxu0 %v1431
    %2207 = vmatpush1.msra.mxu0 %v1430
    %2208 = vmatprep.subr.mxu0 %v1435
    %2209 = vmatpush1.msra.mxu0 %v1434
    %2210 = vmatprep.subr.mxu0 %v1439
    %2211 = vmatpush1.msra.mxu0 %v1438
    %2212 = vmatprep.subr.mxu0 %v1443
    %2213 = vmatpush1.msra.mxu0 %v1442
    %2214 = vmatprep.subr.mxu0 %v1447
    %2215 = vmatpush1.msra.mxu0 %v1446
    %2216 = vmatprep.subr.mxu0 %v1451
    %2217 = vmatpush1.msra.mxu0 %v1450
    %2218 = vmatprep.subr.mxu0 0.0
    %2219 = vmatpush1.msra.mxu0 0.0
    %2220 = vmatprep.subr.mxu0 0.0
    %2221 = vmatpush1.msra.mxu0 0.0
    %2222 = vmatprep.subr.mxu0 0.0
    %2223 = vmatpush1.msra.mxu0 0.0
    %2224 = vmatprep.subr.mxu0 0.0
    %2225 = vmatpush1.msra.mxu0 0.0
    %2226 = vmatprep.subr.mxu0 0.0
    %2227 = vmatpush1.msra.mxu0 0.0
    %2228 = vmatprep.subr.mxu0 0.0
    %2229 = vmatpush1.msra.mxu0 0.0
    %2230 = vmatprep.subr.mxu0 0.0
    %2231 = vmatpush1.msra.mxu0 0.0
    %2232 = vmatprep.subr.mxu0 0.0
    %2233 = vmatpush1.msra.mxu0 0.0
    %2234 = vmatprep.subr.mxu0 0.0
    %2235 = vmatpush1.msra.mxu0 0.0
    %2236 = vmatprep.subr.mxu0 0.0
    %2237 = vmatpush1.msra.mxu0 0.0
    %2238 = vmatprep.subr.mxu0 0.0
    %2239 = vmatpush1.msra.mxu0 0.0
    %2240 = vmatprep.subr.mxu0 0.0
    %2241 = vmatpush1.msra.mxu0 0.0
    %2242 = vmatprep.subr.mxu0 0.0
    %2243 = vmatpush1.msra.mxu0 0.0
    %2244 = vmatprep.subr.mxu0 0.0
    %2245 = vmatpush1.msra.mxu0 0.0
    %2246 = vmatprep.subr.mxu0 0.0
    %2247 = vmatpush1.msra.mxu0 0.0
    %2248 = vmatprep.subr.mxu0 0.0
    %2249 = vmatpush1.msra.mxu0 0.0
    %2250 = vmatprep.mubr.f32.mxu0 0.0
    %2251 = vmatmul.mubr.f32.gmra.mrb[0].mxu0 %v2178
    %v2252 = vpop.f32.mrb[0].mxu0
    %v2253 = vadd.f32 0.0, %v2252
    %v2254 = vpop.f32.mrb[0].mxu0
    %v2255 = vadd.f32 0.0, %v2254
    %2256 = vdwg.mxu0
    %2257 = vmatprep.subr.mxu0 %v1393
    %2258 = vmatpush1.msra.mxu0 %v1392
    %2259 = vmatprep.subr.mxu0 %v1397
    %2260 = vmatpush1.msra.mxu0 %v1396
    %2261 = vmatprep.subr.mxu0 %v1401
    %2262 = vmatpush1.msra.mxu0 %v1400
    %2263 = vmatprep.subr.mxu0 %v1405
    %2264 = vmatpush1.msra.mxu0 %v1404
    %2265 = vmatprep.subr.mxu0 %v1409
    %2266 = vmatpush1.msra.mxu0 %v1408
    %2267 = vmatprep.subr.mxu0 %v1413
    %2268 = vmatpush1.msra.mxu0 %v1412
    %2269 = vmatprep.subr.mxu0 %v1417
    %2270 = vmatpush1.msra.mxu0 %v1416
    %2271 = vmatprep.subr.mxu0 %v1421
    %2272 = vmatpush1.msra.mxu0 %v1420
    %2273 = vmatprep.subr.mxu0 %v1425
    %2274 = vmatpush1.msra.mxu0 %v1424
    %2275 = vmatprep.subr.mxu0 %v1429
    %2276 = vmatpush1.msra.mxu0 %v1428
    %2277 = vmatprep.subr.mxu0 %v1433
    %2278 = vmatpush1.msra.mxu0 %v1432
    %2279 = vmatprep.subr.mxu0 %v1437
    %2280 = vmatpush1.msra.mxu0 %v1436
    %2281 = vmatprep.subr.mxu0 %v1441
    %2282 = vmatpush1.msra.mxu0 %v1440
    %2283 = vmatprep.subr.mxu0 %v1445
    %2284 = vmatpush1.msra.mxu0 %v1444
    %2285 = vmatprep.subr.mxu0 %v1449
    %2286 = vmatpush1.msra.mxu0 %v1448
    %2287 = vmatprep.subr.mxu0 %v1453
    %2288 = vmatpush1.msra.mxu0 %v1452
    %2289 = vmatprep.subr.mxu0 0.0
    %2290 = vmatpush1.msra.mxu0 0.0
    %2291 = vmatprep.subr.mxu0 0.0
    %2292 = vmatpush1.msra.mxu0 0.0
    %2293 = vmatprep.subr.mxu0 0.0
    %2294 = vmatpush1.msra.mxu0 0.0
    %2295 = vmatprep.subr.mxu0 0.0
    %2296 = vmatpush1.msra.mxu0 0.0
    %2297 = vmatprep.subr.mxu0 0.0
    %2298 = vmatpush1.msra.mxu0 0.0
    %2299 = vmatprep.subr.mxu0 0.0
    %2300 = vmatpush1.msra.mxu0 0.0
    %2301 = vmatprep.subr.mxu0 0.0
    %2302 = vmatpush1.msra.mxu0 0.0
    %2303 = vmatprep.subr.mxu0 0.0
    %2304 = vmatpush1.msra.mxu0 0.0
    %2305 = vmatprep.subr.mxu0 0.0
    %2306 = vmatpush1.msra.mxu0 0.0
    %2307 = vmatprep.subr.mxu0 0.0
    %2308 = vmatpush1.msra.mxu0 0.0
    %2309 = vmatprep.subr.mxu0 0.0
    %2310 = vmatpush1.msra.mxu0 0.0
    %2311 = vmatprep.subr.mxu0 0.0
    %2312 = vmatpush1.msra.mxu0 0.0
    %2313 = vmatprep.subr.mxu0 0.0
    %2314 = vmatpush1.msra.mxu0 0.0
    %2315 = vmatprep.subr.mxu0 0.0
    %2316 = vmatpush1.msra.mxu0 0.0
    %2317 = vmatprep.subr.mxu0 0.0
    %2318 = vmatpush1.msra.mxu0 0.0
    %2319 = vmatprep.subr.mxu0 0.0
    %2320 = vmatpush1.msra.mxu0 0.0
    %2321 = vmatprep.mubr.f32.mxu0 0.0
    %2322 = vmatmul.mubr.f32.gmra.mrb[0].mxu0 %v2178
    %v2323 = vpop.f32.mrb[0].mxu0
    %v2324 = vadd.f32 0.0, %v2323
    %v2325 = vpop.f32.mrb[0].mxu0
    %v2326 = vadd.f32 0.0, %v2325
    %2327 = vdwg.mxu0
    %v2328 = vadd.f32 %v2182, %v2253
    %v2329 = vadd.f32 %v2183, %v2255
    %v2330 = vadd.f32 %v2184, %v2324
    %v2331 = vadd.f32 %v2185, %v2326
    %v2332 = vxor.u32 %v2328, 2147483648
    %v2333 = vxor.u32 %v2329, 2147483648
    %v2334 = vmul.f32 %v2332, 1.442695
    %v2335 = vpow.pop %v2334
    %v2336 = vmul.f32 %v2333, 1.442695
    %v2337 = vpow.pop %v2336
    %v2338 = vadd.f32 %v2335, 1.0
    %v2339 = vadd.f32 %v2337, 1.0
    %v2340 = vrcp.pop %v2338
    %v2341 = vmul.f32 1.0, %v2340
    %v2342 = vrcp.pop %v2339
    %v2343 = vmul.f32 1.0, %v2342
    %v2344 = vtanh.pop %v2330
    %v2345 = vxor.u32 %v2331, 2147483648
    %v2346 = vmul.f32 %v2345, 1.442695
    %v2347 = vpow.pop %v2346
    %v2348 = vadd.f32 %v2347, 1.0
    %v2349 = vrcp.pop %v2348
    %v2350 = vmul.f32 1.0, %v2349
    %v2351 = vmul.f32 %v2343, %v2176
    %v2352 = vmul.f32 %v2341, %v2344
    %v2353 = vadd.f32 %v2351, %v2352
    %v2354 = vtanh.pop %v2353
    %v2355 = vmul.f32 %v2350, %v2354
    %s2356 = smul.u32 4, 4
    %s2357 = smul.addr %s2356, 8
    %s2358 = scalar_lea.vmem [#allocation3], %s2357
    %v2359 = vld [vmem:[%s2358] sm:$0xff]
    %v2360 = vld [vmem:[%s2358 + $0x8] sm:$0xff]
    %v2361 = vld [vmem:[%s2358 + $0x10] sm:$0xff]
    %v2362 = vld [vmem:[%s2358 + $0x18] sm:$0xff]
    %2363 = vmatprep.subr.mxu0 %v1391
    %2364 = vmatpush1.msra.mxu0 %v1390
    %2365 = vmatprep.subr.mxu0 %v1395
    %2366 = vmatpush1.msra.mxu0 %v1394
    %2367 = vmatprep.subr.mxu0 %v1399
    %2368 = vmatpush1.msra.mxu0 %v1398
    %2369 = vmatprep.subr.mxu0 %v1403
    %2370 = vmatpush1.msra.mxu0 %v1402
    %2371 = vmatprep.subr.mxu0 %v1407
    %2372 = vmatpush1.msra.mxu0 %v1406
    %2373 = vmatprep.subr.mxu0 %v1411
    %2374 = vmatpush1.msra.mxu0 %v1410
    %2375 = vmatprep.subr.mxu0 %v1415
    %2376 = vmatpush1.msra.mxu0 %v1414
    %2377 = vmatprep.subr.mxu0 %v1419
    %2378 = vmatpush1.msra.mxu0 %v1418
    %2379 = vmatprep.subr.mxu0 %v1423
    %2380 = vmatpush1.msra.mxu0 %v1422
    %2381 = vmatprep.subr.mxu0 %v1427
    %2382 = vmatpush1.msra.mxu0 %v1426
    %2383 = vmatprep.subr.mxu0 %v1431
    %2384 = vmatpush1.msra.mxu0 %v1430
    %2385 = vmatprep.subr.mxu0 %v1435
    %2386 = vmatpush1.msra.mxu0 %v1434
    %2387 = vmatprep.subr.mxu0 %v1439
    %2388 = vmatpush1.msra.mxu0 %v1438
    %2389 = vmatprep.subr.mxu0 %v1443
    %2390 = vmatpush1.msra.mxu0 %v1442
    %2391 = vmatprep.subr.mxu0 %v1447
    %2392 = vmatpush1.msra.mxu0 %v1446
    %2393 = vmatprep.subr.mxu0 %v1451
    %2394 = vmatpush1.msra.mxu0 %v1450
    %2395 = vmatprep.subr.mxu0 0.0
    %2396 = vmatpush1.msra.mxu0 0.0
    %2397 = vmatprep.subr.mxu0 0.0
    %2398 = vmatpush1.msra.mxu0 0.0
    %2399 = vmatprep.subr.mxu0 0.0
    %2400 = vmatpush1.msra.mxu0 0.0
    %2401 = vmatprep.subr.mxu0 0.0
    %2402 = vmatpush1.msra.mxu0 0.0
    %2403 = vmatprep.subr.mxu0 0.0
    %2404 = vmatpush1.msra.mxu0 0.0
    %2405 = vmatprep.subr.mxu0 0.0
    %2406 = vmatpush1.msra.mxu0 0.0
    %2407 = vmatprep.subr.mxu0 0.0
    %2408 = vmatpush1.msra.mxu0 0.0
    %2409 = vmatprep.subr.mxu0 0.0
    %2410 = vmatpush1.msra.mxu0 0.0
    %2411 = vmatprep.subr.mxu0 0.0
    %2412 = vmatpush1.msra.mxu0 0.0
    %2413 = vmatprep.subr.mxu0 0.0
    %2414 = vmatpush1.msra.mxu0 0.0
    %2415 = vmatprep.subr.mxu0 0.0
    %2416 = vmatpush1.msra.mxu0 0.0
    %2417 = vmatprep.subr.mxu0 0.0
    %2418 = vmatpush1.msra.mxu0 0.0
    %2419 = vmatprep.subr.mxu0 0.0
    %2420 = vmatpush1.msra.mxu0 0.0
    %2421 = vmatprep.subr.mxu0 0.0
    %2422 = vmatpush1.msra.mxu0 0.0
    %2423 = vmatprep.subr.mxu0 0.0
    %2424 = vmatpush1.msra.mxu0 0.0
    %2425 = vmatprep.subr.mxu0 0.0
    %2426 = vmatpush1.msra.mxu0 0.0
    %2427 = vmatprep.mubr.f32.mxu0 0.0
    %2428 = vmatmul.mubr.f32.gmra.mrb[0].mxu0 %v2355
    %v2429 = vpop.f32.mrb[0].mxu0
    %v2430 = vadd.f32 0.0, %v2429
    %v2431 = vpop.f32.mrb[0].mxu0
    %v2432 = vadd.f32 0.0, %v2431
    %2433 = vdwg.mxu0
    %2434 = vmatprep.subr.mxu0 %v1393
    %2435 = vmatpush1.msra.mxu0 %v1392
    %2436 = vmatprep.subr.mxu0 %v1397
    %2437 = vmatpush1.msra.mxu0 %v1396
    %2438 = vmatprep.subr.mxu0 %v1401
    %2439 = vmatpush1.msra.mxu0 %v1400
    %2440 = vmatprep.subr.mxu0 %v1405
    %2441 = vmatpush1.msra.mxu0 %v1404
    %2442 = vmatprep.subr.mxu0 %v1409
    %2443 = vmatpush1.msra.mxu0 %v1408
    %2444 = vmatprep.subr.mxu0 %v1413
    %2445 = vmatpush1.msra.mxu0 %v1412
    %2446 = vmatprep.subr.mxu0 %v1417
    %2447 = vmatpush1.msra.mxu0 %v1416
    %2448 = vmatprep.subr.mxu0 %v1421
    %2449 = vmatpush1.msra.mxu0 %v1420
    %2450 = vmatprep.subr.mxu0 %v1425
    %2451 = vmatpush1.msra.mxu0 %v1424
    %2452 = vmatprep.subr.mxu0 %v1429
    %2453 = vmatpush1.msra.mxu0 %v1428
    %2454 = vmatprep.subr.mxu0 %v1433
    %2455 = vmatpush1.msra.mxu0 %v1432
    %2456 = vmatprep.subr.mxu0 %v1437
    %2457 = vmatpush1.msra.mxu0 %v1436
    %2458 = vmatprep.subr.mxu0 %v1441
    %2459 = vmatpush1.msra.mxu0 %v1440
    %2460 = vmatprep.subr.mxu0 %v1445
    %2461 = vmatpush1.msra.mxu0 %v1444
    %2462 = vmatprep.subr.mxu0 %v1449
    %2463 = vmatpush1.msra.mxu0 %v1448
    %2464 = vmatprep.subr.mxu0 %v1453
    %2465 = vmatpush1.msra.mxu0 %v1452
    %2466 = vmatprep.subr.mxu0 0.0
    %2467 = vmatpush1.msra.mxu0 0.0
    %2468 = vmatprep.subr.mxu0 0.0
    %2469 = vmatpush1.msra.mxu0 0.0
    %2470 = vmatprep.subr.mxu0 0.0
    %2471 = vmatpush1.msra.mxu0 0.0
    %2472 = vmatprep.subr.mxu0 0.0
    %2473 = vmatpush1.msra.mxu0 0.0
    %2474 = vmatprep.subr.mxu0 0.0
    %2475 = vmatpush1.msra.mxu0 0.0
    %2476 = vmatprep.subr.mxu0 0.0
    %2477 = vmatpush1.msra.mxu0 0.0
    %2478 = vmatprep.subr.mxu0 0.0
    %2479 = vmatpush1.msra.mxu0 0.0
    %2480 = vmatprep.subr.mxu0 0.0
    %2481 = vmatpush1.msra.mxu0 0.0
    %2482 = vmatprep.subr.mxu0 0.0
    %2483 = vmatpush1.msra.mxu0 0.0
    %2484 = vmatprep.subr.mxu0 0.0
    %2485 = vmatpush1.msra.mxu0 0.0
    %2486 = vmatprep.subr.mxu0 0.0
    %2487 = vmatpush1.msra.mxu0 0.0
    %2488 = vmatprep.subr.mxu0 0.0
    %2489 = vmatpush1.msra.mxu0 0.0
    %2490 = vmatprep.subr.mxu0 0.0
    %2491 = vmatpush1.msra.mxu0 0.0
    %2492 = vmatprep.subr.mxu0 0.0
    %2493 = vmatpush1.msra.mxu0 0.0
    %2494 = vmatprep.subr.mxu0 0.0
    %2495 = vmatpush1.msra.mxu0 0.0
    %2496 = vmatprep.subr.mxu0 0.0
    %2497 = vmatpush1.msra.mxu0 0.0
    %2498 = vmatprep.mubr.f32.mxu0 0.0
    %2499 = vmatmul.mubr.f32.gmra.mrb[0].mxu0 %v2355
    %v2500 = vpop.f32.mrb[0].mxu0
    %v2501 = vadd.f32 0.0, %v2500
    %v2502 = vpop.f32.mrb[0].mxu0
    %v2503 = vadd.f32 0.0, %v2502
    %2504 = vdwg.mxu0
    %v2505 = vadd.f32 %v2359, %v2430
    %v2506 = vadd.f32 %v2360, %v2432
    %v2507 = vadd.f32 %v2361, %v2501
    %v2508 = vadd.f32 %v2362, %v2503
    %v2509 = vxor.u32 %v2505, 2147483648
    %v2510 = vxor.u32 %v2506, 2147483648
    %v2511 = vmul.f32 %v2509, 1.442695
    %v2512 = vpow.pop %v2511
    %v2513 = vmul.f32 %v2510, 1.442695
    %v2514 = vpow.pop %v2513
    %v2515 = vadd.f32 %v2512, 1.0
    %v2516 = vadd.f32 %v2514, 1.0
    %v2517 = vrcp.pop %v2515
    %v2518 = vmul.f32 1.0, %v2517
    %v2519 = vrcp.pop %v2516
    %v2520 = vmul.f32 1.0, %v2519
    %v2521 = vtanh.pop %v2507
    %v2522 = vxor.u32 %v2508, 2147483648
    %v2523 = vmul.f32 %v2522, 1.442695
    %v2524 = vpow.pop %v2523
    %v2525 = vadd.f32 %v2524, 1.0
    %v2526 = vrcp.pop %v2525
    %v2527 = vmul.f32 1.0, %v2526
    %v2528 = vmul.f32 %v2520, %v2353
    %v2529 = vmul.f32 %v2518, %v2521
    %v2530 = vadd.f32 %v2528, %v2529
    %v2531 = vtanh.pop %v2530
    %v2532 = vmul.f32 %v2527, %v2531
    %s2533 = smul.u32 5, 4
    %s2534 = smul.addr %s2533, 8
    %s2535 = scalar_lea.vmem [#allocation3], %s2534
    %v2536 = vld [vmem:[%s2535] sm:$0xff]
    %v2537 = vld [vmem:[%s2535 + $0x8] sm:$0xff]
    %v2538 = vld [vmem:[%s2535 + $0x10] sm:$0xff]
    %v2539 = vld [vmem:[%s2535 + $0x18] sm:$0xff]
    %2540 = vmatprep.subr.mxu0 %v1391
    %2541 = vmatpush1.msra.mxu0 %v1390
    %2542 = vmatprep.subr.mxu0 %v1395
    %2543 = vmatpush1.msra.mxu0 %v1394
    %2544 = vmatprep.subr.mxu0 %v1399
    %2545 = vmatpush1.msra.mxu0 %v1398
    %2546 = vmatprep.subr.mxu0 %v1403
    %2547 = vmatpush1.msra.mxu0 %v1402
    %2548 = vmatprep.subr.mxu0 %v1407
    %2549 = vmatpush1.msra.mxu0 %v1406
    %2550 = vmatprep.subr.mxu0 %v1411
    %2551 = vmatpush1.msra.mxu0 %v1410
    %2552 = vmatprep.subr.mxu0 %v1415
    %2553 = vmatpush1.msra.mxu0 %v1414
    %2554 = vmatprep.subr.mxu0 %v1419
    %2555 = vmatpush1.msra.mxu0 %v1418
    %2556 = vmatprep.subr.mxu0 %v1423
    %2557 = vmatpush1.msra.mxu0 %v1422
    %2558 = vmatprep.subr.mxu0 %v1427
    %2559 = vmatpush1.msra.mxu0 %v1426
    %2560 = vmatprep.subr.mxu0 %v1431
    %2561 = vmatpush1.msra.mxu0 %v1430
    %2562 = vmatprep.subr.mxu0 %v1435
    %2563 = vmatpush1.msra.mxu0 %v1434
    %2564 = vmatprep.subr.mxu0 %v1439
    %2565 = vmatpush1.msra.mxu0 %v1438
    %2566 = vmatprep.subr.mxu0 %v1443
    %2567 = vmatpush1.msra.mxu0 %v1442
    %2568 = vmatprep.subr.mxu0 %v1447
    %2569 = vmatpush1.msra.mxu0 %v1446
    %2570 = vmatprep.subr.mxu0 %v1451
    %2571 = vmatpush1.msra.mxu0 %v1450
    %2572 = vmatprep.subr.mxu0 0.0
    %2573 = vmatpush1.msra.mxu0 0.0
    %2574 = vmatprep.subr.mxu0 0.0
    %2575 = vmatpush1.msra.mxu0 0.0
    %2576 = vmatprep.subr.mxu0 0.0
    %2577 = vmatpush1.msra.mxu0 0.0
    %2578 = vmatprep.subr.mxu0 0.0
    %2579 = vmatpush1.msra.mxu0 0.0
    %2580 = vmatprep.subr.mxu0 0.0
    %2581 = vmatpush1.msra.mxu0 0.0
    %2582 = vmatprep.subr.mxu0 0.0
    %2583 = vmatpush1.msra.mxu0 0.0
    %2584 = vmatprep.subr.mxu0 0.0
    %2585 = vmatpush1.msra.mxu0 0.0
    %2586 = vmatprep.subr.mxu0 0.0
    %2587 = vmatpush1.msra.mxu0 0.0
    %2588 = vmatprep.subr.mxu0 0.0
    %2589 = vmatpush1.msra.mxu0 0.0
    %2590 = vmatprep.subr.mxu0 0.0
    %2591 = vmatpush1.msra.mxu0 0.0
    %2592 = vmatprep.subr.mxu0 0.0
    %2593 = vmatpush1.msra.mxu0 0.0
    %2594 = vmatprep.subr.mxu0 0.0
    %2595 = vmatpush1.msra.mxu0 0.0
    %2596 = vmatprep.subr.mxu0 0.0
    %2597 = vmatpush1.msra.mxu0 0.0
    %2598 = vmatprep.subr.mxu0 0.0
    %2599 = vmatpush1.msra.mxu0 0.0
    %2600 = vmatprep.subr.mxu0 0.0
    %2601 = vmatpush1.msra.mxu0 0.0
    %2602 = vmatprep.subr.mxu0 0.0
    %2603 = vmatpush1.msra.mxu0 0.0
    %2604 = vmatprep.mubr.f32.mxu0 0.0
    %2605 = vmatmul.mubr.f32.gmra.mrb[0].mxu0 %v2532
    %v2606 = vpop.f32.mrb[0].mxu0
    %v2607 = vadd.f32 0.0, %v2606
    %v2608 = vpop.f32.mrb[0].mxu0
    %v2609 = vadd.f32 0.0, %v2608
    %2610 = vdwg.mxu0
    %2611 = vmatprep.subr.mxu0 %v1393
    %2612 = vmatpush1.msra.mxu0 %v1392
    %2613 = vmatprep.subr.mxu0 %v1397
    %2614 = vmatpush1.msra.mxu0 %v1396
    %2615 = vmatprep.subr.mxu0 %v1401
    %2616 = vmatpush1.msra.mxu0 %v1400
    %2617 = vmatprep.subr.mxu0 %v1405
    %2618 = vmatpush1.msra.mxu0 %v1404
    %2619 = vmatprep.subr.mxu0 %v1409
    %2620 = vmatpush1.msra.mxu0 %v1408
    %2621 = vmatprep.subr.mxu0 %v1413
    %2622 = vmatpush1.msra.mxu0 %v1412
    %2623 = vmatprep.subr.mxu0 %v1417
    %2624 = vmatpush1.msra.mxu0 %v1416
    %2625 = vmatprep.subr.mxu0 %v1421
    %2626 = vmatpush1.msra.mxu0 %v1420
    %2627 = vmatprep.subr.mxu0 %v1425
    %2628 = vmatpush1.msra.mxu0 %v1424
    %2629 = vmatprep.subr.mxu0 %v1429
    %2630 = vmatpush1.msra.mxu0 %v1428
    %2631 = vmatprep.subr.mxu0 %v1433
    %2632 = vmatpush1.msra.mxu0 %v1432
    %2633 = vmatprep.subr.mxu0 %v1437
    %2634 = vmatpush1.msra.mxu0 %v1436
    %2635 = vmatprep.subr.mxu0 %v1441
    %2636 = vmatpush1.msra.mxu0 %v1440
    %2637 = vmatprep.subr.mxu0 %v1445
    %2638 = vmatpush1.msra.mxu0 %v1444
    %2639 = vmatprep.subr.mxu0 %v1449
    %2640 = vmatpush1.msra.mxu0 %v1448
    %2641 = vmatprep.subr.mxu0 %v1453
    %2642 = vmatpush1.msra.mxu0 %v1452
    %2643 = vmatprep.subr.mxu0 0.0
    %2644 = vmatpush1.msra.mxu0 0.0
    %2645 = vmatprep.subr.mxu0 0.0
    %2646 = vmatpush1.msra.mxu0 0.0
    %2647 = vmatprep.subr.mxu0 0.0
    %2648 = vmatpush1.msra.mxu0 0.0
    %2649 = vmatprep.subr.mxu0 0.0
    %2650 = vmatpush1.msra.mxu0 0.0
    %2651 = vmatprep.subr.mxu0 0.0
    %2652 = vmatpush1.msra.mxu0 0.0
    %2653 = vmatprep.subr.mxu0 0.0
    %2654 = vmatpush1.msra.mxu0 0.0
    %2655 = vmatprep.subr.mxu0 0.0
    %2656 = vmatpush1.msra.mxu0 0.0
    %2657 = vmatprep.subr.mxu0 0.0
    %2658 = vmatpush1.msra.mxu0 0.0
    %2659 = vmatprep.subr.mxu0 0.0
    %2660 = vmatpush1.msra.mxu0 0.0
    %2661 = vmatprep.subr.mxu0 0.0
    %2662 = vmatpush1.msra.mxu0 0.0
    %2663 = vmatprep.subr.mxu0 0.0
    %2664 = vmatpush1.msra.mxu0 0.0
    %2665 = vmatprep.subr.mxu0 0.0
    %2666 = vmatpush1.msra.mxu0 0.0
    %2667 = vmatprep.subr.mxu0 0.0
    %2668 = vmatpush1.msra.mxu0 0.0
    %2669 = vmatprep.subr.mxu0 0.0
    %2670 = vmatpush1.msra.mxu0 0.0
    %2671 = vmatprep.subr.mxu0 0.0
    %2672 = vmatpush1.msra.mxu0 0.0
    %2673 = vmatprep.subr.mxu0 0.0
    %2674 = vmatpush1.msra.mxu0 0.0
    %2675 = vmatprep.mubr.f32.mxu0 0.0
    %2676 = vmatmul.mubr.f32.gmra.mrb[0].mxu0 %v2532
    %v2677 = vpop.f32.mrb[0].mxu0
    %v2678 = vadd.f32 0.0, %v2677
    %v2679 = vpop.f32.mrb[0].mxu0
    %v2680 = vadd.f32 0.0, %v2679
    %2681 = vdwg.mxu0
    %v2682 = vadd.f32 %v2536, %v2607
    %v2683 = vadd.f32 %v2537, %v2609
    %v2684 = vadd.f32 %v2538, %v2678
    %v2685 = vadd.f32 %v2539, %v2680
    %v2686 = vxor.u32 %v2682, 2147483648
    %v2687 = vxor.u32 %v2683, 2147483648
    %v2688 = vmul.f32 %v2686, 1.442695
    %v2689 = vpow.pop %v2688
    %v2690 = vmul.f32 %v2687, 1.442695
    %v2691 = vpow.pop %v2690
    %v2692 = vadd.f32 %v2689, 1.0
    %v2693 = vadd.f32 %v2691, 1.0
    %v2694 = vrcp.pop %v2692
    %v2695 = vmul.f32 1.0, %v2694
    %v2696 = vrcp.pop %v2693
    %v2697 = vmul.f32 1.0, %v2696
    %v2698 = vtanh.pop %v2684
    %v2699 = vxor.u32 %v2685, 2147483648
    %v2700 = vmul.f32 %v2699, 1.442695
    %v2701 = vpow.pop %v2700
    %v2702 = vadd.f32 %v2701, 1.0
    %v2703 = vrcp.pop %v2702
    %v2704 = vmul.f32 1.0, %v2703
    %v2705 = vmul.f32 %v2697, %v2530
    %v2706 = vmul.f32 %v2695, %v2698
    %v2707 = vadd.f32 %v2705, %v2706
    %v2708 = vtanh.pop %v2707
    %v2709 = vmul.f32 %v2704, %v2708
    %s2710 = smul.u32 6, 4
    %s2711 = smul.addr %s2710, 8
    %s2712 = scalar_lea.vmem [#allocation3], %s2711
    %v2713 = vld [vmem:[%s2712] sm:$0xff]
    %v2714 = vld [vmem:[%s2712 + $0x8] sm:$0xff]
    %v2715 = vld [vmem:[%s2712 + $0x10] sm:$0xff]
    %v2716 = vld [vmem:[%s2712 + $0x18] sm:$0xff]
    %2717 = vmatprep.subr.mxu0 %v1391
    %2718 = vmatpush1.msra.mxu0 %v1390
    %2719 = vmatprep.subr.mxu0 %v1395
    %2720 = vmatpush1.msra.mxu0 %v1394
    %2721 = vmatprep.subr.mxu0 %v1399
    %2722 = vmatpush1.msra.mxu0 %v1398
    %2723 = vmatprep.subr.mxu0 %v1403
    %2724 = vmatpush1.msra.mxu0 %v1402
    %2725 = vmatprep.subr.mxu0 %v1407
    %2726 = vmatpush1.msra.mxu0 %v1406
    %2727 = vmatprep.subr.mxu0 %v1411
    %2728 = vmatpush1.msra.mxu0 %v1410
    %2729 = vmatprep.subr.mxu0 %v1415
    %2730 = vmatpush1.msra.mxu0 %v1414
    %2731 = vmatprep.subr.mxu0 %v1419
    %2732 = vmatpush1.msra.mxu0 %v1418
    %2733 = vmatprep.subr.mxu0 %v1423
    %2734 = vmatpush1.msra.mxu0 %v1422
    %2735 = vmatprep.subr.mxu0 %v1427
    %2736 = vmatpush1.msra.mxu0 %v1426
    %2737 = vmatprep.subr.mxu0 %v1431
    %2738 = vmatpush1.msra.mxu0 %v1430
    %2739 = vmatprep.subr.mxu0 %v1435
    %2740 = vmatpush1.msra.mxu0 %v1434
    %2741 = vmatprep.subr.mxu0 %v1439
    %2742 = vmatpush1.msra.mxu0 %v1438
    %2743 = vmatprep.subr.mxu0 %v1443
    %2744 = vmatpush1.msra.mxu0 %v1442
    %2745 = vmatprep.subr.mxu0 %v1447
    %2746 = vmatpush1.msra.mxu0 %v1446
    %2747 = vmatprep.subr.mxu0 %v1451
    %2748 = vmatpush1.msra.mxu0 %v1450
    %2749 = vmatprep.subr.mxu0 0.0
    %2750 = vmatpush1.msra.mxu0 0.0
    %2751 = vmatprep.subr.mxu0 0.0
    %2752 = vmatpush1.msra.mxu0 0.0
    %2753 = vmatprep.subr.mxu0 0.0
    %2754 = vmatpush1.msra.mxu0 0.0
    %2755 = vmatprep.subr.mxu0 0.0
    %2756 = vmatpush1.msra.mxu0 0.0
    %2757 = vmatprep.subr.mxu0 0.0
    %2758 = vmatpush1.msra.mxu0 0.0
    %2759 = vmatprep.subr.mxu0 0.0
    %2760 = vmatpush1.msra.mxu0 0.0
    %2761 = vmatprep.subr.mxu0 0.0
    %2762 = vmatpush1.msra.mxu0 0.0
    %2763 = vmatprep.subr.mxu0 0.0
    %2764 = vmatpush1.msra.mxu0 0.0
    %2765 = vmatprep.subr.mxu0 0.0
    %2766 = vmatpush1.msra.mxu0 0.0
    %2767 = vmatprep.subr.mxu0 0.0
    %2768 = vmatpush1.msra.mxu0 0.0
    %2769 = vmatprep.subr.mxu0 0.0
    %2770 = vmatpush1.msra.mxu0 0.0
    %2771 = vmatprep.subr.mxu0 0.0
    %2772 = vmatpush1.msra.mxu0 0.0
    %2773 = vmatprep.subr.mxu0 0.0
    %2774 = vmatpush1.msra.mxu0 0.0
    %2775 = vmatprep.subr.mxu0 0.0
    %2776 = vmatpush1.msra.mxu0 0.0
    %2777 = vmatprep.subr.mxu0 0.0
    %2778 = vmatpush1.msra.mxu0 0.0
    %2779 = vmatprep.subr.mxu0 0.0
    %2780 = vmatpush1.msra.mxu0 0.0
    %2781 = vmatprep.mubr.f32.mxu0 0.0
    %2782 = vmatmul.mubr.f32.gmra.mrb[0].mxu0 %v2709
    %v2783 = vpop.f32.mrb[0].mxu0
    %v2784 = vadd.f32 0.0, %v2783
    %v2785 = vpop.f32.mrb[0].mxu0
    %v2786 = vadd.f32 0.0, %v2785
    %2787 = vdwg.mxu0
    %2788 = vmatprep.subr.mxu0 %v1393
    %2789 = vmatpush1.msra.mxu0 %v1392
    %2790 = vmatprep.subr.mxu0 %v1397
    %2791 = vmatpush1.msra.mxu0 %v1396
    %2792 = vmatprep.subr.mxu0 %v1401
    %2793 = vmatpush1.msra.mxu0 %v1400
    %2794 = vmatprep.subr.mxu0 %v1405
    %2795 = vmatpush1.msra.mxu0 %v1404
    %2796 = vmatprep.subr.mxu0 %v1409
    %2797 = vmatpush1.msra.mxu0 %v1408
    %2798 = vmatprep.subr.mxu0 %v1413
    %2799 = vmatpush1.msra.mxu0 %v1412
    %2800 = vmatprep.subr.mxu0 %v1417
    %2801 = vmatpush1.msra.mxu0 %v1416
    %2802 = vmatprep.subr.mxu0 %v1421
    %2803 = vmatpush1.msra.mxu0 %v1420
    %2804 = vmatprep.subr.mxu0 %v1425
    %2805 = vmatpush1.msra.mxu0 %v1424
    %2806 = vmatprep.subr.mxu0 %v1429
    %2807 = vmatpush1.msra.mxu0 %v1428
    %2808 = vmatprep.subr.mxu0 %v1433
    %2809 = vmatpush1.msra.mxu0 %v1432
    %2810 = vmatprep.subr.mxu0 %v1437
    %2811 = vmatpush1.msra.mxu0 %v1436
    %2812 = vmatprep.subr.mxu0 %v1441
    %2813 = vmatpush1.msra.mxu0 %v1440
    %2814 = vmatprep.subr.mxu0 %v1445
    %2815 = vmatpush1.msra.mxu0 %v1444
    %2816 = vmatprep.subr.mxu0 %v1449
    %2817 = vmatpush1.msra.mxu0 %v1448
    %2818 = vmatprep.subr.mxu0 %v1453
    %2819 = vmatpush1.msra.mxu0 %v1452
    %2820 = vmatprep.subr.mxu0 0.0
    %2821 = vmatpush1.msra.mxu0 0.0
    %2822 = vmatprep.subr.mxu0 0.0
    %2823 = vmatpush1.msra.mxu0 0.0
    %2824 = vmatprep.subr.mxu0 0.0
    %2825 = vmatpush1.msra.mxu0 0.0
    %2826 = vmatprep.subr.mxu0 0.0
    %2827 = vmatpush1.msra.mxu0 0.0
    %2828 = vmatprep.subr.mxu0 0.0
    %2829 = vmatpush1.msra.mxu0 0.0
    %2830 = vmatprep.subr.mxu0 0.0
    %2831 = vmatpush1.msra.mxu0 0.0
    %2832 = vmatprep.subr.mxu0 0.0
    %2833 = vmatpush1.msra.mxu0 0.0
    %2834 = vmatprep.subr.mxu0 0.0
    %2835 = vmatpush1.msra.mxu0 0.0
    %2836 = vmatprep.subr.mxu0 0.0
    %2837 = vmatpush1.msra.mxu0 0.0
    %2838 = vmatprep.subr.mxu0 0.0
    %2839 = vmatpush1.msra.mxu0 0.0
    %2840 = vmatprep.subr.mxu0 0.0
    %2841 = vmatpush1.msra.mxu0 0.0
    %2842 = vmatprep.subr.mxu0 0.0
    %2843 = vmatpush1.msra.mxu0 0.0
    %2844 = vmatprep.subr.mxu0 0.0
    %2845 = vmatpush1.msra.mxu0 0.0
    %2846 = vmatprep.subr.mxu0 0.0
    %2847 = vmatpush1.msra.mxu0 0.0
    %2848 = vmatprep.subr.mxu0 0.0
    %2849 = vmatpush1.msra.mxu0 0.0
    %2850 = vmatprep.subr.mxu0 0.0
    %2851 = vmatpush1.msra.mxu0 0.0
    %2852 = vmatprep.mubr.f32.mxu0 0.0
    %2853 = vmatmul.mubr.f32.gmra.mrb[0].mxu0 %v2709
    %v2854 = vpop.f32.mrb[0].mxu0
    %v2855 = vadd.f32 0.0, %v2854
    %v2856 = vpop.f32.mrb[0].mxu0
    %v2857 = vadd.f32 0.0, %v2856
    %2858 = vdwg.mxu0
    %v2859 = vadd.f32 %v2713, %v2784
    %v2860 = vadd.f32 %v2714, %v2786
    %v2861 = vadd.f32 %v2715, %v2855
    %v2862 = vadd.f32 %v2716, %v2857
    %v2863 = vxor.u32 %v2859, 2147483648
    %v2864 = vxor.u32 %v2860, 2147483648
    %v2865 = vmul.f32 %v2863, 1.442695
    %v2866 = vpow.pop %v2865
    %v2867 = vmul.f32 %v2864, 1.442695
    %v2868 = vpow.pop %v2867
    %v2869 = vadd.f32 %v2866, 1.0
    %v2870 = vadd.f32 %v2868, 1.0
    %v2871 = vrcp.pop %v2869
    %v2872 = vmul.f32 1.0, %v2871
    %v2873 = vrcp.pop %v2870
    %v2874 = vmul.f32 1.0, %v2873
    %v2875 = vtanh.pop %v2861
    %v2876 = vxor.u32 %v2862, 2147483648
    %v2877 = vmul.f32 %v2876, 1.442695
    %v2878 = vpow.pop %v2877
    %v2879 = vadd.f32 %v2878, 1.0
    %v2880 = vrcp.pop %v2879
    %v2881 = vmul.f32 1.0, %v2880
    %v2882 = vmul.f32 %v2874, %v2707
    %v2883 = vmul.f32 %v2872, %v2875
    %v2884 = vadd.f32 %v2882, %v2883
    %v2885 = vtanh.pop %v2884
    %v2886 = vmul.f32 %v2881, %v2885
    %s2887 = smul.u32 7, 4
    %s2888 = smul.addr %s2887, 8
    %s2889 = scalar_lea.vmem [#allocation3], %s2888
    %v2890 = vld [vmem:[%s2889] sm:$0xff]
    %v2891 = vld [vmem:[%s2889 + $0x8] sm:$0xff]
    %v2892 = vld [vmem:[%s2889 + $0x10] sm:$0xff]
    %v2893 = vld [vmem:[%s2889 + $0x18] sm:$0xff]
    %2894 = vmatprep.subr.mxu0 %v1391
    %2895 = vmatpush1.msra.mxu0 %v1390
    %2896 = vmatprep.subr.mxu0 %v1395
    %2897 = vmatpush1.msra.mxu0 %v1394
    %2898 = vmatprep.subr.mxu0 %v1399
    %2899 = vmatpush1.msra.mxu0 %v1398
    %2900 = vmatprep.subr.mxu0 %v1403
    %2901 = vmatpush1.msra.mxu0 %v1402
    %2902 = vmatprep.subr.mxu0 %v1407
    %2903 = vmatpush1.msra.mxu0 %v1406
    %2904 = vmatprep.subr.mxu0 %v1411
    %2905 = vmatpush1.msra.mxu0 %v1410
    %2906 = vmatprep.subr.mxu0 %v1415
    %2907 = vmatpush1.msra.mxu0 %v1414
    %2908 = vmatprep.subr.mxu0 %v1419
    %2909 = vmatpush1.msra.mxu0 %v1418
    %2910 = vmatprep.subr.mxu0 %v1423
    %2911 = vmatpush1.msra.mxu0 %v1422
    %2912 = vmatprep.subr.mxu0 %v1427
    %2913 = vmatpush1.msra.mxu0 %v1426
    %2914 = vmatprep.subr.mxu0 %v1431
    %2915 = vmatpush1.msra.mxu0 %v1430
    %2916 = vmatprep.subr.mxu0 %v1435
    %2917 = vmatpush1.msra.mxu0 %v1434
    %2918 = vmatprep.subr.mxu0 %v1439
    %2919 = vmatpush1.msra.mxu0 %v1438
    %2920 = vmatprep.subr.mxu0 %v1443
    %2921 = vmatpush1.msra.mxu0 %v1442
    %2922 = vmatprep.subr.mxu0 %v1447
    %2923 = vmatpush1.msra.mxu0 %v1446
    %2924 = vmatprep.subr.mxu0 %v1451
    %2925 = vmatpush1.msra.mxu0 %v1450
    %2926 = vmatprep.subr.mxu0 0.0
    %2927 = vmatpush1.msra.mxu0 0.0
    %2928 = vmatprep.subr.mxu0 0.0
    %2929 = vmatpush1.msra.mxu0 0.0
    %2930 = vmatprep.subr.mxu0 0.0
    %2931 = vmatpush1.msra.mxu0 0.0
    %2932 = vmatprep.subr.mxu0 0.0
    %2933 = vmatpush1.msra.mxu0 0.0
    %2934 = vmatprep.subr.mxu0 0.0
    %2935 = vmatpush1.msra.mxu0 0.0
    %2936 = vmatprep.subr.mxu0 0.0
    %2937 = vmatpush1.msra.mxu0 0.0
    %2938 = vmatprep.subr.mxu0 0.0
    %2939 = vmatpush1.msra.mxu0 0.0
    %2940 = vmatprep.subr.mxu0 0.0
    %2941 = vmatpush1.msra.mxu0 0.0
    %2942 = vmatprep.subr.mxu0 0.0
    %2943 = vmatpush1.msra.mxu0 0.0
    %2944 = vmatprep.subr.mxu0 0.0
    %2945 = vmatpush1.msra.mxu0 0.0
    %2946 = vmatprep.subr.mxu0 0.0
    %2947 = vmatpush1.msra.mxu0 0.0
    %2948 = vmatprep.subr.mxu0 0.0
    %2949 = vmatpush1.msra.mxu0 0.0
    %2950 = vmatprep.subr.mxu0 0.0
    %2951 = vmatpush1.msra.mxu0 0.0
    %2952 = vmatprep.subr.mxu0 0.0
    %2953 = vmatpush1.msra.mxu0 0.0
    %2954 = vmatprep.subr.mxu0 0.0
    %2955 = vmatpush1.msra.mxu0 0.0
    %2956 = vmatprep.subr.mxu0 0.0
    %2957 = vmatpush1.msra.mxu0 0.0
    %2958 = vmatprep.mubr.f32.mxu0 0.0
    %2959 = vmatmul.mubr.f32.gmra.mrb[0].mxu0 %v2886
    %v2960 = vpop.f32.mrb[0].mxu0
    %v2961 = vadd.f32 0.0, %v2960
    %v2962 = vpop.f32.mrb[0].mxu0
    %v2963 = vadd.f32 0.0, %v2962
    %2964 = vdwg.mxu0
    %2965 = vmatprep.subr.mxu0 %v1393
    %2966 = vmatpush1.msra.mxu0 %v1392
    %2967 = vmatprep.subr.mxu0 %v1397
    %2968 = vmatpush1.msra.mxu0 %v1396
    %2969 = vmatprep.subr.mxu0 %v1401
    %2970 = vmatpush1.msra.mxu0 %v1400
    %2971 = vmatprep.subr.mxu0 %v1405
    %2972 = vmatpush1.msra.mxu0 %v1404
    %2973 = vmatprep.subr.mxu0 %v1409
    %2974 = vmatpush1.msra.mxu0 %v1408
    %2975 = vmatprep.subr.mxu0 %v1413
    %2976 = vmatpush1.msra.mxu0 %v1412
    %2977 = vmatprep.subr.mxu0 %v1417
    %2978 = vmatpush1.msra.mxu0 %v1416
    %2979 = vmatprep.subr.mxu0 %v1421
    %2980 = vmatpush1.msra.mxu0 %v1420
    %2981 = vmatprep.subr.mxu0 %v1425
    %2982 = vmatpush1.msra.mxu0 %v1424
    %2983 = vmatprep.subr.mxu0 %v1429
    %2984 = vmatpush1.msra.mxu0 %v1428
    %2985 = vmatprep.subr.mxu0 %v1433
    %2986 = vmatpush1.msra.mxu0 %v1432
    %2987 = vmatprep.subr.mxu0 %v1437
    %2988 = vmatpush1.msra.mxu0 %v1436
    %2989 = vmatprep.subr.mxu0 %v1441
    %2990 = vmatpush1.msra.mxu0 %v1440
    %2991 = vmatprep.subr.mxu0 %v1445
    %2992 = vmatpush1.msra.mxu0 %v1444
    %2993 = vmatprep.subr.mxu0 %v1449
    %2994 = vmatpush1.msra.mxu0 %v1448
    %2995 = vmatprep.subr.mxu0 %v1453
    %2996 = vmatpush1.msra.mxu0 %v1452
    %2997 = vmatprep.subr.mxu0 0.0
    %2998 = vmatpush1.msra.mxu0 0.0
    %2999 = vmatprep.subr.mxu0 0.0
    %3000 = vmatpush1.msra.mxu0 0.0
    %3001 = vmatprep.subr.mxu0 0.0
    %3002 = vmatpush1.msra.mxu0 0.0
    %3003 = vmatprep.subr.mxu0 0.0
    %3004 = vmatpush1.msra.mxu0 0.0
    %3005 = vmatprep.subr.mxu0 0.0
    %3006 = vmatpush1.msra.mxu0 0.0
    %3007 = vmatprep.subr.mxu0 0.0
    %3008 = vmatpush1.msra.mxu0 0.0
    %3009 = vmatprep.subr.mxu0 0.0
    %3010 = vmatpush1.msra.mxu0 0.0
    %3011 = vmatprep.subr.mxu0 0.0
    %3012 = vmatpush1.msra.mxu0 0.0
    %3013 = vmatprep.subr.mxu0 0.0
    %3014 = vmatpush1.msra.mxu0 0.0
    %3015 = vmatprep.subr.mxu0 0.0
    %3016 = vmatpush1.msra.mxu0 0.0
    %3017 = vmatprep.subr.mxu0 0.0
    %3018 = vmatpush1.msra.mxu0 0.0
    %3019 = vmatprep.subr.mxu0 0.0
    %3020 = vmatpush1.msra.mxu0 0.0
    %3021 = vmatprep.subr.mxu0 0.0
    %3022 = vmatpush1.msra.mxu0 0.0
    %3023 = vmatprep.subr.mxu0 0.0
    %3024 = vmatpush1.msra.mxu0 0.0
    %3025 = vmatprep.subr.mxu0 0.0
    %3026 = vmatpush1.msra.mxu0 0.0
    %3027 = vmatprep.subr.mxu0 0.0
    %3028 = vmatpush1.msra.mxu0 0.0
    %3029 = vmatprep.mubr.f32.mxu0 0.0
    %3030 = vmatmul.mubr.f32.gmra.mrb[0].mxu0 %v2886
    %v3031 = vpop.f32.mrb[0].mxu0
    %v3032 = vadd.f32 0.0, %v3031
    %v3033 = vpop.f32.mrb[0].mxu0
    %v3034 = vadd.f32 0.0, %v3033
    %3035 = vdwg.mxu0
    %v3036 = vadd.f32 %v2890, %v2961
    %v3037 = vadd.f32 %v2891, %v2963
    %v3038 = vadd.f32 %v2892, %v3032
    %v3039 = vadd.f32 %v2893, %v3034
    %v3040 = vxor.u32 %v3036, 2147483648
    %v3041 = vxor.u32 %v3037, 2147483648
    %v3042 = vmul.f32 %v3040, 1.442695
    %v3043 = vpow.pop %v3042
    %v3044 = vmul.f32 %v3041, 1.442695
    %v3045 = vpow.pop %v3044
    %v3046 = vadd.f32 %v3043, 1.0
    %v3047 = vadd.f32 %v3045, 1.0
    %v3048 = vrcp.pop %v3046
    %v3049 = vmul.f32 1.0, %v3048
    %v3050 = vrcp.pop %v3047
    %v3051 = vmul.f32 1.0, %v3050
    %v3052 = vtanh.pop %v3038
    %v3053 = vxor.u32 %v3039, 2147483648
    %v3054 = vmul.f32 %v3053, 1.442695
    %v3055 = vpow.pop %v3054
    %v3056 = vadd.f32 %v3055, 1.0
    %v3057 = vrcp.pop %v3056
    %v3058 = vmul.f32 1.0, %v3057
    %v3059 = vmul.f32 %v3051, %v2884
    %v3060 = vmul.f32 %v3049, %v3052
    %v3061 = vadd.f32 %v3059, %v3060
    %v3062 = vtanh.pop %v3061
    %v3063 = vmul.f32 %v3058, %v3062
    %v3064 = vld [vmem:[%s4] sm:$0x1]
    %v3066 = vlaneseq
    %v3067 = vshrl.u32 %v3066, 7
    %v3068 = vsub.s32 0, %v3067
    %v3069 = vrot.slane %v3064, %v3068
    %v3071 = vmul.f32 %v3063, %v3069
    %3072 = vadd.xlane.f32.xlu0 %v3071
    %v3073 = vpop.xlane.xlu0 %3072
    %v3074 = vld [vmem:[#allocation4] sm:$0x1]
    %v3076 = vlaneseq
    %v3077 = vshrl.u32 %v3076, 7
    %v3078 = vsub.s32 0, %v3077
    %v3079 = vrot.slane %v3074, %v3078
    %v3081 = vadd.f32 %v3073, %v3079
    %vm3082 = vcmask 7168
    %3083 = vst.msk [vmem:[%s6] sm:$0xff] %vm3082, %v3081
    // Predicated region
    $region38: #{tpu_custom_call.1} parent=1 // pred_check
      _
    $region39: #{tpu_custom_call.1} parent=1 // pred_check_branch
      %3085 = sbr.rel (0) target = $region41
    $region40: #{tpu_custom_call.1} parent=1 // pred_region
      _
    $region41: #{tpu_custom_call.1} parent=1 // pred_fallthru
      _
    // Predicated region
    $region42: #{tpu_custom_call.1} parent=1 // pred_check
      _
    $region43: #{tpu_custom_call.1} parent=1 // pred_check_branch
      %3087 = sbr.rel (0) target = $region45
    $region44: #{tpu_custom_call.1} parent=1 // pred_region
      _
    $region45: #{tpu_custom_call.1} parent=1 // pred_fallthru
      _
    %3088 = vsyncpa [#allocation6], 1
    %3089 = vsyncpa [#allocation8], 1

</llo_original>
